<compile_context>
chip_gen: v5e
topology: v5e:2x2
jax: 0.10.0
libtpu: 0.0.40
codegen_flags: <defaults>
</compile_context>

<pallas_src>
import functools

import jax
import jax.numpy as jnp
from jax import lax
from jax.experimental import pallas as pl
from jax.experimental.pallas import tpu as pltpu

VMEM_LIMIT = 48 * 1024 * 1024  # <= v7x 64 MiB physical; plenty of headroom on v5e/v6e
DEFAULT_TILE = 512             # point-axis tile (rows per grid step)


def _round_up(x, m):
    return ((x + m - 1) // m) * m


def _pick_tile(n, tile=DEFAULT_TILE):
    # Full-dim block if it fits (always legal); otherwise an 8-aligned tile.
    return n if n <= tile else tile


def _rep_spec(arr):
    """BlockSpec for a weight/bias replicated across all grid steps (full-array block)."""
    nd = arr.ndim
    return pl.BlockSpec(arr.shape, lambda *_: (0,) * nd)
    # NOTE: replicated full-array blocks are still double-buffered by Pallas; the extra
    # copy is <2 MiB per call here and fits the 48 MiB budget, so pl.Buffered(1) is not
    # needed for correctness or capacity.


def _res_conv1(coords, feat_bf16, w1c, w1f, b1):
    """PointNetRes conv1 with the [coords(3) | feat(65)] concat folded into split weights.
    The 3-channel coords contribution is done on the VPU (3 broadcasts), feat on the MXU."""
    wc = w1c.astype(jnp.float32)                                            # (3, 128)
    h = (coords[:, 0:1] * wc[0:1, :]
         + coords[:, 1:2] * wc[1:2, :]
         + coords[:, 2:3] * wc[2:3, :]
         + jnp.dot(feat_bf16, w1f, preferred_element_type=jnp.float32)
         + b1)
    return jnp.maximum(h, 0.0)                                              # (tp, 128) f32


# ----------------------------------------------------------------------------
# Fused kernels
# ----------------------------------------------------------------------------
def _pointnet_enc_kernel(x_ref, w1, b1, w2, b2, w3, b3, g_ref, *, n_valid, tn, needs_mask):
    """conv1(relu) -> conv2(relu) -> conv3 -> max over points (accumulated over tile axis).
    Padded-tail masking only on the last tile."""
    t = pl.program_id(1)
    nt = pl.num_programs(1)
    x = x_ref[0].astype(jnp.bfloat16)                                       # (tn, Cin)
    h = jnp.dot(x, w1[...], preferred_element_type=jnp.float32) + b1[...]
    h = jnp.maximum(h, 0.0).astype(jnp.bfloat16)
    h = jnp.dot(h, w2[...], preferred_element_type=jnp.float32) + b2[...]
    h = jnp.maximum(h, 0.0).astype(jnp.bfloat16)
    h = jnp.dot(h, w3[...], preferred_element_type=jnp.float32) + b3[...]   # (tn, 1024) f32

    def _accum(hv):
        blk = jnp.max(hv, axis=0, keepdims=True)                            # (1, 1024)

        @pl.when(t == 0)
        def _():
            g_ref[0] = blk

        @pl.when(t > 0)
        def _():
            g_ref[0] = jnp.maximum(g_ref[0], blk)

    if needs_mask:
        @pl.when(t < nt - 1)
        def _():
            _accum(h)

        @pl.when(t == nt - 1)
        def _():
            rows = lax.broadcasted_iota(jnp.int32, (tn, 1), 0)
            _accum(jnp.where(t * tn + rows < n_valid, h, -jnp.inf))
    else:
        _accum(h)


def _res_stage1_kernel(coords_ref, feat_ref, w1c, w1f, b1, w2, b2, w3, b3, w4g, b4,
                       gbias_ref, g_acc, *, n_valid, tp, needs_mask):
    """PointNetRes conv1(relu) -> conv2(relu) -> conv3 -> max over points.
    Finalize: per-batch conv4 global bias = g @ W4_global + b4 (hoisted out of stage 2)."""
    t = pl.program_id(1)
    nt = pl.num_programs(1)
    h1 = _res_conv1(coords_ref[0], feat_ref[0].astype(jnp.bfloat16),
                    w1c[...], w1f[...], b1[...]).astype(jnp.bfloat16)        # (tp, 128)
    h = jnp.maximum(jnp.dot(h1, w2[...], preferred_element_type=jnp.float32) + b2[...],
                    0.0).astype(jnp.bfloat16)
    h = jnp.dot(h, w3[...], preferred_element_type=jnp.float32) + b3[...]    # (tp, 1024) f32

    def _accum(hv):
        blk = jnp.max(hv, axis=0, keepdims=True)                             # (1, 1024)

        @pl.when(t == 0)
        def _():
            g_acc[...] = blk

        @pl.when(t > 0)
        def _():
            g_acc[...] = jnp.maximum(g_acc[...], blk)

    if needs_mask:
        @pl.when(t < nt - 1)
        def _():
            _accum(h)

        @pl.when(t == nt - 1)
        def _():
            rows = lax.broadcasted_iota(jnp.int32, (tp, 1), 0)
            _accum(jnp.where(t * tp + rows < n_valid, h, -jnp.inf))
    else:
        _accum(h)

    @pl.when(t == nt - 1)
    def _():
        g = g_acc[...].astype(jnp.bfloat16)                                  # (1, 1024)
        gbias_ref[0] = (jnp.dot(g, w4g[...], preferred_element_type=jnp.float32)
                        + b4[...])                                           # (1, 512)


def _res_stage2_kernel(coords_ref, feat_ref, gbias_ref, w1c, w1f, b1,
                       w4l, w5, b5, w6, b6, w7t, b7t, o_ref):
    """PointNetRes conv4-7; conv1 recomputed from raw inputs (no pointfeat HBM round trip);
    global feature enters via the precomputed per-batch bias; conv7 output written
    transposed (8 x tp) so points are lane-dense."""
    h1 = _res_conv1(coords_ref[0], feat_ref[0].astype(jnp.bfloat16),
                    w1c[...], w1f[...], b1[...]).astype(jnp.bfloat16)        # (tp, 128)
    gb = gbias_ref[0]                                                        # (1, 512) f32
    h = jnp.maximum(jnp.dot(h1, w4l[...], preferred_element_type=jnp.float32) + gb,
                    0.0).astype(jnp.bfloat16)                                # (tp, 512)
    h = jnp.maximum(jnp.dot(h, w5[...], preferred_element_type=jnp.float32) + b5[...],
                    0.0).astype(jnp.bfloat16)                                # (tp, 256)
    h = jnp.maximum(jnp.dot(h, w6[...], preferred_element_type=jnp.float32) + b6[...],
                    0.0).astype(jnp.bfloat16)                                # (tp, 128)
    out = lax.dot_general(w7t[...], h, (((1,), (1,)), ((), ())),             # (8, tp)
                          preferred_element_type=jnp.float32)
    o_ref[0] = jnp.tanh(out + b7t[...])


def _decoder_kernel(grid_ref, lat_ref, w1g, w1l, b1, w2, b2, w3, b3, w4t, b4t, o_ref):
    """PointGenCon conv1-4 fused; primitive dim is a grid axis; the [rand_grid|lat] concat
    is folded into split conv1 weights; the final 3-channel conv is written transposed
    (8 x npp, lane-dense)."""
    rg = grid_ref[0, 0].astype(jnp.float32)                                  # (npp, 2)
    lat = lat_ref[0].astype(jnp.bfloat16)                                    # (1, bottleneck)
    wg = w1g[0].astype(jnp.float32)                                          # (2, C1)
    h = (rg[:, 0:1] * wg[0:1, :] + rg[:, 1:2] * wg[1:2, :]                   # grid part (VPU)
         + jnp.dot(lat, w1l[0], preferred_element_type=jnp.float32)          # lat part (MXU)
         + b1[0])
    h = jnp.maximum(h, 0.0).astype(jnp.bfloat16)
    h = jnp.maximum(jnp.dot(h, w2[0], preferred_element_type=jnp.float32) + b2[0],
                    0.0).astype(jnp.bfloat16)
    h = jnp.maximum(jnp.dot(h, w3[0], preferred_element_type=jnp.float32) + b3[0],
                    0.0).astype(jnp.bfloat16)                                # (npp, C3)
    out = lax.dot_general(w4t[0], h, (((1,), (1,)), ((), ())),               # (8, npp)
                          preferred_element_type=jnp.float32)
    o_ref[0, 0] = jnp.tanh(out + b4t[0])


# ----------------------------------------------------------------------------
# Wrappers (pallas_call plumbing)
# ----------------------------------------------------------------------------
def pointnet_encode(p, x, tile=DEFAULT_TILE):
    """Fused PointNetfeat / PointNetfeatVarlen trunk.  x: (B, N, Cin_pad) -> (B, 1024) f32."""
    B, N, Cin = x.shape
    tn = _pick_tile(N, tile)
    nt = pl.cdiv(N, tn)
    needs_mask = (N % tn) != 0
    kern = functools.partial(_pointnet_enc_kernel, n_valid=N, tn=tn, needs_mask=needs_mask)
    out = pl.pallas_call(
        kern,
        out_shape=jax.ShapeDtypeStruct((B, 1, 1024), jnp.float32),
        grid=(B, nt),
        in_specs=[
            pl.BlockSpec((1, tn, Cin), lambda b, t: (b, t, 0)),
            _rep_spec(p["w1"]), _rep_spec(p["b1"]),
            _rep_spec(p["w2"]), _rep_spec(p["b2"]),
            _rep_spec(p["w3"]), _rep_spec(p["b3"]),
        ],
        out_specs=pl.BlockSpec((1, 1, 1024), lambda b, t: (b, 0, 0)),
        compiler_params=pltpu.CompilerParams(
            dimension_semantics=("parallel", "arbitrary"),
            vmem_limit_bytes=VMEM_LIMIT),
    )(x, p["w1"], p["b1"], p["w2"], p["b2"], p["w3"], p["b3"])
    return out[:, 0, :]


def rayseq_fwd(p, feat, ray):
    """Linear(2048->bottleneck)+BN+ReLU with the [feat|ray] concat folded into split weights.
    Plain XLA: a single (B,1024)x(1024,bott) matmul is dominated by pallas_call fixed cost."""
    y = (jnp.dot(feat, p["wf"].astype(jnp.float32))
         + jnp.dot(ray, p["wr"].astype(jnp.float32)) + p["b"])
    return jnp.maximum(y, 0.0)


def decode_primitives(p, rand_grid, lat):
    """rand_grid: (n_prim, B, npp, 2), lat: (B, bottleneck) -> (B, n_prim*npp, 3)."""
    n_prim, B, npp, _ = rand_grid.shape
    bott = lat.shape[-1]
    lat3 = lat[:, None, :]                                                   # (B, 1, bott)
    slab = pl.pallas_call(
        _decoder_kernel,
        out_shape=jax.ShapeDtypeStruct((n_prim, B, 8, npp), jnp.float32),
        grid=(n_prim, B),
        in_specs=[
            pl.BlockSpec((1, 1, npp, 2), lambda pr, b: (pr, b, 0, 0)),
            pl.BlockSpec((1, 1, bott), lambda pr, b: (b, 0, 0)),
            pl.BlockSpec((1,) + p["w1g"].shape[1:], lambda pr, b: (pr, 0, 0)),
            pl.BlockSpec((1,) + p["w1l"].shape[1:], lambda pr, b: (pr, 0, 0)),
            pl.BlockSpec((1,) + p["b1"].shape[1:], lambda pr, b: (pr, 0, 0)),
            pl.BlockSpec((1,) + p["w2"].shape[1:], lambda pr, b: (pr, 0, 0)),
            pl.BlockSpec((1,) + p["b2"].shape[1:], lambda pr, b: (pr, 0, 0)),
            pl.BlockSpec((1,) + p["w3"].shape[1:], lambda pr, b: (pr, 0, 0)),
            pl.BlockSpec((1,) + p["b3"].shape[1:], lambda pr, b: (pr, 0, 0)),
            pl.BlockSpec((1,) + p["w4t"].shape[1:], lambda pr, b: (pr, 0, 0)),
            pl.BlockSpec((1,) + p["b4t"].shape[1:], lambda pr, b: (pr, 0, 0)),
        ],
        out_specs=pl.BlockSpec((1, 1, 8, npp), lambda pr, b: (pr, b, 0, 0)),
        compiler_params=pltpu.CompilerParams(
            dimension_semantics=("parallel", "parallel"),
            vmem_limit_bytes=VMEM_LIMIT),
    )(rand_grid, lat3, p["w1g"], p["w1l"], p["b1"], p["w2"], p["b2"],
      p["w3"], p["b3"], p["w4t"], p["b4t"])
    dec = slab[:, :, :3, :]                                                  # (n_prim, B, 3, npp)
    return jnp.transpose(dec, (1, 0, 3, 2)).reshape(B, n_prim * npp, 3)


def pointnet_res(p, coords, feat, tile=DEFAULT_TILE):
    """Fused PointNetRes.  coords: (B, P, 3) f32, feat: (B, P, 65) f32 -> delta (B, P, 3)."""
    B, P, _ = coords.shape
    Cf = feat.shape[-1]
    tp = _pick_tile(P, tile)
    nt = pl.cdiv(P, tp)
    needs_mask = (P % tp) != 0

    kern1 = functools.partial(_res_stage1_kernel, n_valid=P, tp=tp, needs_mask=needs_mask)
    gbias = pl.pallas_call(
        kern1,
        out_shape=jax.ShapeDtypeStruct((B, 1, 512), jnp.float32),
        grid=(B, nt),
        in_specs=[
            pl.BlockSpec((1, tp, 3), lambda b, t: (b, t, 0)),
            pl.BlockSpec((1, tp, Cf), lambda b, t: (b, t, 0)),
            _rep_spec(p["w1c"]), _rep_spec(p["w1f"]), _rep_spec(p["b1"]),
            _rep_spec(p["w2"]), _rep_spec(p["b2"]),
            _rep_spec(p["w3"]), _rep_spec(p["b3"]),
            _rep_spec(p["w4g"]), _rep_spec(p["b4"]),
        ],
        out_specs=pl.BlockSpec((1, 1, 512), lambda b, t: (b, 0, 0)),
        scratch_shapes=[pltpu.VMEM((1, 1024), jnp.float32)],
        compiler_params=pltpu.CompilerParams(
            dimension_semantics=("parallel", "arbitrary"),
            vmem_limit_bytes=VMEM_LIMIT),
    )(coords, feat, p["w1c"], p["w1f"], p["b1"], p["w2"], p["b2"],
      p["w3"], p["b3"], p["w4g"], p["b4"])

    slab = pl.pallas_call(
        _res_stage2_kernel,
        out_shape=jax.ShapeDtypeStruct((B, 8, P), jnp.float32),
        grid=(B, nt),
        in_specs=[
            pl.BlockSpec((1, tp, 3), lambda b, t: (b, t, 0)),
            pl.BlockSpec((1, tp, Cf), lambda b, t: (b, t, 0)),
            pl.BlockSpec((1, 1, 512), lambda b, t: (b, 0, 0)),
            _rep_spec(p["w1c"]), _rep_spec(p["w1f"]), _rep_spec(p["b1"]),
            _rep_spec(p["w4l"]),
            _rep_spec(p["w5"]), _rep_spec(p["b5"]),
            _rep_spec(p["w6"]), _rep_spec(p["b6"]),
            _rep_spec(p["w7t"]), _rep_spec(p["b7t"]),
        ],
        out_specs=pl.BlockSpec((1, 8, tp), lambda b, t: (b, 0, t)),
        compiler_params=pltpu.CompilerParams(
            dimension_semantics=("parallel", "parallel"),
            vmem_limit_bytes=VMEM_LIMIT),
    )(coords, feat, gbias, p["w1c"], p["w1f"], p["b1"], p["w4l"],
      p["w5"], p["b5"], p["w6"], p["b6"], p["w7t"], p["b7t"])
    return jnp.transpose(slab[:, :3, :], (0, 2, 1))                          # (B, P, 3)


# ----------------------------------------------------------------------------
# Parameter construction (synthetic weights, eval-mode BN folded into W / bias)
# ----------------------------------------------------------------------------
def _folded_conv(key, cin, cout, bn=True, cin_pad=None, cout_pad=None):
    kw, kb, kg, kbt = jax.random.split(key, 4)
    w = 0.05 * jax.random.normal(kw, (cin, cout), jnp.float32)
    b = 0.01 * jax.random.normal(kb, (cout,), jnp.float32)
    if bn:
        gamma = 1.0 + 0.1 * jax.random.normal(kg, (cout,), jnp.float32)
        beta = 0.1 * jax.random.normal(kbt, (cout,), jnp.float32)
        scale = gamma / jnp.sqrt(1.0 + 1e-5)        # eval BN: running_mean=0, running_var=1
        shift = beta
    else:
        scale = jnp.ones((cout,), jnp.float32)
        shift = jnp.zeros((cout,), jnp.float32)
    wf = w * scale[None, :]                         # fold BN scale into weight columns
    bf = b * scale + shift                          # fold conv bias + BN shift
    if cin_pad is not None and cin_pad > cin:
        wf = jnp.pad(wf, ((0, cin_pad - cin), (0, 0)))
    if cout_pad is not None and cout_pad > cout:
        wf = jnp.pad(wf, ((0, 0), (0, cout_pad - cout)))
        bf = jnp.pad(bf, (0, cout_pad - cout))
    return wf.astype(jnp.bfloat16), bf[None, :].astype(jnp.float32)


def init_msn(key, bottleneck_size=32, n_primitives=4):
    k_enc, k_ray, k_seq, k_dec, k_res = jax.random.split(key, 5)

    e1, e2, e3 = jax.random.split(k_enc, 3)
    encoder = {}
    encoder["w1"], encoder["b1"] = _folded_conv(e1, 4, 64, cin_pad=8)
    encoder["w2"], encoder["b2"] = _folded_conv(e2, 64, 128)
    encoder["w3"], encoder["b3"] = _folded_conv(e3, 128, 1024)

    r1, r2, r3 = jax.random.split(k_ray, 3)
    raycoder = {}
    raycoder["w1"], raycoder["b1"] = _folded_conv(r1, 9, 64, cin_pad=16)
    raycoder["w2"], raycoder["b2"] = _folded_conv(r2, 64, 128)
    raycoder["w3"], raycoder["b3"] = _folded_conv(r3, 128, 1024)

    wseq, bseq = _folded_conv(k_seq, 2048, bottleneck_size)     # Linear(2048,bott)+BN+ReLU
    rayseq = dict(wf=wseq[:1024], wr=wseq[1024:], b=bseq)       # split along the concat

    bs = 2 + bottleneck_size
    c1 = _round_up(bs, 64)
    c2 = _round_up(bs // 2, 64)
    c3 = _round_up(bs // 4, 64)
    dec_keys = jax.random.split(k_dec, n_primitives)
    stacks = {k: [] for k in ("w1g", "w1l", "b1", "w2", "b2", "w3", "b3", "w4t", "b4t")}
    for dk in dec_keys:
        d1, d2, d3, d4 = jax.random.split(dk, 4)
        w1_, b1_ = _folded_conv(d1, bs, bs, cout_pad=c1)
        w2_, b2_ = _folded_conv(d2, bs, bs // 2, cin_pad=c1, cout_pad=c2)
        w3_, b3_ = _folded_conv(d3, bs // 2, bs // 4, cin_pad=c2, cout_pad=c3)
        w4_, b4_ = _folded_conv(d4, bs // 4, 3, bn=False, cin_pad=c3, cout_pad=8)
        stacks["w1g"].append(w1_[:2]); stacks["w1l"].append(w1_[2:]); stacks["b1"].append(b1_)
        stacks["w2"].append(w2_); stacks["b2"].append(b2_)
        stacks["w3"].append(w3_); stacks["b3"].append(b3_)
        stacks["w4t"].append(jnp.transpose(w4_))                 # (8, c3) bf16
        stacks["b4t"].append(b4_[0][:, None])                    # (8, 1) f32
    decoder = {k: jnp.stack(v) for k, v in stacks.items()}

    ks = jax.random.split(k_res, 7)
    res = {}
    w1, b1 = _folded_conv(ks[0], 68, 128)
    res["w1c"], res["w1f"], res["b1"] = w1[:3], w1[3:], b1        # cat order: [coords | feat]
    res["w2"], res["b2"] = _folded_conv(ks[1], 128, 256)
    res["w3"], res["b3"] = _folded_conv(ks[2], 256, 1024)
    w4, b4 = _folded_conv(ks[3], 1152, 512)
    res["w4g"], res["w4l"], res["b4"] = w4[:1024], w4[1024:], b4  # cat order: [global | pointfeat]
    res["w5"], res["b5"] = _folded_conv(ks[4], 512, 256)
    res["w6"], res["b6"] = _folded_conv(ks[5], 256, 128)
    w7, b7 = _folded_conv(ks[6], 128, 3, bn=False, cout_pad=8)    # bn7 unused in fwd
    res["w7t"], res["b7t"] = jnp.transpose(w7), b7[0][:, None]    # (8,128) bf16 / (8,1) f32

    return dict(encoder=encoder, raycoderv2=raycoder, rayseq=rayseq,
                decoder=decoder, res=res)


# ----------------------------------------------------------------------------
# MSN forward
# ----------------------------------------------------------------------------
def msn_forward(params, x_bcn, mask1, rays, xx_feat, key,
                n_nrays=8, num_points=32, n_primitives=4, tile=DEFAULT_TILE):
    """x_bcn: (B, 3, Npart) PyTorch NCW layout; returns dict of outputs."""
    B = x_bcn.shape[0]
    partial = jnp.transpose(x_bcn, (0, 2, 1))                        # (B, Npart, 3)

    # TODO(synk): sample_rays is an external CUDA op (not in source); mask1 / rays are
    # supplied as synthetic inputs of the shapes the downstream code expects.
    cnt = jnp.count_nonzero(mask1, axis=-1).astype(jnp.float32) / float(n_nrays)
    x4 = jnp.concatenate([partial, cnt[..., None]], axis=-1)         # (B, Npart, 4)
    x_enc = jnp.pad(x4, ((0, 0), (0, 0), (0, 4))).astype(jnp.bfloat16)   # pad Cin 4 -> 8

    feat = pointnet_encode(params["encoder"], x_enc, tile=tile)      # (B, 1024)

    # TODO(synk): original uses torch.split with data-dependent per-batch ray counts;
    # equal-length segments (R rays per batch) are assumed here.
    R = rays.shape[0] // B
    rays_b = rays.reshape(B, R, 9)
    rays_b = jnp.pad(rays_b, ((0, 0), (0, 0), (0, 7))).astype(jnp.bfloat16)  # pad Cin 9 -> 16
    ray = pointnet_encode(params["raycoderv2"], rays_b, tile=tile)   # (B, 1024)

    lat = rayseq_fwd(params["rayseq"], feat, ray)                    # (B, bottleneck)

    npp = num_points // n_primitives
    rand_grid = jax.random.uniform(key, (n_primitives, B, npp, 2), jnp.float32)
    out1 = decode_primitives(params["decoder"], rand_grid, lat)      # (B, num_points, 3)

    # TODO(synk): expansionPenaltyModule is an external CUDA kernel; penalty not reproduced.
    loss_mst = jnp.float32(0.0)

    # TODO(synk): sample_rays_vec / WeightNetHidden / PointNetfeatRayconv / RayClsSample are
    # external undefined modules; the residual-net input is assembled from generated+partial
    # coords plus a supplied placeholder 65-channel feature block (total 68 channels).
    coords = jnp.concatenate([out1, partial], axis=1)                # (B, P, 3) f32
    delta = pointnet_res(params["res"], coords, xx_feat, tile=tile)  # (B, P, 3)
    out2 = coords + delta                                            # residual refinement

    return dict(output1=out1, output2=out2, expansion_penalty=loss_mst)


# ----------------------------------------------------------------------------
def _encode_ref(p, x):
    """Pure-jnp reference of the fused encoder trunk (same bf16/f32 mixed precision)."""
    h = jnp.maximum(jnp.dot(x, p["w1"], preferred_element_type=jnp.float32) + p["b1"], 0.0)
    h = jnp.maximum(jnp.dot(h.astype(jnp.bfloat16), p["w2"],
                            preferred_element_type=jnp.float32) + p["b2"], 0.0)
    h = jnp.dot(h.astype(jnp.bfloat16), p["w3"],
                preferred_element_type=jnp.float32) + p["b3"]
    return jnp.max(h, axis=1)


if __name__ == "__main__":
    B, Npart, num_points, n_prim, bottleneck, n_nrays, R = 2, 20, 32, 4, 32, 8, 12

    key = jax.random.PRNGKey(0)
    kp, kx, km, kr, kf, kg, kc = jax.random.split(key, 7)

    params = init_msn(kp, bottleneck_size=bottleneck, n_primitives=n_prim)

    x = jax.random.normal(kx, (B, 3, Npart), jnp.float32)                 # partial cloud (NCW)
    mask1 = jax.random.bernoulli(km, 0.5, (B, Npart, n_nrays))            # synthetic ray mask
    rays = jax.random.normal(kr, (B * R, 9), jnp.float32)                 # synthetic grouped rays
    xx_feat = 0.1 * jax.random.normal(kf, (B, num_points + Npart, 65), jnp.float32)

    fwd = jax.jit(functools.partial(msn_forward, n_nrays=n_nrays,
                                    num_points=num_points, n_primitives=n_prim))
    out = fwd(params, x, mask1, rays, xx_feat, kg)
    jax.block_until_ready(out)

    assert out["output1"].shape == (B, num_points, 3)
    assert out["output2"].shape == (B, num_points + Npart, 3)
    assert bool(jnp.all(jnp.isfinite(out["output1"])))
    assert bool(jnp.all(jnp.isfinite(out["output2"])))

    # Partial-tile / last-tile masking check: N=20 with tile=8 exercises an out-of-bounds
    # tail tile that must be masked out of the max; the full-tile call is the baseline.
    x_chk = jax.random.normal(kc, (B, Npart, 8), jnp.float32).astype(jnp.bfloat16)
    enc_tiled = jax.jit(lambda a: pointnet_encode(params["encoder"], a, tile=8))(x_chk)
    enc_full = jax.jit(lambda a: pointnet_encode(params["encoder"], a))(x_chk)
    enc_ref = _encode_ref(params["encoder"], x_chk)
    jax.block_until_ready((enc_tiled, enc_full, enc_ref))
    assert bool(jnp.allclose(enc_tiled, enc_full, atol=1e-4, rtol=1e-4))
    assert bool(jnp.allclose(enc_tiled, enc_ref, atol=5e-2, rtol=5e-2))

    print("KERNEL_OK")
</pallas_src>

<mosaic_0001>
module attributes {stable_mosaic.version = 11 : i64} {
  func.func @_pointnet_enc_kernel(%arg0: i32, %arg1: i32, %arg2: memref<1x20x8xbf16, #tpu.memory_space<vmem>>, %arg3: memref<8x64xbf16, #tpu.memory_space<vmem>>, %arg4: memref<1x64xf32, #tpu.memory_space<vmem>>, %arg5: memref<64x128xbf16, #tpu.memory_space<vmem>>, %arg6: memref<1x128xf32, #tpu.memory_space<vmem>>, %arg7: memref<128x1024xbf16, #tpu.memory_space<vmem>>, %arg8: memref<1x1024xf32, #tpu.memory_space<vmem>>, %arg9: memref<1x1x1024xf32, #tpu.memory_space<vmem>>) attributes {dimension_semantics = [#tpu.dimension_semantics<parallel>, #tpu.dimension_semantics<arbitrary>], iteration_bounds = array<i64: 2, 1>, scalar_prefetch = 0 : i64, scratch_operands = 0 : i64, tpu.core_type = #tpu.core_type<tc>, window_params = [{transform_indices = @transform_0, window_bounds = array<i64: 1, 20, 8>}, {pipeline_mode = #tpu.pipeline_mode<synchronous>, transform_indices = @transform_1, window_bounds = array<i64: 8, 64>}, {pipeline_mode = #tpu.pipeline_mode<synchronous>, transform_indices = @transform_2, window_bounds = array<i64: 1, 64>}, {pipeline_mode = #tpu.pipeline_mode<synchronous>, transform_indices = @transform_3, window_bounds = array<i64: 64, 128>}, {pipeline_mode = #tpu.pipeline_mode<synchronous>, transform_indices = @transform_4, window_bounds = array<i64: 1, 128>}, {pipeline_mode = #tpu.pipeline_mode<synchronous>, transform_indices = @transform_5, window_bounds = array<i64: 128, 1024>}, {pipeline_mode = #tpu.pipeline_mode<synchronous>, transform_indices = @transform_6, window_bounds = array<i64: 1, 1024>}, {transform_indices = @transform_7, window_bounds = array<i64: 1, 1, 1024>}]} {
    %c0 = arith.constant 0 : index
    %c0_0 = arith.constant 0 : index
    %c0_1 = arith.constant 0 : index
    %0 = vector.load %arg2[%c0, %c0_0, %c0_1] : memref<1x20x8xbf16, #tpu.memory_space<vmem>>, vector<1x20x8xbf16>
    %1 = vector.shape_cast %0 : vector<1x20x8xbf16> to vector<20x8xbf16>
    %c0_2 = arith.constant 0 : index
    %c0_3 = arith.constant 0 : index
    %2 = vector.load %arg3[%c0_2, %c0_3] : memref<8x64xbf16, #tpu.memory_space<vmem>>, vector<8x64xbf16>
    %cst = arith.constant dense<0.000000e+00> : vector<20x64xf32>
    %3 = tpu.matmul %1, %2, %cst {dimension_numbers = #tpu.dot_dimension_numbers<[1], [0], [0], [1], [0, 0, 1, 1], [], []>} : vector<20x8xbf16>, vector<8x64xbf16>, vector<20x64xf32> -> vector<20x64xf32>
    %c0_4 = arith.constant 0 : index
    %c0_5 = arith.constant 0 : index
    %4 = vector.load %arg4[%c0_4, %c0_5] : memref<1x64xf32, #tpu.memory_space<vmem>>, vector<1x64xf32>
    %5 = vector.broadcast %4 : vector<1x64xf32> to vector<20x64xf32>
    %6 = arith.addf %3, %5 : vector<20x64xf32>
    %cst_6 = arith.constant 0.000000e+00 : f32
    %7 = vector.broadcast %cst_6 : f32 to vector<20x64xf32>
    %8 = arith.maximumf %6, %7 : vector<20x64xf32>
    %9 = arith.truncf %8 : vector<20x64xf32> to vector<20x64xbf16>
    %c0_7 = arith.constant 0 : index
    %c0_8 = arith.constant 0 : index
    %10 = vector.load %arg5[%c0_7, %c0_8] : memref<64x128xbf16, #tpu.memory_space<vmem>>, vector<64x128xbf16>
    %cst_9 = arith.constant dense<0.000000e+00> : vector<20x128xf32>
    %11 = tpu.matmul %9, %10, %cst_9 {dimension_numbers = #tpu.dot_dimension_numbers<[1], [0], [0], [1], [0, 0, 1, 1], [], []>} : vector<20x64xbf16>, vector<64x128xbf16>, vector<20x128xf32> -> vector<20x128xf32>
    %c0_10 = arith.constant 0 : index
    %c0_11 = arith.constant 0 : index
    %12 = vector.load %arg6[%c0_10, %c0_11] : memref<1x128xf32, #tpu.memory_space<vmem>>, vector<1x128xf32>
    %13 = vector.broadcast %12 : vector<1x128xf32> to vector<20x128xf32>
    %14 = arith.addf %11, %13 : vector<20x128xf32>
    %cst_12 = arith.constant 0.000000e+00 : f32
    %15 = vector.broadcast %cst_12 : f32 to vector<20x128xf32>
    %16 = arith.maximumf %14, %15 : vector<20x128xf32>
    %17 = arith.truncf %16 : vector<20x128xf32> to vector<20x128xbf16>
    %c0_13 = arith.constant 0 : index
    %c0_14 = arith.constant 0 : index
    %18 = vector.load %arg7[%c0_13, %c0_14] : memref<128x1024xbf16, #tpu.memory_space<vmem>>, vector<128x1024xbf16>
    %cst_15 = arith.constant dense<0.000000e+00> : vector<20x1024xf32>
    %19 = tpu.matmul %17, %18, %cst_15 {dimension_numbers = #tpu.dot_dimension_numbers<[1], [0], [0], [1], [0, 0, 1, 1], [], []>} : vector<20x128xbf16>, vector<128x1024xbf16>, vector<20x1024xf32> -> vector<20x1024xf32>
    %c0_16 = arith.constant 0 : index
    %c0_17 = arith.constant 0 : index
    %20 = vector.load %arg8[%c0_16, %c0_17] : memref<1x1024xf32, #tpu.memory_space<vmem>>, vector<1x1024xf32>
    %21 = vector.broadcast %20 : vector<1x1024xf32> to vector<20x1024xf32>
    %22 = arith.addf %19, %21 : vector<20x1024xf32>
    %cst_18 = arith.constant dense<0xFF800000> : vector<1024xf32>
    %23 = vector.multi_reduction <maximumf>, %22, %cst_18 [0] : vector<20x1024xf32> to vector<1024xf32>
    %24 = vector.shape_cast %23 : vector<1024xf32> to vector<1x1024xf32>
    %c0_i32 = arith.constant 0 : i32
    %25 = arith.cmpi eq, %arg1, %c0_i32 : i32
    %26 = arith.extui %25 : i1 to i32
    %c0_i32_19 = arith.constant 0 : i32
    %27 = arith.cmpi ne, %26, %c0_i32_19 : i32
    scf.if %27 {
      %c0_22 = arith.constant 0 : index
      %c0_23 = arith.constant 0 : index
      %c0_24 = arith.constant 0 : index
      %31 = vector.load %arg9[%c0_22, %c0_23, %c0_24] : memref<1x1x1024xf32, #tpu.memory_space<vmem>>, vector<1x1x1024xf32>
      %32 = vector.shape_cast %31 : vector<1x1x1024xf32> to vector<1x1024xf32>
      %33 = vector.shape_cast %24 : vector<1x1024xf32> to vector<1x1x1024xf32>
      tpu.vector_store %arg9[%c0_22, %c0_23, %c0_24], %33 {strides = array<i32>} : memref<1x1x1024xf32, #tpu.memory_space<vmem>>, vector<1x1x1024xf32>,
    } else {
    }
    %c0_i32_20 = arith.constant 0 : i32
    %28 = arith.cmpi sgt, %arg1, %c0_i32_20 : i32
    %29 = arith.extui %28 : i1 to i32
    %c0_i32_21 = arith.constant 0 : i32
    %30 = arith.cmpi ne, %29, %c0_i32_21 : i32
    scf.if %30 {
      %c0_22 = arith.constant 0 : index
      %c0_23 = arith.constant 0 : index
      %c0_24 = arith.constant 0 : index
      %31 = vector.load %arg9[%c0_22, %c0_23, %c0_24] : memref<1x1x1024xf32, #tpu.memory_space<vmem>>, vector<1x1x1024xf32>
      %32 = vector.shape_cast %31 : vector<1x1x1024xf32> to vector<1x1024xf32>
      %33 = arith.maximumf %32, %24 : vector<1x1024xf32>
      %c0_25 = arith.constant 0 : index
      %c0_26 = arith.constant 0 : index
      %c0_27 = arith.constant 0 : index
      %34 = vector.load %arg9[%c0_25, %c0_26, %c0_27] : memref<1x1x1024xf32, #tpu.memory_space<vmem>>, vector<1x1x1024xf32>
      %35 = vector.shape_cast %34 : vector<1x1x1024xf32> to vector<1x1024xf32>
      %36 = vector.shape_cast %33 : vector<1x1024xf32> to vector<1x1x1024xf32>
      tpu.vector_store %arg9[%c0_25, %c0_26, %c0_27], %36 {strides = array<i32>} : memref<1x1x1024xf32, #tpu.memory_space<vmem>>, vector<1x1x1024xf32>,
    } else {
    }
    return
  }
  func.func @transform_0(%arg0: i32, %arg1: i32) -> (i32, i32, i32) {
    %c0_i32 = arith.constant 0 : i32
    %c0_i32_0 = arith.constant 0 : i32
    return %arg0, %arg1, %c0_i32 : i32, i32, i32
  }
  func.func @transform_1(%arg0: i32, %arg1: i32) -> (i32, i32) {
    %c0_i32 = arith.constant 0 : i32
    %c0_i32_0 = arith.constant 0 : i32
    %c0_i32_1 = arith.constant 0 : i32
    return %c0_i32, %c0_i32_0 : i32, i32
  }
  func.func @transform_2(%arg0: i32, %arg1: i32) -> (i32, i32) {
    %c0_i32 = arith.constant 0 : i32
    %c0_i32_0 = arith.constant 0 : i32
    %c0_i32_1 = arith.constant 0 : i32
    return %c0_i32, %c0_i32_0 : i32, i32
  }
  func.func @transform_3(%arg0: i32, %arg1: i32) -> (i32, i32) {
    %c0_i32 = arith.constant 0 : i32
    %c0_i32_0 = arith.constant 0 : i32
    %c0_i32_1 = arith.constant 0 : i32
    return %c0_i32, %c0_i32_0 : i32, i32
  }
  func.func @transform_4(%arg0: i32, %arg1: i32) -> (i32, i32) {
    %c0_i32 = arith.constant 0 : i32
    %c0_i32_0 = arith.constant 0 : i32
    %c0_i32_1 = arith.constant 0 : i32
    return %c0_i32, %c0_i32_0 : i32, i32
  }
  func.func @transform_5(%arg0: i32, %arg1: i32) -> (i32, i32) {
    %c0_i32 = arith.constant 0 : i32
    %c0_i32_0 = arith.constant 0 : i32
    %c0_i32_1 = arith.constant 0 : i32
    return %c0_i32, %c0_i32_0 : i32, i32
  }
  func.func @transform_6(%arg0: i32, %arg1: i32) -> (i32, i32) {
    %c0_i32 = arith.constant 0 : i32
    %c0_i32_0 = arith.constant 0 : i32
    %c0_i32_1 = arith.constant 0 : i32
    return %c0_i32, %c0_i32_0 : i32, i32
  }
  func.func @transform_7(%arg0: i32, %arg1: i32) -> (i32, i32, i32) {
    %c0_i32 = arith.constant 0 : i32
    %c0_i32_0 = arith.constant 0 : i32
    %c0_i32_1 = arith.constant 0 : i32
    return %arg0, %c0_i32, %c0_i32_0 : i32, i32, i32
  }
}

module attributes {stable_mosaic.version = 11 : i64} {
  func.func @_pointnet_enc_kernel(%arg0: i32, %arg1: i32, %arg2: memref<1x12x16xbf16, #tpu.memory_space<vmem>>, %arg3: memref<16x64xbf16, #tpu.memory_space<vmem>>, %arg4: memref<1x64xf32, #tpu.memory_space<vmem>>, %arg5: memref<64x128xbf16, #tpu.memory_space<vmem>>, %arg6: memref<1x128xf32, #tpu.memory_space<vmem>>, %arg7: memref<128x1024xbf16, #tpu.memory_space<vmem>>, %arg8: memref<1x1024xf32, #tpu.memory_space<vmem>>, %arg9: memref<1x1x1024xf32, #tpu.memory_space<vmem>>) attributes {dimension_semantics = [#tpu.dimension_semantics<parallel>, #tpu.dimension_semantics<arbitrary>], iteration_bounds = array<i64: 2, 1>, scalar_prefetch = 0 : i64, scratch_operands = 0 : i64, tpu.core_type = #tpu.core_type<tc>, window_params = [{transform_indices = @transform_0, window_bounds = array<i64: 1, 12, 16>}, {pipeline_mode = #tpu.pipeline_mode<synchronous>, transform_indices = @transform_1, window_bounds = array<i64: 16, 64>}, {pipeline_mode = #tpu.pipeline_mode<synchronous>, transform_indices = @transform_2, window_bounds = array<i64: 1, 64>}, {pipeline_mode = #tpu.pipeline_mode<synchronous>, transform_indices = @transform_3, window_bounds = array<i64: 64, 128>}, {pipeline_mode = #tpu.pipeline_mode<synchronous>, transform_indices = @transform_4, window_bounds = array<i64: 1, 128>}, {pipeline_mode = #tpu.pipeline_mode<synchronous>, transform_indices = @transform_5, window_bounds = array<i64: 128, 1024>}, {pipeline_mode = #tpu.pipeline_mode<synchronous>, transform_indices = @transform_6, window_bounds = array<i64: 1, 1024>}, {transform_indices = @transform_7, window_bounds = array<i64: 1, 1, 1024>}]} {
    %c0 = arith.constant 0 : index
    %c0_0 = arith.constant 0 : index
    %c0_1 = arith.constant 0 : index
    %0 = vector.load %arg2[%c0, %c0_0, %c0_1] : memref<1x12x16xbf16, #tpu.memory_space<vmem>>, vector<1x12x16xbf16>
    %1 = vector.shape_cast %0 : vector<1x12x16xbf16> to vector<12x16xbf16>
    %c0_2 = arith.constant 0 : index
    %c0_3 = arith.constant 0 : index
    %2 = vector.load %arg3[%c0_2, %c0_3] : memref<16x64xbf16, #tpu.memory_space<vmem>>, vector<16x64xbf16>
    %cst = arith.constant dense<0.000000e+00> : vector<12x64xf32>
    %3 = tpu.matmul %1, %2, %cst {dimension_numbers = #tpu.dot_dimension_numbers<[1], [0], [0], [1], [0, 0, 1, 1], [], []>} : vector<12x16xbf16>, vector<16x64xbf16>, vector<12x64xf32> -> vector<12x64xf32>
    %c0_4 = arith.constant 0 : index
    %c0_5 = arith.constant 0 : index
    %4 = vector.load %arg4[%c0_4, %c0_5] : memref<1x64xf32, #tpu.memory_space<vmem>>, vector<1x64xf32>
    %5 = vector.broadcast %4 : vector<1x64xf32> to vector<12x64xf32>
    %6 = arith.addf %3, %5 : vector<12x64xf32>
    %cst_6 = arith.constant 0.000000e+00 : f32
    %7 = vector.broadcast %cst_6 : f32 to vector<12x64xf32>
    %8 = arith.maximumf %6, %7 : vector<12x64xf32>
    %9 = arith.truncf %8 : vector<12x64xf32> to vector<12x64xbf16>
    %c0_7 = arith.constant 0 : index
    %c0_8 = arith.constant 0 : index
    %10 = vector.load %arg5[%c0_7, %c0_8] : memref<64x128xbf16, #tpu.memory_space<vmem>>, vector<64x128xbf16>
    %cst_9 = arith.constant dense<0.000000e+00> : vector<12x128xf32>
    %11 = tpu.matmul %9, %10, %cst_9 {dimension_numbers = #tpu.dot_dimension_numbers<[1], [0], [0], [1], [0, 0, 1, 1], [], []>} : vector<12x64xbf16>, vector<64x128xbf16>, vector<12x128xf32> -> vector<12x128xf32>
    %c0_10 = arith.constant 0 : index
    %c0_11 = arith.constant 0 : index
    %12 = vector.load %arg6[%c0_10, %c0_11] : memref<1x128xf32, #tpu.memory_space<vmem>>, vector<1x128xf32>
    %13 = vector.broadcast %12 : vector<1x128xf32> to vector<12x128xf32>
    %14 = arith.addf %11, %13 : vector<12x128xf32>
    %cst_12 = arith.constant 0.000000e+00 : f32
    %15 = vector.broadcast %cst_12 : f32 to vector<12x128xf32>
    %16 = arith.maximumf %14, %15 : vector<12x128xf32>
    %17 = arith.truncf %16 : vector<12x128xf32> to vector<12x128xbf16>
    %c0_13 = arith.constant 0 : index
    %c0_14 = arith.constant 0 : index
    %18 = vector.load %arg7[%c0_13, %c0_14] : memref<128x1024xbf16, #tpu.memory_space<vmem>>, vector<128x1024xbf16>
    %cst_15 = arith.constant dense<0.000000e+00> : vector<12x1024xf32>
    %19 = tpu.matmul %17, %18, %cst_15 {dimension_numbers = #tpu.dot_dimension_numbers<[1], [0], [0], [1], [0, 0, 1, 1], [], []>} : vector<12x128xbf16>, vector<128x1024xbf16>, vector<12x1024xf32> -> vector<12x1024xf32>
    %c0_16 = arith.constant 0 : index
    %c0_17 = arith.constant 0 : index
    %20 = vector.load %arg8[%c0_16, %c0_17] : memref<1x1024xf32, #tpu.memory_space<vmem>>, vector<1x1024xf32>
    %21 = vector.broadcast %20 : vector<1x1024xf32> to vector<12x1024xf32>
    %22 = arith.addf %19, %21 : vector<12x1024xf32>
    %cst_18 = arith.constant dense<0xFF800000> : vector<1024xf32>
    %23 = vector.multi_reduction <maximumf>, %22, %cst_18 [0] : vector<12x1024xf32> to vector<1024xf32>
    %24 = vector.shape_cast %23 : vector<1024xf32> to vector<1x1024xf32>
    %c0_i32 = arith.constant 0 : i32
    %25 = arith.cmpi eq, %arg1, %c0_i32 : i32
    %26 = arith.extui %25 : i1 to i32
    %c0_i32_19 = arith.constant 0 : i32
    %27 = arith.cmpi ne, %26, %c0_i32_19 : i32
    scf.if %27 {
      %c0_22 = arith.constant 0 : index
      %c0_23 = arith.constant 0 : index
      %c0_24 = arith.constant 0 : index
      %31 = vector.load %arg9[%c0_22, %c0_23, %c0_24] : memref<1x1x1024xf32, #tpu.memory_space<vmem>>, vector<1x1x1024xf32>
      %32 = vector.shape_cast %31 : vector<1x1x1024xf32> to vector<1x1024xf32>
      %33 = vector.shape_cast %24 : vector<1x1024xf32> to vector<1x1x1024xf32>
      tpu.vector_store %arg9[%c0_22, %c0_23, %c0_24], %33 {strides = array<i32>} : memref<1x1x1024xf32, #tpu.memory_space<vmem>>, vector<1x1x1024xf32>,
    } else {
    }
    %c0_i32_20 = arith.constant 0 : i32
    %28 = arith.cmpi sgt, %arg1, %c0_i32_20 : i32
    %29 = arith.extui %28 : i1 to i32
    %c0_i32_21 = arith.constant 0 : i32
    %30 = arith.cmpi ne, %29, %c0_i32_21 : i32
    scf.if %30 {
      %c0_22 = arith.constant 0 : index
      %c0_23 = arith.constant 0 : index
      %c0_24 = arith.constant 0 : index
      %31 = vector.load %arg9[%c0_22, %c0_23, %c0_24] : memref<1x1x1024xf32, #tpu.memory_space<vmem>>, vector<1x1x1024xf32>
      %32 = vector.shape_cast %31 : vector<1x1x1024xf32> to vector<1x1024xf32>
      %33 = arith.maximumf %32, %24 : vector<1x1024xf32>
      %c0_25 = arith.constant 0 : index
      %c0_26 = arith.constant 0 : index
      %c0_27 = arith.constant 0 : index
      %34 = vector.load %arg9[%c0_25, %c0_26, %c0_27] : memref<1x1x1024xf32, #tpu.memory_space<vmem>>, vector<1x1x1024xf32>
      %35 = vector.shape_cast %34 : vector<1x1x1024xf32> to vector<1x1024xf32>
      %36 = vector.shape_cast %33 : vector<1x1024xf32> to vector<1x1x1024xf32>
      tpu.vector_store %arg9[%c0_25, %c0_26, %c0_27], %36 {strides = array<i32>} : memref<1x1x1024xf32, #tpu.memory_space<vmem>>, vector<1x1x1024xf32>,
    } else {
    }
    return
  }
  func.func @transform_0(%arg0: i32, %arg1: i32) -> (i32, i32, i32) {
    %c0_i32 = arith.constant 0 : i32
    %c0_i32_0 = arith.constant 0 : i32
    return %arg0, %arg1, %c0_i32 : i32, i32, i32
  }
  func.func @transform_1(%arg0: i32, %arg1: i32) -> (i32, i32) {
    %c0_i32 = arith.constant 0 : i32
    %c0_i32_0 = arith.constant 0 : i32
    %c0_i32_1 = arith.constant 0 : i32
    return %c0_i32, %c0_i32_0 : i32, i32
  }
  func.func @transform_2(%arg0: i32, %arg1: i32) -> (i32, i32) {
    %c0_i32 = arith.constant 0 : i32
    %c0_i32_0 = arith.constant 0 : i32
    %c0_i32_1 = arith.constant 0 : i32
    return %c0_i32, %c0_i32_0 : i32, i32
  }
  func.func @transform_3(%arg0: i32, %arg1: i32) -> (i32, i32) {
    %c0_i32 = arith.constant 0 : i32
    %c0_i32_0 = arith.constant 0 : i32
    %c0_i32_1 = arith.constant 0 : i32
    return %c0_i32, %c0_i32_0 : i32, i32
  }
  func.func @transform_4(%arg0: i32, %arg1: i32) -> (i32, i32) {
    %c0_i32 = arith.constant 0 : i32
    %c0_i32_0 = arith.constant 0 : i32
    %c0_i32_1 = arith.constant 0 : i32
    return %c0_i32, %c0_i32_0 : i32, i32
  }
  func.func @transform_5(%arg0: i32, %arg1: i32) -> (i32, i32) {
    %c0_i32 = arith.constant 0 : i32
    %c0_i32_0 = arith.constant 0 : i32
    %c0_i32_1 = arith.constant 0 : i32
    return %c0_i32, %c0_i32_0 : i32, i32
  }
  func.func @transform_6(%arg0: i32, %arg1: i32) -> (i32, i32) {
    %c0_i32 = arith.constant 0 : i32
    %c0_i32_0 = arith.constant 0 : i32
    %c0_i32_1 = arith.constant 0 : i32
    return %c0_i32, %c0_i32_0 : i32, i32
  }
  func.func @transform_7(%arg0: i32, %arg1: i32) -> (i32, i32, i32) {
    %c0_i32 = arith.constant 0 : i32
    %c0_i32_0 = arith.constant 0 : i32
    %c0_i32_1 = arith.constant 0 : i32
    return %arg0, %c0_i32, %c0_i32_0 : i32, i32, i32
  }
}

module attributes {stable_mosaic.version = 11 : i64} {
  func.func @_decoder_kernel(%arg0: i32, %arg1: i32, %arg2: memref<1x1x8x2xf32, #tpu.memory_space<vmem>>, %arg3: memref<1x1x32xf32, #tpu.memory_space<vmem>>, %arg4: memref<1x2x64xbf16, #tpu.memory_space<vmem>>, %arg5: memref<1x32x64xbf16, #tpu.memory_space<vmem>>, %arg6: memref<1x1x64xf32, #tpu.memory_space<vmem>>, %arg7: memref<1x64x64xbf16, #tpu.memory_space<vmem>>, %arg8: memref<1x1x64xf32, #tpu.memory_space<vmem>>, %arg9: memref<1x64x64xbf16, #tpu.memory_space<vmem>>, %arg10: memref<1x1x64xf32, #tpu.memory_space<vmem>>, %arg11: memref<1x8x64xbf16, #tpu.memory_space<vmem>>, %arg12: memref<1x8x1xf32, #tpu.memory_space<vmem>>, %arg13: memref<1x1x8x8xf32, #tpu.memory_space<vmem>>) attributes {dimension_semantics = [#tpu.dimension_semantics<parallel>, #tpu.dimension_semantics<parallel>], iteration_bounds = array<i64: 4, 2>, scalar_prefetch = 0 : i64, scratch_operands = 0 : i64, tpu.core_type = #tpu.core_type<tc>, window_params = [{transform_indices = @transform_0, window_bounds = array<i64: 1, 1, 8, 2>}, {transform_indices = @transform_1, window_bounds = array<i64: 1, 1, 32>}, {transform_indices = @transform_2, window_bounds = array<i64: 1, 2, 64>}, {transform_indices = @transform_3, window_bounds = array<i64: 1, 32, 64>}, {transform_indices = @transform_4, window_bounds = array<i64: 1, 1, 64>}, {transform_indices = @transform_5, window_bounds = array<i64: 1, 64, 64>}, {transform_indices = @transform_6, window_bounds = array<i64: 1, 1, 64>}, {transform_indices = @transform_7, window_bounds = array<i64: 1, 64, 64>}, {transform_indices = @transform_8, window_bounds = array<i64: 1, 1, 64>}, {transform_indices = @transform_9, window_bounds = array<i64: 1, 8, 64>}, {transform_indices = @transform_10, window_bounds = array<i64: 1, 8, 1>}, {transform_indices = @transform_11, window_bounds = array<i64: 1, 1, 8, 8>}]} {
    %c0 = arith.constant 0 : index
    %c0_0 = arith.constant 0 : index
    %c0_1 = arith.constant 0 : index
    %c0_2 = arith.constant 0 : index
    %0 = vector.load %arg2[%c0, %c0_0, %c0_1, %c0_2] : memref<1x1x8x2xf32, #tpu.memory_space<vmem>>, vector<1x1x8x2xf32>
    %1 = vector.shape_cast %0 : vector<1x1x8x2xf32> to vector<8x2xf32>
    %c0_3 = arith.constant 0 : index
    %c0_4 = arith.constant 0 : index
    %c0_5 = arith.constant 0 : index
    %2 = vector.load %arg3[%c0_3, %c0_4, %c0_5] : memref<1x1x32xf32, #tpu.memory_space<vmem>>, vector<1x1x32xf32>
    %3 = vector.shape_cast %2 : vector<1x1x32xf32> to vector<1x32xf32>
    %4 = arith.truncf %3 : vector<1x32xf32> to vector<1x32xbf16>
    %c0_6 = arith.constant 0 : index
    %c0_7 = arith.constant 0 : index
    %c0_8 = arith.constant 0 : index
    %5 = vector.load %arg4[%c0_6, %c0_7, %c0_8] : memref<1x2x64xbf16, #tpu.memory_space<vmem>>, vector<1x2x64xbf16>
    %6 = vector.shape_cast %5 : vector<1x2x64xbf16> to vector<2x64xbf16>
    %7 = arith.extf %6 : vector<2x64xbf16> to vector<2x64xf32>
    %8 = vector.extract_strided_slice %1 {offsets = [0, 0], sizes = [8, 1], strides = [1, 1]} : vector<8x2xf32> to vector<8x1xf32>
    %9 = vector.extract_strided_slice %7 {offsets = [0, 0], sizes = [1, 64], strides = [1, 1]} : vector<2x64xf32> to vector<1x64xf32>
    %10 = vector.broadcast %8 : vector<8x1xf32> to vector<8x64xf32>
    %11 = vector.broadcast %9 : vector<1x64xf32> to vector<8x64xf32>
    %12 = arith.mulf %10, %11 : vector<8x64xf32>
    %13 = vector.extract_strided_slice %1 {offsets = [0, 1], sizes = [8, 1], strides = [1, 1]} : vector<8x2xf32> to vector<8x1xf32>
    %14 = vector.extract_strided_slice %7 {offsets = [1, 0], sizes = [1, 64], strides = [1, 1]} : vector<2x64xf32> to vector<1x64xf32>
    %15 = vector.broadcast %13 : vector<8x1xf32> to vector<8x64xf32>
    %16 = vector.broadcast %14 : vector<1x64xf32> to vector<8x64xf32>
    %17 = arith.mulf %15, %16 : vector<8x64xf32>
    %18 = arith.addf %12, %17 : vector<8x64xf32>
    %c0_9 = arith.constant 0 : index
    %c0_10 = arith.constant 0 : index
    %c0_11 = arith.constant 0 : index
    %19 = vector.load %arg5[%c0_9, %c0_10, %c0_11] : memref<1x32x64xbf16, #tpu.memory_space<vmem>>, vector<1x32x64xbf16>
    %20 = vector.shape_cast %19 : vector<1x32x64xbf16> to vector<32x64xbf16>
    %cst = arith.constant dense<0.000000e+00> : vector<1x64xf32>
    %21 = tpu.matmul %4, %20, %cst {dimension_numbers = #tpu.dot_dimension_numbers<[1], [0], [0], [1], [0, 0, 1, 1], [], []>} : vector<1x32xbf16>, vector<32x64xbf16>, vector<1x64xf32> -> vector<1x64xf32>
    %22 = vector.broadcast %21 : vector<1x64xf32> to vector<8x64xf32>
    %23 = arith.addf %18, %22 : vector<8x64xf32>
    %c0_12 = arith.constant 0 : index
    %c0_13 = arith.constant 0 : index
    %c0_14 = arith.constant 0 : index
    %24 = vector.load %arg6[%c0_12, %c0_13, %c0_14] : memref<1x1x64xf32, #tpu.memory_space<vmem>>, vector<1x1x64xf32>
    %25 = vector.shape_cast %24 : vector<1x1x64xf32> to vector<1x64xf32>
    %26 = vector.broadcast %25 : vector<1x64xf32> to vector<8x64xf32>
    %27 = arith.addf %23, %26 : vector<8x64xf32>
    %cst_15 = arith.constant 0.000000e+00 : f32
    %28 = vector.broadcast %cst_15 : f32 to vector<8x64xf32>
    %29 = arith.maximumf %27, %28 : vector<8x64xf32>
    %30 = arith.truncf %29 : vector<8x64xf32> to vector<8x64xbf16>
    %c0_16 = arith.constant 0 : index
    %c0_17 = arith.constant 0 : index
    %c0_18 = arith.constant 0 : index
    %31 = vector.load %arg7[%c0_16, %c0_17, %c0_18] : memref<1x64x64xbf16, #tpu.memory_space<vmem>>, vector<1x64x64xbf16>
    %32 = vector.shape_cast %31 : vector<1x64x64xbf16> to vector<64x64xbf16>
    %cst_19 = arith.constant dense<0.000000e+00> : vector<8x64xf32>
    %33 = tpu.matmul %30, %32, %cst_19 {dimension_numbers = #tpu.dot_dimension_numbers<[1], [0], [0], [1], [0, 0, 1, 1], [], []>} : vector<8x64xbf16>, vector<64x64xbf16>, vector<8x64xf32> -> vector<8x64xf32>
    %c0_20 = arith.constant 0 : index
    %c0_21 = arith.constant 0 : index
    %c0_22 = arith.constant 0 : index
    %34 = vector.load %arg8[%c0_20, %c0_21, %c0_22] : memref<1x1x64xf32, #tpu.memory_space<vmem>>, vector<1x1x64xf32>
    %35 = vector.shape_cast %34 : vector<1x1x64xf32> to vector<1x64xf32>
    %36 = vector.broadcast %35 : vector<1x64xf32> to vector<8x64xf32>
    %37 = arith.addf %33, %36 : vector<8x64xf32>
    %cst_23 = arith.constant 0.000000e+00 : f32
    %38 = vector.broadcast %cst_23 : f32 to vector<8x64xf32>
    %39 = arith.maximumf %37, %38 : vector<8x64xf32>
    %40 = arith.truncf %39 : vector<8x64xf32> to vector<8x64xbf16>
    %c0_24 = arith.constant 0 : index
    %c0_25 = arith.constant 0 : index
    %c0_26 = arith.constant 0 : index
    %41 = vector.load %arg9[%c0_24, %c0_25, %c0_26] : memref<1x64x64xbf16, #tpu.memory_space<vmem>>, vector<1x64x64xbf16>
    %42 = vector.shape_cast %41 : vector<1x64x64xbf16> to vector<64x64xbf16>
    %cst_27 = arith.constant dense<0.000000e+00> : vector<8x64xf32>
    %43 = tpu.matmul %40, %42, %cst_27 {dimension_numbers = #tpu.dot_dimension_numbers<[1], [0], [0], [1], [0, 0, 1, 1], [], []>} : vector<8x64xbf16>, vector<64x64xbf16>, vector<8x64xf32> -> vector<8x64xf32>
    %c0_28 = arith.constant 0 : index
    %c0_29 = arith.constant 0 : index
    %c0_30 = arith.constant 0 : index
    %44 = vector.load %arg10[%c0_28, %c0_29, %c0_30] : memref<1x1x64xf32, #tpu.memory_space<vmem>>, vector<1x1x64xf32>
    %45 = vector.shape_cast %44 : vector<1x1x64xf32> to vector<1x64xf32>
    %46 = vector.broadcast %45 : vector<1x64xf32> to vector<8x64xf32>
    %47 = arith.addf %43, %46 : vector<8x64xf32>
    %cst_31 = arith.constant 0.000000e+00 : f32
    %48 = vector.broadcast %cst_31 : f32 to vector<8x64xf32>
    %49 = arith.maximumf %47, %48 : vector<8x64xf32>
    %50 = arith.truncf %49 : vector<8x64xf32> to vector<8x64xbf16>
    %c0_32 = arith.constant 0 : index
    %c0_33 = arith.constant 0 : index
    %c0_34 = arith.constant 0 : index
    %51 = vector.load %arg11[%c0_32, %c0_33, %c0_34] : memref<1x8x64xbf16, #tpu.memory_space<vmem>>, vector<1x8x64xbf16>
    %52 = vector.shape_cast %51 : vector<1x8x64xbf16> to vector<8x64xbf16>
    %cst_35 = arith.constant dense<0.000000e+00> : vector<8x8xf32>
    %53 = tpu.matmul %52, %50, %cst_35 {dimension_numbers = #tpu.dot_dimension_numbers<[1], [1], [0], [0], [0, 0, 1, 0], [], []>} : vector<8x64xbf16>, vector<8x64xbf16>, vector<8x8xf32> -> vector<8x8xf32>
    %c0_36 = arith.constant 0 : index
    %c0_37 = arith.constant 0 : index
    %c0_38 = arith.constant 0 : index
    %54 = vector.load %arg12[%c0_36, %c0_37, %c0_38] : memref<1x8x1xf32, #tpu.memory_space<vmem>>, vector<1x8x1xf32>
    %55 = vector.shape_cast %54 : vector<1x8x1xf32> to vector<8x1xf32>
    %56 = vector.broadcast %55 : vector<8x1xf32> to vector<8x8xf32>
    %57 = arith.addf %53, %56 : vector<8x8xf32>
    %58 = math.tanh %57 : vector<8x8xf32>
    %c0_39 = arith.constant 0 : index
    %c0_40 = arith.constant 0 : index
    %c0_41 = arith.constant 0 : index
    %c0_42 = arith.constant 0 : index
    %59 = vector.load %arg13[%c0_39, %c0_40, %c0_41, %c0_42] : memref<1x1x8x8xf32, #tpu.memory_space<vmem>>, vector<1x1x8x8xf32>
    %60 = vector.shape_cast %59 : vector<1x1x8x8xf32> to vector<8x8xf32>
    %61 = vector.shape_cast %58 : vector<8x8xf32> to vector<1x1x8x8xf32>
    tpu.vector_store %arg13[%c0_39, %c0_40, %c0_41, %c0_42], %61 {strides = array<i32>} : memref<1x1x8x8xf32, #tpu.memory_space<vmem>>, vector<1x1x8x8xf32>,
    return
  }
  func.func @transform_0(%arg0: i32, %arg1: i32) -> (i32, i32, i32, i32) {
    %c0_i32 = arith.constant 0 : i32
    %c0_i32_0 = arith.constant 0 : i32
    %c0_i32_1 = arith.constant 0 : i32
    return %arg0, %arg1, %c0_i32, %c0_i32_0 : i32, i32, i32, i32
  }
  func.func @transform_1(%arg0: i32, %arg1: i32) -> (i32, i32, i32) {
    %c0_i32 = arith.constant 0 : i32
    %c0_i32_0 = arith.constant 0 : i32
    %c0_i32_1 = arith.constant 0 : i32
    return %arg1, %c0_i32, %c0_i32_0 : i32, i32, i32
  }
  func.func @transform_2(%arg0: i32, %arg1: i32) -> (i32, i32, i32) {
    %c0_i32 = arith.constant 0 : i32
    %c0_i32_0 = arith.constant 0 : i32
    %c0_i32_1 = arith.constant 0 : i32
    return %arg0, %c0_i32, %c0_i32_0 : i32, i32, i32
  }
  func.func @transform_3(%arg0: i32, %arg1: i32) -> (i32, i32, i32) {
    %c0_i32 = arith.constant 0 : i32
    %c0_i32_0 = arith.constant 0 : i32
    %c0_i32_1 = arith.constant 0 : i32
    return %arg0, %c0_i32, %c0_i32_0 : i32, i32, i32
  }
  func.func @transform_4(%arg0: i32, %arg1: i32) -> (i32, i32, i32) {
    %c0_i32 = arith.constant 0 : i32
    %c0_i32_0 = arith.constant 0 : i32
    %c0_i32_1 = arith.constant 0 : i32
    return %arg0, %c0_i32, %c0_i32_0 : i32, i32, i32
  }
  func.func @transform_5(%arg0: i32, %arg1: i32) -> (i32, i32, i32) {
    %c0_i32 = arith.constant 0 : i32
    %c0_i32_0 = arith.constant 0 : i32
    %c0_i32_1 = arith.constant 0 : i32
    return %arg0, %c0_i32, %c0_i32_0 : i32, i32, i32
  }
  func.func @transform_6(%arg0: i32, %arg1: i32) -> (i32, i32, i32) {
    %c0_i32 = arith.constant 0 : i32
    %c0_i32_0 = arith.constant 0 : i32
    %c0_i32_1 = arith.constant 0 : i32
    return %arg0, %c0_i32, %c0_i32_0 : i32, i32, i32
  }
  func.func @transform_7(%arg0: i32, %arg1: i32) -> (i32, i32, i32) {
    %c0_i32 = arith.constant 0 : i32
    %c0_i32_0 = arith.constant 0 : i32
    %c0_i32_1 = arith.constant 0 : i32
    return %arg0, %c0_i32, %c0_i32_0 : i32, i32, i32
  }
  func.func @transform_8(%arg0: i32, %arg1: i32) -> (i32, i32, i32) {
    %c0_i32 = arith.constant 0 : i32
    %c0_i32_0 = arith.constant 0 : i32
    %c0_i32_1 = arith.constant 0 : i32
    return %arg0, %c0_i32, %c0_i32_0 : i32, i32, i32
  }
  func.func @transform_9(%arg0: i32, %arg1: i32) -> (i32, i32, i32) {
    %c0_i32 = arith.constant 0 : i32
    %c0_i32_0 = arith.constant 0 : i32
    %c0_i32_1 = arith.constant 0 : i32
    return %arg0, %c0_i32, %c0_i32_0 : i32, i32, i32
  }
  func.func @transform_10(%arg0: i32, %arg1: i32) -> (i32, i32, i32) {
    %c0_i32 = arith.constant 0 : i32
    %c0_i32_0 = arith.constant 0 : i32
    %c0_i32_1 = arith.constant 0 : i32
    return %arg0, %c0_i32, %c0_i32_0 : i32, i32, i32
  }
  func.func @transform_11(%arg0: i32, %arg1: i32) -> (i32, i32, i32, i32) {
    %c0_i32 = arith.constant 0 : i32
    %c0_i32_0 = arith.constant 0 : i32
    %c0_i32_1 = arith.constant 0 : i32
    return %arg0, %arg1, %c0_i32, %c0_i32_0 : i32, i32, i32, i32
  }
}

module attributes {stable_mosaic.version = 11 : i64} {
  func.func @_res_stage1_kernel(%arg0: i32, %arg1: i32, %arg2: memref<1x52x3xf32, #tpu.memory_space<vmem>>, %arg3: memref<1x52x65xf32, #tpu.memory_space<vmem>>, %arg4: memref<3x128xbf16, #tpu.memory_space<vmem>>, %arg5: memref<65x128xbf16, #tpu.memory_space<vmem>>, %arg6: memref<1x128xf32, #tpu.memory_space<vmem>>, %arg7: memref<128x256xbf16, #tpu.memory_space<vmem>>, %arg8: memref<1x256xf32, #tpu.memory_space<vmem>>, %arg9: memref<256x1024xbf16, #tpu.memory_space<vmem>>, %arg10: memref<1x1024xf32, #tpu.memory_space<vmem>>, %arg11: memref<1024x512xbf16, #tpu.memory_space<vmem>>, %arg12: memref<1x512xf32, #tpu.memory_space<vmem>>, %arg13: memref<1x1x512xf32, #tpu.memory_space<vmem>>, %arg14: memref<1x1024xf32, #tpu.memory_space<vmem>>) attributes {dimension_semantics = [#tpu.dimension_semantics<parallel>, #tpu.dimension_semantics<arbitrary>], iteration_bounds = array<i64: 2, 1>, scalar_prefetch = 0 : i64, scratch_operands = 1 : i64, tpu.core_type = #tpu.core_type<tc>, window_params = [{transform_indices = @transform_0, window_bounds = array<i64: 1, 52, 3>}, {transform_indices = @transform_1, window_bounds = array<i64: 1, 52, 65>}, {pipeline_mode = #tpu.pipeline_mode<synchronous>, transform_indices = @transform_2, window_bounds = array<i64: 3, 128>}, {pipeline_mode = #tpu.pipeline_mode<synchronous>, transform_indices = @transform_3, window_bounds = array<i64: 65, 128>}, {pipeline_mode = #tpu.pipeline_mode<synchronous>, transform_indices = @transform_4, window_bounds = array<i64: 1, 128>}, {pipeline_mode = #tpu.pipeline_mode<synchronous>, transform_indices = @transform_5, window_bounds = array<i64: 128, 256>}, {pipeline_mode = #tpu.pipeline_mode<synchronous>, transform_indices = @transform_6, window_bounds = array<i64: 1, 256>}, {pipeline_mode = #tpu.pipeline_mode<synchronous>, transform_indices = @transform_7, window_bounds = array<i64: 256, 1024>}, {pipeline_mode = #tpu.pipeline_mode<synchronous>, transform_indices = @transform_8, window_bounds = array<i64: 1, 1024>}, {pipeline_mode = #tpu.pipeline_mode<synchronous>, transform_indices = @transform_9, window_bounds = array<i64: 1024, 512>}, {pipeline_mode = #tpu.pipeline_mode<synchronous>, transform_indices = @transform_10, window_bounds = array<i64: 1, 512>}, {transform_indices = @transform_11, window_bounds = array<i64: 1, 1, 512>}]} {
    %c0 = arith.constant 0 : index
    %c0_0 = arith.constant 0 : index
    %c0_1 = arith.constant 0 : index
    %0 = vector.load %arg2[%c0, %c0_0, %c0_1] : memref<1x52x3xf32, #tpu.memory_space<vmem>>, vector<1x52x3xf32>
    %1 = vector.shape_cast %0 : vector<1x52x3xf32> to vector<52x3xf32>
    %c0_2 = arith.constant 0 : index
    %c0_3 = arith.constant 0 : index
    %c0_4 = arith.constant 0 : index
    %2 = vector.load %arg3[%c0_2, %c0_3, %c0_4] : memref<1x52x65xf32, #tpu.memory_space<vmem>>, vector<1x52x65xf32>
    %3 = vector.shape_cast %2 : vector<1x52x65xf32> to vector<52x65xf32>
    %4 = arith.truncf %3 : vector<52x65xf32> to vector<52x65xbf16>
    %c0_5 = arith.constant 0 : index
    %c0_6 = arith.constant 0 : index
    %5 = vector.load %arg4[%c0_5, %c0_6] : memref<3x128xbf16, #tpu.memory_space<vmem>>, vector<3x128xbf16>
    %c0_7 = arith.constant 0 : index
    %c0_8 = arith.constant 0 : index
    %6 = vector.load %arg5[%c0_7, %c0_8] : memref<65x128xbf16, #tpu.memory_space<vmem>>, vector<65x128xbf16>
    %c0_9 = arith.constant 0 : index
    %c0_10 = arith.constant 0 : index
    %7 = vector.load %arg6[%c0_9, %c0_10] : memref<1x128xf32, #tpu.memory_space<vmem>>, vector<1x128xf32>
    %8 = arith.extf %5 : vector<3x128xbf16> to vector<3x128xf32>
    %9 = vector.extract_strided_slice %1 {offsets = [0, 0], sizes = [52, 1], strides = [1, 1]} : vector<52x3xf32> to vector<52x1xf32>
    %10 = vector.extract_strided_slice %8 {offsets = [0, 0], sizes = [1, 128], strides = [1, 1]} : vector<3x128xf32> to vector<1x128xf32>
    %11 = vector.broadcast %9 : vector<52x1xf32> to vector<52x128xf32>
    %12 = vector.broadcast %10 : vector<1x128xf32> to vector<52x128xf32>
    %13 = arith.mulf %11, %12 : vector<52x128xf32>
    %14 = vector.extract_strided_slice %1 {offsets = [0, 1], sizes = [52, 1], strides = [1, 1]} : vector<52x3xf32> to vector<52x1xf32>
    %15 = vector.extract_strided_slice %8 {offsets = [1, 0], sizes = [1, 128], strides = [1, 1]} : vector<3x128xf32> to vector<1x128xf32>
    %16 = vector.broadcast %14 : vector<52x1xf32> to vector<52x128xf32>
    %17 = vector.broadcast %15 : vector<1x128xf32> to vector<52x128xf32>
    %18 = arith.mulf %16, %17 : vector<52x128xf32>
    %19 = arith.addf %13, %18 : vector<52x128xf32>
    %20 = vector.extract_strided_slice %1 {offsets = [0, 2], sizes = [52, 1], strides = [1, 1]} : vector<52x3xf32> to vector<52x1xf32>
    %21 = vector.extract_strided_slice %8 {offsets = [2, 0], sizes = [1, 128], strides = [1, 1]} : vector<3x128xf32> to vector<1x128xf32>
    %22 = vector.broadcast %20 : vector<52x1xf32> to vector<52x128xf32>
    %23 = vector.broadcast %21 : vector<1x128xf32> to vector<52x128xf32>
    %24 = arith.mulf %22, %23 : vector<52x128xf32>
    %25 = arith.addf %19, %24 : vector<52x128xf32>
    %cst = arith.constant dense<0.000000e+00> : vector<52x128xf32>
    %26 = tpu.matmul %4, %6, %cst {dimension_numbers = #tpu.dot_dimension_numbers<[1], [0], [0], [1], [0, 0, 1, 1], [], []>} : vector<52x65xbf16>, vector<65x128xbf16>, vector<52x128xf32> -> vector<52x128xf32>
    %27 = arith.addf %25, %26 : vector<52x128xf32>
    %28 = vector.broadcast %7 : vector<1x128xf32> to vector<52x128xf32>
    %29 = arith.addf %27, %28 : vector<52x128xf32>
    %cst_11 = arith.constant 0.000000e+00 : f32
    %30 = vector.broadcast %cst_11 : f32 to vector<52x128xf32>
    %31 = arith.maximumf %29, %30 : vector<52x128xf32>
    %32 = arith.truncf %31 : vector<52x128xf32> to vector<52x128xbf16>
    %c0_12 = arith.constant 0 : index
    %c0_13 = arith.constant 0 : index
    %33 = vector.load %arg7[%c0_12, %c0_13] : memref<128x256xbf16, #tpu.memory_space<vmem>>, vector<128x256xbf16>
    %cst_14 = arith.constant dense<0.000000e+00> : vector<52x256xf32>
    %34 = tpu.matmul %32, %33, %cst_14 {dimension_numbers = #tpu.dot_dimension_numbers<[1], [0], [0], [1], [0, 0, 1, 1], [], []>} : vector<52x128xbf16>, vector<128x256xbf16>, vector<52x256xf32> -> vector<52x256xf32>
    %c0_15 = arith.constant 0 : index
    %c0_16 = arith.constant 0 : index
    %35 = vector.load %arg8[%c0_15, %c0_16] : memref<1x256xf32, #tpu.memory_space<vmem>>, vector<1x256xf32>
    %36 = vector.broadcast %35 : vector<1x256xf32> to vector<52x256xf32>
    %37 = arith.addf %34, %36 : vector<52x256xf32>
    %cst_17 = arith.constant 0.000000e+00 : f32
    %38 = vector.broadcast %cst_17 : f32 to vector<52x256xf32>
    %39 = arith.maximumf %37, %38 : vector<52x256xf32>
    %40 = arith.truncf %39 : vector<52x256xf32> to vector<52x256xbf16>
    %c0_18 = arith.constant 0 : index
    %c0_19 = arith.constant 0 : index
    %41 = vector.load %arg9[%c0_18, %c0_19] : memref<256x1024xbf16, #tpu.memory_space<vmem>>, vector<256x1024xbf16>
    %cst_20 = arith.constant dense<0.000000e+00> : vector<52x1024xf32>
    %42 = tpu.matmul %40, %41, %cst_20 {dimension_numbers = #tpu.dot_dimension_numbers<[1], [0], [0], [1], [0, 0, 1, 1], [], []>} : vector<52x256xbf16>, vector<256x1024xbf16>, vector<52x1024xf32> -> vector<52x1024xf32>
    %c0_21 = arith.constant 0 : index
    %c0_22 = arith.constant 0 : index
    %43 = vector.load %arg10[%c0_21, %c0_22] : memref<1x1024xf32, #tpu.memory_space<vmem>>, vector<1x1024xf32>
    %44 = vector.broadcast %43 : vector<1x1024xf32> to vector<52x1024xf32>
    %45 = arith.addf %42, %44 : vector<52x1024xf32>
    %cst_23 = arith.constant dense<0xFF800000> : vector<1024xf32>
    %46 = vector.multi_reduction <maximumf>, %45, %cst_23 [0] : vector<52x1024xf32> to vector<1024xf32>
    %47 = vector.shape_cast %46 : vector<1024xf32> to vector<1x1024xf32>
    %c0_i32 = arith.constant 0 : i32
    %48 = arith.cmpi eq, %arg1, %c0_i32 : i32
    %49 = arith.extui %48 : i1 to i32
    %c0_i32_24 = arith.constant 0 : i32
    %50 = arith.cmpi ne, %49, %c0_i32_24 : i32
    scf.if %50 {
      %c0_29 = arith.constant 0 : index
      %c0_30 = arith.constant 0 : index
      %57 = vector.load %arg14[%c0_29, %c0_30] : memref<1x1024xf32, #tpu.memory_space<vmem>>, vector<1x1024xf32>
      tpu.vector_store %arg14[%c0_29, %c0_30], %47 {strides = array<i32>} : memref<1x1024xf32, #tpu.memory_space<vmem>>, vector<1x1024xf32>,
    } else {
    }
    %c0_i32_25 = arith.constant 0 : i32
    %51 = arith.cmpi sgt, %arg1, %c0_i32_25 : i32
    %52 = arith.extui %51 : i1 to i32
    %c0_i32_26 = arith.constant 0 : i32
    %53 = arith.cmpi ne, %52, %c0_i32_26 : i32
    scf.if %53 {
      %c0_29 = arith.constant 0 : index
      %c0_30 = arith.constant 0 : index
      %57 = vector.load %arg14[%c0_29, %c0_30] : memref<1x1024xf32, #tpu.memory_space<vmem>>, vector<1x1024xf32>
      %58 = arith.maximumf %57, %47 : vector<1x1024xf32>
      %c0_31 = arith.constant 0 : index
      %c0_32 = arith.constant 0 : index
      %59 = vector.load %arg14[%c0_31, %c0_32] : memref<1x1024xf32, #tpu.memory_space<vmem>>, vector<1x1024xf32>
      tpu.vector_store %arg14[%c0_31, %c0_32], %58 {strides = array<i32>} : memref<1x1024xf32, #tpu.memory_space<vmem>>, vector<1x1024xf32>,
    } else {
    }
    %c0_i32_27 = arith.constant 0 : i32
    %54 = arith.cmpi eq, %arg1, %c0_i32_27 : i32
    %55 = arith.extui %54 : i1 to i32
    %c0_i32_28 = arith.constant 0 : i32
    %56 = arith.cmpi ne, %55, %c0_i32_28 : i32
    scf.if %56 {
      %c0_29 = arith.constant 0 : index
      %c0_30 = arith.constant 0 : index
      %57 = vector.load %arg14[%c0_29, %c0_30] : memref<1x1024xf32, #tpu.memory_space<vmem>>, vector<1x1024xf32>
      %58 = arith.truncf %57 : vector<1x1024xf32> to vector<1x1024xbf16>
      %c0_31 = arith.constant 0 : index
      %c0_32 = arith.constant 0 : index
      %59 = vector.load %arg11[%c0_31, %c0_32] : memref<1024x512xbf16, #tpu.memory_space<vmem>>, vector<1024x512xbf16>
      %cst_33 = arith.constant dense<0.000000e+00> : vector<1x512xf32>
      %60 = tpu.matmul %58, %59, %cst_33 {dimension_numbers = #tpu.dot_dimension_numbers<[1], [0], [0], [1], [0, 0, 1, 1], [], []>} : vector<1x1024xbf16>, vector<1024x512xbf16>, vector<1x512xf32> -> vector<1x512xf32>
      %c0_34 = arith.constant 0 : index
      %c0_35 = arith.constant 0 : index
      %61 = vector.load %arg12[%c0_34, %c0_35] : memref<1x512xf32, #tpu.memory_space<vmem>>, vector<1x512xf32>
      %62 = arith.addf %60, %61 : vector<1x512xf32>
      %c0_36 = arith.constant 0 : index
      %c0_37 = arith.constant 0 : index
      %c0_38 = arith.constant 0 : index
      %63 = vector.load %arg13[%c0_36, %c0_37, %c0_38] : memref<1x1x512xf32, #tpu.memory_space<vmem>>, vector<1x1x512xf32>
      %64 = vector.shape_cast %63 : vector<1x1x512xf32> to vector<1x512xf32>
      %65 = vector.shape_cast %62 : vector<1x512xf32> to vector<1x1x512xf32>
      tpu.vector_store %arg13[%c0_36, %c0_37, %c0_38], %65 {strides = array<i32>} : memref<1x1x512xf32, #tpu.memory_space<vmem>>, vector<1x1x512xf32>,
    } else {
    }
    return
  }
  func.func @transform_0(%arg0: i32, %arg1: i32) -> (i32, i32, i32) {
    %c0_i32 = arith.constant 0 : i32
    %c0_i32_0 = arith.constant 0 : i32
    return %arg0, %arg1, %c0_i32 : i32, i32, i32
  }
  func.func @transform_1(%arg0: i32, %arg1: i32) -> (i32, i32, i32) {
    %c0_i32 = arith.constant 0 : i32
    %c0_i32_0 = arith.constant 0 : i32
    return %arg0, %arg1, %c0_i32 : i32, i32, i32
  }
  func.func @transform_2(%arg0: i32, %arg1: i32) -> (i32, i32) {
    %c0_i32 = arith.constant 0 : i32
    %c0_i32_0 = arith.constant 0 : i32
    %c0_i32_1 = arith.constant 0 : i32
    return %c0_i32, %c0_i32_0 : i32, i32
  }
  func.func @transform_3(%arg0: i32, %arg1: i32) -> (i32, i32) {
    %c0_i32 = arith.constant 0 : i32
    %c0_i32_0 = arith.constant 0 : i32
    %c0_i32_1 = arith.constant 0 : i32
    return %c0_i32, %c0_i32_0 : i32, i32
  }
  func.func @transform_4(%arg0: i32, %arg1: i32) -> (i32, i32) {
    %c0_i32 = arith.constant 0 : i32
    %c0_i32_0 = arith.constant 0 : i32
    %c0_i32_1 = arith.constant 0 : i32
    return %c0_i32, %c0_i32_0 : i32, i32
  }
  func.func @transform_5(%arg0: i32, %arg1: i32) -> (i32, i32) {
    %c0_i32 = arith.constant 0 : i32
    %c0_i32_0 = arith.constant 0 : i32
    %c0_i32_1 = arith.constant 0 : i32
    return %c0_i32, %c0_i32_0 : i32, i32
  }
  func.func @transform_6(%arg0: i32, %arg1: i32) -> (i32, i32) {
    %c0_i32 = arith.constant 0 : i32
    %c0_i32_0 = arith.constant 0 : i32
    %c0_i32_1 = arith.constant 0 : i32
    return %c0_i32, %c0_i32_0 : i32, i32
  }
  func.func @transform_7(%arg0: i32, %arg1: i32) -> (i32, i32) {
    %c0_i32 = arith.constant 0 : i32
    %c0_i32_0 = arith.constant 0 : i32
    %c0_i32_1 = arith.constant 0 : i32
    return %c0_i32, %c0_i32_0 : i32, i32
  }
  func.func @transform_8(%arg0: i32, %arg1: i32) -> (i32, i32) {
    %c0_i32 = arith.constant 0 : i32
    %c0_i32_0 = arith.constant 0 : i32
    %c0_i32_1 = arith.constant 0 : i32
    return %c0_i32, %c0_i32_0 : i32, i32
  }
  func.func @transform_9(%arg0: i32, %arg1: i32) -> (i32, i32) {
    %c0_i32 = arith.constant 0 : i32
    %c0_i32_0 = arith.constant 0 : i32
    %c0_i32_1 = arith.constant 0 : i32
    return %c0_i32, %c0_i32_0 : i32, i32
  }
  func.func @transform_10(%arg0: i32, %arg1: i32) -> (i32, i32) {
    %c0_i32 = arith.constant 0 : i32
    %c0_i32_0 = arith.constant 0 : i32
    %c0_i32_1 = arith.constant 0 : i32
    return %c0_i32, %c0_i32_0 : i32, i32
  }
  func.func @transform_11(%arg0: i32, %arg1: i32) -> (i32, i32, i32) {
    %c0_i32 = arith.constant 0 : i32
    %c0_i32_0 = arith.constant 0 : i32
    %c0_i32_1 = arith.constant 0 : i32
    return %arg0, %c0_i32, %c0_i32_0 : i32, i32, i32
  }
}

module attributes {stable_mosaic.version = 11 : i64} {
  func.func @_res_stage2_kernel(%arg0: i32, %arg1: i32, %arg2: memref<1x52x3xf32, #tpu.memory_space<vmem>>, %arg3: memref<1x52x65xf32, #tpu.memory_space<vmem>>, %arg4: memref<1x1x512xf32, #tpu.memory_space<vmem>>, %arg5: memref<3x128xbf16, #tpu.memory_space<vmem>>, %arg6: memref<65x128xbf16, #tpu.memory_space<vmem>>, %arg7: memref<1x128xf32, #tpu.memory_space<vmem>>, %arg8: memref<128x512xbf16, #tpu.memory_space<vmem>>, %arg9: memref<512x256xbf16, #tpu.memory_space<vmem>>, %arg10: memref<1x256xf32, #tpu.memory_space<vmem>>, %arg11: memref<256x128xbf16, #tpu.memory_space<vmem>>, %arg12: memref<1x128xf32, #tpu.memory_space<vmem>>, %arg13: memref<8x128xbf16, #tpu.memory_space<vmem>>, %arg14: memref<8x1xf32, #tpu.memory_space<vmem>>, %arg15: memref<1x8x52xf32, #tpu.memory_space<vmem>>) attributes {dimension_semantics = [#tpu.dimension_semantics<parallel>, #tpu.dimension_semantics<parallel>], iteration_bounds = array<i64: 2, 1>, scalar_prefetch = 0 : i64, scratch_operands = 0 : i64, tpu.core_type = #tpu.core_type<tc>, window_params = [{transform_indices = @transform_0, window_bounds = array<i64: 1, 52, 3>}, {transform_indices = @transform_1, window_bounds = array<i64: 1, 52, 65>}, {transform_indices = @transform_2, window_bounds = array<i64: 1, 1, 512>}, {pipeline_mode = #tpu.pipeline_mode<synchronous>, transform_indices = @transform_3, window_bounds = array<i64: 3, 128>}, {pipeline_mode = #tpu.pipeline_mode<synchronous>, transform_indices = @transform_4, window_bounds = array<i64: 65, 128>}, {pipeline_mode = #tpu.pipeline_mode<synchronous>, transform_indices = @transform_5, window_bounds = array<i64: 1, 128>}, {pipeline_mode = #tpu.pipeline_mode<synchronous>, transform_indices = @transform_6, window_bounds = array<i64: 128, 512>}, {pipeline_mode = #tpu.pipeline_mode<synchronous>, transform_indices = @transform_7, window_bounds = array<i64: 512, 256>}, {pipeline_mode = #tpu.pipeline_mode<synchronous>, transform_indices = @transform_8, window_bounds = array<i64: 1, 256>}, {pipeline_mode = #tpu.pipeline_mode<synchronous>, transform_indices = @transform_9, window_bounds = array<i64: 256, 128>}, {pipeline_mode = #tpu.pipeline_mode<synchronous>, transform_indices = @transform_10, window_bounds = array<i64: 1, 128>}, {pipeline_mode = #tpu.pipeline_mode<synchronous>, transform_indices = @transform_11, window_bounds = array<i64: 8, 128>}, {pipeline_mode = #tpu.pipeline_mode<synchronous>, transform_indices = @transform_12, window_bounds = array<i64: 8, 1>}, {transform_indices = @transform_13, window_bounds = array<i64: 1, 8, 52>}]} {
    %c0 = arith.constant 0 : index
    %c0_0 = arith.constant 0 : index
    %c0_1 = arith.constant 0 : index
    %0 = vector.load %arg2[%c0, %c0_0, %c0_1] : memref<1x52x3xf32, #tpu.memory_space<vmem>>, vector<1x52x3xf32>
    %1 = vector.shape_cast %0 : vector<1x52x3xf32> to vector<52x3xf32>
    %c0_2 = arith.constant 0 : index
    %c0_3 = arith.constant 0 : index
    %c0_4 = arith.constant 0 : index
    %2 = vector.load %arg3[%c0_2, %c0_3, %c0_4] : memref<1x52x65xf32, #tpu.memory_space<vmem>>, vector<1x52x65xf32>
    %3 = vector.shape_cast %2 : vector<1x52x65xf32> to vector<52x65xf32>
    %4 = arith.truncf %3 : vector<52x65xf32> to vector<52x65xbf16>
    %c0_5 = arith.constant 0 : index
    %c0_6 = arith.constant 0 : index
    %5 = vector.load %arg5[%c0_5, %c0_6] : memref<3x128xbf16, #tpu.memory_space<vmem>>, vector<3x128xbf16>
    %c0_7 = arith.constant 0 : index
    %c0_8 = arith.constant 0 : index
    %6 = vector.load %arg6[%c0_7, %c0_8] : memref<65x128xbf16, #tpu.memory_space<vmem>>, vector<65x128xbf16>
    %c0_9 = arith.constant 0 : index
    %c0_10 = arith.constant 0 : index
    %7 = vector.load %arg7[%c0_9, %c0_10] : memref<1x128xf32, #tpu.memory_space<vmem>>, vector<1x128xf32>
    %8 = arith.extf %5 : vector<3x128xbf16> to vector<3x128xf32>
    %9 = vector.extract_strided_slice %1 {offsets = [0, 0], sizes = [52, 1], strides = [1, 1]} : vector<52x3xf32> to vector<52x1xf32>
    %10 = vector.extract_strided_slice %8 {offsets = [0, 0], sizes = [1, 128], strides = [1, 1]} : vector<3x128xf32> to vector<1x128xf32>
    %11 = vector.broadcast %9 : vector<52x1xf32> to vector<52x128xf32>
    %12 = vector.broadcast %10 : vector<1x128xf32> to vector<52x128xf32>
    %13 = arith.mulf %11, %12 : vector<52x128xf32>
    %14 = vector.extract_strided_slice %1 {offsets = [0, 1], sizes = [52, 1], strides = [1, 1]} : vector<52x3xf32> to vector<52x1xf32>
    %15 = vector.extract_strided_slice %8 {offsets = [1, 0], sizes = [1, 128], strides = [1, 1]} : vector<3x128xf32> to vector<1x128xf32>
    %16 = vector.broadcast %14 : vector<52x1xf32> to vector<52x128xf32>
    %17 = vector.broadcast %15 : vector<1x128xf32> to vector<52x128xf32>
    %18 = arith.mulf %16, %17 : vector<52x128xf32>
    %19 = arith.addf %13, %18 : vector<52x128xf32>
    %20 = vector.extract_strided_slice %1 {offsets = [0, 2], sizes = [52, 1], strides = [1, 1]} : vector<52x3xf32> to vector<52x1xf32>
    %21 = vector.extract_strided_slice %8 {offsets = [2, 0], sizes = [1, 128], strides = [1, 1]} : vector<3x128xf32> to vector<1x128xf32>
    %22 = vector.broadcast %20 : vector<52x1xf32> to vector<52x128xf32>
    %23 = vector.broadcast %21 : vector<1x128xf32> to vector<52x128xf32>
    %24 = arith.mulf %22, %23 : vector<52x128xf32>
    %25 = arith.addf %19, %24 : vector<52x128xf32>
    %cst = arith.constant dense<0.000000e+00> : vector<52x128xf32>
    %26 = tpu.matmul %4, %6, %cst {dimension_numbers = #tpu.dot_dimension_numbers<[1], [0], [0], [1], [0, 0, 1, 1], [], []>} : vector<52x65xbf16>, vector<65x128xbf16>, vector<52x128xf32> -> vector<52x128xf32>
    %27 = arith.addf %25, %26 : vector<52x128xf32>
    %28 = vector.broadcast %7 : vector<1x128xf32> to vector<52x128xf32>
    %29 = arith.addf %27, %28 : vector<52x128xf32>
    %cst_11 = arith.constant 0.000000e+00 : f32
    %30 = vector.broadcast %cst_11 : f32 to vector<52x128xf32>
    %31 = arith.maximumf %29, %30 : vector<52x128xf32>
    %32 = arith.truncf %31 : vector<52x128xf32> to vector<52x128xbf16>
    %c0_12 = arith.constant 0 : index
    %c0_13 = arith.constant 0 : index
    %c0_14 = arith.constant 0 : index
    %33 = vector.load %arg4[%c0_12, %c0_13, %c0_14] : memref<1x1x512xf32, #tpu.memory_space<vmem>>, vector<1x1x512xf32>
    %34 = vector.shape_cast %33 : vector<1x1x512xf32> to vector<1x512xf32>
    %c0_15 = arith.constant 0 : index
    %c0_16 = arith.constant 0 : index
    %35 = vector.load %arg8[%c0_15, %c0_16] : memref<128x512xbf16, #tpu.memory_space<vmem>>, vector<128x512xbf16>
    %cst_17 = arith.constant dense<0.000000e+00> : vector<52x512xf32>
    %36 = tpu.matmul %32, %35, %cst_17 {dimension_numbers = #tpu.dot_dimension_numbers<[1], [0], [0], [1], [0, 0, 1, 1], [], []>} : vector<52x128xbf16>, vector<128x512xbf16>, vector<52x512xf32> -> vector<52x512xf32>
    %37 = vector.broadcast %34 : vector<1x512xf32> to vector<52x512xf32>
    %38 = arith.addf %36, %37 : vector<52x512xf32>
    %cst_18 = arith.constant 0.000000e+00 : f32
    %39 = vector.broadcast %cst_18 : f32 to vector<52x512xf32>
    %40 = arith.maximumf %38, %39 : vector<52x512xf32>
    %41 = arith.truncf %40 : vector<52x512xf32> to vector<52x512xbf16>
    %c0_19 = arith.constant 0 : index
    %c0_20 = arith.constant 0 : index
    %42 = vector.load %arg9[%c0_19, %c0_20] : memref<512x256xbf16, #tpu.memory_space<vmem>>, vector<512x256xbf16>
    %cst_21 = arith.constant dense<0.000000e+00> : vector<52x256xf32>
    %43 = tpu.matmul %41, %42, %cst_21 {dimension_numbers = #tpu.dot_dimension_numbers<[1], [0], [0], [1], [0, 0, 1, 1], [], []>} : vector<52x512xbf16>, vector<512x256xbf16>, vector<52x256xf32> -> vector<52x256xf32>
    %c0_22 = arith.constant 0 : index
    %c0_23 = arith.constant 0 : index
    %44 = vector.load %arg10[%c0_22, %c0_23] : memref<1x256xf32, #tpu.memory_space<vmem>>, vector<1x256xf32>
    %45 = vector.broadcast %44 : vector<1x256xf32> to vector<52x256xf32>
    %46 = arith.addf %43, %45 : vector<52x256xf32>
    %cst_24 = arith.constant 0.000000e+00 : f32
    %47 = vector.broadcast %cst_24 : f32 to vector<52x256xf32>
    %48 = arith.maximumf %46, %47 : vector<52x256xf32>
    %49 = arith.truncf %48 : vector<52x256xf32> to vector<52x256xbf16>
    %c0_25 = arith.constant 0 : index
    %c0_26 = arith.constant 0 : index
    %50 = vector.load %arg11[%c0_25, %c0_26] : memref<256x128xbf16, #tpu.memory_space<vmem>>, vector<256x128xbf16>
    %cst_27 = arith.constant dense<0.000000e+00> : vector<52x128xf32>
    %51 = tpu.matmul %49, %50, %cst_27 {dimension_numbers = #tpu.dot_dimension_numbers<[1], [0], [0], [1], [0, 0, 1, 1], [], []>} : vector<52x256xbf16>, vector<256x128xbf16>, vector<52x128xf32> -> vector<52x128xf32>
    %c0_28 = arith.constant 0 : index
    %c0_29 = arith.constant 0 : index
    %52 = vector.load %arg12[%c0_28, %c0_29] : memref<1x128xf32, #tpu.memory_space<vmem>>, vector<1x128xf32>
    %53 = vector.broadcast %52 : vector<1x128xf32> to vector<52x128xf32>
    %54 = arith.addf %51, %53 : vector<52x128xf32>
    %cst_30 = arith.constant 0.000000e+00 : f32
    %55 = vector.broadcast %cst_30 : f32 to vector<52x128xf32>
    %56 = arith.maximumf %54, %55 : vector<52x128xf32>
    %57 = arith.truncf %56 : vector<52x128xf32> to vector<52x128xbf16>
    %c0_31 = arith.constant 0 : index
    %c0_32 = arith.constant 0 : index
    %58 = vector.load %arg13[%c0_31, %c0_32] : memref<8x128xbf16, #tpu.memory_space<vmem>>, vector<8x128xbf16>
    %cst_33 = arith.constant dense<0.000000e+00> : vector<8x52xf32>
    %59 = tpu.matmul %58, %57, %cst_33 {dimension_numbers = #tpu.dot_dimension_numbers<[1], [1], [0], [0], [0, 0, 1, 0], [], []>} : vector<8x128xbf16>, vector<52x128xbf16>, vector<8x52xf32> -> vector<8x52xf32>
    %c0_34 = arith.constant 0 : index
    %c0_35 = arith.constant 0 : index
    %60 = vector.load %arg14[%c0_34, %c0_35] : memref<8x1xf32, #tpu.memory_space<vmem>>, vector<8x1xf32>
    %61 = vector.broadcast %60 : vector<8x1xf32> to vector<8x52xf32>
    %62 = arith.addf %59, %61 : vector<8x52xf32>
    %63 = math.tanh %62 : vector<8x52xf32>
    %c0_36 = arith.constant 0 : index
    %c0_37 = arith.constant 0 : index
    %c0_38 = arith.constant 0 : index
    %64 = vector.load %arg15[%c0_36, %c0_37, %c0_38] : memref<1x8x52xf32, #tpu.memory_space<vmem>>, vector<1x8x52xf32>
    %65 = vector.shape_cast %64 : vector<1x8x52xf32> to vector<8x52xf32>
    %66 = vector.shape_cast %63 : vector<8x52xf32> to vector<1x8x52xf32>
    tpu.vector_store %arg15[%c0_36, %c0_37, %c0_38], %66 {strides = array<i32>} : memref<1x8x52xf32, #tpu.memory_space<vmem>>, vector<1x8x52xf32>,
    return
  }
  func.func @transform_0(%arg0: i32, %arg1: i32) -> (i32, i32, i32) {
    %c0_i32 = arith.constant 0 : i32
    %c0_i32_0 = arith.constant 0 : i32
    return %arg0, %arg1, %c0_i32 : i32, i32, i32
  }
  func.func @transform_1(%arg0: i32, %arg1: i32) -> (i32, i32, i32) {
    %c0_i32 = arith.constant 0 : i32
    %c0_i32_0 = arith.constant 0 : i32
    return %arg0, %arg1, %c0_i32 : i32, i32, i32
  }
  func.func @transform_2(%arg0: i32, %arg1: i32) -> (i32, i32, i32) {
    %c0_i32 = arith.constant 0 : i32
    %c0_i32_0 = arith.constant 0 : i32
    %c0_i32_1 = arith.constant 0 : i32
    return %arg0, %c0_i32, %c0_i32_0 : i32, i32, i32
  }
  func.func @transform_3(%arg0: i32, %arg1: i32) -> (i32, i32) {
    %c0_i32 = arith.constant 0 : i32
    %c0_i32_0 = arith.constant 0 : i32
    %c0_i32_1 = arith.constant 0 : i32
    return %c0_i32, %c0_i32_0 : i32, i32
  }
  func.func @transform_4(%arg0: i32, %arg1: i32) -> (i32, i32) {
    %c0_i32 = arith.constant 0 : i32
    %c0_i32_0 = arith.constant 0 : i32
    %c0_i32_1 = arith.constant 0 : i32
    return %c0_i32, %c0_i32_0 : i32, i32
  }
  func.func @transform_5(%arg0: i32, %arg1: i32) -> (i32, i32) {
    %c0_i32 = arith.constant 0 : i32
    %c0_i32_0 = arith.constant 0 : i32
    %c0_i32_1 = arith.constant 0 : i32
    return %c0_i32, %c0_i32_0 : i32, i32
  }
  func.func @transform_6(%arg0: i32, %arg1: i32) -> (i32, i32) {
    %c0_i32 = arith.constant 0 : i32
    %c0_i32_0 = arith.constant 0 : i32
    %c0_i32_1 = arith.constant 0 : i32
    return %c0_i32, %c0_i32_0 : i32, i32
  }
  func.func @transform_7(%arg0: i32, %arg1: i32) -> (i32, i32) {
    %c0_i32 = arith.constant 0 : i32
    %c0_i32_0 = arith.constant 0 : i32
    %c0_i32_1 = arith.constant 0 : i32
    return %c0_i32, %c0_i32_0 : i32, i32
  }
  func.func @transform_8(%arg0: i32, %arg1: i32) -> (i32, i32) {
    %c0_i32 = arith.constant 0 : i32
    %c0_i32_0 = arith.constant 0 : i32
    %c0_i32_1 = arith.constant 0 : i32
    return %c0_i32, %c0_i32_0 : i32, i32
  }
  func.func @transform_9(%arg0: i32, %arg1: i32) -> (i32, i32) {
    %c0_i32 = arith.constant 0 : i32
    %c0_i32_0 = arith.constant 0 : i32
    %c0_i32_1 = arith.constant 0 : i32
    return %c0_i32, %c0_i32_0 : i32, i32
  }
  func.func @transform_10(%arg0: i32, %arg1: i32) -> (i32, i32) {
    %c0_i32 = arith.constant 0 : i32
    %c0_i32_0 = arith.constant 0 : i32
    %c0_i32_1 = arith.constant 0 : i32
    return %c0_i32, %c0_i32_0 : i32, i32
  }
  func.func @transform_11(%arg0: i32, %arg1: i32) -> (i32, i32) {
    %c0_i32 = arith.constant 0 : i32
    %c0_i32_0 = arith.constant 0 : i32
    %c0_i32_1 = arith.constant 0 : i32
    return %c0_i32, %c0_i32_0 : i32, i32
  }
  func.func @transform_12(%arg0: i32, %arg1: i32) -> (i32, i32) {
    %c0_i32 = arith.constant 0 : i32
    %c0_i32_0 = arith.constant 0 : i32
    %c0_i32_1 = arith.constant 0 : i32
    return %c0_i32, %c0_i32_0 : i32, i32
  }
  func.func @transform_13(%arg0: i32, %arg1: i32) -> (i32, i32, i32) {
    %c0_i32 = arith.constant 0 : i32
    %c0_i32_0 = arith.constant 0 : i32
    return %arg0, %c0_i32, %arg1 : i32, i32, i32
  }
}

</mosaic_0001>

<llo_original>
// kernel: msn_forward.7
$region0: #{msn_forward.7}
  #allocation0 [shape = 'u32[]', space=smem, size = 0x4, offset = 0x4, fixed_abs, tag = 'smem constant byte address 0x4 - core index']
  #allocation1 [shape = 'u32[72,128]{1,0:T(1,128)}', space=vmem, size = 0x9000, scoped, tag = 'internal scratch']
  %s0 = inlined_call_operand.vmem [shape: f32[4,2,8,2], index: 0, kind: input, shape index: {}]
  %s1 = inlined_call_operand.vmem [shape: f32[2,1,32], index: 1, kind: input, shape index: {}]
  %s2 = inlined_call_operand.hbm [shape: bf16[4,2,64], index: 2, kind: input, shape index: {}]
  %s3 = inlined_call_operand.hbm [shape: bf16[4,32,64], index: 3, kind: input, shape index: {}]
  %s4 = inlined_call_operand.hbm [shape: f32[4,1,64], index: 4, kind: input, shape index: {}]
  %s5 = inlined_call_operand.vmem [shape: bf16[4,64,64], index: 5, kind: input, shape index: {}]
  %s6 = inlined_call_operand.hbm [shape: f32[4,1,64], index: 6, kind: input, shape index: {}]
  %s7 = inlined_call_operand.vmem [shape: bf16[4,64,64], index: 7, kind: input, shape index: {}]
  %s8 = inlined_call_operand.hbm [shape: f32[4,1,64], index: 8, kind: input, shape index: {}]
  %s9 = inlined_call_operand.hbm [shape: bf16[4,8,64], index: 9, kind: input, shape index: {}]
  %s10 = inlined_call_operand.vmem [shape: f32[4,8,1], index: 10, kind: input, shape index: {}]
  %s11 = inlined_call_operand.vmem [shape: f32[4,2,8,8], index: 11, kind: output, shape index: {}]
  %s12 = sld [smem:[#allocation0]]
  $region101: #{msn_forward.7} parent=0
    _
  %s14 = ssub.s32 1, %s12
  %s15 = scalar_select 0, %s14, %s12
  $region1: #{msn_forward.7} parent=0
    #allocation2 [shape = 'u8[1024]{0}', space=vmem, size = 0x400, scoped, tag = 'input window, operand 2']
    #allocation3 [shape = 's32[2]{0}', space=sflag, size = 0x8, scoped, tag = 'scoped memory for msn_forward.7']
    #allocation4 [shape = 'u8[16384]{0}', space=vmem, size = 0x4000, scoped, tag = 'input window, operand 3']
    #allocation5 [shape = 's32[2]{0}', space=sflag, size = 0x8, scoped, tag = 'scoped memory for msn_forward.7']
    #allocation6 [shape = 'u8[1024]{0}', space=vmem, size = 0x400, scoped, tag = 'input window, operand 4']
    #allocation7 [shape = 'u8[1024]{0}', space=vmem, size = 0x400, scoped, tag = 'input window, operand 6']
    #allocation8 [shape = 's32[2]{0}', space=sflag, size = 0x8, scoped, tag = 'scoped memory for msn_forward.7']
    #allocation9 [shape = 'u8[1024]{0}', space=vmem, size = 0x400, scoped, tag = 'input window, operand 8']
    #allocation10 [shape = 'u8[4096]{0}', space=vmem, size = 0x1000, scoped, tag = 'input window, operand 9']
    #allocation11 [shape = 's32[2]{0}', space=sflag, size = 0x8, scoped, tag = 'scoped memory for msn_forward.7']
    %16 = vsyncpa [#allocation3], 0
    %s17 = scalar_lea.sflag [#allocation3], 1
    %18 = vsyncpa %s17, 0
    %19 = vsyncpa [#allocation5], 0
    %s20 = scalar_lea.sflag [#allocation5], 1
    %21 = vsyncpa %s20, 0
    %22 = vsyncpa [#allocation8], 0
    %s23 = scalar_lea.sflag [#allocation8], 1
    %24 = vsyncpa %s23, 0
    %25 = vsyncpa [#allocation11], 0
    %s26 = scalar_lea.sflag [#allocation11], 1
    %27 = vsyncpa %s26, 0
    loop: start=0, step=1, limit=10
    $region2: #{msn_forward.7} parent=1 // loop_pre_header
      _
    $region3: #{msn_forward.7} parent=1 // loop_header
      %s29 = sphi 0, %s33
      %p30 = scmp.ge.s32.totalorder %s29, 10
      %s36 = sphi 0, %s48
      %s37 = sphi 0, %s44
      %s38 = sphi 0, %s36
      %s39 = sphi 0, %s37
      %s40 = sphi 0, %s38
      %s41 = sphi 0, %s39
      %s53 = sphi 0, %s55
      %s56 = sphi 0, %s53
      %s57 = sphi 0, %s56
      %s73 = sphi 0, %s57
      %s79 = sphi 0, %s81
      %s82 = sphi 0, %s79
      %s83 = sphi 0, %s82
      %s99 = sphi 0, %s83
      %s105 = sphi 0, %s107
      %s108 = sphi 0, %s105
      %s109 = sphi 0, %s108
      %s125 = sphi 0, %s109
      %s131 = sphi 0, %s133
      %s134 = sphi 0, %s131
      %s135 = sphi 0, %s134
      %s151 = sphi 0, %s135
      %s157 = sphi 0, %s159
      %s160 = sphi 0, %s157
      %s161 = sphi 0, %s160
      %s177 = sphi 0, %s161
      %s183 = sphi 0, %s185
      %s186 = sphi 0, %s183
      %s187 = sphi 0, %s186
      %s203 = sphi 0, %s187
      %s209 = sphi 0, %s211
      %s212 = sphi 0, %s209
      %s213 = sphi 0, %s212
      %s229 = sphi 0, %s213
      %s235 = sphi 0, %s237
      %s238 = sphi 0, %s235
      %s239 = sphi 0, %s238
      %s255 = sphi 0, %s239
      %s261 = sphi 0, %s263
      %s264 = sphi 0, %s261
      %s265 = sphi 0, %s264
      %s281 = sphi 0, %s265
      %s287 = sphi 0, %s289
      %s290 = sphi 0, %s287
      %s291 = sphi 0, %s290
      %s307 = sphi 0, %s291
      %s313 = sphi 0, %s315
      %s316 = sphi 0, %s313
      %s317 = sphi 0, %s316
      %s333 = sphi 0, %s317
      %s341 = sphi 0, %s343
      %s344 = sphi 0, %s341
      %s345 = sphi 0, %s344
      %s361 = sphi 0, %s345
    $region4: #{msn_forward.7} parent=1 // loop_header_branch
      %32 = sbr.rel (%p30) target = $region8
    $region5: #{msn_forward.7} parent=1 // loop_body
      %s34 = ssub.s32 %s29, 1
      %s35 = ssub.s32 %s29, 2
      %s42 = sadd.s32 1, %s37
      %p43 = scmp.ge.s32.totalorder %s42, 2
      %s44 = scalar_select %p43, 0, %s42
      %s45 = sadd.s32 1, %s36
      %s46 = scalar_select %p43, %s45, %s36
      %p47 = scmp.ge.s32.totalorder %s46, 4
      %s48 = scalar_select %p47, 0, %s46
      %s49 = ssub.s32 %s36, %s48
      %s50 = ssub.s32 %s37, %s44
      %s51 = sor.u32 %s49, %s50
      %p52 = scmp.eq.s32.totalorder %s51, 0
      %s54 = sadd.s32 %s53, 1
      %s55 = scalar_select %p52, %s53, %s54
      %p58 = pneg %p52
      %p59 = scmp.eq.s32.totalorder %s29, 7
      %p60 = por %p58, %p59
      %p61 = scmp.ne.s32.totalorder %s53, %s56
      %p62 = scmp.eq.s32.totalorder %s29, 0
      %p63 = por %p61, %p62
      %p64 = scmp.ne.s32.totalorder %s53, %s56
      %p65 = scmp.eq.s32.totalorder %s34, 7
      %p66 = por %p64, %p65
      %p67 = scmp.ne.s32.totalorder %s56, %s57
      %p68 = scmp.eq.s32.totalorder %s34, 0
      %p69 = por %p67, %p68
      %p70 = scmp.ne.s32.totalorder %s56, %s57
      %p71 = scmp.eq.s32.totalorder %s35, 7
      %p72 = por %p70, %p71
      %p74 = scmp.ne.s32.totalorder %s57, %s73
      %p75 = scmp.eq.s32.totalorder %s35, 0
      %p76 = por %p74, %p75
      %s77 = ssub.s32 %s37, %s44
      %p78 = scmp.eq.s32.totalorder %s77, 0
      %s80 = sadd.s32 %s79, 1
      %s81 = scalar_select %p78, %s79, %s80
      %p84 = pneg %p78
      %p85 = scmp.eq.s32.totalorder %s29, 7
      %p86 = por %p84, %p85
      %p87 = scmp.ne.s32.totalorder %s79, %s82
      %p88 = scmp.eq.s32.totalorder %s29, 0
      %p89 = por %p87, %p88
      %p90 = scmp.ne.s32.totalorder %s79, %s82
      %p91 = scmp.eq.s32.totalorder %s34, 7
      %p92 = por %p90, %p91
      %p93 = scmp.ne.s32.totalorder %s82, %s83
      %p94 = scmp.eq.s32.totalorder %s34, 0
      %p95 = por %p93, %p94
      %p96 = scmp.ne.s32.totalorder %s82, %s83
      %p97 = scmp.eq.s32.totalorder %s35, 7
      %p98 = por %p96, %p97
      %p100 = scmp.ne.s32.totalorder %s83, %s99
      %p101 = scmp.eq.s32.totalorder %s35, 0
      %p102 = por %p100, %p101
      %s103 = ssub.s32 %s36, %s48
      %p104 = scmp.eq.s32.totalorder %s103, 0
      %s106 = sadd.s32 %s105, 1
      %s107 = scalar_select %p104, %s105, %s106
      %p110 = pneg %p104
      %p111 = scmp.eq.s32.totalorder %s29, 7
      %p112 = por %p110, %p111
      %p113 = scmp.ne.s32.totalorder %s105, %s108
      %p114 = scmp.eq.s32.totalorder %s29, 0
      %p115 = por %p113, %p114
      %p116 = scmp.ne.s32.totalorder %s105, %s108
      %p117 = scmp.eq.s32.totalorder %s34, 7
      %p118 = por %p116, %p117
      %p119 = scmp.ne.s32.totalorder %s108, %s109
      %p120 = scmp.eq.s32.totalorder %s34, 0
      %p121 = por %p119, %p120
      %p122 = scmp.ne.s32.totalorder %s108, %s109
      %p123 = scmp.eq.s32.totalorder %s35, 7
      %p124 = por %p122, %p123
      %p126 = scmp.ne.s32.totalorder %s109, %s125
      %p127 = scmp.eq.s32.totalorder %s35, 0
      %p128 = por %p126, %p127
      %s129 = ssub.s32 %s36, %s48
      %p130 = scmp.eq.s32.totalorder %s129, 0
      %s132 = sadd.s32 %s131, 1
      %s133 = scalar_select %p130, %s131, %s132
      %p136 = pneg %p130
      %p137 = scmp.eq.s32.totalorder %s29, 7
      %p138 = por %p136, %p137
      %p139 = scmp.ne.s32.totalorder %s131, %s134
      %p140 = scmp.eq.s32.totalorder %s29, 0
      %p141 = por %p139, %p140
      %p142 = scmp.ne.s32.totalorder %s131, %s134
      %p143 = scmp.eq.s32.totalorder %s34, 7
      %p144 = por %p142, %p143
      %p145 = scmp.ne.s32.totalorder %s134, %s135
      %p146 = scmp.eq.s32.totalorder %s34, 0
      %p147 = por %p145, %p146
      %p148 = scmp.ne.s32.totalorder %s134, %s135
      %p149 = scmp.eq.s32.totalorder %s35, 7
      %p150 = por %p148, %p149
      %p152 = scmp.ne.s32.totalorder %s135, %s151
      %p153 = scmp.eq.s32.totalorder %s35, 0
      %p154 = por %p152, %p153
      %s155 = ssub.s32 %s36, %s48
      %p156 = scmp.eq.s32.totalorder %s155, 0
      %s158 = sadd.s32 %s157, 1
      %s159 = scalar_select %p156, %s157, %s158
      %p162 = pneg %p156
      %p163 = scmp.eq.s32.totalorder %s29, 7
      %p164 = por %p162, %p163
      %p165 = scmp.ne.s32.totalorder %s157, %s160
      %p166 = scmp.eq.s32.totalorder %s29, 0
      %p167 = por %p165, %p166
      %p168 = scmp.ne.s32.totalorder %s157, %s160
      %p169 = scmp.eq.s32.totalorder %s34, 7
      %p170 = por %p168, %p169
      %p171 = scmp.ne.s32.totalorder %s160, %s161
      %p172 = scmp.eq.s32.totalorder %s34, 0
      %p173 = por %p171, %p172
      %p174 = scmp.ne.s32.totalorder %s160, %s161
      %p175 = scmp.eq.s32.totalorder %s35, 7
      %p176 = por %p174, %p175
      %p178 = scmp.ne.s32.totalorder %s161, %s177
      %p179 = scmp.eq.s32.totalorder %s35, 0
      %p180 = por %p178, %p179
      %s181 = ssub.s32 %s36, %s48
      %p182 = scmp.eq.s32.totalorder %s181, 0
      %s184 = sadd.s32 %s183, 1
      %s185 = scalar_select %p182, %s183, %s184
      %p188 = pneg %p182
      %p189 = scmp.eq.s32.totalorder %s29, 7
      %p190 = por %p188, %p189
      %p191 = scmp.ne.s32.totalorder %s183, %s186
      %p192 = scmp.eq.s32.totalorder %s29, 0
      %p193 = por %p191, %p192
      %p194 = scmp.ne.s32.totalorder %s183, %s186
      %p195 = scmp.eq.s32.totalorder %s34, 7
      %p196 = por %p194, %p195
      %p197 = scmp.ne.s32.totalorder %s186, %s187
      %p198 = scmp.eq.s32.totalorder %s34, 0
      %p199 = por %p197, %p198
      %p200 = scmp.ne.s32.totalorder %s186, %s187
      %p201 = scmp.eq.s32.totalorder %s35, 7
      %p202 = por %p200, %p201
      %p204 = scmp.ne.s32.totalorder %s187, %s203
      %p205 = scmp.eq.s32.totalorder %s35, 0
      %p206 = por %p204, %p205
      %s207 = ssub.s32 %s36, %s48
      %p208 = scmp.eq.s32.totalorder %s207, 0
      %s210 = sadd.s32 %s209, 1
      %s211 = scalar_select %p208, %s209, %s210
      %p214 = pneg %p208
      %p215 = scmp.eq.s32.totalorder %s29, 7
      %p216 = por %p214, %p215
      %p217 = scmp.ne.s32.totalorder %s209, %s212
      %p218 = scmp.eq.s32.totalorder %s29, 0
      %p219 = por %p217, %p218
      %p220 = scmp.ne.s32.totalorder %s209, %s212
      %p221 = scmp.eq.s32.totalorder %s34, 7
      %p222 = por %p220, %p221
      %p223 = scmp.ne.s32.totalorder %s212, %s213
      %p224 = scmp.eq.s32.totalorder %s34, 0
      %p225 = por %p223, %p224
      %p226 = scmp.ne.s32.totalorder %s212, %s213
      %p227 = scmp.eq.s32.totalorder %s35, 7
      %p228 = por %p226, %p227
      %p230 = scmp.ne.s32.totalorder %s213, %s229
      %p231 = scmp.eq.s32.totalorder %s35, 0
      %p232 = por %p230, %p231
      %s233 = ssub.s32 %s36, %s48
      %p234 = scmp.eq.s32.totalorder %s233, 0
      %s236 = sadd.s32 %s235, 1
      %s237 = scalar_select %p234, %s235, %s236
      %p240 = pneg %p234
      %p241 = scmp.eq.s32.totalorder %s29, 7
      %p242 = por %p240, %p241
      %p243 = scmp.ne.s32.totalorder %s235, %s238
      %p244 = scmp.eq.s32.totalorder %s29, 0
      %p245 = por %p243, %p244
      %p246 = scmp.ne.s32.totalorder %s235, %s238
      %p247 = scmp.eq.s32.totalorder %s34, 7
      %p248 = por %p246, %p247
      %p249 = scmp.ne.s32.totalorder %s238, %s239
      %p250 = scmp.eq.s32.totalorder %s34, 0
      %p251 = por %p249, %p250
      %p252 = scmp.ne.s32.totalorder %s238, %s239
      %p253 = scmp.eq.s32.totalorder %s35, 7
      %p254 = por %p252, %p253
      %p256 = scmp.ne.s32.totalorder %s239, %s255
      %p257 = scmp.eq.s32.totalorder %s35, 0
      %p258 = por %p256, %p257
      %s259 = ssub.s32 %s36, %s48
      %p260 = scmp.eq.s32.totalorder %s259, 0
      %s262 = sadd.s32 %s261, 1
      %s263 = scalar_select %p260, %s261, %s262
      %p266 = pneg %p260
      %p267 = scmp.eq.s32.totalorder %s29, 7
      %p268 = por %p266, %p267
      %p269 = scmp.ne.s32.totalorder %s261, %s264
      %p270 = scmp.eq.s32.totalorder %s29, 0
      %p271 = por %p269, %p270
      %p272 = scmp.ne.s32.totalorder %s261, %s264
      %p273 = scmp.eq.s32.totalorder %s34, 7
      %p274 = por %p272, %p273
      %p275 = scmp.ne.s32.totalorder %s264, %s265
      %p276 = scmp.eq.s32.totalorder %s34, 0
      %p277 = por %p275, %p276
      %p278 = scmp.ne.s32.totalorder %s264, %s265
      %p279 = scmp.eq.s32.totalorder %s35, 7
      %p280 = por %p278, %p279
      %p282 = scmp.ne.s32.totalorder %s265, %s281
      %p283 = scmp.eq.s32.totalorder %s35, 0
      %p284 = por %p282, %p283
      %s285 = ssub.s32 %s36, %s48
      %p286 = scmp.eq.s32.totalorder %s285, 0
      %s288 = sadd.s32 %s287, 1
      %s289 = scalar_select %p286, %s287, %s288
      %p292 = pneg %p286
      %p293 = scmp.eq.s32.totalorder %s29, 7
      %p294 = por %p292, %p293
      %p295 = scmp.ne.s32.totalorder %s287, %s290
      %p296 = scmp.eq.s32.totalorder %s29, 0
      %p297 = por %p295, %p296
      %p298 = scmp.ne.s32.totalorder %s287, %s290
      %p299 = scmp.eq.s32.totalorder %s34, 7
      %p300 = por %p298, %p299
      %p301 = scmp.ne.s32.totalorder %s290, %s291
      %p302 = scmp.eq.s32.totalorder %s34, 0
      %p303 = por %p301, %p302
      %p304 = scmp.ne.s32.totalorder %s290, %s291
      %p305 = scmp.eq.s32.totalorder %s35, 7
      %p306 = por %p304, %p305
      %p308 = scmp.ne.s32.totalorder %s291, %s307
      %p309 = scmp.eq.s32.totalorder %s35, 0
      %p310 = por %p308, %p309
      %s311 = ssub.s32 %s36, %s48
      %p312 = scmp.eq.s32.totalorder %s311, 0
      %s314 = sadd.s32 %s313, 1
      %s315 = scalar_select %p312, %s313, %s314
      %p318 = pneg %p312
      %p319 = scmp.eq.s32.totalorder %s29, 7
      %p320 = por %p318, %p319
      %p321 = scmp.ne.s32.totalorder %s313, %s316
      %p322 = scmp.eq.s32.totalorder %s29, 0
      %p323 = por %p321, %p322
      %p324 = scmp.ne.s32.totalorder %s313, %s316
      %p325 = scmp.eq.s32.totalorder %s34, 7
      %p326 = por %p324, %p325
      %p327 = scmp.ne.s32.totalorder %s316, %s317
      %p328 = scmp.eq.s32.totalorder %s34, 0
      %p329 = por %p327, %p328
      %p330 = scmp.ne.s32.totalorder %s316, %s317
      %p331 = scmp.eq.s32.totalorder %s35, 7
      %p332 = por %p330, %p331
      %p334 = scmp.ne.s32.totalorder %s317, %s333
      %p335 = scmp.eq.s32.totalorder %s35, 0
      %p336 = por %p334, %p335
      %s337 = ssub.s32 %s36, %s48
      %s338 = ssub.s32 %s37, %s44
      %s339 = sor.u32 %s337, %s338
      %p340 = scmp.eq.s32.totalorder %s339, 0
      %s342 = sadd.s32 %s341, 1
      %s343 = scalar_select %p340, %s341, %s342
      %p346 = pneg %p340
      %p347 = scmp.eq.s32.totalorder %s29, 7
      %p348 = por %p346, %p347
      %p349 = scmp.ne.s32.totalorder %s341, %s344
      %p350 = scmp.eq.s32.totalorder %s29, 0
      %p351 = por %p349, %p350
      %p352 = scmp.ne.s32.totalorder %s341, %s344
      %p353 = scmp.eq.s32.totalorder %s34, 7
      %p354 = por %p352, %p353
      %p355 = scmp.ne.s32.totalorder %s344, %s345
      %p356 = scmp.eq.s32.totalorder %s34, 0
      %p357 = por %p355, %p356
      %p358 = scmp.ne.s32.totalorder %s344, %s345
      %p359 = scmp.eq.s32.totalorder %s35, 7
      %p360 = por %p358, %p359
      %p362 = scmp.ne.s32.totalorder %s345, %s361
      %p363 = scmp.eq.s32.totalorder %s35, 0
      %p364 = por %p362, %p363
      %p365 = scmp.le.s32.totalorder 1, %s29
      %p366 = scmp.lt.s32.totalorder %s29, 9
      %p367 = pnand %p365, %p366
      %p368 = pneg %p367
      // Predicated region
      $region9: #{msn_forward.7} parent=5 // pred_check
        _
      $region10: #{msn_forward.7} parent=5 // pred_check_branch
        %370 = sbr.rel (%p367) target = $region12
      $region11: #{msn_forward.7} parent=5 // pred_region
        %s371 = ssub.s32 %s29, 1
      $region12: #{msn_forward.7} parent=5 // pred_fallthru
        _
      %p372 = scmp.lt.s32.totalorder %s29, 8
      // Predicated region
      $region13: #{msn_forward.7} parent=5 // pred_check
        %p373 = pneg %p372
      $region14: #{msn_forward.7} parent=5 // pred_check_branch
        %375 = sbr.rel (%p373) target = $region16
      $region15: #{msn_forward.7} parent=5 // pred_region
        // Predicated region
        $region17: #{msn_forward.7} parent=15 // pred_check
          %p376 = pneg %p63
        $region18: #{msn_forward.7} parent=15 // pred_check_branch
          %378 = sbr.rel (%p376) target = $region20
        $region19: #{msn_forward.7} parent=15 // pred_region
          %p379 = scmp.lt.s32.totalorder %s36, 3
          %s380 = scalar_select %p379, %s36, 3
          %p381 = scmp.lt.s32.totalorder %s37, 1
          %s382 = scalar_select %p381, %s37, 1
          %s383 = smul.addr %s380, 2
          %s384 = sadd.s32 %s382, %s383
          %s385 = smul.addr %s384, 8
          %s386 = scalar_lea.vmem %s0, %s385
        $region20: #{msn_forward.7} parent=15 // pred_fallthru
          _
        // Predicated region
        $region21: #{msn_forward.7} parent=15 // pred_check
          %p387 = pneg %p89
        $region22: #{msn_forward.7} parent=15 // pred_check_branch
          %389 = sbr.rel (%p387) target = $region24
        $region23: #{msn_forward.7} parent=15 // pred_region
          %p390 = scmp.lt.s32.totalorder %s37, 1
          %s391 = scalar_select %p390, %s37, 1
          %s392 = scalar_lea.vmem %s1, %s391
        $region24: #{msn_forward.7} parent=15 // pred_fallthru
          _
        // Predicated region
        $region25: #{msn_forward.7} parent=15 // pred_check
          %p393 = pneg %p115
        $region26: #{msn_forward.7} parent=15 // pred_check_branch
          %395 = sbr.rel (%p393) target = $region28
        $region27: #{msn_forward.7} parent=15 // pred_region
          %s396 = sand.u32 %s105, 1
          %s397 = scalar_lea.sflag [#allocation3], %s396
          %s398 = sand.u32 %s105, 1
          %s399 = scalar_lea.vmem [#allocation2], %s398
          %401 = vsyncadd %s397, 0
          %s402 = scalar_lea.hbm %s2, %s36
          %s404 = sshll.u32 %s402, 4
          %s405 = int_to_ptr.hbm [resolvable:$true] %s404
          %s406 = sshll.u32 %s399, 4
          %s407 = int_to_ptr.vmem [resolvable:$true] %s406
          %409 = dma.hbm_to_vmem [thread:$0]  %s405, 16, %s407, %s397
        $region28: #{msn_forward.7} parent=15 // pred_fallthru
          _
        // Predicated region
        $region29: #{msn_forward.7} parent=15 // pred_check
          %p410 = pneg %p141
        $region30: #{msn_forward.7} parent=15 // pred_check_branch
          %412 = sbr.rel (%p410) target = $region32
        $region31: #{msn_forward.7} parent=15 // pred_region
          %s413 = sand.u32 %s29, 1
          %s414 = scalar_lea.sflag [#allocation5], %s413
          %s415 = sand.u32 %s131, 1
          %s416 = smul.addr %s415, 16
          %s417 = scalar_lea.vmem [#allocation4], %s416
          %419 = vsyncadd %s414, 0
          %s420 = smul.addr %s36, 4
          %s421 = smul.addr %s420, 4
          %s422 = scalar_lea.hbm %s3, %s421
          %s423 = sshll.u32 %s422, 4
          %s424 = int_to_ptr.hbm [resolvable:$true] %s423
          %s425 = sshll.u32 %s417, 4
          %s426 = int_to_ptr.vmem [resolvable:$true] %s425
          %431 = dma.hbm_to_vmem [thread:$0]  %s424, 256, %s426, %s414, 64, 64, 4
        $region32: #{msn_forward.7} parent=15 // pred_fallthru
          _
        // Predicated region
        $region33: #{msn_forward.7} parent=15 // pred_check
          %p432 = pneg %p167
        $region34: #{msn_forward.7} parent=15 // pred_check_branch
          %434 = sbr.rel (%p432) target = $region36
        $region35: #{msn_forward.7} parent=15 // pred_region
          %s435 = sand.u32 %s29, 1
          %s436 = scalar_lea.sflag [#allocation5], %s435
          %s437 = sand.u32 %s157, 1
          %s438 = scalar_lea.vmem [#allocation6], %s437
          %440 = vsyncadd %s436, 0
          %s441 = scalar_lea.hbm %s4, %s36
          %s443 = sshll.u32 %s441, 4
          %s444 = int_to_ptr.hbm [resolvable:$true] %s443
          %s445 = sshll.u32 %s438, 4
          %s446 = int_to_ptr.vmem [resolvable:$true] %s445
          %448 = dma.hbm_to_vmem [thread:$0]  %s444, 16, %s446, %s436
        $region36: #{msn_forward.7} parent=15 // pred_fallthru
          _
        // Predicated region
        $region37: #{msn_forward.7} parent=15 // pred_check
          %p449 = pneg %p193
        $region38: #{msn_forward.7} parent=15 // pred_check_branch
          %451 = sbr.rel (%p449) target = $region40
        $region39: #{msn_forward.7} parent=15 // pred_region
          %p452 = scmp.lt.s32.totalorder %s36, 3
          %s453 = scalar_select %p452, %s36, 3
          %s454 = smul.addr %s453, 8
          %s455 = smul.addr %s454, 4
          %s456 = scalar_lea.vmem %s5, %s455
        $region40: #{msn_forward.7} parent=15 // pred_fallthru
          _
        // Predicated region
        $region41: #{msn_forward.7} parent=15 // pred_check
          %p457 = pneg %p219
        $region42: #{msn_forward.7} parent=15 // pred_check_branch
          %459 = sbr.rel (%p457) target = $region44
        $region43: #{msn_forward.7} parent=15 // pred_region
          %s460 = sand.u32 %s29, 1
          %s461 = scalar_lea.sflag [#allocation8], %s460
          %s462 = sand.u32 %s209, 1
          %s463 = scalar_lea.vmem [#allocation7], %s462
          %465 = vsyncadd %s461, 0
          %s466 = scalar_lea.hbm %s6, %s36
          %s468 = sshll.u32 %s466, 4
          %s469 = int_to_ptr.hbm [resolvable:$true] %s468
          %s470 = sshll.u32 %s463, 4
          %s471 = int_to_ptr.vmem [resolvable:$true] %s470
          %473 = dma.hbm_to_vmem [thread:$0]  %s469, 16, %s471, %s461
        $region44: #{msn_forward.7} parent=15 // pred_fallthru
          _
        // Predicated region
        $region45: #{msn_forward.7} parent=15 // pred_check
          %p474 = pneg %p245
        $region46: #{msn_forward.7} parent=15 // pred_check_branch
          %476 = sbr.rel (%p474) target = $region48
        $region47: #{msn_forward.7} parent=15 // pred_region
          %p477 = scmp.lt.s32.totalorder %s36, 3
          %s478 = scalar_select %p477, %s36, 3
          %s479 = smul.addr %s478, 8
          %s480 = smul.addr %s479, 4
          %s481 = scalar_lea.vmem %s7, %s480
        $region48: #{msn_forward.7} parent=15 // pred_fallthru
          _
        // Predicated region
        $region49: #{msn_forward.7} parent=15 // pred_check
          %p482 = pneg %p271
        $region50: #{msn_forward.7} parent=15 // pred_check_branch
          %484 = sbr.rel (%p482) target = $region52
        $region51: #{msn_forward.7} parent=15 // pred_region
          %s485 = sand.u32 %s29, 1
          %s486 = scalar_lea.sflag [#allocation8], %s485
          %s487 = sand.u32 %s261, 1
          %s488 = scalar_lea.vmem [#allocation9], %s487
          %490 = vsyncadd %s486, 0
          %s491 = scalar_lea.hbm %s8, %s36
          %s493 = sshll.u32 %s491, 4
          %s494 = int_to_ptr.hbm [resolvable:$true] %s493
          %s495 = sshll.u32 %s488, 4
          %s496 = int_to_ptr.vmem [resolvable:$true] %s495
          %498 = dma.hbm_to_vmem [thread:$0]  %s494, 16, %s496, %s486
        $region52: #{msn_forward.7} parent=15 // pred_fallthru
          _
        // Predicated region
        $region53: #{msn_forward.7} parent=15 // pred_check
          %p499 = pneg %p297
        $region54: #{msn_forward.7} parent=15 // pred_check_branch
          %501 = sbr.rel (%p499) target = $region56
        $region55: #{msn_forward.7} parent=15 // pred_region
          %s502 = sand.u32 %s287, 1
          %s503 = scalar_lea.sflag [#allocation11], %s502
          %s504 = sand.u32 %s287, 1
          %s505 = smul.addr %s504, 4
          %s506 = scalar_lea.vmem [#allocation10], %s505
          %508 = vsyncadd %s503, 0
          %s509 = smul.addr %s36, 4
          %s510 = scalar_lea.hbm %s9, %s509
          %s512 = sshll.u32 %s510, 4
          %s513 = int_to_ptr.hbm [resolvable:$true] %s512
          %s514 = sshll.u32 %s506, 4
          %s515 = int_to_ptr.vmem [resolvable:$true] %s514
          %517 = dma.hbm_to_vmem [thread:$0]  %s513, 64, %s515, %s503
        $region56: #{msn_forward.7} parent=15 // pred_fallthru
          _
        // Predicated region
        $region57: #{msn_forward.7} parent=15 // pred_check
          %p518 = pneg %p323
        $region58: #{msn_forward.7} parent=15 // pred_check_branch
          %520 = sbr.rel (%p518) target = $region60
        $region59: #{msn_forward.7} parent=15 // pred_region
          %p521 = scmp.lt.s32.totalorder %s36, 3
          %s522 = scalar_select %p521, %s36, 3
          %s523 = smul.addr %s522, 8
          %s524 = scalar_lea.vmem %s10, %s523
        $region60: #{msn_forward.7} parent=15 // pred_fallthru
          _
      $region16: #{msn_forward.7} parent=5 // pred_fallthru
        _
      %p525 = scmp.le.s32.totalorder 1, %s29
      %p526 = scmp.lt.s32.totalorder %s29, 9
      %p527 = pnand %p525, %p526
      %p528 = pneg %p527
      // Predicated region
      $region61: #{msn_forward.7} parent=5 // pred_check
        _
      $region62: #{msn_forward.7} parent=5 // pred_check_branch
        %530 = sbr.rel (%p527) target = $region64
      $region63: #{msn_forward.7} parent=5 // pred_region
        %s531 = ssub.s32 %s29, 1
        %s532 = sand.u32 %s108, 1
        %s533 = scalar_lea.sflag [#allocation3], %s532
        %s534 = sand.u32 %s108, 1
        %s535 = scalar_lea.vmem [#allocation2], %s534
        // Predicated region
        $region65: #{msn_forward.7} parent=63 // pred_check
          %p536 = pneg %p121
        $region66: #{msn_forward.7} parent=63 // pred_check_branch
          %538 = sbr.rel (%p536) target = $region68
        $region67: #{msn_forward.7} parent=63 // pred_region
          %540 = dma.done %s533, 16
        $region68: #{msn_forward.7} parent=63 // pred_fallthru
          _
        %s541 = sand.u32 %s34, 1
        %s542 = scalar_lea.sflag [#allocation5], %s541
        %s543 = sand.u32 %s134, 1
        %s544 = smul.addr %s543, 16
        %s545 = scalar_lea.vmem [#allocation4], %s544
        // Predicated region
        $region69: #{msn_forward.7} parent=63 // pred_check
          %p546 = pneg %p147
        $region70: #{msn_forward.7} parent=63 // pred_check_branch
          %548 = sbr.rel (%p546) target = $region72
        $region71: #{msn_forward.7} parent=63 // pred_region
          %550 = dma.done %s542, 256
        $region72: #{msn_forward.7} parent=63 // pred_fallthru
          _
        %s551 = sand.u32 %s34, 1
        %s552 = scalar_lea.sflag [#allocation5], %s551
        %s553 = sand.u32 %s160, 1
        %s554 = scalar_lea.vmem [#allocation6], %s553
        // Predicated region
        $region73: #{msn_forward.7} parent=63 // pred_check
          %p555 = pneg %p173
        $region74: #{msn_forward.7} parent=63 // pred_check_branch
          %557 = sbr.rel (%p555) target = $region76
        $region75: #{msn_forward.7} parent=63 // pred_region
          %559 = dma.done %s552, 16
        $region76: #{msn_forward.7} parent=63 // pred_fallthru
          _
        %s560 = sand.u32 %s34, 1
        %s561 = scalar_lea.sflag [#allocation8], %s560
        %s562 = sand.u32 %s212, 1
        %s563 = scalar_lea.vmem [#allocation7], %s562
        // Predicated region
        $region77: #{msn_forward.7} parent=63 // pred_check
          %p564 = pneg %p225
        $region78: #{msn_forward.7} parent=63 // pred_check_branch
          %566 = sbr.rel (%p564) target = $region80
        $region79: #{msn_forward.7} parent=63 // pred_region
          %568 = dma.done %s561, 16
        $region80: #{msn_forward.7} parent=63 // pred_fallthru
          _
        %s569 = sand.u32 %s34, 1
        %s570 = scalar_lea.sflag [#allocation8], %s569
        %s571 = sand.u32 %s264, 1
        %s572 = scalar_lea.vmem [#allocation9], %s571
        // Predicated region
        $region81: #{msn_forward.7} parent=63 // pred_check
          %p573 = pneg %p277
        $region82: #{msn_forward.7} parent=63 // pred_check_branch
          %575 = sbr.rel (%p573) target = $region84
        $region83: #{msn_forward.7} parent=63 // pred_region
          %577 = dma.done %s570, 16
        $region84: #{msn_forward.7} parent=63 // pred_fallthru
          _
        %s578 = sand.u32 %s290, 1
        %s579 = scalar_lea.sflag [#allocation11], %s578
        %s580 = sand.u32 %s290, 1
        %s581 = smul.addr %s580, 4
        %s582 = scalar_lea.vmem [#allocation10], %s581
        // Predicated region
        $region85: #{msn_forward.7} parent=63 // pred_check
          %p583 = pneg %p303
        $region86: #{msn_forward.7} parent=63 // pred_check_branch
          %585 = sbr.rel (%p583) target = $region88
        $region87: #{msn_forward.7} parent=63 // pred_region
          %587 = dma.done %s579, 64
        $region88: #{msn_forward.7} parent=63 // pred_fallthru
          _
        %p588 = scmp.lt.s32.totalorder %s38, 3
        %s589 = scalar_select %p588, %s38, 3
        %p590 = scmp.lt.s32.totalorder %s39, 1
        %s591 = scalar_select %p590, %s39, 1
        %s592 = smul.addr %s589, 2
        %s593 = sadd.s32 %s591, %s592
        %s594 = smul.addr %s593, 8
        %s595 = scalar_lea.vmem %s0, %s594
        %p596 = pneg %p69
        %p597 = pneg %p66
        %p598 = scmp.lt.s32.totalorder %s39, 1
        %s599 = scalar_select %p598, %s39, 1
        %s600 = scalar_lea.vmem %s1, %s599
        %p601 = pneg %p95
        %p602 = pneg %p92
        %s603 = sand.u32 %s108, 1
        %s604 = scalar_lea.sflag [#allocation3], %s603
        %s605 = sand.u32 %s108, 1
        %s606 = scalar_lea.vmem [#allocation2], %s605
        %p607 = pneg %p121
        %p608 = pneg %p118
        %s609 = sand.u32 %s34, 1
        %s610 = scalar_lea.sflag [#allocation5], %s609
        %s611 = sand.u32 %s134, 1
        %s612 = smul.addr %s611, 16
        %s613 = scalar_lea.vmem [#allocation4], %s612
        %p614 = pneg %p147
        %p615 = pneg %p144
        %s616 = sand.u32 %s34, 1
        %s617 = scalar_lea.sflag [#allocation5], %s616
        %s618 = sand.u32 %s160, 1
        %s619 = scalar_lea.vmem [#allocation6], %s618
        %p620 = pneg %p173
        %p621 = pneg %p170
        %p622 = scmp.lt.s32.totalorder %s38, 3
        %s623 = scalar_select %p622, %s38, 3
        %s624 = smul.addr %s623, 8
        %s625 = smul.addr %s624, 4
        %s626 = scalar_lea.vmem %s5, %s625
        %p627 = pneg %p199
        %p628 = pneg %p196
        %s629 = sand.u32 %s34, 1
        %s630 = scalar_lea.sflag [#allocation8], %s629
        %s631 = sand.u32 %s212, 1
        %s632 = scalar_lea.vmem [#allocation7], %s631
        %p633 = pneg %p225
        %p634 = pneg %p222
        %p635 = scmp.lt.s32.totalorder %s38, 3
        %s636 = scalar_select %p635, %s38, 3
        %s637 = smul.addr %s636, 8
        %s638 = smul.addr %s637, 4
        %s639 = scalar_lea.vmem %s7, %s638
        %p640 = pneg %p251
        %p641 = pneg %p248
        %s642 = sand.u32 %s34, 1
        %s643 = scalar_lea.sflag [#allocation8], %s642
        %s644 = sand.u32 %s264, 1
        %s645 = scalar_lea.vmem [#allocation9], %s644
        %p646 = pneg %p277
        %p647 = pneg %p274
        %s648 = sand.u32 %s290, 1
        %s649 = scalar_lea.sflag [#allocation11], %s648
        %s650 = sand.u32 %s290, 1
        %s651 = smul.addr %s650, 4
        %s652 = scalar_lea.vmem [#allocation10], %s651
        %p653 = pneg %p303
        %p654 = pneg %p300
        %p655 = scmp.lt.s32.totalorder %s38, 3
        %s656 = scalar_select %p655, %s38, 3
        %s657 = smul.addr %s656, 8
        %s658 = scalar_lea.vmem %s10, %s657
        %p659 = pneg %p329
        %p660 = pneg %p326
        %p661 = pneg %p357
        %p662 = pneg %p354
        %p663 = scmp.lt.s32.totalorder %s38, 3
        %s664 = scalar_select %p663, %s38, 3
        %p665 = scmp.lt.s32.totalorder %s39, 1
        %s666 = scalar_select %p665, %s39, 1
        %s667 = smul.addr %s664, 2
        %s668 = sadd.s32 %s666, %s667
        %s669 = smul.addr %s668, 8
        %s670 = scalar_lea.vmem %s11, %s669
        %p671 = scmp.lt.s32.totalorder %s38, 3
        %s672 = scalar_select %p671, %s38, 3
        %p673 = scmp.lt.s32.totalorder %s39, 1
        %s674 = scalar_select %p673, %s39, 1
        %s675 = smul.addr %s672, 2
        %s676 = sadd.s32 %s674, %s675
        %s677 = smul.addr %s676, 8
        %s678 = scalar_lea.vmem %s0, %s677
        %p679 = scmp.lt.s32.totalorder %s39, 1
        %s680 = scalar_select %p679, %s39, 1
        %s681 = scalar_lea.vmem %s1, %s680
        %p682 = scmp.lt.s32.totalorder %s38, 3
        %s683 = scalar_select %p682, %s38, 3
        %s684 = smul.addr %s683, 8
        %s685 = smul.addr %s684, 4
        %s686 = scalar_lea.vmem %s5, %s685
        %p687 = scmp.lt.s32.totalorder %s38, 3
        %s688 = scalar_select %p687, %s38, 3
        %s689 = smul.addr %s688, 8
        %s690 = smul.addr %s689, 4
        %s691 = scalar_lea.vmem %s7, %s690
        %p692 = scmp.lt.s32.totalorder %s38, 3
        %s693 = scalar_select %p692, %s38, 3
        %s694 = smul.addr %s693, 8
        %s695 = scalar_lea.vmem %s10, %s694
        %p696 = scmp.lt.s32.totalorder %s38, 3
        %s697 = scalar_select %p696, %s38, 3
        %p698 = scmp.lt.s32.totalorder %s39, 1
        %s699 = scalar_select %p698, %s39, 1
        %s700 = smul.addr %s697, 2
        %s701 = sadd.s32 %s699, %s700
        %s702 = smul.addr %s701, 8
        %s703 = scalar_lea.vmem %s11, %s702
        %v705 = vld [vmem:[%s678] sm:$0xff]
        %v706 = vld [vmem:[%s681] sm:$0x1]
        %v707 = vpack.c.bf16 %v706, %v706
        %v708 = vld [vmem:[%s535] sm:$0x1]
        %v709 = vunpack.c.l.bf16 %v708
        %711 = vset.pattern.permute.xlu0 0
        %712 = vperm.xlu0 %711, %v705
        %v713 = vpop.permute.xlu0 %712
        %v715 = vperm.slane %v709, 0
        %v716 = vmul.f32 %v713, %v715
        %717 = vset.pattern.permute.xlu0 1
        %718 = vperm.xlu0 %717, %v705
        %v719 = vpop.permute.xlu0 %718
        %v721 = vperm.slane %v709, 1
        %v722 = vmul.f32 %v719, %v721
        %v723 = vadd.f32 %v716, %v722
        %v724 = vld [vmem:[%s545] sm:$0xf]
        %v725 = vld [vmem:[%s545 + $0x4] sm:$0xf]
        %v726 = vld [vmem:[%s545 + $0x8] sm:$0xf]
        %v727 = vld [vmem:[%s545 + $0xc] sm:$0xf]
        %v732 = vunpack.c.l.b16 %v724
        %v733 = vunpack.c.l.b16 %v725
        %v734 = vunpack.c.l.b16 %v726
        %v735 = vunpack.c.l.b16 %v727
        %v736 = vpack.c.b16 %v733, %v732
        %v737 = vpack.c.b16 %v735, %v734
        %vm740 = vcmask 261120
        %v742 = vsel %vm740, %v707, 0
        %744 = vmatpush.bf16.msra.mxu0 0
        %745 = vmatpush.bf16.msra.mxu0 0
        %746 = vmatpush.bf16.msra.mxu0 0
        %747 = vmatpush.bf16.msra.mxu0 0
        %748 = vmatpush.bf16.msra.mxu0 0
        %749 = vmatpush.bf16.msra.mxu0 0
        %750 = vmatpush.bf16.msra.mxu0 %v737
        %751 = vmatpush.bf16.msra.mxu0 %v736
        %752 = vmatmul.bf16.gmra.mxu0 %v742
        %v753 = vpop.f32.mrf.mxu0
        %v754 = vadd.f32 0.0, %v753
        %v755 = vpop.f32.mrf.mxu0
        %756 = vdwg.mxu0
        %v757 = vperm.slane %v754, 0
        %v758 = vadd.f32 %v723, %v757
        %v759 = vld [vmem:[%s554] sm:$0x1]
        %v761 = vperm.slane %v759, 0
        %v763 = vadd.f32 %v758, %v761
        %v764 = vmax.f32 %v763, 0.0
        %v765 = vpack.c.bf16 %v764, %v764
        %v766 = vld [vmem:[%s686] sm:$0xf]
        %v767 = vld [vmem:[%s686 + $0x4] sm:$0xf]
        %v768 = vld [vmem:[%s686 + $0x8] sm:$0xf]
        %v769 = vld [vmem:[%s686 + $0xc] sm:$0xf]
        %v770 = vld [vmem:[%s686 + $0x10] sm:$0xf]
        %v771 = vld [vmem:[%s686 + $0x14] sm:$0xf]
        %v772 = vld [vmem:[%s686 + $0x18] sm:$0xf]
        %v773 = vld [vmem:[%s686 + $0x1c] sm:$0xf]
        %v774 = vld [vmem:[%s563] sm:$0x1]
        %v776 = vperm.slane %v774, 0
        %v786 = vunpack.c.l.b16 %v766
        %v787 = vunpack.c.l.b16 %v767
        %v788 = vunpack.c.l.b16 %v768
        %v789 = vunpack.c.l.b16 %v769
        %v790 = vunpack.c.l.b16 %v770
        %v791 = vunpack.c.l.b16 %v771
        %v792 = vunpack.c.l.b16 %v772
        %v793 = vunpack.c.l.b16 %v773
        %v794 = vpack.c.b16 %v787, %v786
        %v795 = vpack.c.b16 %v789, %v788
        %v796 = vpack.c.b16 %v791, %v790
        %v797 = vpack.c.b16 %v793, %v792
        %vm802 = vcmask 523264
        %v804 = vsel %vm802, %v765, 0
        %806 = vmatpush.bf16.msra.mxu0 0
        %807 = vmatpush.bf16.msra.mxu0 0
        %808 = vmatpush.bf16.msra.mxu0 0
        %809 = vmatpush.bf16.msra.mxu0 0
        %810 = vmatpush.bf16.msra.mxu0 %v797
        %811 = vmatpush.bf16.msra.mxu0 %v796
        %812 = vmatpush.bf16.msra.mxu0 %v795
        %813 = vmatpush.bf16.msra.mxu0 %v794
        %814 = vmatmul.bf16.gmra.mxu0 %v804
        %v815 = vpop.f32.mrf.mxu0
        %v816 = vadd.f32 %v776, %v815
        %v817 = vpop.f32.mrf.mxu0
        %818 = vdwg.mxu0
        %v819 = vmax.f32 %v816, 0.0
        %v820 = vpack.c.bf16 %v819, %v819
        %v821 = vld [vmem:[%s691] sm:$0xf]
        %v822 = vld [vmem:[%s691 + $0x4] sm:$0xf]
        %v823 = vld [vmem:[%s691 + $0x8] sm:$0xf]
        %v824 = vld [vmem:[%s691 + $0xc] sm:$0xf]
        %v825 = vld [vmem:[%s691 + $0x10] sm:$0xf]
        %v826 = vld [vmem:[%s691 + $0x14] sm:$0xf]
        %v827 = vld [vmem:[%s691 + $0x18] sm:$0xf]
        %v828 = vld [vmem:[%s691 + $0x1c] sm:$0xf]
        %v829 = vld [vmem:[%s572] sm:$0x1]
        %v831 = vperm.slane %v829, 0
        %v841 = vunpack.c.l.b16 %v821
        %v842 = vunpack.c.l.b16 %v822
        %v843 = vunpack.c.l.b16 %v823
        %v844 = vunpack.c.l.b16 %v824
        %v845 = vunpack.c.l.b16 %v825
        %v846 = vunpack.c.l.b16 %v826
        %v847 = vunpack.c.l.b16 %v827
        %v848 = vunpack.c.l.b16 %v828
        %v849 = vpack.c.b16 %v842, %v841
        %v850 = vpack.c.b16 %v844, %v843
        %v851 = vpack.c.b16 %v846, %v845
        %v852 = vpack.c.b16 %v848, %v847
        %v858 = vsel %vm802, %v820, 0
        %860 = vmatpush.bf16.msra.mxu0 0
        %861 = vmatpush.bf16.msra.mxu0 0
        %862 = vmatpush.bf16.msra.mxu0 0
        %863 = vmatpush.bf16.msra.mxu0 0
        %864 = vmatpush.bf16.msra.mxu0 %v852
        %865 = vmatpush.bf16.msra.mxu0 %v851
        %866 = vmatpush.bf16.msra.mxu0 %v850
        %867 = vmatpush.bf16.msra.mxu0 %v849
        %868 = vmatmul.bf16.gmra.mxu0 %v858
        %v869 = vpop.f32.mrf.mxu0
        %v870 = vadd.f32 %v831, %v869
        %v871 = vpop.f32.mrf.mxu0
        %872 = vdwg.mxu0
        %v873 = vmax.f32 %v870, 0.0
        %v874 = vpack.c.bf16 %v873, %v873
        %v875 = vld [vmem:[%s582] sm:$0xf]
        %v876 = vld [vmem:[%s695] sm:$0xff]
        %878 = vset.pattern.permute.xlu0 0
        %879 = vperm.xlu0 %878, %v876
        %v880 = vpop.permute.xlu0 %879
        %v883 = vsel %vm802, %v875, 0
        %v886 = vsel %vm802, %v874, 0
        %888 = vmatpush.bf16.xpose.msra.mxu0 0
        %889 = vmatpush.bf16.xpose.msra.mxu0 0
        %890 = vmatpush.bf16.xpose.msra.mxu0 0
        %891 = vmatpush.bf16.xpose.msra.mxu0 0
        %892 = vmatpush.bf16.xpose.msra.mxu0 0
        %893 = vmatpush.bf16.xpose.msra.mxu0 0
        %894 = vmatpush.bf16.xpose.msra.mxu0 0
        %895 = vmatpush.bf16.xpose.msra.mxu0 %v886
        %896 = vmatmul.bf16.gmra.mxu0 %v883
        %v897 = vpop.f32.mrf.mxu0
        %v898 = vadd.f32 %v880, %v897
        %v899 = vpop.f32.mrf.mxu0
        %900 = vdwg.mxu0
        %v901 = vtanh.pop %v898
        %vm902 = vcmask 64512
        %903 = vst.msk [vmem:[%s703] sm:$0xff] %vm902, %v901
        %p904 = scmp.lt.s32.totalorder %s38, 3
        %s905 = scalar_select %p904, %s38, 3
        %p906 = scmp.lt.s32.totalorder %s39, 1
        %s907 = scalar_select %p906, %s39, 1
        %s908 = smul.addr %s905, 2
        %s909 = sadd.s32 %s907, %s908
        %s910 = smul.addr %s909, 8
        %s911 = scalar_lea.vmem %s11, %s910
        // Predicated region
        $region89: #{msn_forward.7} parent=63 // pred_check
          %p912 = pneg %p354
        $region90: #{msn_forward.7} parent=63 // pred_check_branch
          %914 = sbr.rel (%p912) target = $region92
        $region91: #{msn_forward.7} parent=63 // pred_region
          _
        $region92: #{msn_forward.7} parent=63 // pred_fallthru
          _
      $region64: #{msn_forward.7} parent=5 // pred_fallthru
        _
      %p915 = scmp.le.s32.totalorder 2, %s29
      // Predicated region
      $region93: #{msn_forward.7} parent=5 // pred_check
        %p916 = pneg %p915
      $region94: #{msn_forward.7} parent=5 // pred_check_branch
        %918 = sbr.rel (%p916) target = $region96
      $region95: #{msn_forward.7} parent=5 // pred_region
        %s919 = ssub.s32 %s29, 2
        // Predicated region
        $region97: #{msn_forward.7} parent=95 // pred_check
          %p920 = pneg %p360
        $region98: #{msn_forward.7} parent=95 // pred_check_branch
          %922 = sbr.rel (%p920) target = $region100
        $region99: #{msn_forward.7} parent=95 // pred_region
          %p923 = scmp.lt.s32.totalorder %s40, 3
          %s924 = scalar_select %p923, %s40, 3
          %p925 = scmp.lt.s32.totalorder %s41, 1
          %s926 = scalar_select %p925, %s41, 1
          %s927 = smul.addr %s924, 2
          %s928 = sadd.s32 %s926, %s927
          %s929 = smul.addr %s928, 8
          %s930 = scalar_lea.vmem %s11, %s929
        $region100: #{msn_forward.7} parent=95 // pred_fallthru
          _
      $region96: #{msn_forward.7} parent=5 // pred_fallthru
        _
    $region6: #{msn_forward.7} parent=1 // loop_footer
      %s33 = sadd.s32 1, %s29
    $region7: #{msn_forward.7} parent=1 // loop_footer_branch
      %28 = sbr.rel target = $region3
    $region8: #{msn_forward.7} parent=1 // loop_exit
      _
    %931 = vsyncpa [#allocation3], 1
    %s932 = scalar_lea.sflag [#allocation3], 1
    %933 = vsyncpa %s932, 1
    %934 = vsyncpa [#allocation5], 1
    %s935 = scalar_lea.sflag [#allocation5], 1
    %936 = vsyncpa %s935, 1
    %937 = vsyncpa [#allocation8], 1
    %s938 = scalar_lea.sflag [#allocation8], 1
    %939 = vsyncpa %s938, 1
    %940 = vsyncpa [#allocation11], 1
    %s941 = scalar_lea.sflag [#allocation11], 1
    %942 = vsyncpa %s941, 1

// kernel: msn_forward.6
$region0: #{msn_forward.6}
  #allocation0 [shape = 'u32[]', space=smem, size = 0x4, offset = 0x4, fixed_abs, tag = 'smem constant byte address 0x4 - core index']
  #allocation1 [shape = 'u32[72,128]{1,0:T(1,128)}', space=vmem, size = 0x9000, scoped, tag = 'internal scratch']
  %s0 = inlined_call_operand.vmem [shape: bf16[2,12,16], index: 0, kind: input, shape index: {}]
  %s1 = inlined_call_operand.vmem [shape: bf16[16,64], index: 1, kind: input, shape index: {}]
  %s2 = inlined_call_operand.vmem [shape: f32[1,64], index: 2, kind: input, shape index: {}]
  %s3 = inlined_call_operand.hbm [shape: bf16[64,128], index: 3, kind: input, shape index: {}]
  %s4 = inlined_call_operand.vmem [shape: f32[1,128], index: 4, kind: input, shape index: {}]
  %s5 = inlined_call_operand.hbm [shape: bf16[128,1024], index: 5, kind: input, shape index: {}]
  %s6 = inlined_call_operand.vmem [shape: f32[1,1024], index: 6, kind: input, shape index: {}]
  %s7 = inlined_call_operand.vmem [shape: f32[2,1,1024], index: 7, kind: output, shape index: {}]
  %s8 = sld [smem:[#allocation0]]
  $region77: #{msn_forward.6} parent=0
    _
  %s10 = ssub.s32 1, %s8
  %s11 = scalar_select 0, %s10, %s8
  $region1: #{msn_forward.6} parent=0
    #allocation2 [shape = 'u8[16384]{0}', space=vmem, size = 0x4000, scoped, tag = 'input window, operand 3, single buffered']
    #allocation3 [shape = 's32[2]{0}', space=sflag, size = 0x8, scoped, tag = 'scoped memory for msn_forward.6']
    #allocation4 [shape = 'u8[262144]{0}', space=vmem, size = 0x40000, scoped, tag = 'input window, operand 5, single buffered']
    #allocation5 [shape = 's32[1]{0}', space=sflag, size = 0x4, scoped, tag = 'scoped memory for msn_forward.6']
    %12 = vsyncpa [#allocation3], 0
    %13 = vsyncpa [#allocation5], 0
    loop: start=0, step=1, limit=4
    $region2: #{msn_forward.6} parent=1 // loop_pre_header
      _
    $region3: #{msn_forward.6} parent=1 // loop_header
      %s15 = sphi 0, %s19
      %p16 = scmp.ge.s32.totalorder %s15, 4
      %s22 = sphi 0, %s34
      %s23 = sphi 0, %s30
      %s24 = sphi 0, %s22
      %s25 = sphi 0, %s23
      %s26 = sphi 0, %s24
      %s27 = sphi 0, %s25
      %s39 = sphi 0, %s41
      %s42 = sphi 0, %s39
      %s43 = sphi 0, %s42
      %s59 = sphi 0, %s43
      %s63 = sphi 0, %s63
      %s65 = sphi 0, %s63
      %s66 = sphi 0, %s65
      %s80 = sphi 0, %s66
      %s84 = sphi 0, %s84
      %s86 = sphi 0, %s84
      %s87 = sphi 0, %s86
      %s101 = sphi 0, %s87
      %s105 = sphi 0, %s105
      %s107 = sphi 0, %s105
      %s108 = sphi 0, %s107
      %s122 = sphi 0, %s108
      %s126 = sphi 0, %s126
      %s128 = sphi 0, %s126
      %s129 = sphi 0, %s128
      %s143 = sphi 0, %s129
      %s147 = sphi 0, %s147
      %s149 = sphi 0, %s147
      %s150 = sphi 0, %s149
      %s164 = sphi 0, %s150
      %s168 = sphi 0, %s168
      %s170 = sphi 0, %s168
      %s171 = sphi 0, %s170
      %s185 = sphi 0, %s171
      %s191 = sphi 0, %s193
      %s194 = sphi 0, %s191
      %s195 = sphi 0, %s194
      %s211 = sphi 0, %s195
    $region4: #{msn_forward.6} parent=1 // loop_header_branch
      %18 = sbr.rel (%p16) target = $region8
    $region5: #{msn_forward.6} parent=1 // loop_body
      %s20 = ssub.s32 %s15, 1
      %s21 = ssub.s32 %s15, 2
      %s28 = sadd.s32 1, %s23
      %p29 = scmp.ge.s32.totalorder %s28, 1
      %s30 = scalar_select %p29, 0, %s28
      %s31 = sadd.s32 1, %s22
      %s32 = scalar_select %p29, %s31, %s22
      %p33 = scmp.ge.s32.totalorder %s32, 2
      %s34 = scalar_select %p33, 0, %s32
      %s35 = ssub.s32 %s22, %s34
      %s36 = ssub.s32 %s23, %s30
      %s37 = sor.u32 %s35, %s36
      %p38 = scmp.eq.s32.totalorder %s37, 0
      %s40 = sadd.s32 %s39, 1
      %s41 = scalar_select %p38, %s39, %s40
      %p44 = pneg %p38
      %p45 = scmp.eq.s32.totalorder %s15, 1
      %p46 = por %p44, %p45
      %p47 = scmp.ne.s32.totalorder %s39, %s42
      %p48 = scmp.eq.s32.totalorder %s15, 0
      %p49 = por %p47, %p48
      %p50 = scmp.ne.s32.totalorder %s39, %s42
      %p51 = scmp.eq.s32.totalorder %s20, 1
      %p52 = por %p50, %p51
      %p53 = scmp.ne.s32.totalorder %s42, %s43
      %p54 = scmp.eq.s32.totalorder %s20, 0
      %p55 = por %p53, %p54
      %p56 = scmp.ne.s32.totalorder %s42, %s43
      %p57 = scmp.eq.s32.totalorder %s21, 1
      %p58 = por %p56, %p57
      %p60 = scmp.ne.s32.totalorder %s43, %s59
      %p61 = scmp.eq.s32.totalorder %s21, 0
      %p62 = por %p60, %p61
      %s64 = sadd.s32 %s63, 1
      %p67 = scmp.eq.s32.totalorder %s15, 1
      %p68 = scmp.ne.s32.totalorder %s63, %s65
      %p69 = scmp.eq.s32.totalorder %s15, 0
      %p70 = por %p68, %p69
      %p71 = scmp.ne.s32.totalorder %s63, %s65
      %p72 = scmp.eq.s32.totalorder %s20, 1
      %p73 = por %p71, %p72
      %p74 = scmp.ne.s32.totalorder %s65, %s66
      %p75 = scmp.eq.s32.totalorder %s20, 0
      %p76 = por %p74, %p75
      %p77 = scmp.ne.s32.totalorder %s65, %s66
      %p78 = scmp.eq.s32.totalorder %s21, 1
      %p79 = por %p77, %p78
      %p81 = scmp.ne.s32.totalorder %s66, %s80
      %p82 = scmp.eq.s32.totalorder %s21, 0
      %p83 = por %p81, %p82
      %s85 = sadd.s32 %s84, 1
      %p88 = scmp.eq.s32.totalorder %s15, 1
      %p89 = scmp.ne.s32.totalorder %s84, %s86
      %p90 = scmp.eq.s32.totalorder %s15, 0
      %p91 = por %p89, %p90
      %p92 = scmp.ne.s32.totalorder %s84, %s86
      %p93 = scmp.eq.s32.totalorder %s20, 1
      %p94 = por %p92, %p93
      %p95 = scmp.ne.s32.totalorder %s86, %s87
      %p96 = scmp.eq.s32.totalorder %s20, 0
      %p97 = por %p95, %p96
      %p98 = scmp.ne.s32.totalorder %s86, %s87
      %p99 = scmp.eq.s32.totalorder %s21, 1
      %p100 = por %p98, %p99
      %p102 = scmp.ne.s32.totalorder %s87, %s101
      %p103 = scmp.eq.s32.totalorder %s21, 0
      %p104 = por %p102, %p103
      %s106 = sadd.s32 %s105, 1
      %p109 = scmp.eq.s32.totalorder %s15, 1
      %p110 = scmp.ne.s32.totalorder %s105, %s107
      %p111 = scmp.eq.s32.totalorder %s15, 0
      %p112 = por %p110, %p111
      %p113 = scmp.ne.s32.totalorder %s105, %s107
      %p114 = scmp.eq.s32.totalorder %s20, 1
      %p115 = por %p113, %p114
      %p116 = scmp.ne.s32.totalorder %s107, %s108
      %p117 = scmp.eq.s32.totalorder %s20, 0
      %p118 = por %p116, %p117
      %p119 = scmp.ne.s32.totalorder %s107, %s108
      %p120 = scmp.eq.s32.totalorder %s21, 1
      %p121 = por %p119, %p120
      %p123 = scmp.ne.s32.totalorder %s108, %s122
      %p124 = scmp.eq.s32.totalorder %s21, 0
      %p125 = por %p123, %p124
      %s127 = sadd.s32 %s126, 1
      %p130 = scmp.eq.s32.totalorder %s15, 1
      %p131 = scmp.ne.s32.totalorder %s126, %s128
      %p132 = scmp.eq.s32.totalorder %s15, 0
      %p133 = por %p131, %p132
      %p134 = scmp.ne.s32.totalorder %s126, %s128
      %p135 = scmp.eq.s32.totalorder %s20, 1
      %p136 = por %p134, %p135
      %p137 = scmp.ne.s32.totalorder %s128, %s129
      %p138 = scmp.eq.s32.totalorder %s20, 0
      %p139 = por %p137, %p138
      %p140 = scmp.ne.s32.totalorder %s128, %s129
      %p141 = scmp.eq.s32.totalorder %s21, 1
      %p142 = por %p140, %p141
      %p144 = scmp.ne.s32.totalorder %s129, %s143
      %p145 = scmp.eq.s32.totalorder %s21, 0
      %p146 = por %p144, %p145
      %s148 = sadd.s32 %s147, 1
      %p151 = scmp.eq.s32.totalorder %s15, 1
      %p152 = scmp.ne.s32.totalorder %s147, %s149
      %p153 = scmp.eq.s32.totalorder %s15, 0
      %p154 = por %p152, %p153
      %p155 = scmp.ne.s32.totalorder %s147, %s149
      %p156 = scmp.eq.s32.totalorder %s20, 1
      %p157 = por %p155, %p156
      %p158 = scmp.ne.s32.totalorder %s149, %s150
      %p159 = scmp.eq.s32.totalorder %s20, 0
      %p160 = por %p158, %p159
      %p161 = scmp.ne.s32.totalorder %s149, %s150
      %p162 = scmp.eq.s32.totalorder %s21, 1
      %p163 = por %p161, %p162
      %p165 = scmp.ne.s32.totalorder %s150, %s164
      %p166 = scmp.eq.s32.totalorder %s21, 0
      %p167 = por %p165, %p166
      %s169 = sadd.s32 %s168, 1
      %p172 = scmp.eq.s32.totalorder %s15, 1
      %p173 = scmp.ne.s32.totalorder %s168, %s170
      %p174 = scmp.eq.s32.totalorder %s15, 0
      %p175 = por %p173, %p174
      %p176 = scmp.ne.s32.totalorder %s168, %s170
      %p177 = scmp.eq.s32.totalorder %s20, 1
      %p178 = por %p176, %p177
      %p179 = scmp.ne.s32.totalorder %s170, %s171
      %p180 = scmp.eq.s32.totalorder %s20, 0
      %p181 = por %p179, %p180
      %p182 = scmp.ne.s32.totalorder %s170, %s171
      %p183 = scmp.eq.s32.totalorder %s21, 1
      %p184 = por %p182, %p183
      %p186 = scmp.ne.s32.totalorder %s171, %s185
      %p187 = scmp.eq.s32.totalorder %s21, 0
      %p188 = por %p186, %p187
      %s189 = ssub.s32 %s22, %s34
      %p190 = scmp.eq.s32.totalorder %s189, 0
      %s192 = sadd.s32 %s191, 1
      %s193 = scalar_select %p190, %s191, %s192
      %p196 = pneg %p190
      %p197 = scmp.eq.s32.totalorder %s15, 1
      %p198 = por %p196, %p197
      %p199 = scmp.ne.s32.totalorder %s191, %s194
      %p200 = scmp.eq.s32.totalorder %s15, 0
      %p201 = por %p199, %p200
      %p202 = scmp.ne.s32.totalorder %s191, %s194
      %p203 = scmp.eq.s32.totalorder %s20, 1
      %p204 = por %p202, %p203
      %p205 = scmp.ne.s32.totalorder %s194, %s195
      %p206 = scmp.eq.s32.totalorder %s20, 0
      %p207 = por %p205, %p206
      %p208 = scmp.ne.s32.totalorder %s194, %s195
      %p209 = scmp.eq.s32.totalorder %s21, 1
      %p210 = por %p208, %p209
      %p212 = scmp.ne.s32.totalorder %s195, %s211
      %p213 = scmp.eq.s32.totalorder %s21, 0
      %p214 = por %p212, %p213
      %p215 = scmp.le.s32.totalorder 1, %s15
      %p216 = scmp.lt.s32.totalorder %s15, 3
      %p217 = pnand %p215, %p216
      %p218 = pneg %p217
      // Predicated region
      $region9: #{msn_forward.6} parent=5 // pred_check
        _
      $region10: #{msn_forward.6} parent=5 // pred_check_branch
        %220 = sbr.rel (%p217) target = $region12
      $region11: #{msn_forward.6} parent=5 // pred_region
        %s221 = ssub.s32 %s15, 1
        // Predicated region
        $region13: #{msn_forward.6} parent=11 // pred_check
          %p222 = pneg %p76
        $region14: #{msn_forward.6} parent=11 // pred_check_branch
          %224 = sbr.rel (%p222) target = $region16
        $region15: #{msn_forward.6} parent=11 // pred_region
          _
        $region16: #{msn_forward.6} parent=11 // pred_fallthru
          _
        // Predicated region
        $region17: #{msn_forward.6} parent=11 // pred_check
          %p225 = pneg %p97
        $region18: #{msn_forward.6} parent=11 // pred_check_branch
          %227 = sbr.rel (%p225) target = $region20
        $region19: #{msn_forward.6} parent=11 // pred_region
          _
        $region20: #{msn_forward.6} parent=11 // pred_fallthru
          _
        // Predicated region
        $region21: #{msn_forward.6} parent=11 // pred_check
          %p228 = pneg %p118
        $region22: #{msn_forward.6} parent=11 // pred_check_branch
          %230 = sbr.rel (%p228) target = $region24
        $region23: #{msn_forward.6} parent=11 // pred_region
          %232 = vsyncadd [#allocation3], 0
          %s233 = sshll.u32 %s3, 4
          %s234 = int_to_ptr.hbm [resolvable:$true] %s233
          %s235 = sshll.u32 [#allocation2], 4
          %s236 = int_to_ptr.vmem [resolvable:$true] %s235
          %241 = dma.hbm_to_vmem [thread:$0]  %s234, 512, %s236, [#allocation3], 64, 64, 4
        $region24: #{msn_forward.6} parent=11 // pred_fallthru
          _
        // Predicated region
        $region25: #{msn_forward.6} parent=11 // pred_check
          %p242 = pneg %p139
        $region26: #{msn_forward.6} parent=11 // pred_check_branch
          %244 = sbr.rel (%p242) target = $region28
        $region27: #{msn_forward.6} parent=11 // pred_region
          _
        $region28: #{msn_forward.6} parent=11 // pred_fallthru
          _
        // Predicated region
        $region29: #{msn_forward.6} parent=11 // pred_check
          %p245 = pneg %p160
        $region30: #{msn_forward.6} parent=11 // pred_check_branch
          %247 = sbr.rel (%p245) target = $region32
        $region31: #{msn_forward.6} parent=11 // pred_region
          %249 = vsyncadd [#allocation5], 0
          %s250 = sshll.u32 %s5, 4
          %s251 = int_to_ptr.hbm [resolvable:$true] %s250
          %s252 = sshll.u32 [#allocation4], 4
          %s253 = int_to_ptr.vmem [resolvable:$true] %s252
          %258 = dma.hbm_to_vmem [thread:$0]  %s251, 8192, %s253, [#allocation5], 512, 512, 32
        $region32: #{msn_forward.6} parent=11 // pred_fallthru
          _
        // Predicated region
        $region33: #{msn_forward.6} parent=11 // pred_check
          %p259 = pneg %p181
        $region34: #{msn_forward.6} parent=11 // pred_check_branch
          %261 = sbr.rel (%p259) target = $region36
        $region35: #{msn_forward.6} parent=11 // pred_region
          _
        $region36: #{msn_forward.6} parent=11 // pred_fallthru
          _
      $region12: #{msn_forward.6} parent=5 // pred_fallthru
        _
      %p262 = scmp.lt.s32.totalorder %s15, 2
      // Predicated region
      $region37: #{msn_forward.6} parent=5 // pred_check
        %p263 = pneg %p262
      $region38: #{msn_forward.6} parent=5 // pred_check_branch
        %265 = sbr.rel (%p263) target = $region40
      $region39: #{msn_forward.6} parent=5 // pred_region
        // Predicated region
        $region41: #{msn_forward.6} parent=39 // pred_check
          %p266 = pneg %p49
        $region42: #{msn_forward.6} parent=39 // pred_check_branch
          %268 = sbr.rel (%p266) target = $region44
        $region43: #{msn_forward.6} parent=39 // pred_region
          %s269 = smul.u32 2, %s23
          %p270 = scmp.lt.s32.totalorder %s22, 1
          %s271 = scalar_select %p270, %s22, 1
          %p272 = scmp.lt.s32.totalorder %s269, 1
          %s273 = scalar_select %p272, %s269, 1
          %s274 = smul.addr %s271, 2
          %s275 = sadd.s32 %s273, %s274
          %s276 = smul.addr %s275, 4
          %s277 = scalar_lea.vmem %s0, %s276
          %s278 = smul.u32 2, %s23
        $region44: #{msn_forward.6} parent=39 // pred_fallthru
          _
      $region40: #{msn_forward.6} parent=5 // pred_fallthru
        _
      %p279 = scmp.le.s32.totalorder 1, %s15
      %p280 = scmp.lt.s32.totalorder %s15, 3
      %p281 = pnand %p279, %p280
      %p282 = pneg %p281
      // Predicated region
      $region45: #{msn_forward.6} parent=5 // pred_check
        _
      $region46: #{msn_forward.6} parent=5 // pred_check_branch
        %284 = sbr.rel (%p281) target = $region48
      $region47: #{msn_forward.6} parent=5 // pred_region
        %s285 = ssub.s32 %s15, 1
        // Predicated region
        $region49: #{msn_forward.6} parent=47 // pred_check
          %p286 = pneg %p118
        $region50: #{msn_forward.6} parent=47 // pred_check_branch
          %288 = sbr.rel (%p286) target = $region52
        $region51: #{msn_forward.6} parent=47 // pred_region
          %290 = dma.done [#allocation3], 512
        $region52: #{msn_forward.6} parent=47 // pred_fallthru
          _
        // Predicated region
        $region53: #{msn_forward.6} parent=47 // pred_check
          %p291 = pneg %p160
        $region54: #{msn_forward.6} parent=47 // pred_check_branch
          %293 = sbr.rel (%p291) target = $region56
        $region55: #{msn_forward.6} parent=47 // pred_region
          %295 = dma.done [#allocation5], 8192
        $region56: #{msn_forward.6} parent=47 // pred_fallthru
          _
        %s296 = smul.u32 2, %s25
        %p297 = scmp.lt.s32.totalorder %s24, 1
        %s298 = scalar_select %p297, %s24, 1
        %p299 = scmp.lt.s32.totalorder %s296, 1
        %s300 = scalar_select %p299, %s296, 1
        %s301 = smul.addr %s298, 2
        %s302 = sadd.s32 %s300, %s301
        %s303 = smul.addr %s302, 4
        %s304 = scalar_lea.vmem %s0, %s303
        %p305 = pneg %p55
        %p306 = pneg %p52
        %p307 = pneg %p76
        %p308 = pneg %p73
        %p309 = pneg %p97
        %p310 = pneg %p94
        %p311 = pneg %p118
        %p312 = pneg %p115
        %p313 = pneg %p139
        %p314 = pneg %p136
        %p315 = pneg %p160
        %p316 = pneg %p157
        %p317 = pneg %p181
        %p318 = pneg %p178
        %p319 = pneg %p207
        %p320 = pneg %p204
        %p321 = scmp.lt.s32.totalorder %s24, 1
        %s322 = scalar_select %p321, %s24, 1
        %s323 = smul.addr %s322, 8
        %s324 = scalar_lea.vmem %s7, %s323
        %s325 = smul.u32 2, %s25
        %p326 = scmp.lt.s32.totalorder %s24, 1
        %s327 = scalar_select %p326, %s24, 1
        %p328 = scmp.lt.s32.totalorder %s325, 1
        %s329 = scalar_select %p328, %s325, 1
        %s330 = smul.addr %s327, 2
        %s331 = sadd.s32 %s329, %s330
        %s332 = smul.addr %s331, 4
        %s333 = scalar_lea.vmem %s0, %s332
        %s334 = smul.u32 2, %s25
        %p335 = scmp.lt.s32.totalorder %s24, 1
        %s336 = scalar_select %p335, %s24, 1
        %s337 = smul.addr %s336, 8
        %s338 = scalar_lea.vmem %s7, %s337
        %v340 = vld [vmem:[%s333] sm:$0xf]
        %v341 = vld [vmem:[%s333 + $0x4] sm:$0x3]
        %v342 = vld [vmem:[%s1] sm:$0xf]
        %v343 = vld [vmem:[%s1 + $0x4] sm:$0xf]
        %v344 = vld [vmem:[%s2] sm:$0x1]
        %v346 = vperm.slane %v344, 0
        %v350 = vunpack.c.l.b16 %v340
        %v351 = vunpack.c.l.b16 %v341
        %v352 = vpack.c.b16 %v351, %v350
        %v355 = vunpack.c.l.b16 %v342
        %v356 = vunpack.c.l.b16 %v343
        %v357 = vpack.c.b16 %v356, %v355
        %vm359 = vcmask 130048
        %v361 = vsel %vm359, %v352, 0
        %363 = vmatpush.bf16.msra.mxu0 0
        %364 = vmatpush.bf16.msra.mxu0 0
        %365 = vmatpush.bf16.msra.mxu0 0
        %366 = vmatpush.bf16.msra.mxu0 0
        %367 = vmatpush.bf16.msra.mxu0 0
        %368 = vmatpush.bf16.msra.mxu0 0
        %369 = vmatpush.bf16.msra.mxu0 0
        %370 = vmatpush.bf16.msra.mxu0 %v357
        %371 = vmatmul.bf16.gmra.mxu0 %v361
        %v372 = vpop.f32.mrf.mxu0
        %v373 = vadd.f32 %v346, %v372
        %v374 = vpop.f32.mrf.mxu0
        %v375 = vadd.f32 %v346, %v374
        %376 = vdwg.mxu0
        %v377 = vmax.f32 %v373, 0.0
        %v378 = vmax.f32 %v375, 0.0
        %v379 = vpack.c.bf16 %v378, %v377
        %v380 = vld [vmem:[#allocation2] sm:$0xf]
        %v381 = vld [vmem:[#allocation2 + $0x4] sm:$0xf]
        %v382 = vld [vmem:[#allocation2 + $0x8] sm:$0xf]
        %v383 = vld [vmem:[#allocation2 + $0xc] sm:$0xf]
        %v384 = vld [vmem:[#allocation2 + $0x10] sm:$0xf]
        %v385 = vld [vmem:[#allocation2 + $0x14] sm:$0xf]
        %v386 = vld [vmem:[#allocation2 + $0x18] sm:$0xf]
        %v387 = vld [vmem:[#allocation2 + $0x1c] sm:$0xf]
        %v388 = vld [vmem:[%s4] sm:$0x1]
        %v390 = vperm.slane %v388, 0
        %v400 = vunpack.c.l.b16 %v380
        %v401 = vunpack.c.l.b16 %v381
        %v402 = vunpack.c.l.b16 %v382
        %v403 = vunpack.c.l.b16 %v383
        %v404 = vunpack.c.l.b16 %v384
        %v405 = vunpack.c.l.b16 %v385
        %v406 = vunpack.c.l.b16 %v386
        %v407 = vunpack.c.l.b16 %v387
        %v408 = vpack.c.b16 %v401, %v400
        %v409 = vpack.c.b16 %v403, %v402
        %v410 = vpack.c.b16 %v405, %v404
        %v411 = vpack.c.b16 %v407, %v406
        %vm416 = vcmask 523264
        %v418 = vsel %vm416, %v379, 0
        %420 = vmatpush.bf16.msra.mxu0 0
        %421 = vmatpush.bf16.msra.mxu0 0
        %422 = vmatpush.bf16.msra.mxu0 0
        %423 = vmatpush.bf16.msra.mxu0 0
        %424 = vmatpush.bf16.msra.mxu0 %v411
        %425 = vmatpush.bf16.msra.mxu0 %v410
        %426 = vmatpush.bf16.msra.mxu0 %v409
        %427 = vmatpush.bf16.msra.mxu0 %v408
        %428 = vmatmul.bf16.gmra.mxu0 %v418
        %v429 = vpop.f32.mrf.mxu0
        %v430 = vadd.f32 %v390, %v429
        %v431 = vpop.f32.mrf.mxu0
        %v432 = vadd.f32 %v390, %v431
        %433 = vdwg.mxu0
        %v434 = vmax.f32 %v430, 0.0
        %v435 = vmax.f32 %v432, 0.0
        %v436 = vpack.c.bf16 %v435, %v434
        %v437 = vld [vmem:[#allocation4] sm:$0xff]
        %v438 = vld [vmem:[#allocation4 + $0x8] sm:$0xff]
        %v439 = vld [vmem:[#allocation4 + $0x10] sm:$0xff]
        %v440 = vld [vmem:[#allocation4 + $0x18] sm:$0xff]
        %v441 = vld [vmem:[#allocation4 + $0x20] sm:$0xff]
        %v442 = vld [vmem:[#allocation4 + $0x28] sm:$0xff]
        %v443 = vld [vmem:[#allocation4 + $0x30] sm:$0xff]
        %v444 = vld [vmem:[#allocation4 + $0x38] sm:$0xff]
        %v445 = vld [vmem:[#allocation4 + $0x40] sm:$0xff]
        %v446 = vld [vmem:[#allocation4 + $0x48] sm:$0xff]
        %v447 = vld [vmem:[#allocation4 + $0x50] sm:$0xff]
        %v448 = vld [vmem:[#allocation4 + $0x58] sm:$0xff]
        %v449 = vld [vmem:[#allocation4 + $0x60] sm:$0xff]
        %v450 = vld [vmem:[#allocation4 + $0x68] sm:$0xff]
        %v451 = vld [vmem:[#allocation4 + $0x70] sm:$0xff]
        %v452 = vld [vmem:[#allocation4 + $0x78] sm:$0xff]
        %v453 = vld [vmem:[#allocation4 + $0x80] sm:$0xff]
        %v454 = vld [vmem:[#allocation4 + $0x88] sm:$0xff]
        %v455 = vld [vmem:[#allocation4 + $0x90] sm:$0xff]
        %v456 = vld [vmem:[#allocation4 + $0x98] sm:$0xff]
        %v457 = vld [vmem:[#allocation4 + $0xa0] sm:$0xff]
        %v458 = vld [vmem:[#allocation4 + $0xa8] sm:$0xff]
        %v459 = vld [vmem:[#allocation4 + $0xb0] sm:$0xff]
        %v460 = vld [vmem:[#allocation4 + $0xb8] sm:$0xff]
        %v461 = vld [vmem:[#allocation4 + $0xc0] sm:$0xff]
        %v462 = vld [vmem:[#allocation4 + $0xc8] sm:$0xff]
        %v463 = vld [vmem:[#allocation4 + $0xd0] sm:$0xff]
        %v464 = vld [vmem:[#allocation4 + $0xd8] sm:$0xff]
        %v465 = vld [vmem:[#allocation4 + $0xe0] sm:$0xff]
        %v466 = vld [vmem:[#allocation4 + $0xe8] sm:$0xff]
        %v467 = vld [vmem:[#allocation4 + $0xf0] sm:$0xff]
        %v468 = vld [vmem:[#allocation4 + $0xf8] sm:$0xff]
        %v469 = vld [vmem:[#allocation4 + $0x100] sm:$0xff]
        %v470 = vld [vmem:[#allocation4 + $0x108] sm:$0xff]
        %v471 = vld [vmem:[#allocation4 + $0x110] sm:$0xff]
        %v472 = vld [vmem:[#allocation4 + $0x118] sm:$0xff]
        %v473 = vld [vmem:[#allocation4 + $0x120] sm:$0xff]
        %v474 = vld [vmem:[#allocation4 + $0x128] sm:$0xff]
        %v475 = vld [vmem:[#allocation4 + $0x130] sm:$0xff]
        %v476 = vld [vmem:[#allocation4 + $0x138] sm:$0xff]
        %v477 = vld [vmem:[#allocation4 + $0x140] sm:$0xff]
        %v478 = vld [vmem:[#allocation4 + $0x148] sm:$0xff]
        %v479 = vld [vmem:[#allocation4 + $0x150] sm:$0xff]
        %v480 = vld [vmem:[#allocation4 + $0x158] sm:$0xff]
        %v481 = vld [vmem:[#allocation4 + $0x160] sm:$0xff]
        %v482 = vld [vmem:[#allocation4 + $0x168] sm:$0xff]
        %v483 = vld [vmem:[#allocation4 + $0x170] sm:$0xff]
        %v484 = vld [vmem:[#allocation4 + $0x178] sm:$0xff]
        %v485 = vld [vmem:[#allocation4 + $0x180] sm:$0xff]
        %v486 = vld [vmem:[#allocation4 + $0x188] sm:$0xff]
        %v487 = vld [vmem:[#allocation4 + $0x190] sm:$0xff]
        %v488 = vld [vmem:[#allocation4 + $0x198] sm:$0xff]
        %v489 = vld [vmem:[#allocation4 + $0x1a0] sm:$0xff]
        %v490 = vld [vmem:[#allocation4 + $0x1a8] sm:$0xff]
        %v491 = vld [vmem:[#allocation4 + $0x1b0] sm:$0xff]
        %v492 = vld [vmem:[#allocation4 + $0x1b8] sm:$0xff]
        %v493 = vld [vmem:[#allocation4 + $0x1c0] sm:$0xff]
        %v494 = vld [vmem:[#allocation4 + $0x1c8] sm:$0xff]
        %v495 = vld [vmem:[#allocation4 + $0x1d0] sm:$0xff]
        %v496 = vld [vmem:[#allocation4 + $0x1d8] sm:$0xff]
        %v497 = vld [vmem:[#allocation4 + $0x1e0] sm:$0xff]
        %v498 = vld [vmem:[#allocation4 + $0x1e8] sm:$0xff]
        %v499 = vld [vmem:[#allocation4 + $0x1f0] sm:$0xff]
        %v500 = vld [vmem:[#allocation4 + $0x1f8] sm:$0xff]
        %v501 = vld [vmem:[%s6] sm:$0xff]
        %v503 = vperm.slane %v501, 0
        %v504 = vperm.slane %v501, 1
        %v505 = vperm.slane %v501, 2
        %v506 = vperm.slane %v501, 3
        %v507 = vperm.slane %v501, 4
        %v508 = vperm.slane %v501, 5
        %v509 = vperm.slane %v501, 6
        %v510 = vperm.slane %v501, 7
        %v583 = vunpack.c.l.b16 %v437
        %v584 = vunpack.c.h.b16 %v437
        %v585 = vunpack.c.l.b16 %v438
        %v586 = vunpack.c.h.b16 %v438
        %v587 = vunpack.c.l.b16 %v439
        %v588 = vunpack.c.h.b16 %v439
        %v589 = vunpack.c.l.b16 %v440
        %v590 = vunpack.c.h.b16 %v440
        %v591 = vunpack.c.l.b16 %v441
        %v592 = vunpack.c.h.b16 %v441
        %v593 = vunpack.c.l.b16 %v442
        %v594 = vunpack.c.h.b16 %v442
        %v595 = vunpack.c.l.b16 %v443
        %v596 = vunpack.c.h.b16 %v443
        %v597 = vunpack.c.l.b16 %v444
        %v598 = vunpack.c.h.b16 %v444
        %v599 = vunpack.c.l.b16 %v445
        %v600 = vunpack.c.h.b16 %v445
        %v601 = vunpack.c.l.b16 %v446
        %v602 = vunpack.c.h.b16 %v446
        %v603 = vunpack.c.l.b16 %v447
        %v604 = vunpack.c.h.b16 %v447
        %v605 = vunpack.c.l.b16 %v448
        %v606 = vunpack.c.h.b16 %v448
        %v607 = vunpack.c.l.b16 %v449
        %v608 = vunpack.c.h.b16 %v449
        %v609 = vunpack.c.l.b16 %v450
        %v610 = vunpack.c.h.b16 %v450
        %v611 = vunpack.c.l.b16 %v451
        %v612 = vunpack.c.h.b16 %v451
        %v613 = vunpack.c.l.b16 %v452
        %v614 = vunpack.c.h.b16 %v452
        %v615 = vunpack.c.l.b16 %v453
        %v616 = vunpack.c.h.b16 %v453
        %v617 = vunpack.c.l.b16 %v454
        %v618 = vunpack.c.h.b16 %v454
        %v619 = vunpack.c.l.b16 %v455
        %v620 = vunpack.c.h.b16 %v455
        %v621 = vunpack.c.l.b16 %v456
        %v622 = vunpack.c.h.b16 %v456
        %v623 = vunpack.c.l.b16 %v457
        %v624 = vunpack.c.h.b16 %v457
        %v625 = vunpack.c.l.b16 %v458
        %v626 = vunpack.c.h.b16 %v458
        %v627 = vunpack.c.l.b16 %v459
        %v628 = vunpack.c.h.b16 %v459
        %v629 = vunpack.c.l.b16 %v460
        %v630 = vunpack.c.h.b16 %v460
        %v631 = vunpack.c.l.b16 %v461
        %v632 = vunpack.c.h.b16 %v461
        %v633 = vunpack.c.l.b16 %v462
        %v634 = vunpack.c.h.b16 %v462
        %v635 = vunpack.c.l.b16 %v463
        %v636 = vunpack.c.h.b16 %v463
        %v637 = vunpack.c.l.b16 %v464
        %v638 = vunpack.c.h.b16 %v464
        %v639 = vunpack.c.l.b16 %v465
        %v640 = vunpack.c.h.b16 %v465
        %v641 = vunpack.c.l.b16 %v466
        %v642 = vunpack.c.h.b16 %v466
        %v643 = vunpack.c.l.b16 %v467
        %v644 = vunpack.c.h.b16 %v467
        %v645 = vunpack.c.l.b16 %v468
        %v646 = vunpack.c.h.b16 %v468
        %v647 = vunpack.c.l.b16 %v469
        %v648 = vunpack.c.h.b16 %v469
        %v649 = vunpack.c.l.b16 %v470
        %v650 = vunpack.c.h.b16 %v470
        %v651 = vunpack.c.l.b16 %v471
        %v652 = vunpack.c.h.b16 %v471
        %v653 = vunpack.c.l.b16 %v472
        %v654 = vunpack.c.h.b16 %v472
        %v655 = vunpack.c.l.b16 %v473
        %v656 = vunpack.c.h.b16 %v473
        %v657 = vunpack.c.l.b16 %v474
        %v658 = vunpack.c.h.b16 %v474
        %v659 = vunpack.c.l.b16 %v475
        %v660 = vunpack.c.h.b16 %v475
        %v661 = vunpack.c.l.b16 %v476
        %v662 = vunpack.c.h.b16 %v476
        %v663 = vunpack.c.l.b16 %v477
        %v664 = vunpack.c.h.b16 %v477
        %v665 = vunpack.c.l.b16 %v478
        %v666 = vunpack.c.h.b16 %v478
        %v667 = vunpack.c.l.b16 %v479
        %v668 = vunpack.c.h.b16 %v479
        %v669 = vunpack.c.l.b16 %v480
        %v670 = vunpack.c.h.b16 %v480
        %v671 = vunpack.c.l.b16 %v481
        %v672 = vunpack.c.h.b16 %v481
        %v673 = vunpack.c.l.b16 %v482
        %v674 = vunpack.c.h.b16 %v482
        %v675 = vunpack.c.l.b16 %v483
        %v676 = vunpack.c.h.b16 %v483
        %v677 = vunpack.c.l.b16 %v484
        %v678 = vunpack.c.h.b16 %v484
        %v679 = vunpack.c.l.b16 %v485
        %v680 = vunpack.c.h.b16 %v485
        %v681 = vunpack.c.l.b16 %v486
        %v682 = vunpack.c.h.b16 %v486
        %v683 = vunpack.c.l.b16 %v487
        %v684 = vunpack.c.h.b16 %v487
        %v685 = vunpack.c.l.b16 %v488
        %v686 = vunpack.c.h.b16 %v488
        %v687 = vunpack.c.l.b16 %v489
        %v688 = vunpack.c.h.b16 %v489
        %v689 = vunpack.c.l.b16 %v490
        %v690 = vunpack.c.h.b16 %v490
        %v691 = vunpack.c.l.b16 %v491
        %v692 = vunpack.c.h.b16 %v491
        %v693 = vunpack.c.l.b16 %v492
        %v694 = vunpack.c.h.b16 %v492
        %v695 = vunpack.c.l.b16 %v493
        %v696 = vunpack.c.h.b16 %v493
        %v697 = vunpack.c.l.b16 %v494
        %v698 = vunpack.c.h.b16 %v494
        %v699 = vunpack.c.l.b16 %v495
        %v700 = vunpack.c.h.b16 %v495
        %v701 = vunpack.c.l.b16 %v496
        %v702 = vunpack.c.h.b16 %v496
        %v703 = vunpack.c.l.b16 %v497
        %v704 = vunpack.c.h.b16 %v497
        %v705 = vunpack.c.l.b16 %v498
        %v706 = vunpack.c.h.b16 %v498
        %v707 = vunpack.c.l.b16 %v499
        %v708 = vunpack.c.h.b16 %v499
        %v709 = vunpack.c.l.b16 %v500
        %v710 = vunpack.c.h.b16 %v500
        %v711 = vpack.c.b16 %v591, %v583
        %v712 = vpack.c.b16 %v592, %v584
        %v713 = vpack.c.b16 %v593, %v585
        %v714 = vpack.c.b16 %v594, %v586
        %v715 = vpack.c.b16 %v595, %v587
        %v716 = vpack.c.b16 %v596, %v588
        %v717 = vpack.c.b16 %v597, %v589
        %v718 = vpack.c.b16 %v598, %v590
        %v719 = vpack.c.b16 %v607, %v599
        %v720 = vpack.c.b16 %v608, %v600
        %v721 = vpack.c.b16 %v609, %v601
        %v722 = vpack.c.b16 %v610, %v602
        %v723 = vpack.c.b16 %v611, %v603
        %v724 = vpack.c.b16 %v612, %v604
        %v725 = vpack.c.b16 %v613, %v605
        %v726 = vpack.c.b16 %v614, %v606
        %v727 = vpack.c.b16 %v623, %v615
        %v728 = vpack.c.b16 %v624, %v616
        %v729 = vpack.c.b16 %v625, %v617
        %v730 = vpack.c.b16 %v626, %v618
        %v731 = vpack.c.b16 %v627, %v619
        %v732 = vpack.c.b16 %v628, %v620
        %v733 = vpack.c.b16 %v629, %v621
        %v734 = vpack.c.b16 %v630, %v622
        %v735 = vpack.c.b16 %v639, %v631
        %v736 = vpack.c.b16 %v640, %v632
        %v737 = vpack.c.b16 %v641, %v633
        %v738 = vpack.c.b16 %v642, %v634
        %v739 = vpack.c.b16 %v643, %v635
        %v740 = vpack.c.b16 %v644, %v636
        %v741 = vpack.c.b16 %v645, %v637
        %v742 = vpack.c.b16 %v646, %v638
        %v743 = vpack.c.b16 %v655, %v647
        %v744 = vpack.c.b16 %v656, %v648
        %v745 = vpack.c.b16 %v657, %v649
        %v746 = vpack.c.b16 %v658, %v650
        %v747 = vpack.c.b16 %v659, %v651
        %v748 = vpack.c.b16 %v660, %v652
        %v749 = vpack.c.b16 %v661, %v653
        %v750 = vpack.c.b16 %v662, %v654
        %v751 = vpack.c.b16 %v671, %v663
        %v752 = vpack.c.b16 %v672, %v664
        %v753 = vpack.c.b16 %v673, %v665
        %v754 = vpack.c.b16 %v674, %v666
        %v755 = vpack.c.b16 %v675, %v667
        %v756 = vpack.c.b16 %v676, %v668
        %v757 = vpack.c.b16 %v677, %v669
        %v758 = vpack.c.b16 %v678, %v670
        %v759 = vpack.c.b16 %v687, %v679
        %v760 = vpack.c.b16 %v688, %v680
        %v761 = vpack.c.b16 %v689, %v681
        %v762 = vpack.c.b16 %v690, %v682
        %v763 = vpack.c.b16 %v691, %v683
        %v764 = vpack.c.b16 %v692, %v684
        %v765 = vpack.c.b16 %v693, %v685
        %v766 = vpack.c.b16 %v694, %v686
        %v767 = vpack.c.b16 %v703, %v695
        %v768 = vpack.c.b16 %v704, %v696
        %v769 = vpack.c.b16 %v705, %v697
        %v770 = vpack.c.b16 %v706, %v698
        %v771 = vpack.c.b16 %v707, %v699
        %v772 = vpack.c.b16 %v708, %v700
        %v773 = vpack.c.b16 %v709, %v701
        %v774 = vpack.c.b16 %v710, %v702
        %839 = vmatpush.bf16.msra.mxu0 %v767
        %840 = vmatpush.bf16.msra.mxu0 %v759
        %841 = vmatpush.bf16.msra.mxu0 %v751
        %842 = vmatpush.bf16.msra.mxu0 %v743
        %843 = vmatpush.bf16.msra.mxu0 %v735
        %844 = vmatpush.bf16.msra.mxu0 %v727
        %845 = vmatpush.bf16.msra.mxu0 %v719
        %846 = vmatpush.bf16.msra.mxu0 %v711
        %847 = vmatmul.bf16.gmra.mxu0 %v436
        %v848 = vpop.f32.mrf.mxu0
        %v849 = vadd.f32 %v503, %v848
        %v850 = vpop.f32.mrf.mxu0
        %v851 = vadd.f32 %v503, %v850
        %852 = vdwg.mxu0
        %853 = vmatpush.bf16.msra.mxu0 %v768
        %854 = vmatpush.bf16.msra.mxu0 %v760
        %855 = vmatpush.bf16.msra.mxu0 %v752
        %856 = vmatpush.bf16.msra.mxu0 %v744
        %857 = vmatpush.bf16.msra.mxu0 %v736
        %858 = vmatpush.bf16.msra.mxu0 %v728
        %859 = vmatpush.bf16.msra.mxu0 %v720
        %860 = vmatpush.bf16.msra.mxu0 %v712
        %861 = vmatmul.bf16.gmra.mxu0 %v436
        %v862 = vpop.f32.mrf.mxu0
        %v863 = vadd.f32 %v504, %v862
        %v864 = vpop.f32.mrf.mxu0
        %v865 = vadd.f32 %v504, %v864
        %866 = vdwg.mxu0
        %867 = vmatpush.bf16.msra.mxu0 %v769
        %868 = vmatpush.bf16.msra.mxu0 %v761
        %869 = vmatpush.bf16.msra.mxu0 %v753
        %870 = vmatpush.bf16.msra.mxu0 %v745
        %871 = vmatpush.bf16.msra.mxu0 %v737
        %872 = vmatpush.bf16.msra.mxu0 %v729
        %873 = vmatpush.bf16.msra.mxu0 %v721
        %874 = vmatpush.bf16.msra.mxu0 %v713
        %875 = vmatmul.bf16.gmra.mxu0 %v436
        %v876 = vpop.f32.mrf.mxu0
        %v877 = vadd.f32 %v505, %v876
        %v878 = vpop.f32.mrf.mxu0
        %v879 = vadd.f32 %v505, %v878
        %880 = vdwg.mxu0
        %881 = vmatpush.bf16.msra.mxu0 %v770
        %882 = vmatpush.bf16.msra.mxu0 %v762
        %883 = vmatpush.bf16.msra.mxu0 %v754
        %884 = vmatpush.bf16.msra.mxu0 %v746
        %885 = vmatpush.bf16.msra.mxu0 %v738
        %886 = vmatpush.bf16.msra.mxu0 %v730
        %887 = vmatpush.bf16.msra.mxu0 %v722
        %888 = vmatpush.bf16.msra.mxu0 %v714
        %889 = vmatmul.bf16.gmra.mxu0 %v436
        %v890 = vpop.f32.mrf.mxu0
        %v891 = vadd.f32 %v506, %v890
        %v892 = vpop.f32.mrf.mxu0
        %v893 = vadd.f32 %v506, %v892
        %894 = vdwg.mxu0
        %895 = vmatpush.bf16.msra.mxu0 %v771
        %896 = vmatpush.bf16.msra.mxu0 %v763
        %897 = vmatpush.bf16.msra.mxu0 %v755
        %898 = vmatpush.bf16.msra.mxu0 %v747
        %899 = vmatpush.bf16.msra.mxu0 %v739
        %900 = vmatpush.bf16.msra.mxu0 %v731
        %901 = vmatpush.bf16.msra.mxu0 %v723
        %902 = vmatpush.bf16.msra.mxu0 %v715
        %903 = vmatmul.bf16.gmra.mxu0 %v436
        %v904 = vpop.f32.mrf.mxu0
        %v905 = vadd.f32 %v507, %v904
        %v906 = vpop.f32.mrf.mxu0
        %v907 = vadd.f32 %v507, %v906
        %908 = vdwg.mxu0
        %909 = vmatpush.bf16.msra.mxu0 %v772
        %910 = vmatpush.bf16.msra.mxu0 %v764
        %911 = vmatpush.bf16.msra.mxu0 %v756
        %912 = vmatpush.bf16.msra.mxu0 %v748
        %913 = vmatpush.bf16.msra.mxu0 %v740
        %914 = vmatpush.bf16.msra.mxu0 %v732
        %915 = vmatpush.bf16.msra.mxu0 %v724
        %916 = vmatpush.bf16.msra.mxu0 %v716
        %917 = vmatmul.bf16.gmra.mxu0 %v436
        %v918 = vpop.f32.mrf.mxu0
        %v919 = vadd.f32 %v508, %v918
        %v920 = vpop.f32.mrf.mxu0
        %v921 = vadd.f32 %v508, %v920
        %922 = vdwg.mxu0
        %923 = vmatpush.bf16.msra.mxu0 %v773
        %924 = vmatpush.bf16.msra.mxu0 %v765
        %925 = vmatpush.bf16.msra.mxu0 %v757
        %926 = vmatpush.bf16.msra.mxu0 %v749
        %927 = vmatpush.bf16.msra.mxu0 %v741
        %928 = vmatpush.bf16.msra.mxu0 %v733
        %929 = vmatpush.bf16.msra.mxu0 %v725
        %930 = vmatpush.bf16.msra.mxu0 %v717
        %931 = vmatmul.bf16.gmra.mxu0 %v436
        %v932 = vpop.f32.mrf.mxu0
        %v933 = vadd.f32 %v509, %v932
        %v934 = vpop.f32.mrf.mxu0
        %v935 = vadd.f32 %v509, %v934
        %936 = vdwg.mxu0
        %937 = vmatpush.bf16.msra.mxu0 %v774
        %938 = vmatpush.bf16.msra.mxu0 %v766
        %939 = vmatpush.bf16.msra.mxu0 %v758
        %940 = vmatpush.bf16.msra.mxu0 %v750
        %941 = vmatpush.bf16.msra.mxu0 %v742
        %942 = vmatpush.bf16.msra.mxu0 %v734
        %943 = vmatpush.bf16.msra.mxu0 %v726
        %944 = vmatpush.bf16.msra.mxu0 %v718
        %945 = vmatmul.bf16.gmra.mxu0 %v436
        %v946 = vpop.f32.mrf.mxu0
        %v947 = vadd.f32 %v510, %v946
        %v948 = vpop.f32.mrf.mxu0
        %v949 = vadd.f32 %v510, %v948
        %950 = vdwg.mxu0
        %vm951 = vcmask 1043456
        %v952 = vsel %vm951, %v851, -inf
        %v953 = vmax.f32 %v849, %v952
        %v954 = vrot.slane %v953, 4
        %v955 = vmax.f32 %v953, %v954
        %v956 = vrot.slane %v955, 2
        %v957 = vmax.f32 %v955, %v956
        %v958 = vrot.slane %v957, 1
        %v959 = vmax.f32 %v957, %v958
        %v960 = vsel %vm951, %v865, -inf
        %v961 = vmax.f32 %v863, %v960
        %v962 = vrot.slane %v961, 4
        %v963 = vmax.f32 %v961, %v962
        %v964 = vrot.slane %v963, 2
        %v965 = vmax.f32 %v963, %v964
        %v966 = vrot.slane %v965, 1
        %v967 = vmax.f32 %v965, %v966
        %v968 = vsel %vm951, %v879, -inf
        %v969 = vmax.f32 %v877, %v968
        %v970 = vrot.slane %v969, 4
        %v971 = vmax.f32 %v969, %v970
        %v972 = vrot.slane %v971, 2
        %v973 = vmax.f32 %v971, %v972
        %v974 = vrot.slane %v973, 1
        %v975 = vmax.f32 %v973, %v974
        %v976 = vsel %vm951, %v893, -inf
        %v977 = vmax.f32 %v891, %v976
        %v978 = vrot.slane %v977, 4
        %v979 = vmax.f32 %v977, %v978
        %v980 = vrot.slane %v979, 2
        %v981 = vmax.f32 %v979, %v980
        %v982 = vrot.slane %v981, 1
        %v983 = vmax.f32 %v981, %v982
        %v984 = vsel %vm951, %v907, -inf
        %v985 = vmax.f32 %v905, %v984
        %v986 = vrot.slane %v985, 4
        %v987 = vmax.f32 %v985, %v986
        %v988 = vrot.slane %v987, 2
        %v989 = vmax.f32 %v987, %v988
        %v990 = vrot.slane %v989, 1
        %v991 = vmax.f32 %v989, %v990
        %v992 = vsel %vm951, %v921, -inf
        %v993 = vmax.f32 %v919, %v992
        %v994 = vrot.slane %v993, 4
        %v995 = vmax.f32 %v993, %v994
        %v996 = vrot.slane %v995, 2
        %v997 = vmax.f32 %v995, %v996
        %v998 = vrot.slane %v997, 1
        %v999 = vmax.f32 %v997, %v998
        %v1000 = vsel %vm951, %v935, -inf
        %v1001 = vmax.f32 %v933, %v1000
        %v1002 = vrot.slane %v1001, 4
        %v1003 = vmax.f32 %v1001, %v1002
        %v1004 = vrot.slane %v1003, 2
        %v1005 = vmax.f32 %v1003, %v1004
        %v1006 = vrot.slane %v1005, 1
        %v1007 = vmax.f32 %v1005, %v1006
        %v1008 = vsel %vm951, %v949, -inf
        %v1009 = vmax.f32 %v947, %v1008
        %v1010 = vrot.slane %v1009, 4
        %v1011 = vmax.f32 %v1009, %v1010
        %v1012 = vrot.slane %v1011, 2
        %v1013 = vmax.f32 %v1011, %v1012
        %v1014 = vrot.slane %v1013, 1
        %v1015 = vmax.f32 %v1013, %v1014
        %p1016 = scmp.eq.s32.totalorder %s25, 0
        // Predicated region
        $region57: #{msn_forward.6} parent=47 // pred_check
          %p1017 = pneg %p1016
        $region58: #{msn_forward.6} parent=47 // pred_check_branch
          %1019 = sbr.rel (%p1017) target = $region60
        $region59: #{msn_forward.6} parent=47 // pred_region
          %v1028 = vrot.slane %v967, 7
          %v1029 = vrot.slane %v975, 6
          %v1030 = vrot.slane %v983, 5
          %v1031 = vrot.slane %v991, 4
          %v1032 = vrot.slane %v999, 3
          %v1033 = vrot.slane %v1007, 2
          %v1034 = vrot.slane %v1015, 1
          %vm1035 = vcmask 1040384
          %v1036 = vsel %vm1035, %v959, %v1028
          %vm1037 = vcmask 1042434
          %v1038 = vsel %vm1037, %v1029, %v1030
          %vm1039 = vcmask 1041408
          %v1040 = vsel %vm1039, %v1036, %v1038
          %vm1041 = vcmask 1044484
          %v1042 = vsel %vm1041, %v1031, %v1032
          %vm1043 = vcmask 1046534
          %v1044 = vsel %vm1043, %v1033, %v1034
          %vm1045 = vcmask 1045508
          %v1046 = vsel %vm1045, %v1042, %v1044
          %v1047 = vsel %vm951, %v1040, %v1046
          %1049 = vst [vmem:[%s338] sm:$0xff] %v1047
        $region60: #{msn_forward.6} parent=47 // pred_fallthru
          _
        %p1050 = scmp.gt.s32.totalorder %s25, 0
        // Predicated region
        $region61: #{msn_forward.6} parent=47 // pred_check
          %p1051 = pneg %p1050
        $region62: #{msn_forward.6} parent=47 // pred_check_branch
          %1053 = sbr.rel (%p1051) target = $region64
        $region63: #{msn_forward.6} parent=47 // pred_region
          %v1054 = vld [vmem:[%s338] sm:$0xff]
          %v1063 = vrot.slane %v967, 7
          %v1064 = vrot.slane %v975, 6
          %v1065 = vrot.slane %v983, 5
          %v1066 = vrot.slane %v991, 4
          %v1067 = vrot.slane %v999, 3
          %v1068 = vrot.slane %v1007, 2
          %v1069 = vrot.slane %v1015, 1
          %vm1070 = vcmask 1040384
          %v1071 = vsel %vm1070, %v959, %v1063
          %vm1072 = vcmask 1042434
          %v1073 = vsel %vm1072, %v1064, %v1065
          %vm1074 = vcmask 1041408
          %v1075 = vsel %vm1074, %v1071, %v1073
          %vm1076 = vcmask 1044484
          %v1077 = vsel %vm1076, %v1066, %v1067
          %vm1078 = vcmask 1046534
          %v1079 = vsel %vm1078, %v1068, %v1069
          %vm1080 = vcmask 1045508
          %v1081 = vsel %vm1080, %v1077, %v1079
          %v1082 = vsel %vm951, %v1075, %v1081
          %v1084 = vmax.f32 %v1054, %v1082
          %1085 = vst [vmem:[%s338] sm:$0xff] %v1084
        $region64: #{msn_forward.6} parent=47 // pred_fallthru
          _
        %p1086 = scmp.lt.s32.totalorder %s24, 1
        %s1087 = scalar_select %p1086, %s24, 1
        %s1088 = smul.addr %s1087, 8
        %s1089 = scalar_lea.vmem %s7, %s1088
        // Predicated region
        $region65: #{msn_forward.6} parent=47 // pred_check
          %p1090 = pneg %p204
        $region66: #{msn_forward.6} parent=47 // pred_check_branch
          %1092 = sbr.rel (%p1090) target = $region68
        $region67: #{msn_forward.6} parent=47 // pred_region
          _
        $region68: #{msn_forward.6} parent=47 // pred_fallthru
          _
      $region48: #{msn_forward.6} parent=5 // pred_fallthru
        _
      %p1093 = scmp.le.s32.totalorder 2, %s15
      // Predicated region
      $region69: #{msn_forward.6} parent=5 // pred_check
        %p1094 = pneg %p1093
      $region70: #{msn_forward.6} parent=5 // pred_check_branch
        %1096 = sbr.rel (%p1094) target = $region72
      $region71: #{msn_forward.6} parent=5 // pred_region
        %s1097 = ssub.s32 %s15, 2
        // Predicated region
        $region73: #{msn_forward.6} parent=71 // pred_check
          %p1098 = pneg %p210
        $region74: #{msn_forward.6} parent=71 // pred_check_branch
          %1100 = sbr.rel (%p1098) target = $region76
        $region75: #{msn_forward.6} parent=71 // pred_region
          %p1101 = scmp.lt.s32.totalorder %s26, 1
          %s1102 = scalar_select %p1101, %s26, 1
          %s1103 = smul.addr %s1102, 8
          %s1104 = scalar_lea.vmem %s7, %s1103
        $region76: #{msn_forward.6} parent=71 // pred_fallthru
          _
      $region72: #{msn_forward.6} parent=5 // pred_fallthru
        _
    $region6: #{msn_forward.6} parent=1 // loop_footer
      %s19 = sadd.s32 1, %s15
    $region7: #{msn_forward.6} parent=1 // loop_footer_branch
      %14 = sbr.rel target = $region3
    $region8: #{msn_forward.6} parent=1 // loop_exit
      _
    %1105 = vsyncpa [#allocation3], 1
    %s1106 = scalar_lea.sflag [#allocation3], 1
    %1107 = vsyncpa %s1106, 1
    %1108 = vsyncpa [#allocation5], 1

// kernel: msn_forward.5
$region0: #{msn_forward.5}
  #allocation0 [shape = 'u32[]', space=smem, size = 0x4, offset = 0x4, fixed_abs, tag = 'smem constant byte address 0x4 - core index']
  #allocation1 [shape = 'u32[72,128]{1,0:T(1,128)}', space=vmem, size = 0x9000, scoped, tag = 'internal scratch']
  %s0 = inlined_call_operand.vmem [shape: bf16[2,20,8], index: 0, kind: input, shape index: {}]
  %s1 = inlined_call_operand.vmem [shape: bf16[8,64], index: 1, kind: input, shape index: {}]
  %s2 = inlined_call_operand.vmem [shape: f32[1,64], index: 2, kind: input, shape index: {}]
  %s3 = inlined_call_operand.vmem [shape: bf16[64,128], index: 3, kind: input, shape index: {}]
  %s4 = inlined_call_operand.vmem [shape: f32[1,128], index: 4, kind: input, shape index: {}]
  %s5 = inlined_call_operand.hbm [shape: bf16[128,1024], index: 5, kind: input, shape index: {}]
  %s6 = inlined_call_operand.vmem [shape: f32[1,1024], index: 6, kind: input, shape index: {}]
  %s7 = inlined_call_operand.vmem [shape: f32[2,1,1024], index: 7, kind: output, shape index: {}]
  %s8 = sld [smem:[#allocation0]]
  $region73: #{msn_forward.5} parent=0
    _
  %s10 = ssub.s32 1, %s8
  %s11 = scalar_select 0, %s10, %s8
  $region1: #{msn_forward.5} parent=0
    #allocation2 [shape = 'u8[262144]{0}', space=vmem, size = 0x40000, scoped, tag = 'input window, operand 5, single buffered']
    #allocation3 [shape = 's32[2]{0}', space=sflag, size = 0x8, scoped, tag = 'scoped memory for msn_forward.5']
    %12 = vsyncpa [#allocation3], 0
    loop: start=0, step=1, limit=4
    $region2: #{msn_forward.5} parent=1 // loop_pre_header
      _
    $region3: #{msn_forward.5} parent=1 // loop_header
      %s14 = sphi 0, %s18
      %p15 = scmp.ge.s32.totalorder %s14, 4
      %s21 = sphi 0, %s33
      %s22 = sphi 0, %s29
      %s23 = sphi 0, %s21
      %s24 = sphi 0, %s22
      %s25 = sphi 0, %s23
      %s26 = sphi 0, %s24
      %s38 = sphi 0, %s40
      %s41 = sphi 0, %s38
      %s42 = sphi 0, %s41
      %s58 = sphi 0, %s42
      %s62 = sphi 0, %s62
      %s64 = sphi 0, %s62
      %s65 = sphi 0, %s64
      %s79 = sphi 0, %s65
      %s83 = sphi 0, %s83
      %s85 = sphi 0, %s83
      %s86 = sphi 0, %s85
      %s100 = sphi 0, %s86
      %s104 = sphi 0, %s104
      %s106 = sphi 0, %s104
      %s107 = sphi 0, %s106
      %s121 = sphi 0, %s107
      %s125 = sphi 0, %s125
      %s127 = sphi 0, %s125
      %s128 = sphi 0, %s127
      %s142 = sphi 0, %s128
      %s146 = sphi 0, %s146
      %s148 = sphi 0, %s146
      %s149 = sphi 0, %s148
      %s163 = sphi 0, %s149
      %s167 = sphi 0, %s167
      %s169 = sphi 0, %s167
      %s170 = sphi 0, %s169
      %s184 = sphi 0, %s170
      %s190 = sphi 0, %s192
      %s193 = sphi 0, %s190
      %s194 = sphi 0, %s193
      %s210 = sphi 0, %s194
    $region4: #{msn_forward.5} parent=1 // loop_header_branch
      %17 = sbr.rel (%p15) target = $region8
    $region5: #{msn_forward.5} parent=1 // loop_body
      %s19 = ssub.s32 %s14, 1
      %s20 = ssub.s32 %s14, 2
      %s27 = sadd.s32 1, %s22
      %p28 = scmp.ge.s32.totalorder %s27, 1
      %s29 = scalar_select %p28, 0, %s27
      %s30 = sadd.s32 1, %s21
      %s31 = scalar_select %p28, %s30, %s21
      %p32 = scmp.ge.s32.totalorder %s31, 2
      %s33 = scalar_select %p32, 0, %s31
      %s34 = ssub.s32 %s21, %s33
      %s35 = ssub.s32 %s22, %s29
      %s36 = sor.u32 %s34, %s35
      %p37 = scmp.eq.s32.totalorder %s36, 0
      %s39 = sadd.s32 %s38, 1
      %s40 = scalar_select %p37, %s38, %s39
      %p43 = pneg %p37
      %p44 = scmp.eq.s32.totalorder %s14, 1
      %p45 = por %p43, %p44
      %p46 = scmp.ne.s32.totalorder %s38, %s41
      %p47 = scmp.eq.s32.totalorder %s14, 0
      %p48 = por %p46, %p47
      %p49 = scmp.ne.s32.totalorder %s38, %s41
      %p50 = scmp.eq.s32.totalorder %s19, 1
      %p51 = por %p49, %p50
      %p52 = scmp.ne.s32.totalorder %s41, %s42
      %p53 = scmp.eq.s32.totalorder %s19, 0
      %p54 = por %p52, %p53
      %p55 = scmp.ne.s32.totalorder %s41, %s42
      %p56 = scmp.eq.s32.totalorder %s20, 1
      %p57 = por %p55, %p56
      %p59 = scmp.ne.s32.totalorder %s42, %s58
      %p60 = scmp.eq.s32.totalorder %s20, 0
      %p61 = por %p59, %p60
      %s63 = sadd.s32 %s62, 1
      %p66 = scmp.eq.s32.totalorder %s14, 1
      %p67 = scmp.ne.s32.totalorder %s62, %s64
      %p68 = scmp.eq.s32.totalorder %s14, 0
      %p69 = por %p67, %p68
      %p70 = scmp.ne.s32.totalorder %s62, %s64
      %p71 = scmp.eq.s32.totalorder %s19, 1
      %p72 = por %p70, %p71
      %p73 = scmp.ne.s32.totalorder %s64, %s65
      %p74 = scmp.eq.s32.totalorder %s19, 0
      %p75 = por %p73, %p74
      %p76 = scmp.ne.s32.totalorder %s64, %s65
      %p77 = scmp.eq.s32.totalorder %s20, 1
      %p78 = por %p76, %p77
      %p80 = scmp.ne.s32.totalorder %s65, %s79
      %p81 = scmp.eq.s32.totalorder %s20, 0
      %p82 = por %p80, %p81
      %s84 = sadd.s32 %s83, 1
      %p87 = scmp.eq.s32.totalorder %s14, 1
      %p88 = scmp.ne.s32.totalorder %s83, %s85
      %p89 = scmp.eq.s32.totalorder %s14, 0
      %p90 = por %p88, %p89
      %p91 = scmp.ne.s32.totalorder %s83, %s85
      %p92 = scmp.eq.s32.totalorder %s19, 1
      %p93 = por %p91, %p92
      %p94 = scmp.ne.s32.totalorder %s85, %s86
      %p95 = scmp.eq.s32.totalorder %s19, 0
      %p96 = por %p94, %p95
      %p97 = scmp.ne.s32.totalorder %s85, %s86
      %p98 = scmp.eq.s32.totalorder %s20, 1
      %p99 = por %p97, %p98
      %p101 = scmp.ne.s32.totalorder %s86, %s100
      %p102 = scmp.eq.s32.totalorder %s20, 0
      %p103 = por %p101, %p102
      %s105 = sadd.s32 %s104, 1
      %p108 = scmp.eq.s32.totalorder %s14, 1
      %p109 = scmp.ne.s32.totalorder %s104, %s106
      %p110 = scmp.eq.s32.totalorder %s14, 0
      %p111 = por %p109, %p110
      %p112 = scmp.ne.s32.totalorder %s104, %s106
      %p113 = scmp.eq.s32.totalorder %s19, 1
      %p114 = por %p112, %p113
      %p115 = scmp.ne.s32.totalorder %s106, %s107
      %p116 = scmp.eq.s32.totalorder %s19, 0
      %p117 = por %p115, %p116
      %p118 = scmp.ne.s32.totalorder %s106, %s107
      %p119 = scmp.eq.s32.totalorder %s20, 1
      %p120 = por %p118, %p119
      %p122 = scmp.ne.s32.totalorder %s107, %s121
      %p123 = scmp.eq.s32.totalorder %s20, 0
      %p124 = por %p122, %p123
      %s126 = sadd.s32 %s125, 1
      %p129 = scmp.eq.s32.totalorder %s14, 1
      %p130 = scmp.ne.s32.totalorder %s125, %s127
      %p131 = scmp.eq.s32.totalorder %s14, 0
      %p132 = por %p130, %p131
      %p133 = scmp.ne.s32.totalorder %s125, %s127
      %p134 = scmp.eq.s32.totalorder %s19, 1
      %p135 = por %p133, %p134
      %p136 = scmp.ne.s32.totalorder %s127, %s128
      %p137 = scmp.eq.s32.totalorder %s19, 0
      %p138 = por %p136, %p137
      %p139 = scmp.ne.s32.totalorder %s127, %s128
      %p140 = scmp.eq.s32.totalorder %s20, 1
      %p141 = por %p139, %p140
      %p143 = scmp.ne.s32.totalorder %s128, %s142
      %p144 = scmp.eq.s32.totalorder %s20, 0
      %p145 = por %p143, %p144
      %s147 = sadd.s32 %s146, 1
      %p150 = scmp.eq.s32.totalorder %s14, 1
      %p151 = scmp.ne.s32.totalorder %s146, %s148
      %p152 = scmp.eq.s32.totalorder %s14, 0
      %p153 = por %p151, %p152
      %p154 = scmp.ne.s32.totalorder %s146, %s148
      %p155 = scmp.eq.s32.totalorder %s19, 1
      %p156 = por %p154, %p155
      %p157 = scmp.ne.s32.totalorder %s148, %s149
      %p158 = scmp.eq.s32.totalorder %s19, 0
      %p159 = por %p157, %p158
      %p160 = scmp.ne.s32.totalorder %s148, %s149
      %p161 = scmp.eq.s32.totalorder %s20, 1
      %p162 = por %p160, %p161
      %p164 = scmp.ne.s32.totalorder %s149, %s163
      %p165 = scmp.eq.s32.totalorder %s20, 0
      %p166 = por %p164, %p165
      %s168 = sadd.s32 %s167, 1
      %p171 = scmp.eq.s32.totalorder %s14, 1
      %p172 = scmp.ne.s32.totalorder %s167, %s169
      %p173 = scmp.eq.s32.totalorder %s14, 0
      %p174 = por %p172, %p173
      %p175 = scmp.ne.s32.totalorder %s167, %s169
      %p176 = scmp.eq.s32.totalorder %s19, 1
      %p177 = por %p175, %p176
      %p178 = scmp.ne.s32.totalorder %s169, %s170
      %p179 = scmp.eq.s32.totalorder %s19, 0
      %p180 = por %p178, %p179
      %p181 = scmp.ne.s32.totalorder %s169, %s170
      %p182 = scmp.eq.s32.totalorder %s20, 1
      %p183 = por %p181, %p182
      %p185 = scmp.ne.s32.totalorder %s170, %s184
      %p186 = scmp.eq.s32.totalorder %s20, 0
      %p187 = por %p185, %p186
      %s188 = ssub.s32 %s21, %s33
      %p189 = scmp.eq.s32.totalorder %s188, 0
      %s191 = sadd.s32 %s190, 1
      %s192 = scalar_select %p189, %s190, %s191
      %p195 = pneg %p189
      %p196 = scmp.eq.s32.totalorder %s14, 1
      %p197 = por %p195, %p196
      %p198 = scmp.ne.s32.totalorder %s190, %s193
      %p199 = scmp.eq.s32.totalorder %s14, 0
      %p200 = por %p198, %p199
      %p201 = scmp.ne.s32.totalorder %s190, %s193
      %p202 = scmp.eq.s32.totalorder %s19, 1
      %p203 = por %p201, %p202
      %p204 = scmp.ne.s32.totalorder %s193, %s194
      %p205 = scmp.eq.s32.totalorder %s19, 0
      %p206 = por %p204, %p205
      %p207 = scmp.ne.s32.totalorder %s193, %s194
      %p208 = scmp.eq.s32.totalorder %s20, 1
      %p209 = por %p207, %p208
      %p211 = scmp.ne.s32.totalorder %s194, %s210
      %p212 = scmp.eq.s32.totalorder %s20, 0
      %p213 = por %p211, %p212
      %p214 = scmp.le.s32.totalorder 1, %s14
      %p215 = scmp.lt.s32.totalorder %s14, 3
      %p216 = pnand %p214, %p215
      %p217 = pneg %p216
      // Predicated region
      $region9: #{msn_forward.5} parent=5 // pred_check
        _
      $region10: #{msn_forward.5} parent=5 // pred_check_branch
        %219 = sbr.rel (%p216) target = $region12
      $region11: #{msn_forward.5} parent=5 // pred_region
        %s220 = ssub.s32 %s14, 1
        // Predicated region
        $region13: #{msn_forward.5} parent=11 // pred_check
          %p221 = pneg %p75
        $region14: #{msn_forward.5} parent=11 // pred_check_branch
          %223 = sbr.rel (%p221) target = $region16
        $region15: #{msn_forward.5} parent=11 // pred_region
          _
        $region16: #{msn_forward.5} parent=11 // pred_fallthru
          _
        // Predicated region
        $region17: #{msn_forward.5} parent=11 // pred_check
          %p224 = pneg %p96
        $region18: #{msn_forward.5} parent=11 // pred_check_branch
          %226 = sbr.rel (%p224) target = $region20
        $region19: #{msn_forward.5} parent=11 // pred_region
          _
        $region20: #{msn_forward.5} parent=11 // pred_fallthru
          _
        // Predicated region
        $region21: #{msn_forward.5} parent=11 // pred_check
          %p227 = pneg %p117
        $region22: #{msn_forward.5} parent=11 // pred_check_branch
          %229 = sbr.rel (%p227) target = $region24
        $region23: #{msn_forward.5} parent=11 // pred_region
          _
        $region24: #{msn_forward.5} parent=11 // pred_fallthru
          _
        // Predicated region
        $region25: #{msn_forward.5} parent=11 // pred_check
          %p230 = pneg %p138
        $region26: #{msn_forward.5} parent=11 // pred_check_branch
          %232 = sbr.rel (%p230) target = $region28
        $region27: #{msn_forward.5} parent=11 // pred_region
          _
        $region28: #{msn_forward.5} parent=11 // pred_fallthru
          _
        // Predicated region
        $region29: #{msn_forward.5} parent=11 // pred_check
          %p233 = pneg %p159
        $region30: #{msn_forward.5} parent=11 // pred_check_branch
          %235 = sbr.rel (%p233) target = $region32
        $region31: #{msn_forward.5} parent=11 // pred_region
          %237 = vsyncadd [#allocation3], 0
          %s238 = sshll.u32 %s5, 4
          %s239 = int_to_ptr.hbm [resolvable:$true] %s238
          %s240 = sshll.u32 [#allocation2], 4
          %s241 = int_to_ptr.vmem [resolvable:$true] %s240
          %246 = dma.hbm_to_vmem [thread:$0]  %s239, 8192, %s241, [#allocation3], 512, 512, 32
        $region32: #{msn_forward.5} parent=11 // pred_fallthru
          _
        // Predicated region
        $region33: #{msn_forward.5} parent=11 // pred_check
          %p247 = pneg %p180
        $region34: #{msn_forward.5} parent=11 // pred_check_branch
          %249 = sbr.rel (%p247) target = $region36
        $region35: #{msn_forward.5} parent=11 // pred_region
          _
        $region36: #{msn_forward.5} parent=11 // pred_fallthru
          _
      $region12: #{msn_forward.5} parent=5 // pred_fallthru
        _
      %p250 = scmp.lt.s32.totalorder %s14, 2
      // Predicated region
      $region37: #{msn_forward.5} parent=5 // pred_check
        %p251 = pneg %p250
      $region38: #{msn_forward.5} parent=5 // pred_check_branch
        %253 = sbr.rel (%p251) target = $region40
      $region39: #{msn_forward.5} parent=5 // pred_region
        // Predicated region
        $region41: #{msn_forward.5} parent=39 // pred_check
          %p254 = pneg %p48
        $region42: #{msn_forward.5} parent=39 // pred_check_branch
          %256 = sbr.rel (%p254) target = $region44
        $region43: #{msn_forward.5} parent=39 // pred_region
          %s257 = smul.u32 3, %s22
          %p258 = scmp.lt.s32.totalorder %s21, 1
          %s259 = scalar_select %p258, %s21, 1
          %p260 = scmp.lt.s32.totalorder %s257, 2
          %s261 = scalar_select %p260, %s257, 2
          %s262 = smul.addr %s259, 3
          %s263 = sadd.s32 %s261, %s262
          %s264 = smul.addr %s263, 4
          %s265 = scalar_lea.vmem %s0, %s264
          %s266 = smul.u32 3, %s22
        $region44: #{msn_forward.5} parent=39 // pred_fallthru
          _
      $region40: #{msn_forward.5} parent=5 // pred_fallthru
        _
      %p267 = scmp.le.s32.totalorder 1, %s14
      %p268 = scmp.lt.s32.totalorder %s14, 3
      %p269 = pnand %p267, %p268
      %p270 = pneg %p269
      // Predicated region
      $region45: #{msn_forward.5} parent=5 // pred_check
        _
      $region46: #{msn_forward.5} parent=5 // pred_check_branch
        %272 = sbr.rel (%p269) target = $region48
      $region47: #{msn_forward.5} parent=5 // pred_region
        %s273 = ssub.s32 %s14, 1
        // Predicated region
        $region49: #{msn_forward.5} parent=47 // pred_check
          %p274 = pneg %p159
        $region50: #{msn_forward.5} parent=47 // pred_check_branch
          %276 = sbr.rel (%p274) target = $region52
        $region51: #{msn_forward.5} parent=47 // pred_region
          %278 = dma.done [#allocation3], 8192
        $region52: #{msn_forward.5} parent=47 // pred_fallthru
          _
        %s279 = smul.u32 3, %s24
        %p280 = scmp.lt.s32.totalorder %s23, 1
        %s281 = scalar_select %p280, %s23, 1
        %p282 = scmp.lt.s32.totalorder %s279, 2
        %s283 = scalar_select %p282, %s279, 2
        %s284 = smul.addr %s281, 3
        %s285 = sadd.s32 %s283, %s284
        %s286 = smul.addr %s285, 4
        %s287 = scalar_lea.vmem %s0, %s286
        %p288 = pneg %p54
        %p289 = pneg %p51
        %p290 = pneg %p75
        %p291 = pneg %p72
        %p292 = pneg %p96
        %p293 = pneg %p93
        %p294 = pneg %p117
        %p295 = pneg %p114
        %p296 = pneg %p138
        %p297 = pneg %p135
        %p298 = pneg %p159
        %p299 = pneg %p156
        %p300 = pneg %p180
        %p301 = pneg %p177
        %p302 = pneg %p206
        %p303 = pneg %p203
        %p304 = scmp.lt.s32.totalorder %s23, 1
        %s305 = scalar_select %p304, %s23, 1
        %s306 = smul.addr %s305, 8
        %s307 = scalar_lea.vmem %s7, %s306
        %s308 = smul.u32 3, %s24
        %p309 = scmp.lt.s32.totalorder %s23, 1
        %s310 = scalar_select %p309, %s23, 1
        %p311 = scmp.lt.s32.totalorder %s308, 2
        %s312 = scalar_select %p311, %s308, 2
        %s313 = smul.addr %s310, 3
        %s314 = sadd.s32 %s312, %s313
        %s315 = smul.addr %s314, 4
        %s316 = scalar_lea.vmem %s0, %s315
        %s317 = smul.u32 3, %s24
        %p318 = scmp.lt.s32.totalorder %s23, 1
        %s319 = scalar_select %p318, %s23, 1
        %s320 = smul.addr %s319, 8
        %s321 = scalar_lea.vmem %s7, %s320
        %v323 = vld [vmem:[%s316] sm:$0xf]
        %v324 = vld [vmem:[%s316 + $0x4] sm:$0xf]
        %v325 = vld [vmem:[%s316 + $0x8] sm:$0x3]
        %v326 = vld [vmem:[%s1] sm:$0xf]
        %v327 = vld [vmem:[%s2] sm:$0x1]
        %v329 = vperm.slane %v327, 0
        %v334 = vunpack.c.l.b16 %v323
        %v335 = vunpack.c.l.b16 %v324
        %v336 = vunpack.c.l.b16 %v325
        %v337 = vpack.c.b16 %v335, %v334
        %v338 = vpack.c.b16 %v336, %v336
        %vm339 = vcmask 64512
        %v341 = vsel %vm339, %v337, 0
        %v344 = vsel %vm339, %v338, 0
        %vm346 = vcmask 1043456
        %v348 = vsel %vm346, %v326, 0
        %350 = vmatpush.bf16.msra.mxu0 0
        %351 = vmatpush.bf16.msra.mxu0 0
        %352 = vmatpush.bf16.msra.mxu0 0
        %353 = vmatpush.bf16.msra.mxu0 0
        %354 = vmatpush.bf16.msra.mxu0 0
        %355 = vmatpush.bf16.msra.mxu0 0
        %356 = vmatpush.bf16.msra.mxu0 0
        %357 = vmatpush.bf16.msra.mxu0 %v348
        %358 = vmatmul.bf16.gmra.mxu0 %v341
        %v359 = vpop.f32.mrf.mxu0
        %v360 = vadd.f32 %v329, %v359
        %v361 = vpop.f32.mrf.mxu0
        %v362 = vadd.f32 %v329, %v361
        %363 = vmatmul.bf16.gmra.mxu0 %v344
        %v364 = vpop.f32.mrf.mxu0
        %v365 = vadd.f32 %v329, %v364
        %v366 = vpop.f32.mrf.mxu0
        %367 = vdwg.mxu0
        %v368 = vmax.f32 %v360, 0.0
        %v369 = vmax.f32 %v362, 0.0
        %v370 = vmax.f32 %v365, 0.0
        %v371 = vpack.c.bf16 %v369, %v368
        %v372 = vpack.c.bf16 %v370, %v370
        %v373 = vld [vmem:[%s3] sm:$0xf]
        %v374 = vld [vmem:[%s3 + $0x4] sm:$0xf]
        %v375 = vld [vmem:[%s3 + $0x8] sm:$0xf]
        %v376 = vld [vmem:[%s3 + $0xc] sm:$0xf]
        %v377 = vld [vmem:[%s3 + $0x10] sm:$0xf]
        %v378 = vld [vmem:[%s3 + $0x14] sm:$0xf]
        %v379 = vld [vmem:[%s3 + $0x18] sm:$0xf]
        %v380 = vld [vmem:[%s3 + $0x1c] sm:$0xf]
        %v381 = vld [vmem:[%s4] sm:$0x1]
        %v383 = vperm.slane %v381, 0
        %v393 = vunpack.c.l.b16 %v373
        %v394 = vunpack.c.l.b16 %v374
        %v395 = vunpack.c.l.b16 %v375
        %v396 = vunpack.c.l.b16 %v376
        %v397 = vunpack.c.l.b16 %v377
        %v398 = vunpack.c.l.b16 %v378
        %v399 = vunpack.c.l.b16 %v379
        %v400 = vunpack.c.l.b16 %v380
        %v401 = vpack.c.b16 %v394, %v393
        %v402 = vpack.c.b16 %v396, %v395
        %v403 = vpack.c.b16 %v398, %v397
        %v404 = vpack.c.b16 %v400, %v399
        %vm409 = vcmask 523264
        %v411 = vsel %vm409, %v371, 0
        %v414 = vsel %vm409, %v372, 0
        %416 = vmatpush.bf16.msra.mxu0 0
        %417 = vmatpush.bf16.msra.mxu0 0
        %418 = vmatpush.bf16.msra.mxu0 0
        %419 = vmatpush.bf16.msra.mxu0 0
        %420 = vmatpush.bf16.msra.mxu0 %v404
        %421 = vmatpush.bf16.msra.mxu0 %v403
        %422 = vmatpush.bf16.msra.mxu0 %v402
        %423 = vmatpush.bf16.msra.mxu0 %v401
        %424 = vmatmul.bf16.gmra.mxu0 %v411
        %v425 = vpop.f32.mrf.mxu0
        %v426 = vadd.f32 %v383, %v425
        %v427 = vpop.f32.mrf.mxu0
        %v428 = vadd.f32 %v383, %v427
        %429 = vmatmul.bf16.gmra.mxu0 %v414
        %v430 = vpop.f32.mrf.mxu0
        %v431 = vadd.f32 %v383, %v430
        %v432 = vpop.f32.mrf.mxu0
        %433 = vdwg.mxu0
        %v434 = vmax.f32 %v426, 0.0
        %v435 = vmax.f32 %v428, 0.0
        %v436 = vmax.f32 %v431, 0.0
        %v437 = vpack.c.bf16 %v435, %v434
        %v438 = vpack.c.bf16 %v436, %v436
        %v439 = vld [vmem:[#allocation2] sm:$0xff]
        %v440 = vld [vmem:[#allocation2 + $0x8] sm:$0xff]
        %v441 = vld [vmem:[#allocation2 + $0x10] sm:$0xff]
        %v442 = vld [vmem:[#allocation2 + $0x18] sm:$0xff]
        %v443 = vld [vmem:[#allocation2 + $0x20] sm:$0xff]
        %v444 = vld [vmem:[#allocation2 + $0x28] sm:$0xff]
        %v445 = vld [vmem:[#allocation2 + $0x30] sm:$0xff]
        %v446 = vld [vmem:[#allocation2 + $0x38] sm:$0xff]
        %v447 = vld [vmem:[#allocation2 + $0x40] sm:$0xff]
        %v448 = vld [vmem:[#allocation2 + $0x48] sm:$0xff]
        %v449 = vld [vmem:[#allocation2 + $0x50] sm:$0xff]
        %v450 = vld [vmem:[#allocation2 + $0x58] sm:$0xff]
        %v451 = vld [vmem:[#allocation2 + $0x60] sm:$0xff]
        %v452 = vld [vmem:[#allocation2 + $0x68] sm:$0xff]
        %v453 = vld [vmem:[#allocation2 + $0x70] sm:$0xff]
        %v454 = vld [vmem:[#allocation2 + $0x78] sm:$0xff]
        %v455 = vld [vmem:[#allocation2 + $0x80] sm:$0xff]
        %v456 = vld [vmem:[#allocation2 + $0x88] sm:$0xff]
        %v457 = vld [vmem:[#allocation2 + $0x90] sm:$0xff]
        %v458 = vld [vmem:[#allocation2 + $0x98] sm:$0xff]
        %v459 = vld [vmem:[#allocation2 + $0xa0] sm:$0xff]
        %v460 = vld [vmem:[#allocation2 + $0xa8] sm:$0xff]
        %v461 = vld [vmem:[#allocation2 + $0xb0] sm:$0xff]
        %v462 = vld [vmem:[#allocation2 + $0xb8] sm:$0xff]
        %v463 = vld [vmem:[#allocation2 + $0xc0] sm:$0xff]
        %v464 = vld [vmem:[#allocation2 + $0xc8] sm:$0xff]
        %v465 = vld [vmem:[#allocation2 + $0xd0] sm:$0xff]
        %v466 = vld [vmem:[#allocation2 + $0xd8] sm:$0xff]
        %v467 = vld [vmem:[#allocation2 + $0xe0] sm:$0xff]
        %v468 = vld [vmem:[#allocation2 + $0xe8] sm:$0xff]
        %v469 = vld [vmem:[#allocation2 + $0xf0] sm:$0xff]
        %v470 = vld [vmem:[#allocation2 + $0xf8] sm:$0xff]
        %v471 = vld [vmem:[#allocation2 + $0x100] sm:$0xff]
        %v472 = vld [vmem:[#allocation2 + $0x108] sm:$0xff]
        %v473 = vld [vmem:[#allocation2 + $0x110] sm:$0xff]
        %v474 = vld [vmem:[#allocation2 + $0x118] sm:$0xff]
        %v475 = vld [vmem:[#allocation2 + $0x120] sm:$0xff]
        %v476 = vld [vmem:[#allocation2 + $0x128] sm:$0xff]
        %v477 = vld [vmem:[#allocation2 + $0x130] sm:$0xff]
        %v478 = vld [vmem:[#allocation2 + $0x138] sm:$0xff]
        %v479 = vld [vmem:[#allocation2 + $0x140] sm:$0xff]
        %v480 = vld [vmem:[#allocation2 + $0x148] sm:$0xff]
        %v481 = vld [vmem:[#allocation2 + $0x150] sm:$0xff]
        %v482 = vld [vmem:[#allocation2 + $0x158] sm:$0xff]
        %v483 = vld [vmem:[#allocation2 + $0x160] sm:$0xff]
        %v484 = vld [vmem:[#allocation2 + $0x168] sm:$0xff]
        %v485 = vld [vmem:[#allocation2 + $0x170] sm:$0xff]
        %v486 = vld [vmem:[#allocation2 + $0x178] sm:$0xff]
        %v487 = vld [vmem:[#allocation2 + $0x180] sm:$0xff]
        %v488 = vld [vmem:[#allocation2 + $0x188] sm:$0xff]
        %v489 = vld [vmem:[#allocation2 + $0x190] sm:$0xff]
        %v490 = vld [vmem:[#allocation2 + $0x198] sm:$0xff]
        %v491 = vld [vmem:[#allocation2 + $0x1a0] sm:$0xff]
        %v492 = vld [vmem:[#allocation2 + $0x1a8] sm:$0xff]
        %v493 = vld [vmem:[#allocation2 + $0x1b0] sm:$0xff]
        %v494 = vld [vmem:[#allocation2 + $0x1b8] sm:$0xff]
        %v495 = vld [vmem:[#allocation2 + $0x1c0] sm:$0xff]
        %v496 = vld [vmem:[#allocation2 + $0x1c8] sm:$0xff]
        %v497 = vld [vmem:[#allocation2 + $0x1d0] sm:$0xff]
        %v498 = vld [vmem:[#allocation2 + $0x1d8] sm:$0xff]
        %v499 = vld [vmem:[#allocation2 + $0x1e0] sm:$0xff]
        %v500 = vld [vmem:[#allocation2 + $0x1e8] sm:$0xff]
        %v501 = vld [vmem:[#allocation2 + $0x1f0] sm:$0xff]
        %v502 = vld [vmem:[#allocation2 + $0x1f8] sm:$0xff]
        %v503 = vld [vmem:[%s6] sm:$0xff]
        %v505 = vperm.slane %v503, 0
        %v506 = vperm.slane %v503, 1
        %v507 = vperm.slane %v503, 2
        %v508 = vperm.slane %v503, 3
        %v509 = vperm.slane %v503, 4
        %v510 = vperm.slane %v503, 5
        %v511 = vperm.slane %v503, 6
        %v512 = vperm.slane %v503, 7
        %v585 = vunpack.c.l.b16 %v439
        %v586 = vunpack.c.h.b16 %v439
        %v587 = vunpack.c.l.b16 %v440
        %v588 = vunpack.c.h.b16 %v440
        %v589 = vunpack.c.l.b16 %v441
        %v590 = vunpack.c.h.b16 %v441
        %v591 = vunpack.c.l.b16 %v442
        %v592 = vunpack.c.h.b16 %v442
        %v593 = vunpack.c.l.b16 %v443
        %v594 = vunpack.c.h.b16 %v443
        %v595 = vunpack.c.l.b16 %v444
        %v596 = vunpack.c.h.b16 %v444
        %v597 = vunpack.c.l.b16 %v445
        %v598 = vunpack.c.h.b16 %v445
        %v599 = vunpack.c.l.b16 %v446
        %v600 = vunpack.c.h.b16 %v446
        %v601 = vunpack.c.l.b16 %v447
        %v602 = vunpack.c.h.b16 %v447
        %v603 = vunpack.c.l.b16 %v448
        %v604 = vunpack.c.h.b16 %v448
        %v605 = vunpack.c.l.b16 %v449
        %v606 = vunpack.c.h.b16 %v449
        %v607 = vunpack.c.l.b16 %v450
        %v608 = vunpack.c.h.b16 %v450
        %v609 = vunpack.c.l.b16 %v451
        %v610 = vunpack.c.h.b16 %v451
        %v611 = vunpack.c.l.b16 %v452
        %v612 = vunpack.c.h.b16 %v452
        %v613 = vunpack.c.l.b16 %v453
        %v614 = vunpack.c.h.b16 %v453
        %v615 = vunpack.c.l.b16 %v454
        %v616 = vunpack.c.h.b16 %v454
        %v617 = vunpack.c.l.b16 %v455
        %v618 = vunpack.c.h.b16 %v455
        %v619 = vunpack.c.l.b16 %v456
        %v620 = vunpack.c.h.b16 %v456
        %v621 = vunpack.c.l.b16 %v457
        %v622 = vunpack.c.h.b16 %v457
        %v623 = vunpack.c.l.b16 %v458
        %v624 = vunpack.c.h.b16 %v458
        %v625 = vunpack.c.l.b16 %v459
        %v626 = vunpack.c.h.b16 %v459
        %v627 = vunpack.c.l.b16 %v460
        %v628 = vunpack.c.h.b16 %v460
        %v629 = vunpack.c.l.b16 %v461
        %v630 = vunpack.c.h.b16 %v461
        %v631 = vunpack.c.l.b16 %v462
        %v632 = vunpack.c.h.b16 %v462
        %v633 = vunpack.c.l.b16 %v463
        %v634 = vunpack.c.h.b16 %v463
        %v635 = vunpack.c.l.b16 %v464
        %v636 = vunpack.c.h.b16 %v464
        %v637 = vunpack.c.l.b16 %v465
        %v638 = vunpack.c.h.b16 %v465
        %v639 = vunpack.c.l.b16 %v466
        %v640 = vunpack.c.h.b16 %v466
        %v641 = vunpack.c.l.b16 %v467
        %v642 = vunpack.c.h.b16 %v467
        %v643 = vunpack.c.l.b16 %v468
        %v644 = vunpack.c.h.b16 %v468
        %v645 = vunpack.c.l.b16 %v469
        %v646 = vunpack.c.h.b16 %v469
        %v647 = vunpack.c.l.b16 %v470
        %v648 = vunpack.c.h.b16 %v470
        %v649 = vunpack.c.l.b16 %v471
        %v650 = vunpack.c.h.b16 %v471
        %v651 = vunpack.c.l.b16 %v472
        %v652 = vunpack.c.h.b16 %v472
        %v653 = vunpack.c.l.b16 %v473
        %v654 = vunpack.c.h.b16 %v473
        %v655 = vunpack.c.l.b16 %v474
        %v656 = vunpack.c.h.b16 %v474
        %v657 = vunpack.c.l.b16 %v475
        %v658 = vunpack.c.h.b16 %v475
        %v659 = vunpack.c.l.b16 %v476
        %v660 = vunpack.c.h.b16 %v476
        %v661 = vunpack.c.l.b16 %v477
        %v662 = vunpack.c.h.b16 %v477
        %v663 = vunpack.c.l.b16 %v478
        %v664 = vunpack.c.h.b16 %v478
        %v665 = vunpack.c.l.b16 %v479
        %v666 = vunpack.c.h.b16 %v479
        %v667 = vunpack.c.l.b16 %v480
        %v668 = vunpack.c.h.b16 %v480
        %v669 = vunpack.c.l.b16 %v481
        %v670 = vunpack.c.h.b16 %v481
        %v671 = vunpack.c.l.b16 %v482
        %v672 = vunpack.c.h.b16 %v482
        %v673 = vunpack.c.l.b16 %v483
        %v674 = vunpack.c.h.b16 %v483
        %v675 = vunpack.c.l.b16 %v484
        %v676 = vunpack.c.h.b16 %v484
        %v677 = vunpack.c.l.b16 %v485
        %v678 = vunpack.c.h.b16 %v485
        %v679 = vunpack.c.l.b16 %v486
        %v680 = vunpack.c.h.b16 %v486
        %v681 = vunpack.c.l.b16 %v487
        %v682 = vunpack.c.h.b16 %v487
        %v683 = vunpack.c.l.b16 %v488
        %v684 = vunpack.c.h.b16 %v488
        %v685 = vunpack.c.l.b16 %v489
        %v686 = vunpack.c.h.b16 %v489
        %v687 = vunpack.c.l.b16 %v490
        %v688 = vunpack.c.h.b16 %v490
        %v689 = vunpack.c.l.b16 %v491
        %v690 = vunpack.c.h.b16 %v491
        %v691 = vunpack.c.l.b16 %v492
        %v692 = vunpack.c.h.b16 %v492
        %v693 = vunpack.c.l.b16 %v493
        %v694 = vunpack.c.h.b16 %v493
        %v695 = vunpack.c.l.b16 %v494
        %v696 = vunpack.c.h.b16 %v494
        %v697 = vunpack.c.l.b16 %v495
        %v698 = vunpack.c.h.b16 %v495
        %v699 = vunpack.c.l.b16 %v496
        %v700 = vunpack.c.h.b16 %v496
        %v701 = vunpack.c.l.b16 %v497
        %v702 = vunpack.c.h.b16 %v497
        %v703 = vunpack.c.l.b16 %v498
        %v704 = vunpack.c.h.b16 %v498
        %v705 = vunpack.c.l.b16 %v499
        %v706 = vunpack.c.h.b16 %v499
        %v707 = vunpack.c.l.b16 %v500
        %v708 = vunpack.c.h.b16 %v500
        %v709 = vunpack.c.l.b16 %v501
        %v710 = vunpack.c.h.b16 %v501
        %v711 = vunpack.c.l.b16 %v502
        %v712 = vunpack.c.h.b16 %v502
        %v713 = vpack.c.b16 %v593, %v585
        %v714 = vpack.c.b16 %v594, %v586
        %v715 = vpack.c.b16 %v595, %v587
        %v716 = vpack.c.b16 %v596, %v588
        %v717 = vpack.c.b16 %v597, %v589
        %v718 = vpack.c.b16 %v598, %v590
        %v719 = vpack.c.b16 %v599, %v591
        %v720 = vpack.c.b16 %v600, %v592
        %v721 = vpack.c.b16 %v609, %v601
        %v722 = vpack.c.b16 %v610, %v602
        %v723 = vpack.c.b16 %v611, %v603
        %v724 = vpack.c.b16 %v612, %v604
        %v725 = vpack.c.b16 %v613, %v605
        %v726 = vpack.c.b16 %v614, %v606
        %v727 = vpack.c.b16 %v615, %v607
        %v728 = vpack.c.b16 %v616, %v608
        %v729 = vpack.c.b16 %v625, %v617
        %v730 = vpack.c.b16 %v626, %v618
        %v731 = vpack.c.b16 %v627, %v619
        %v732 = vpack.c.b16 %v628, %v620
        %v733 = vpack.c.b16 %v629, %v621
        %v734 = vpack.c.b16 %v630, %v622
        %v735 = vpack.c.b16 %v631, %v623
        %v736 = vpack.c.b16 %v632, %v624
        %v737 = vpack.c.b16 %v641, %v633
        %v738 = vpack.c.b16 %v642, %v634
        %v739 = vpack.c.b16 %v643, %v635
        %v740 = vpack.c.b16 %v644, %v636
        %v741 = vpack.c.b16 %v645, %v637
        %v742 = vpack.c.b16 %v646, %v638
        %v743 = vpack.c.b16 %v647, %v639
        %v744 = vpack.c.b16 %v648, %v640
        %v745 = vpack.c.b16 %v657, %v649
        %v746 = vpack.c.b16 %v658, %v650
        %v747 = vpack.c.b16 %v659, %v651
        %v748 = vpack.c.b16 %v660, %v652
        %v749 = vpack.c.b16 %v661, %v653
        %v750 = vpack.c.b16 %v662, %v654
        %v751 = vpack.c.b16 %v663, %v655
        %v752 = vpack.c.b16 %v664, %v656
        %v753 = vpack.c.b16 %v673, %v665
        %v754 = vpack.c.b16 %v674, %v666
        %v755 = vpack.c.b16 %v675, %v667
        %v756 = vpack.c.b16 %v676, %v668
        %v757 = vpack.c.b16 %v677, %v669
        %v758 = vpack.c.b16 %v678, %v670
        %v759 = vpack.c.b16 %v679, %v671
        %v760 = vpack.c.b16 %v680, %v672
        %v761 = vpack.c.b16 %v689, %v681
        %v762 = vpack.c.b16 %v690, %v682
        %v763 = vpack.c.b16 %v691, %v683
        %v764 = vpack.c.b16 %v692, %v684
        %v765 = vpack.c.b16 %v693, %v685
        %v766 = vpack.c.b16 %v694, %v686
        %v767 = vpack.c.b16 %v695, %v687
        %v768 = vpack.c.b16 %v696, %v688
        %v769 = vpack.c.b16 %v705, %v697
        %v770 = vpack.c.b16 %v706, %v698
        %v771 = vpack.c.b16 %v707, %v699
        %v772 = vpack.c.b16 %v708, %v700
        %v773 = vpack.c.b16 %v709, %v701
        %v774 = vpack.c.b16 %v710, %v702
        %v775 = vpack.c.b16 %v711, %v703
        %v776 = vpack.c.b16 %v712, %v704
        %841 = vmatpush.bf16.msra.mxu0 %v769
        %842 = vmatpush.bf16.msra.mxu0 %v761
        %843 = vmatpush.bf16.msra.mxu0 %v753
        %844 = vmatpush.bf16.msra.mxu0 %v745
        %845 = vmatpush.bf16.msra.mxu0 %v737
        %846 = vmatpush.bf16.msra.mxu0 %v729
        %847 = vmatpush.bf16.msra.mxu0 %v721
        %848 = vmatpush.bf16.msra.mxu0 %v713
        %849 = vmatmul.bf16.gmra.mxu0 %v437
        %v850 = vpop.f32.mrf.mxu0
        %v851 = vadd.f32 %v505, %v850
        %v852 = vpop.f32.mrf.mxu0
        %v853 = vadd.f32 %v505, %v852
        %854 = vmatmul.bf16.gmra.mxu0 %v438
        %v855 = vpop.f32.mrf.mxu0
        %v856 = vadd.f32 %v505, %v855
        %v857 = vpop.f32.mrf.mxu0
        %858 = vdwg.mxu0
        %859 = vmatpush.bf16.msra.mxu0 %v770
        %860 = vmatpush.bf16.msra.mxu0 %v762
        %861 = vmatpush.bf16.msra.mxu0 %v754
        %862 = vmatpush.bf16.msra.mxu0 %v746
        %863 = vmatpush.bf16.msra.mxu0 %v738
        %864 = vmatpush.bf16.msra.mxu0 %v730
        %865 = vmatpush.bf16.msra.mxu0 %v722
        %866 = vmatpush.bf16.msra.mxu0 %v714
        %867 = vmatmul.bf16.gmra.mxu0 %v437
        %v868 = vpop.f32.mrf.mxu0
        %v869 = vadd.f32 %v506, %v868
        %v870 = vpop.f32.mrf.mxu0
        %v871 = vadd.f32 %v506, %v870
        %872 = vmatmul.bf16.gmra.mxu0 %v438
        %v873 = vpop.f32.mrf.mxu0
        %v874 = vadd.f32 %v506, %v873
        %v875 = vpop.f32.mrf.mxu0
        %876 = vdwg.mxu0
        %877 = vmatpush.bf16.msra.mxu0 %v771
        %878 = vmatpush.bf16.msra.mxu0 %v763
        %879 = vmatpush.bf16.msra.mxu0 %v755
        %880 = vmatpush.bf16.msra.mxu0 %v747
        %881 = vmatpush.bf16.msra.mxu0 %v739
        %882 = vmatpush.bf16.msra.mxu0 %v731
        %883 = vmatpush.bf16.msra.mxu0 %v723
        %884 = vmatpush.bf16.msra.mxu0 %v715
        %885 = vmatmul.bf16.gmra.mxu0 %v437
        %v886 = vpop.f32.mrf.mxu0
        %v887 = vadd.f32 %v507, %v886
        %v888 = vpop.f32.mrf.mxu0
        %v889 = vadd.f32 %v507, %v888
        %890 = vmatmul.bf16.gmra.mxu0 %v438
        %v891 = vpop.f32.mrf.mxu0
        %v892 = vadd.f32 %v507, %v891
        %v893 = vpop.f32.mrf.mxu0
        %894 = vdwg.mxu0
        %895 = vmatpush.bf16.msra.mxu0 %v772
        %896 = vmatpush.bf16.msra.mxu0 %v764
        %897 = vmatpush.bf16.msra.mxu0 %v756
        %898 = vmatpush.bf16.msra.mxu0 %v748
        %899 = vmatpush.bf16.msra.mxu0 %v740
        %900 = vmatpush.bf16.msra.mxu0 %v732
        %901 = vmatpush.bf16.msra.mxu0 %v724
        %902 = vmatpush.bf16.msra.mxu0 %v716
        %903 = vmatmul.bf16.gmra.mxu0 %v437
        %v904 = vpop.f32.mrf.mxu0
        %v905 = vadd.f32 %v508, %v904
        %v906 = vpop.f32.mrf.mxu0
        %v907 = vadd.f32 %v508, %v906
        %908 = vmatmul.bf16.gmra.mxu0 %v438
        %v909 = vpop.f32.mrf.mxu0
        %v910 = vadd.f32 %v508, %v909
        %v911 = vpop.f32.mrf.mxu0
        %912 = vdwg.mxu0
        %913 = vmatpush.bf16.msra.mxu0 %v773
        %914 = vmatpush.bf16.msra.mxu0 %v765
        %915 = vmatpush.bf16.msra.mxu0 %v757
        %916 = vmatpush.bf16.msra.mxu0 %v749
        %917 = vmatpush.bf16.msra.mxu0 %v741
        %918 = vmatpush.bf16.msra.mxu0 %v733
        %919 = vmatpush.bf16.msra.mxu0 %v725
        %920 = vmatpush.bf16.msra.mxu0 %v717
        %921 = vmatmul.bf16.gmra.mxu0 %v437
        %v922 = vpop.f32.mrf.mxu0
        %v923 = vadd.f32 %v509, %v922
        %v924 = vpop.f32.mrf.mxu0
        %v925 = vadd.f32 %v509, %v924
        %926 = vmatmul.bf16.gmra.mxu0 %v438
        %v927 = vpop.f32.mrf.mxu0
        %v928 = vadd.f32 %v509, %v927
        %v929 = vpop.f32.mrf.mxu0
        %930 = vdwg.mxu0
        %931 = vmatpush.bf16.msra.mxu0 %v774
        %932 = vmatpush.bf16.msra.mxu0 %v766
        %933 = vmatpush.bf16.msra.mxu0 %v758
        %934 = vmatpush.bf16.msra.mxu0 %v750
        %935 = vmatpush.bf16.msra.mxu0 %v742
        %936 = vmatpush.bf16.msra.mxu0 %v734
        %937 = vmatpush.bf16.msra.mxu0 %v726
        %938 = vmatpush.bf16.msra.mxu0 %v718
        %939 = vmatmul.bf16.gmra.mxu0 %v437
        %v940 = vpop.f32.mrf.mxu0
        %v941 = vadd.f32 %v510, %v940
        %v942 = vpop.f32.mrf.mxu0
        %v943 = vadd.f32 %v510, %v942
        %944 = vmatmul.bf16.gmra.mxu0 %v438
        %v945 = vpop.f32.mrf.mxu0
        %v946 = vadd.f32 %v510, %v945
        %v947 = vpop.f32.mrf.mxu0
        %948 = vdwg.mxu0
        %949 = vmatpush.bf16.msra.mxu0 %v775
        %950 = vmatpush.bf16.msra.mxu0 %v767
        %951 = vmatpush.bf16.msra.mxu0 %v759
        %952 = vmatpush.bf16.msra.mxu0 %v751
        %953 = vmatpush.bf16.msra.mxu0 %v743
        %954 = vmatpush.bf16.msra.mxu0 %v735
        %955 = vmatpush.bf16.msra.mxu0 %v727
        %956 = vmatpush.bf16.msra.mxu0 %v719
        %957 = vmatmul.bf16.gmra.mxu0 %v437
        %v958 = vpop.f32.mrf.mxu0
        %v959 = vadd.f32 %v511, %v958
        %v960 = vpop.f32.mrf.mxu0
        %v961 = vadd.f32 %v511, %v960
        %962 = vmatmul.bf16.gmra.mxu0 %v438
        %v963 = vpop.f32.mrf.mxu0
        %v964 = vadd.f32 %v511, %v963
        %v965 = vpop.f32.mrf.mxu0
        %966 = vdwg.mxu0
        %967 = vmatpush.bf16.msra.mxu0 %v776
        %968 = vmatpush.bf16.msra.mxu0 %v768
        %969 = vmatpush.bf16.msra.mxu0 %v760
        %970 = vmatpush.bf16.msra.mxu0 %v752
        %971 = vmatpush.bf16.msra.mxu0 %v744
        %972 = vmatpush.bf16.msra.mxu0 %v736
        %973 = vmatpush.bf16.msra.mxu0 %v728
        %974 = vmatpush.bf16.msra.mxu0 %v720
        %975 = vmatmul.bf16.gmra.mxu0 %v437
        %v976 = vpop.f32.mrf.mxu0
        %v977 = vadd.f32 %v512, %v976
        %v978 = vpop.f32.mrf.mxu0
        %v979 = vadd.f32 %v512, %v978
        %980 = vmatmul.bf16.gmra.mxu0 %v438
        %v981 = vpop.f32.mrf.mxu0
        %v982 = vadd.f32 %v512, %v981
        %v983 = vpop.f32.mrf.mxu0
        %984 = vdwg.mxu0
        %v985 = vmax.f32 %v851, %v853
        %v986 = vsel %vm346, %v856, -inf
        %v987 = vmax.f32 %v985, %v986
        %v988 = vrot.slane %v987, 4
        %v989 = vmax.f32 %v987, %v988
        %v990 = vrot.slane %v989, 2
        %v991 = vmax.f32 %v989, %v990
        %v992 = vrot.slane %v991, 1
        %v993 = vmax.f32 %v991, %v992
        %v994 = vmax.f32 %v869, %v871
        %v995 = vsel %vm346, %v874, -inf
        %v996 = vmax.f32 %v994, %v995
        %v997 = vrot.slane %v996, 4
        %v998 = vmax.f32 %v996, %v997
        %v999 = vrot.slane %v998, 2
        %v1000 = vmax.f32 %v998, %v999
        %v1001 = vrot.slane %v1000, 1
        %v1002 = vmax.f32 %v1000, %v1001
        %v1003 = vmax.f32 %v887, %v889
        %v1004 = vsel %vm346, %v892, -inf
        %v1005 = vmax.f32 %v1003, %v1004
        %v1006 = vrot.slane %v1005, 4
        %v1007 = vmax.f32 %v1005, %v1006
        %v1008 = vrot.slane %v1007, 2
        %v1009 = vmax.f32 %v1007, %v1008
        %v1010 = vrot.slane %v1009, 1
        %v1011 = vmax.f32 %v1009, %v1010
        %v1012 = vmax.f32 %v905, %v907
        %v1013 = vsel %vm346, %v910, -inf
        %v1014 = vmax.f32 %v1012, %v1013
        %v1015 = vrot.slane %v1014, 4
        %v1016 = vmax.f32 %v1014, %v1015
        %v1017 = vrot.slane %v1016, 2
        %v1018 = vmax.f32 %v1016, %v1017
        %v1019 = vrot.slane %v1018, 1
        %v1020 = vmax.f32 %v1018, %v1019
        %v1021 = vmax.f32 %v923, %v925
        %v1022 = vsel %vm346, %v928, -inf
        %v1023 = vmax.f32 %v1021, %v1022
        %v1024 = vrot.slane %v1023, 4
        %v1025 = vmax.f32 %v1023, %v1024
        %v1026 = vrot.slane %v1025, 2
        %v1027 = vmax.f32 %v1025, %v1026
        %v1028 = vrot.slane %v1027, 1
        %v1029 = vmax.f32 %v1027, %v1028
        %v1030 = vmax.f32 %v941, %v943
        %v1031 = vsel %vm346, %v946, -inf
        %v1032 = vmax.f32 %v1030, %v1031
        %v1033 = vrot.slane %v1032, 4
        %v1034 = vmax.f32 %v1032, %v1033
        %v1035 = vrot.slane %v1034, 2
        %v1036 = vmax.f32 %v1034, %v1035
        %v1037 = vrot.slane %v1036, 1
        %v1038 = vmax.f32 %v1036, %v1037
        %v1039 = vmax.f32 %v959, %v961
        %v1040 = vsel %vm346, %v964, -inf
        %v1041 = vmax.f32 %v1039, %v1040
        %v1042 = vrot.slane %v1041, 4
        %v1043 = vmax.f32 %v1041, %v1042
        %v1044 = vrot.slane %v1043, 2
        %v1045 = vmax.f32 %v1043, %v1044
        %v1046 = vrot.slane %v1045, 1
        %v1047 = vmax.f32 %v1045, %v1046
        %v1048 = vmax.f32 %v977, %v979
        %v1049 = vsel %vm346, %v982, -inf
        %v1050 = vmax.f32 %v1048, %v1049
        %v1051 = vrot.slane %v1050, 4
        %v1052 = vmax.f32 %v1050, %v1051
        %v1053 = vrot.slane %v1052, 2
        %v1054 = vmax.f32 %v1052, %v1053
        %v1055 = vrot.slane %v1054, 1
        %v1056 = vmax.f32 %v1054, %v1055
        %p1057 = scmp.eq.s32.totalorder %s24, 0
        // Predicated region
        $region53: #{msn_forward.5} parent=47 // pred_check
          %p1058 = pneg %p1057
        $region54: #{msn_forward.5} parent=47 // pred_check_branch
          %1060 = sbr.rel (%p1058) target = $region56
        $region55: #{msn_forward.5} parent=47 // pred_region
          %v1069 = vrot.slane %v1002, 7
          %v1070 = vrot.slane %v1011, 6
          %v1071 = vrot.slane %v1020, 5
          %v1072 = vrot.slane %v1029, 4
          %v1073 = vrot.slane %v1038, 3
          %v1074 = vrot.slane %v1047, 2
          %v1075 = vrot.slane %v1056, 1
          %vm1076 = vcmask 1040384
          %v1077 = vsel %vm1076, %v993, %v1069
          %vm1078 = vcmask 1042434
          %v1079 = vsel %vm1078, %v1070, %v1071
          %vm1080 = vcmask 1041408
          %v1081 = vsel %vm1080, %v1077, %v1079
          %vm1082 = vcmask 1044484
          %v1083 = vsel %vm1082, %v1072, %v1073
          %vm1084 = vcmask 1046534
          %v1085 = vsel %vm1084, %v1074, %v1075
          %vm1086 = vcmask 1045508
          %v1087 = vsel %vm1086, %v1083, %v1085
          %v1088 = vsel %vm346, %v1081, %v1087
          %1090 = vst [vmem:[%s321] sm:$0xff] %v1088
        $region56: #{msn_forward.5} parent=47 // pred_fallthru
          _
        %p1091 = scmp.gt.s32.totalorder %s24, 0
        // Predicated region
        $region57: #{msn_forward.5} parent=47 // pred_check
          %p1092 = pneg %p1091
        $region58: #{msn_forward.5} parent=47 // pred_check_branch
          %1094 = sbr.rel (%p1092) target = $region60
        $region59: #{msn_forward.5} parent=47 // pred_region
          %v1095 = vld [vmem:[%s321] sm:$0xff]
          %v1104 = vrot.slane %v1002, 7
          %v1105 = vrot.slane %v1011, 6
          %v1106 = vrot.slane %v1020, 5
          %v1107 = vrot.slane %v1029, 4
          %v1108 = vrot.slane %v1038, 3
          %v1109 = vrot.slane %v1047, 2
          %v1110 = vrot.slane %v1056, 1
          %vm1111 = vcmask 1040384
          %v1112 = vsel %vm1111, %v993, %v1104
          %vm1113 = vcmask 1042434
          %v1114 = vsel %vm1113, %v1105, %v1106
          %vm1115 = vcmask 1041408
          %v1116 = vsel %vm1115, %v1112, %v1114
          %vm1117 = vcmask 1044484
          %v1118 = vsel %vm1117, %v1107, %v1108
          %vm1119 = vcmask 1046534
          %v1120 = vsel %vm1119, %v1109, %v1110
          %vm1121 = vcmask 1045508
          %v1122 = vsel %vm1121, %v1118, %v1120
          %v1123 = vsel %vm346, %v1116, %v1122
          %v1125 = vmax.f32 %v1095, %v1123
          %1126 = vst [vmem:[%s321] sm:$0xff] %v1125
        $region60: #{msn_forward.5} parent=47 // pred_fallthru
          _
        %p1127 = scmp.lt.s32.totalorder %s23, 1
        %s1128 = scalar_select %p1127, %s23, 1
        %s1129 = smul.addr %s1128, 8
        %s1130 = scalar_lea.vmem %s7, %s1129
        // Predicated region
        $region61: #{msn_forward.5} parent=47 // pred_check
          %p1131 = pneg %p203
        $region62: #{msn_forward.5} parent=47 // pred_check_branch
          %1133 = sbr.rel (%p1131) target = $region64
        $region63: #{msn_forward.5} parent=47 // pred_region
          _
        $region64: #{msn_forward.5} parent=47 // pred_fallthru
          _
      $region48: #{msn_forward.5} parent=5 // pred_fallthru
        _
      %p1134 = scmp.le.s32.totalorder 2, %s14
      // Predicated region
      $region65: #{msn_forward.5} parent=5 // pred_check
        %p1135 = pneg %p1134
      $region66: #{msn_forward.5} parent=5 // pred_check_branch
        %1137 = sbr.rel (%p1135) target = $region68
      $region67: #{msn_forward.5} parent=5 // pred_region
        %s1138 = ssub.s32 %s14, 2
        // Predicated region
        $region69: #{msn_forward.5} parent=67 // pred_check
          %p1139 = pneg %p209
        $region70: #{msn_forward.5} parent=67 // pred_check_branch
          %1141 = sbr.rel (%p1139) target = $region72
        $region71: #{msn_forward.5} parent=67 // pred_region
          %p1142 = scmp.lt.s32.totalorder %s25, 1
          %s1143 = scalar_select %p1142, %s25, 1
          %s1144 = smul.addr %s1143, 8
          %s1145 = scalar_lea.vmem %s7, %s1144
        $region72: #{msn_forward.5} parent=67 // pred_fallthru
          _
      $region68: #{msn_forward.5} parent=5 // pred_fallthru
        _
    $region6: #{msn_forward.5} parent=1 // loop_footer
      %s18 = sadd.s32 1, %s14
    $region7: #{msn_forward.5} parent=1 // loop_footer_branch
      %13 = sbr.rel target = $region3
    $region8: #{msn_forward.5} parent=1 // loop_exit
      _
    %1146 = vsyncpa [#allocation3], 1
    %s1147 = scalar_lea.sflag [#allocation3], 1
    %1148 = vsyncpa %s1147, 1

// kernel: msn_forward.9
$region0: #{msn_forward.9}
  #allocation0 [shape = 'u32[]', space=smem, size = 0x4, offset = 0x4, fixed_abs, tag = 'smem constant byte address 0x4 - core index']
  #allocation1 [shape = 'u32[72,128]{1,0:T(1,128)}', space=vmem, size = 0x9000, scoped, tag = 'internal scratch']
  %s0 = inlined_call_operand.vmem [shape: f32[2,52,3], index: 0, kind: input, shape index: {}]
  %s1 = inlined_call_operand.vmem [shape: f32[2,52,65], index: 1, kind: input, shape index: {}]
  %s2 = inlined_call_operand.vmem [shape: f32[2,1,512], index: 2, kind: input, shape index: {}]
  %s3 = inlined_call_operand.vmem [shape: bf16[3,128], index: 3, kind: input, shape index: {}]
  %s4 = inlined_call_operand.vmem [shape: bf16[65,128], index: 4, kind: input, shape index: {}]
  %s5 = inlined_call_operand.vmem [shape: f32[1,128], index: 5, kind: input, shape index: {}]
  %s6 = inlined_call_operand.hbm [shape: bf16[128,512], index: 6, kind: input, shape index: {}]
  %s7 = inlined_call_operand.vmem [shape: bf16[512,256], index: 7, kind: input, shape index: {}]
  %s8 = inlined_call_operand.vmem [shape: f32[1,256], index: 8, kind: input, shape index: {}]
  %s9 = inlined_call_operand.vmem [shape: bf16[256,128], index: 9, kind: input, shape index: {}]
  %s10 = inlined_call_operand.vmem [shape: f32[1,128], index: 10, kind: input, shape index: {}]
  %s11 = inlined_call_operand.vmem [shape: bf16[8,128], index: 11, kind: input, shape index: {}]
  %s12 = inlined_call_operand.vmem [shape: f32[8,1], index: 12, kind: input, shape index: {}]
  %s13 = inlined_call_operand.vmem [shape: f32[2,8,52], index: 13, kind: output, shape index: {}]
  %s14 = sld [smem:[#allocation0]]
  $region89: #{msn_forward.9} parent=0
    _
  %s16 = ssub.s32 1, %s14
  %s17 = scalar_select 0, %s16, %s14
  $region1: #{msn_forward.9} parent=0
    #allocation2 [shape = 'u8[131072]{0}', space=vmem, size = 0x20000, scoped, tag = 'input window, operand 6, single buffered']
    #allocation3 [shape = 's32[2]{0}', space=sflag, size = 0x8, scoped, tag = 'scoped memory for msn_forward.9']
    %18 = vsyncpa [#allocation3], 0
    loop: start=0, step=1, limit=4
    $region2: #{msn_forward.9} parent=1 // loop_pre_header
      _
    $region3: #{msn_forward.9} parent=1 // loop_header
      %s20 = sphi 0, %s24
      %p21 = scmp.ge.s32.totalorder %s20, 4
      %s27 = sphi 0, %s39
      %s28 = sphi 0, %s35
      %s29 = sphi 0, %s27
      %s30 = sphi 0, %s28
      %s31 = sphi 0, %s29
      %s32 = sphi 0, %s30
      %s44 = sphi 0, %s46
      %s47 = sphi 0, %s44
      %s48 = sphi 0, %s47
      %s64 = sphi 0, %s48
      %s72 = sphi 0, %s74
      %s75 = sphi 0, %s72
      %s76 = sphi 0, %s75
      %s92 = sphi 0, %s76
      %s98 = sphi 0, %s100
      %s101 = sphi 0, %s98
      %s102 = sphi 0, %s101
      %s118 = sphi 0, %s102
      %s122 = sphi 0, %s122
      %s124 = sphi 0, %s122
      %s125 = sphi 0, %s124
      %s139 = sphi 0, %s125
      %s143 = sphi 0, %s143
      %s145 = sphi 0, %s143
      %s146 = sphi 0, %s145
      %s160 = sphi 0, %s146
      %s164 = sphi 0, %s164
      %s166 = sphi 0, %s164
      %s167 = sphi 0, %s166
      %s181 = sphi 0, %s167
      %s185 = sphi 0, %s185
      %s187 = sphi 0, %s185
      %s188 = sphi 0, %s187
      %s202 = sphi 0, %s188
      %s206 = sphi 0, %s206
      %s208 = sphi 0, %s206
      %s209 = sphi 0, %s208
      %s223 = sphi 0, %s209
      %s227 = sphi 0, %s227
      %s229 = sphi 0, %s227
      %s230 = sphi 0, %s229
      %s244 = sphi 0, %s230
      %s248 = sphi 0, %s248
      %s250 = sphi 0, %s248
      %s251 = sphi 0, %s250
      %s265 = sphi 0, %s251
      %s269 = sphi 0, %s269
      %s271 = sphi 0, %s269
      %s272 = sphi 0, %s271
      %s286 = sphi 0, %s272
      %s290 = sphi 0, %s290
      %s292 = sphi 0, %s290
      %s293 = sphi 0, %s292
      %s307 = sphi 0, %s293
      %s311 = sphi 0, %s311
      %s313 = sphi 0, %s311
      %s314 = sphi 0, %s313
      %s328 = sphi 0, %s314
      %s336 = sphi 0, %s338
      %s339 = sphi 0, %s336
      %s340 = sphi 0, %s339
      %s356 = sphi 0, %s340
    $region4: #{msn_forward.9} parent=1 // loop_header_branch
      %23 = sbr.rel (%p21) target = $region8
    $region5: #{msn_forward.9} parent=1 // loop_body
      %s25 = ssub.s32 %s20, 1
      %s26 = ssub.s32 %s20, 2
      %s33 = sadd.s32 1, %s28
      %p34 = scmp.ge.s32.totalorder %s33, 1
      %s35 = scalar_select %p34, 0, %s33
      %s36 = sadd.s32 1, %s27
      %s37 = scalar_select %p34, %s36, %s27
      %p38 = scmp.ge.s32.totalorder %s37, 2
      %s39 = scalar_select %p38, 0, %s37
      %s40 = ssub.s32 %s27, %s39
      %s41 = ssub.s32 %s28, %s35
      %s42 = sor.u32 %s40, %s41
      %p43 = scmp.eq.s32.totalorder %s42, 0
      %s45 = sadd.s32 %s44, 1
      %s46 = scalar_select %p43, %s44, %s45
      %p49 = pneg %p43
      %p50 = scmp.eq.s32.totalorder %s20, 1
      %p51 = por %p49, %p50
      %p52 = scmp.ne.s32.totalorder %s44, %s47
      %p53 = scmp.eq.s32.totalorder %s20, 0
      %p54 = por %p52, %p53
      %p55 = scmp.ne.s32.totalorder %s44, %s47
      %p56 = scmp.eq.s32.totalorder %s25, 1
      %p57 = por %p55, %p56
      %p58 = scmp.ne.s32.totalorder %s47, %s48
      %p59 = scmp.eq.s32.totalorder %s25, 0
      %p60 = por %p58, %p59
      %p61 = scmp.ne.s32.totalorder %s47, %s48
      %p62 = scmp.eq.s32.totalorder %s26, 1
      %p63 = por %p61, %p62
      %p65 = scmp.ne.s32.totalorder %s48, %s64
      %p66 = scmp.eq.s32.totalorder %s26, 0
      %p67 = por %p65, %p66
      %s68 = ssub.s32 %s27, %s39
      %s69 = ssub.s32 %s28, %s35
      %s70 = sor.u32 %s68, %s69
      %p71 = scmp.eq.s32.totalorder %s70, 0
      %s73 = sadd.s32 %s72, 1
      %s74 = scalar_select %p71, %s72, %s73
      %p77 = pneg %p71
      %p78 = scmp.eq.s32.totalorder %s20, 1
      %p79 = por %p77, %p78
      %p80 = scmp.ne.s32.totalorder %s72, %s75
      %p81 = scmp.eq.s32.totalorder %s20, 0
      %p82 = por %p80, %p81
      %p83 = scmp.ne.s32.totalorder %s72, %s75
      %p84 = scmp.eq.s32.totalorder %s25, 1
      %p85 = por %p83, %p84
      %p86 = scmp.ne.s32.totalorder %s75, %s76
      %p87 = scmp.eq.s32.totalorder %s25, 0
      %p88 = por %p86, %p87
      %p89 = scmp.ne.s32.totalorder %s75, %s76
      %p90 = scmp.eq.s32.totalorder %s26, 1
      %p91 = por %p89, %p90
      %p93 = scmp.ne.s32.totalorder %s76, %s92
      %p94 = scmp.eq.s32.totalorder %s26, 0
      %p95 = por %p93, %p94
      %s96 = ssub.s32 %s27, %s39
      %p97 = scmp.eq.s32.totalorder %s96, 0
      %s99 = sadd.s32 %s98, 1
      %s100 = scalar_select %p97, %s98, %s99
      %p103 = pneg %p97
      %p104 = scmp.eq.s32.totalorder %s20, 1
      %p105 = por %p103, %p104
      %p106 = scmp.ne.s32.totalorder %s98, %s101
      %p107 = scmp.eq.s32.totalorder %s20, 0
      %p108 = por %p106, %p107
      %p109 = scmp.ne.s32.totalorder %s98, %s101
      %p110 = scmp.eq.s32.totalorder %s25, 1
      %p111 = por %p109, %p110
      %p112 = scmp.ne.s32.totalorder %s101, %s102
      %p113 = scmp.eq.s32.totalorder %s25, 0
      %p114 = por %p112, %p113
      %p115 = scmp.ne.s32.totalorder %s101, %s102
      %p116 = scmp.eq.s32.totalorder %s26, 1
      %p117 = por %p115, %p116
      %p119 = scmp.ne.s32.totalorder %s102, %s118
      %p120 = scmp.eq.s32.totalorder %s26, 0
      %p121 = por %p119, %p120
      %s123 = sadd.s32 %s122, 1
      %p126 = scmp.eq.s32.totalorder %s20, 1
      %p127 = scmp.ne.s32.totalorder %s122, %s124
      %p128 = scmp.eq.s32.totalorder %s20, 0
      %p129 = por %p127, %p128
      %p130 = scmp.ne.s32.totalorder %s122, %s124
      %p131 = scmp.eq.s32.totalorder %s25, 1
      %p132 = por %p130, %p131
      %p133 = scmp.ne.s32.totalorder %s124, %s125
      %p134 = scmp.eq.s32.totalorder %s25, 0
      %p135 = por %p133, %p134
      %p136 = scmp.ne.s32.totalorder %s124, %s125
      %p137 = scmp.eq.s32.totalorder %s26, 1
      %p138 = por %p136, %p137
      %p140 = scmp.ne.s32.totalorder %s125, %s139
      %p141 = scmp.eq.s32.totalorder %s26, 0
      %p142 = por %p140, %p141
      %s144 = sadd.s32 %s143, 1
      %p147 = scmp.eq.s32.totalorder %s20, 1
      %p148 = scmp.ne.s32.totalorder %s143, %s145
      %p149 = scmp.eq.s32.totalorder %s20, 0
      %p150 = por %p148, %p149
      %p151 = scmp.ne.s32.totalorder %s143, %s145
      %p152 = scmp.eq.s32.totalorder %s25, 1
      %p153 = por %p151, %p152
      %p154 = scmp.ne.s32.totalorder %s145, %s146
      %p155 = scmp.eq.s32.totalorder %s25, 0
      %p156 = por %p154, %p155
      %p157 = scmp.ne.s32.totalorder %s145, %s146
      %p158 = scmp.eq.s32.totalorder %s26, 1
      %p159 = por %p157, %p158
      %p161 = scmp.ne.s32.totalorder %s146, %s160
      %p162 = scmp.eq.s32.totalorder %s26, 0
      %p163 = por %p161, %p162
      %s165 = sadd.s32 %s164, 1
      %p168 = scmp.eq.s32.totalorder %s20, 1
      %p169 = scmp.ne.s32.totalorder %s164, %s166
      %p170 = scmp.eq.s32.totalorder %s20, 0
      %p171 = por %p169, %p170
      %p172 = scmp.ne.s32.totalorder %s164, %s166
      %p173 = scmp.eq.s32.totalorder %s25, 1
      %p174 = por %p172, %p173
      %p175 = scmp.ne.s32.totalorder %s166, %s167
      %p176 = scmp.eq.s32.totalorder %s25, 0
      %p177 = por %p175, %p176
      %p178 = scmp.ne.s32.totalorder %s166, %s167
      %p179 = scmp.eq.s32.totalorder %s26, 1
      %p180 = por %p178, %p179
      %p182 = scmp.ne.s32.totalorder %s167, %s181
      %p183 = scmp.eq.s32.totalorder %s26, 0
      %p184 = por %p182, %p183
      %s186 = sadd.s32 %s185, 1
      %p189 = scmp.eq.s32.totalorder %s20, 1
      %p190 = scmp.ne.s32.totalorder %s185, %s187
      %p191 = scmp.eq.s32.totalorder %s20, 0
      %p192 = por %p190, %p191
      %p193 = scmp.ne.s32.totalorder %s185, %s187
      %p194 = scmp.eq.s32.totalorder %s25, 1
      %p195 = por %p193, %p194
      %p196 = scmp.ne.s32.totalorder %s187, %s188
      %p197 = scmp.eq.s32.totalorder %s25, 0
      %p198 = por %p196, %p197
      %p199 = scmp.ne.s32.totalorder %s187, %s188
      %p200 = scmp.eq.s32.totalorder %s26, 1
      %p201 = por %p199, %p200
      %p203 = scmp.ne.s32.totalorder %s188, %s202
      %p204 = scmp.eq.s32.totalorder %s26, 0
      %p205 = por %p203, %p204
      %s207 = sadd.s32 %s206, 1
      %p210 = scmp.eq.s32.totalorder %s20, 1
      %p211 = scmp.ne.s32.totalorder %s206, %s208
      %p212 = scmp.eq.s32.totalorder %s20, 0
      %p213 = por %p211, %p212
      %p214 = scmp.ne.s32.totalorder %s206, %s208
      %p215 = scmp.eq.s32.totalorder %s25, 1
      %p216 = por %p214, %p215
      %p217 = scmp.ne.s32.totalorder %s208, %s209
      %p218 = scmp.eq.s32.totalorder %s25, 0
      %p219 = por %p217, %p218
      %p220 = scmp.ne.s32.totalorder %s208, %s209
      %p221 = scmp.eq.s32.totalorder %s26, 1
      %p222 = por %p220, %p221
      %p224 = scmp.ne.s32.totalorder %s209, %s223
      %p225 = scmp.eq.s32.totalorder %s26, 0
      %p226 = por %p224, %p225
      %s228 = sadd.s32 %s227, 1
      %p231 = scmp.eq.s32.totalorder %s20, 1
      %p232 = scmp.ne.s32.totalorder %s227, %s229
      %p233 = scmp.eq.s32.totalorder %s20, 0
      %p234 = por %p232, %p233
      %p235 = scmp.ne.s32.totalorder %s227, %s229
      %p236 = scmp.eq.s32.totalorder %s25, 1
      %p237 = por %p235, %p236
      %p238 = scmp.ne.s32.totalorder %s229, %s230
      %p239 = scmp.eq.s32.totalorder %s25, 0
      %p240 = por %p238, %p239
      %p241 = scmp.ne.s32.totalorder %s229, %s230
      %p242 = scmp.eq.s32.totalorder %s26, 1
      %p243 = por %p241, %p242
      %p245 = scmp.ne.s32.totalorder %s230, %s244
      %p246 = scmp.eq.s32.totalorder %s26, 0
      %p247 = por %p245, %p246
      %s249 = sadd.s32 %s248, 1
      %p252 = scmp.eq.s32.totalorder %s20, 1
      %p253 = scmp.ne.s32.totalorder %s248, %s250
      %p254 = scmp.eq.s32.totalorder %s20, 0
      %p255 = por %p253, %p254
      %p256 = scmp.ne.s32.totalorder %s248, %s250
      %p257 = scmp.eq.s32.totalorder %s25, 1
      %p258 = por %p256, %p257
      %p259 = scmp.ne.s32.totalorder %s250, %s251
      %p260 = scmp.eq.s32.totalorder %s25, 0
      %p261 = por %p259, %p260
      %p262 = scmp.ne.s32.totalorder %s250, %s251
      %p263 = scmp.eq.s32.totalorder %s26, 1
      %p264 = por %p262, %p263
      %p266 = scmp.ne.s32.totalorder %s251, %s265
      %p267 = scmp.eq.s32.totalorder %s26, 0
      %p268 = por %p266, %p267
      %s270 = sadd.s32 %s269, 1
      %p273 = scmp.eq.s32.totalorder %s20, 1
      %p274 = scmp.ne.s32.totalorder %s269, %s271
      %p275 = scmp.eq.s32.totalorder %s20, 0
      %p276 = por %p274, %p275
      %p277 = scmp.ne.s32.totalorder %s269, %s271
      %p278 = scmp.eq.s32.totalorder %s25, 1
      %p279 = por %p277, %p278
      %p280 = scmp.ne.s32.totalorder %s271, %s272
      %p281 = scmp.eq.s32.totalorder %s25, 0
      %p282 = por %p280, %p281
      %p283 = scmp.ne.s32.totalorder %s271, %s272
      %p284 = scmp.eq.s32.totalorder %s26, 1
      %p285 = por %p283, %p284
      %p287 = scmp.ne.s32.totalorder %s272, %s286
      %p288 = scmp.eq.s32.totalorder %s26, 0
      %p289 = por %p287, %p288
      %s291 = sadd.s32 %s290, 1
      %p294 = scmp.eq.s32.totalorder %s20, 1
      %p295 = scmp.ne.s32.totalorder %s290, %s292
      %p296 = scmp.eq.s32.totalorder %s20, 0
      %p297 = por %p295, %p296
      %p298 = scmp.ne.s32.totalorder %s290, %s292
      %p299 = scmp.eq.s32.totalorder %s25, 1
      %p300 = por %p298, %p299
      %p301 = scmp.ne.s32.totalorder %s292, %s293
      %p302 = scmp.eq.s32.totalorder %s25, 0
      %p303 = por %p301, %p302
      %p304 = scmp.ne.s32.totalorder %s292, %s293
      %p305 = scmp.eq.s32.totalorder %s26, 1
      %p306 = por %p304, %p305
      %p308 = scmp.ne.s32.totalorder %s293, %s307
      %p309 = scmp.eq.s32.totalorder %s26, 0
      %p310 = por %p308, %p309
      %s312 = sadd.s32 %s311, 1
      %p315 = scmp.eq.s32.totalorder %s20, 1
      %p316 = scmp.ne.s32.totalorder %s311, %s313
      %p317 = scmp.eq.s32.totalorder %s20, 0
      %p318 = por %p316, %p317
      %p319 = scmp.ne.s32.totalorder %s311, %s313
      %p320 = scmp.eq.s32.totalorder %s25, 1
      %p321 = por %p319, %p320
      %p322 = scmp.ne.s32.totalorder %s313, %s314
      %p323 = scmp.eq.s32.totalorder %s25, 0
      %p324 = por %p322, %p323
      %p325 = scmp.ne.s32.totalorder %s313, %s314
      %p326 = scmp.eq.s32.totalorder %s26, 1
      %p327 = por %p325, %p326
      %p329 = scmp.ne.s32.totalorder %s314, %s328
      %p330 = scmp.eq.s32.totalorder %s26, 0
      %p331 = por %p329, %p330
      %s332 = ssub.s32 %s27, %s39
      %s333 = ssub.s32 %s28, %s35
      %s334 = sor.u32 %s332, %s333
      %p335 = scmp.eq.s32.totalorder %s334, 0
      %s337 = sadd.s32 %s336, 1
      %s338 = scalar_select %p335, %s336, %s337
      %p341 = pneg %p335
      %p342 = scmp.eq.s32.totalorder %s20, 1
      %p343 = por %p341, %p342
      %p344 = scmp.ne.s32.totalorder %s336, %s339
      %p345 = scmp.eq.s32.totalorder %s20, 0
      %p346 = por %p344, %p345
      %p347 = scmp.ne.s32.totalorder %s336, %s339
      %p348 = scmp.eq.s32.totalorder %s25, 1
      %p349 = por %p347, %p348
      %p350 = scmp.ne.s32.totalorder %s339, %s340
      %p351 = scmp.eq.s32.totalorder %s25, 0
      %p352 = por %p350, %p351
      %p353 = scmp.ne.s32.totalorder %s339, %s340
      %p354 = scmp.eq.s32.totalorder %s26, 1
      %p355 = por %p353, %p354
      %p357 = scmp.ne.s32.totalorder %s340, %s356
      %p358 = scmp.eq.s32.totalorder %s26, 0
      %p359 = por %p357, %p358
      %p360 = scmp.le.s32.totalorder 1, %s20
      %p361 = scmp.lt.s32.totalorder %s20, 3
      %p362 = pnand %p360, %p361
      %p363 = pneg %p362
      // Predicated region
      $region9: #{msn_forward.9} parent=5 // pred_check
        _
      $region10: #{msn_forward.9} parent=5 // pred_check_branch
        %365 = sbr.rel (%p362) target = $region12
      $region11: #{msn_forward.9} parent=5 // pred_region
        %s366 = ssub.s32 %s20, 1
        // Predicated region
        $region13: #{msn_forward.9} parent=11 // pred_check
          %p367 = pneg %p135
        $region14: #{msn_forward.9} parent=11 // pred_check_branch
          %369 = sbr.rel (%p367) target = $region16
        $region15: #{msn_forward.9} parent=11 // pred_region
          _
        $region16: #{msn_forward.9} parent=11 // pred_fallthru
          _
        // Predicated region
        $region17: #{msn_forward.9} parent=11 // pred_check
          %p370 = pneg %p156
        $region18: #{msn_forward.9} parent=11 // pred_check_branch
          %372 = sbr.rel (%p370) target = $region20
        $region19: #{msn_forward.9} parent=11 // pred_region
          _
        $region20: #{msn_forward.9} parent=11 // pred_fallthru
          _
        // Predicated region
        $region21: #{msn_forward.9} parent=11 // pred_check
          %p373 = pneg %p177
        $region22: #{msn_forward.9} parent=11 // pred_check_branch
          %375 = sbr.rel (%p373) target = $region24
        $region23: #{msn_forward.9} parent=11 // pred_region
          _
        $region24: #{msn_forward.9} parent=11 // pred_fallthru
          _
        // Predicated region
        $region25: #{msn_forward.9} parent=11 // pred_check
          %p376 = pneg %p198
        $region26: #{msn_forward.9} parent=11 // pred_check_branch
          %378 = sbr.rel (%p376) target = $region28
        $region27: #{msn_forward.9} parent=11 // pred_region
          %380 = vsyncadd [#allocation3], 0
          %s381 = sshll.u32 %s6, 4
          %s382 = int_to_ptr.hbm [resolvable:$true] %s381
          %s383 = sshll.u32 [#allocation2], 4
          %s384 = int_to_ptr.vmem [resolvable:$true] %s383
          %389 = dma.hbm_to_vmem [thread:$0]  %s382, 4096, %s384, [#allocation3], 256, 256, 16
        $region28: #{msn_forward.9} parent=11 // pred_fallthru
          _
        // Predicated region
        $region29: #{msn_forward.9} parent=11 // pred_check
          %p390 = pneg %p219
        $region30: #{msn_forward.9} parent=11 // pred_check_branch
          %392 = sbr.rel (%p390) target = $region32
        $region31: #{msn_forward.9} parent=11 // pred_region
          _
        $region32: #{msn_forward.9} parent=11 // pred_fallthru
          _
        // Predicated region
        $region33: #{msn_forward.9} parent=11 // pred_check
          %p393 = pneg %p240
        $region34: #{msn_forward.9} parent=11 // pred_check_branch
          %395 = sbr.rel (%p393) target = $region36
        $region35: #{msn_forward.9} parent=11 // pred_region
          _
        $region36: #{msn_forward.9} parent=11 // pred_fallthru
          _
        // Predicated region
        $region37: #{msn_forward.9} parent=11 // pred_check
          %p396 = pneg %p261
        $region38: #{msn_forward.9} parent=11 // pred_check_branch
          %398 = sbr.rel (%p396) target = $region40
        $region39: #{msn_forward.9} parent=11 // pred_region
          _
        $region40: #{msn_forward.9} parent=11 // pred_fallthru
          _
        // Predicated region
        $region41: #{msn_forward.9} parent=11 // pred_check
          %p399 = pneg %p282
        $region42: #{msn_forward.9} parent=11 // pred_check_branch
          %401 = sbr.rel (%p399) target = $region44
        $region43: #{msn_forward.9} parent=11 // pred_region
          _
        $region44: #{msn_forward.9} parent=11 // pred_fallthru
          _
        // Predicated region
        $region45: #{msn_forward.9} parent=11 // pred_check
          %p402 = pneg %p303
        $region46: #{msn_forward.9} parent=11 // pred_check_branch
          %404 = sbr.rel (%p402) target = $region48
        $region47: #{msn_forward.9} parent=11 // pred_region
          _
        $region48: #{msn_forward.9} parent=11 // pred_fallthru
          _
        // Predicated region
        $region49: #{msn_forward.9} parent=11 // pred_check
          %p405 = pneg %p324
        $region50: #{msn_forward.9} parent=11 // pred_check_branch
          %407 = sbr.rel (%p405) target = $region52
        $region51: #{msn_forward.9} parent=11 // pred_region
          _
        $region52: #{msn_forward.9} parent=11 // pred_fallthru
          _
      $region12: #{msn_forward.9} parent=5 // pred_fallthru
        _
      %p408 = scmp.lt.s32.totalorder %s20, 2
      // Predicated region
      $region53: #{msn_forward.9} parent=5 // pred_check
        %p409 = pneg %p408
      $region54: #{msn_forward.9} parent=5 // pred_check_branch
        %411 = sbr.rel (%p409) target = $region56
      $region55: #{msn_forward.9} parent=5 // pred_region
        // Predicated region
        $region57: #{msn_forward.9} parent=55 // pred_check
          %p412 = pneg %p54
        $region58: #{msn_forward.9} parent=55 // pred_check_branch
          %414 = sbr.rel (%p412) target = $region60
        $region59: #{msn_forward.9} parent=55 // pred_region
          %s415 = smul.u32 7, %s28
          %p416 = scmp.lt.s32.totalorder %s27, 1
          %s417 = scalar_select %p416, %s27, 1
          %p418 = scmp.lt.s32.totalorder %s415, 6
          %s419 = scalar_select %p418, %s415, 6
          %s420 = smul.addr %s417, 7
          %s421 = sadd.s32 %s419, %s420
          %s422 = smul.addr %s421, 8
          %s423 = scalar_lea.vmem %s0, %s422
          %s424 = smul.u32 7, %s28
        $region60: #{msn_forward.9} parent=55 // pred_fallthru
          _
        // Predicated region
        $region61: #{msn_forward.9} parent=55 // pred_check
          %p425 = pneg %p82
        $region62: #{msn_forward.9} parent=55 // pred_check_branch
          %427 = sbr.rel (%p425) target = $region64
        $region63: #{msn_forward.9} parent=55 // pred_region
          %s428 = smul.u32 7, %s28
          %p429 = scmp.lt.s32.totalorder %s27, 1
          %s430 = scalar_select %p429, %s27, 1
          %p431 = scmp.lt.s32.totalorder %s428, 6
          %s432 = scalar_select %p431, %s428, 6
          %s433 = smul.addr %s430, 7
          %s434 = sadd.s32 %s432, %s433
          %s435 = smul.addr %s434, 8
          %s436 = scalar_lea.vmem %s1, %s435
          %s437 = smul.u32 7, %s28
        $region64: #{msn_forward.9} parent=55 // pred_fallthru
          _
        // Predicated region
        $region65: #{msn_forward.9} parent=55 // pred_check
          %p438 = pneg %p108
        $region66: #{msn_forward.9} parent=55 // pred_check_branch
          %440 = sbr.rel (%p438) target = $region68
        $region67: #{msn_forward.9} parent=55 // pred_region
          %p441 = scmp.lt.s32.totalorder %s27, 1
          %s442 = scalar_select %p441, %s27, 1
          %s443 = smul.addr %s442, 4
          %s444 = scalar_lea.vmem %s2, %s443
        $region68: #{msn_forward.9} parent=55 // pred_fallthru
          _
      $region56: #{msn_forward.9} parent=5 // pred_fallthru
        _
      %p445 = scmp.le.s32.totalorder 1, %s20
      %p446 = scmp.lt.s32.totalorder %s20, 3
      %p447 = pnand %p445, %p446
      %p448 = pneg %p447
      // Predicated region
      $region69: #{msn_forward.9} parent=5 // pred_check
        _
      $region70: #{msn_forward.9} parent=5 // pred_check_branch
        %450 = sbr.rel (%p447) target = $region72
      $region71: #{msn_forward.9} parent=5 // pred_region
        %s451 = ssub.s32 %s20, 1
        // Predicated region
        $region73: #{msn_forward.9} parent=71 // pred_check
          %p452 = pneg %p198
        $region74: #{msn_forward.9} parent=71 // pred_check_branch
          %454 = sbr.rel (%p452) target = $region76
        $region75: #{msn_forward.9} parent=71 // pred_region
          %456 = dma.done [#allocation3], 4096
        $region76: #{msn_forward.9} parent=71 // pred_fallthru
          _
        %s457 = smul.u32 7, %s30
        %p458 = scmp.lt.s32.totalorder %s29, 1
        %s459 = scalar_select %p458, %s29, 1
        %p460 = scmp.lt.s32.totalorder %s457, 6
        %s461 = scalar_select %p460, %s457, 6
        %s462 = smul.addr %s459, 7
        %s463 = sadd.s32 %s461, %s462
        %s464 = smul.addr %s463, 8
        %s465 = scalar_lea.vmem %s0, %s464
        %p466 = pneg %p60
        %p467 = pneg %p57
        %s468 = smul.u32 7, %s30
        %p469 = scmp.lt.s32.totalorder %s29, 1
        %s470 = scalar_select %p469, %s29, 1
        %p471 = scmp.lt.s32.totalorder %s468, 6
        %s472 = scalar_select %p471, %s468, 6
        %s473 = smul.addr %s470, 7
        %s474 = sadd.s32 %s472, %s473
        %s475 = smul.addr %s474, 8
        %s476 = scalar_lea.vmem %s1, %s475
        %p477 = pneg %p88
        %p478 = pneg %p85
        %p479 = scmp.lt.s32.totalorder %s29, 1
        %s480 = scalar_select %p479, %s29, 1
        %s481 = smul.addr %s480, 4
        %s482 = scalar_lea.vmem %s2, %s481
        %p483 = pneg %p114
        %p484 = pneg %p111
        %p485 = pneg %p135
        %p486 = pneg %p132
        %p487 = pneg %p156
        %p488 = pneg %p153
        %p489 = pneg %p177
        %p490 = pneg %p174
        %p491 = pneg %p198
        %p492 = pneg %p195
        %p493 = pneg %p219
        %p494 = pneg %p216
        %p495 = pneg %p240
        %p496 = pneg %p237
        %p497 = pneg %p261
        %p498 = pneg %p258
        %p499 = pneg %p282
        %p500 = pneg %p279
        %p501 = pneg %p303
        %p502 = pneg %p300
        %p503 = pneg %p324
        %p504 = pneg %p321
        %p505 = pneg %p352
        %p506 = pneg %p349
        %p507 = scmp.lt.s32.totalorder %s29, 1
        %s508 = scalar_select %p507, %s29, 1
        %p509 = scmp.lt.s32.totalorder %s30, 0
        %s510 = scalar_select %p509, %s30, 0
        %s511 = sadd.s32 %s510, %s508
        %s512 = smul.addr %s511, 8
        %s513 = scalar_lea.vmem %s13, %s512
        %s514 = smul.u32 7, %s30
        %p515 = scmp.lt.s32.totalorder %s29, 1
        %s516 = scalar_select %p515, %s29, 1
        %p517 = scmp.lt.s32.totalorder %s514, 6
        %s518 = scalar_select %p517, %s514, 6
        %s519 = smul.addr %s516, 7
        %s520 = sadd.s32 %s518, %s519
        %s521 = smul.addr %s520, 8
        %s522 = scalar_lea.vmem %s0, %s521
        %s523 = smul.u32 7, %s30
        %s524 = smul.u32 7, %s30
        %p525 = scmp.lt.s32.totalorder %s29, 1
        %s526 = scalar_select %p525, %s29, 1
        %p527 = scmp.lt.s32.totalorder %s524, 6
        %s528 = scalar_select %p527, %s524, 6
        %s529 = smul.addr %s526, 7
        %s530 = sadd.s32 %s528, %s529
        %s531 = smul.addr %s530, 8
        %s532 = scalar_lea.vmem %s1, %s531
        %s533 = smul.u32 7, %s30
        %p534 = scmp.lt.s32.totalorder %s29, 1
        %s535 = scalar_select %p534, %s29, 1
        %s536 = smul.addr %s535, 4
        %s537 = scalar_lea.vmem %s2, %s536
        %p538 = scmp.lt.s32.totalorder %s29, 1
        %s539 = scalar_select %p538, %s29, 1
        %p540 = scmp.lt.s32.totalorder %s30, 0
        %s541 = scalar_select %p540, %s30, 0
        %s542 = sadd.s32 %s541, %s539
        %s543 = smul.addr %s542, 8
        %s544 = scalar_lea.vmem %s13, %s543
        %v546 = vld [vmem:[%s522] sm:$0xff]
        %v547 = vld [vmem:[%s522 + $0x8] sm:$0xff]
        %v548 = vld [vmem:[%s522 + $0x10] sm:$0xff]
        %v549 = vld [vmem:[%s522 + $0x18] sm:$0xff]
        %v550 = vld [vmem:[%s522 + $0x20] sm:$0xff]
        %v551 = vld [vmem:[%s522 + $0x28] sm:$0xff]
        %v552 = vld [vmem:[%s522 + $0x30] sm:$0xf]
        %v553 = vld [vmem:[%s532] sm:$0xff]
        %v554 = vld [vmem:[%s532 + $0x8] sm:$0xff]
        %v555 = vld [vmem:[%s532 + $0x10] sm:$0xff]
        %v556 = vld [vmem:[%s532 + $0x18] sm:$0xff]
        %v557 = vld [vmem:[%s532 + $0x20] sm:$0xff]
        %v558 = vld [vmem:[%s532 + $0x28] sm:$0xff]
        %v559 = vld [vmem:[%s532 + $0x30] sm:$0xf]
        %v560 = vpack.c.bf16 %v554, %v553
        %v561 = vpack.c.bf16 %v556, %v555
        %v562 = vpack.c.bf16 %v558, %v557
        %v563 = vpack.c.bf16 %v559, %v559
        %v564 = vld [vmem:[%s3] sm:$0x3]
        %v565 = vld [vmem:[%s4] sm:$0xf]
        %v566 = vld [vmem:[%s4 + $0x4] sm:$0xf]
        %v567 = vld [vmem:[%s4 + $0x8] sm:$0xf]
        %v568 = vld [vmem:[%s4 + $0xc] sm:$0xf]
        %v569 = vld [vmem:[%s4 + $0x10] sm:$0xf]
        %v570 = vld [vmem:[%s4 + $0x14] sm:$0xf]
        %v571 = vld [vmem:[%s4 + $0x18] sm:$0xf]
        %v572 = vld [vmem:[%s4 + $0x1c] sm:$0xf]
        %v573 = vld [vmem:[%s4 + $0x20] sm:$0x1]
        %v574 = vld [vmem:[%s5] sm:$0x1]
        %v575 = vunpack.c.l.bf16 %v564
        %577 = vset.pattern.permute.xlu0 0
        %578 = vperm.xlu0 %577, %v546
        %v579 = vpop.permute.xlu0 %578
        %582 = vset.pattern.permute.xlu0 0
        %583 = vperm.xlu0 %582, %v547
        %v584 = vpop.permute.xlu0 %583
        %587 = vset.pattern.permute.xlu0 0
        %588 = vperm.xlu0 %587, %v548
        %v589 = vpop.permute.xlu0 %588
        %592 = vset.pattern.permute.xlu0 0
        %593 = vperm.xlu0 %592, %v549
        %v594 = vpop.permute.xlu0 %593
        %597 = vset.pattern.permute.xlu0 0
        %598 = vperm.xlu0 %597, %v550
        %v599 = vpop.permute.xlu0 %598
        %602 = vset.pattern.permute.xlu0 0
        %603 = vperm.xlu0 %602, %v551
        %v604 = vpop.permute.xlu0 %603
        %607 = vset.pattern.permute.xlu0 0
        %608 = vperm.xlu0 %607, %v552
        %v609 = vpop.permute.xlu0 %608
        %v611 = vperm.slane %v575, 0
        %v612 = vmul.f32 %v579, %v611
        %v613 = vmul.f32 %v584, %v611
        %v614 = vmul.f32 %v589, %v611
        %v615 = vmul.f32 %v594, %v611
        %v616 = vmul.f32 %v599, %v611
        %v617 = vmul.f32 %v604, %v611
        %v618 = vmul.f32 %v609, %v611
        %619 = vset.pattern.permute.xlu0 1
        %620 = vperm.xlu0 %619, %v546
        %v621 = vpop.permute.xlu0 %620
        %623 = vset.pattern.permute.xlu0 1
        %624 = vperm.xlu0 %623, %v547
        %v625 = vpop.permute.xlu0 %624
        %627 = vset.pattern.permute.xlu0 1
        %628 = vperm.xlu0 %627, %v548
        %v629 = vpop.permute.xlu0 %628
        %631 = vset.pattern.permute.xlu0 1
        %632 = vperm.xlu0 %631, %v549
        %v633 = vpop.permute.xlu0 %632
        %635 = vset.pattern.permute.xlu0 1
        %636 = vperm.xlu0 %635, %v550
        %v637 = vpop.permute.xlu0 %636
        %639 = vset.pattern.permute.xlu0 1
        %640 = vperm.xlu0 %639, %v551
        %v641 = vpop.permute.xlu0 %640
        %643 = vset.pattern.permute.xlu0 1
        %644 = vperm.xlu0 %643, %v552
        %v645 = vpop.permute.xlu0 %644
        %v647 = vperm.slane %v575, 1
        %v648 = vmul.f32 %v621, %v647
        %v649 = vmul.f32 %v625, %v647
        %v650 = vmul.f32 %v629, %v647
        %v651 = vmul.f32 %v633, %v647
        %v652 = vmul.f32 %v637, %v647
        %v653 = vmul.f32 %v641, %v647
        %v654 = vmul.f32 %v645, %v647
        %v655 = vadd.f32 %v612, %v648
        %v656 = vadd.f32 %v613, %v649
        %v657 = vadd.f32 %v614, %v650
        %v658 = vadd.f32 %v615, %v651
        %v659 = vadd.f32 %v616, %v652
        %v660 = vadd.f32 %v617, %v653
        %v661 = vadd.f32 %v618, %v654
        %662 = vset.pattern.permute.xlu0 2
        %663 = vperm.xlu0 %662, %v546
        %v664 = vpop.permute.xlu0 %663
        %666 = vset.pattern.permute.xlu0 2
        %667 = vperm.xlu0 %666, %v547
        %v668 = vpop.permute.xlu0 %667
        %670 = vset.pattern.permute.xlu0 2
        %671 = vperm.xlu0 %670, %v548
        %v672 = vpop.permute.xlu0 %671
        %674 = vset.pattern.permute.xlu0 2
        %675 = vperm.xlu0 %674, %v549
        %v676 = vpop.permute.xlu0 %675
        %678 = vset.pattern.permute.xlu0 2
        %679 = vperm.xlu0 %678, %v550
        %v680 = vpop.permute.xlu0 %679
        %682 = vset.pattern.permute.xlu0 2
        %683 = vperm.xlu0 %682, %v551
        %v684 = vpop.permute.xlu0 %683
        %686 = vset.pattern.permute.xlu0 2
        %687 = vperm.xlu0 %686, %v552
        %v688 = vpop.permute.xlu0 %687
        %v690 = vperm.slane %v575, 2
        %v691 = vmul.f32 %v664, %v690
        %v692 = vmul.f32 %v668, %v690
        %v693 = vmul.f32 %v672, %v690
        %v694 = vmul.f32 %v676, %v690
        %v695 = vmul.f32 %v680, %v690
        %v696 = vmul.f32 %v684, %v690
        %v697 = vmul.f32 %v688, %v690
        %v698 = vadd.f32 %v655, %v691
        %v699 = vadd.f32 %v656, %v692
        %v700 = vadd.f32 %v657, %v693
        %v701 = vadd.f32 %v658, %v694
        %v702 = vadd.f32 %v659, %v695
        %v703 = vadd.f32 %v660, %v696
        %v704 = vadd.f32 %v661, %v697
        %v714 = vunpack.c.l.b16 %v565
        %v715 = vunpack.c.l.b16 %v566
        %v716 = vunpack.c.l.b16 %v567
        %v717 = vunpack.c.l.b16 %v568
        %v718 = vunpack.c.l.b16 %v569
        %v719 = vunpack.c.l.b16 %v570
        %v720 = vunpack.c.l.b16 %v571
        %v721 = vunpack.c.l.b16 %v572
        %v722 = vunpack.c.l.b16 %v573
        %v723 = vpack.c.b16 %v715, %v714
        %v724 = vpack.c.b16 %v717, %v716
        %v725 = vpack.c.b16 %v719, %v718
        %v726 = vpack.c.b16 %v721, %v720
        %v727 = vpack.c.b16 %v722, %v722
        %vm732 = vcmask 531456
        %v734 = vsel %vm732, %v560, 0
        %v737 = vsel %vm732, %v561, 0
        %v740 = vsel %vm732, %v562, 0
        %v743 = vsel %vm732, %v563, 0
        %vm745 = vcmask 1040384
        %v746 = vsel 0, 4294967295, 65535
        %v747 = vsel %vm745, %v746, 0
        %v749 = vand.u32 %v727, %v747
        %751 = vmatpush.bf16.msra.mxu0 0
        %752 = vmatpush.bf16.msra.mxu0 0
        %753 = vmatpush.bf16.msra.mxu0 0
        %754 = vmatpush.bf16.msra.mxu0 %v749
        %755 = vmatpush.bf16.msra.mxu0 %v726
        %756 = vmatpush.bf16.msra.mxu0 %v725
        %757 = vmatpush.bf16.msra.mxu0 %v724
        %758 = vmatpush.bf16.msra.mxu0 %v723
        %759 = vmatmul.bf16.gmra.mxu0 %v734
        %v760 = vpop.f32.mrf.mxu0
        %v761 = vadd.f32 0.0, %v760
        %v762 = vpop.f32.mrf.mxu0
        %v763 = vadd.f32 0.0, %v762
        %764 = vmatmul.bf16.gmra.mxu0 %v737
        %v765 = vpop.f32.mrf.mxu0
        %v766 = vadd.f32 0.0, %v765
        %v767 = vpop.f32.mrf.mxu0
        %v768 = vadd.f32 0.0, %v767
        %769 = vmatmul.bf16.gmra.mxu0 %v740
        %v770 = vpop.f32.mrf.mxu0
        %v771 = vadd.f32 0.0, %v770
        %v772 = vpop.f32.mrf.mxu0
        %v773 = vadd.f32 0.0, %v772
        %774 = vmatmul.bf16.gmra.mxu0 %v743
        %v775 = vpop.f32.mrf.mxu0
        %v776 = vadd.f32 0.0, %v775
        %v777 = vpop.f32.mrf.mxu0
        %778 = vdwg.mxu0
        %v779 = vadd.f32 %v698, %v761
        %v780 = vadd.f32 %v699, %v763
        %v781 = vadd.f32 %v700, %v766
        %v782 = vadd.f32 %v701, %v768
        %v783 = vadd.f32 %v702, %v771
        %v784 = vadd.f32 %v703, %v773
        %v785 = vadd.f32 %v704, %v776
        %v787 = vperm.slane %v574, 0
        %v789 = vadd.f32 %v779, %v787
        %v790 = vadd.f32 %v780, %v787
        %v791 = vadd.f32 %v781, %v787
        %v792 = vadd.f32 %v782, %v787
        %v793 = vadd.f32 %v783, %v787
        %v794 = vadd.f32 %v784, %v787
        %v795 = vadd.f32 %v785, %v787
        %v796 = vmax.f32 %v789, 0.0
        %v797 = vmax.f32 %v790, 0.0
        %v798 = vmax.f32 %v791, 0.0
        %v799 = vmax.f32 %v792, 0.0
        %v800 = vmax.f32 %v793, 0.0
        %v801 = vmax.f32 %v794, 0.0
        %v802 = vmax.f32 %v795, 0.0
        %v803 = vpack.c.bf16 %v797, %v796
        %v804 = vpack.c.bf16 %v799, %v798
        %v805 = vpack.c.bf16 %v801, %v800
        %v806 = vpack.c.bf16 %v802, %v802
        %v807 = vld [vmem:[%s537] sm:$0xf]
        %v808 = vld [vmem:[#allocation2] sm:$0xff]
        %v809 = vld [vmem:[#allocation2 + $0x8] sm:$0xff]
        %v810 = vld [vmem:[#allocation2 + $0x10] sm:$0xff]
        %v811 = vld [vmem:[#allocation2 + $0x18] sm:$0xff]
        %v812 = vld [vmem:[#allocation2 + $0x20] sm:$0xff]
        %v813 = vld [vmem:[#allocation2 + $0x28] sm:$0xff]
        %v814 = vld [vmem:[#allocation2 + $0x30] sm:$0xff]
        %v815 = vld [vmem:[#allocation2 + $0x38] sm:$0xff]
        %v816 = vld [vmem:[#allocation2 + $0x40] sm:$0xff]
        %v817 = vld [vmem:[#allocation2 + $0x48] sm:$0xff]
        %v818 = vld [vmem:[#allocation2 + $0x50] sm:$0xff]
        %v819 = vld [vmem:[#allocation2 + $0x58] sm:$0xff]
        %v820 = vld [vmem:[#allocation2 + $0x60] sm:$0xff]
        %v821 = vld [vmem:[#allocation2 + $0x68] sm:$0xff]
        %v822 = vld [vmem:[#allocation2 + $0x70] sm:$0xff]
        %v823 = vld [vmem:[#allocation2 + $0x78] sm:$0xff]
        %v824 = vld [vmem:[#allocation2 + $0x80] sm:$0xff]
        %v825 = vld [vmem:[#allocation2 + $0x88] sm:$0xff]
        %v826 = vld [vmem:[#allocation2 + $0x90] sm:$0xff]
        %v827 = vld [vmem:[#allocation2 + $0x98] sm:$0xff]
        %v828 = vld [vmem:[#allocation2 + $0xa0] sm:$0xff]
        %v829 = vld [vmem:[#allocation2 + $0xa8] sm:$0xff]
        %v830 = vld [vmem:[#allocation2 + $0xb0] sm:$0xff]
        %v831 = vld [vmem:[#allocation2 + $0xb8] sm:$0xff]
        %v832 = vld [vmem:[#allocation2 + $0xc0] sm:$0xff]
        %v833 = vld [vmem:[#allocation2 + $0xc8] sm:$0xff]
        %v834 = vld [vmem:[#allocation2 + $0xd0] sm:$0xff]
        %v835 = vld [vmem:[#allocation2 + $0xd8] sm:$0xff]
        %v836 = vld [vmem:[#allocation2 + $0xe0] sm:$0xff]
        %v837 = vld [vmem:[#allocation2 + $0xe8] sm:$0xff]
        %v838 = vld [vmem:[#allocation2 + $0xf0] sm:$0xff]
        %v839 = vld [vmem:[#allocation2 + $0xf8] sm:$0xff]
        %v841 = vperm.slane %v807, 0
        %v842 = vperm.slane %v807, 1
        %v843 = vperm.slane %v807, 2
        %v844 = vperm.slane %v807, 3
        %v881 = vunpack.c.l.b16 %v808
        %v882 = vunpack.c.h.b16 %v808
        %v883 = vunpack.c.l.b16 %v809
        %v884 = vunpack.c.h.b16 %v809
        %v885 = vunpack.c.l.b16 %v810
        %v886 = vunpack.c.h.b16 %v810
        %v887 = vunpack.c.l.b16 %v811
        %v888 = vunpack.c.h.b16 %v811
        %v889 = vunpack.c.l.b16 %v812
        %v890 = vunpack.c.h.b16 %v812
        %v891 = vunpack.c.l.b16 %v813
        %v892 = vunpack.c.h.b16 %v813
        %v893 = vunpack.c.l.b16 %v814
        %v894 = vunpack.c.h.b16 %v814
        %v895 = vunpack.c.l.b16 %v815
        %v896 = vunpack.c.h.b16 %v815
        %v897 = vunpack.c.l.b16 %v816
        %v898 = vunpack.c.h.b16 %v816
        %v899 = vunpack.c.l.b16 %v817
        %v900 = vunpack.c.h.b16 %v817
        %v901 = vunpack.c.l.b16 %v818
        %v902 = vunpack.c.h.b16 %v818
        %v903 = vunpack.c.l.b16 %v819
        %v904 = vunpack.c.h.b16 %v819
        %v905 = vunpack.c.l.b16 %v820
        %v906 = vunpack.c.h.b16 %v820
        %v907 = vunpack.c.l.b16 %v821
        %v908 = vunpack.c.h.b16 %v821
        %v909 = vunpack.c.l.b16 %v822
        %v910 = vunpack.c.h.b16 %v822
        %v911 = vunpack.c.l.b16 %v823
        %v912 = vunpack.c.h.b16 %v823
        %v913 = vunpack.c.l.b16 %v824
        %v914 = vunpack.c.h.b16 %v824
        %v915 = vunpack.c.l.b16 %v825
        %v916 = vunpack.c.h.b16 %v825
        %v917 = vunpack.c.l.b16 %v826
        %v918 = vunpack.c.h.b16 %v826
        %v919 = vunpack.c.l.b16 %v827
        %v920 = vunpack.c.h.b16 %v827
        %v921 = vunpack.c.l.b16 %v828
        %v922 = vunpack.c.h.b16 %v828
        %v923 = vunpack.c.l.b16 %v829
        %v924 = vunpack.c.h.b16 %v829
        %v925 = vunpack.c.l.b16 %v830
        %v926 = vunpack.c.h.b16 %v830
        %v927 = vunpack.c.l.b16 %v831
        %v928 = vunpack.c.h.b16 %v831
        %v929 = vunpack.c.l.b16 %v832
        %v930 = vunpack.c.h.b16 %v832
        %v931 = vunpack.c.l.b16 %v833
        %v932 = vunpack.c.h.b16 %v833
        %v933 = vunpack.c.l.b16 %v834
        %v934 = vunpack.c.h.b16 %v834
        %v935 = vunpack.c.l.b16 %v835
        %v936 = vunpack.c.h.b16 %v835
        %v937 = vunpack.c.l.b16 %v836
        %v938 = vunpack.c.h.b16 %v836
        %v939 = vunpack.c.l.b16 %v837
        %v940 = vunpack.c.h.b16 %v837
        %v941 = vunpack.c.l.b16 %v838
        %v942 = vunpack.c.h.b16 %v838
        %v943 = vunpack.c.l.b16 %v839
        %v944 = vunpack.c.h.b16 %v839
        %v945 = vpack.c.b16 %v885, %v881
        %v946 = vpack.c.b16 %v886, %v882
        %v947 = vpack.c.b16 %v887, %v883
        %v948 = vpack.c.b16 %v888, %v884
        %v949 = vpack.c.b16 %v893, %v889
        %v950 = vpack.c.b16 %v894, %v890
        %v951 = vpack.c.b16 %v895, %v891
        %v952 = vpack.c.b16 %v896, %v892
        %v953 = vpack.c.b16 %v901, %v897
        %v954 = vpack.c.b16 %v902, %v898
        %v955 = vpack.c.b16 %v903, %v899
        %v956 = vpack.c.b16 %v904, %v900
        %v957 = vpack.c.b16 %v909, %v905
        %v958 = vpack.c.b16 %v910, %v906
        %v959 = vpack.c.b16 %v911, %v907
        %v960 = vpack.c.b16 %v912, %v908
        %v961 = vpack.c.b16 %v917, %v913
        %v962 = vpack.c.b16 %v918, %v914
        %v963 = vpack.c.b16 %v919, %v915
        %v964 = vpack.c.b16 %v920, %v916
        %v965 = vpack.c.b16 %v925, %v921
        %v966 = vpack.c.b16 %v926, %v922
        %v967 = vpack.c.b16 %v927, %v923
        %v968 = vpack.c.b16 %v928, %v924
        %v969 = vpack.c.b16 %v933, %v929
        %v970 = vpack.c.b16 %v934, %v930
        %v971 = vpack.c.b16 %v935, %v931
        %v972 = vpack.c.b16 %v936, %v932
        %v973 = vpack.c.b16 %v941, %v937
        %v974 = vpack.c.b16 %v942, %v938
        %v975 = vpack.c.b16 %v943, %v939
        %v976 = vpack.c.b16 %v944, %v940
        %1009 = vmatpush.bf16.msra.mxu0 %v973
        %1010 = vmatpush.bf16.msra.mxu0 %v969
        %1011 = vmatpush.bf16.msra.mxu0 %v965
        %1012 = vmatpush.bf16.msra.mxu0 %v961
        %1013 = vmatpush.bf16.msra.mxu0 %v957
        %1014 = vmatpush.bf16.msra.mxu0 %v953
        %1015 = vmatpush.bf16.msra.mxu0 %v949
        %1016 = vmatpush.bf16.msra.mxu0 %v945
        %1017 = vmatmul.bf16.gmra.mxu0 %v803
        %v1018 = vpop.f32.mrf.mxu0
        %v1019 = vadd.f32 %v841, %v1018
        %v1020 = vpop.f32.mrf.mxu0
        %v1021 = vadd.f32 %v841, %v1020
        %1022 = vmatmul.bf16.gmra.mxu0 %v804
        %v1023 = vpop.f32.mrf.mxu0
        %v1024 = vadd.f32 %v841, %v1023
        %v1025 = vpop.f32.mrf.mxu0
        %v1026 = vadd.f32 %v841, %v1025
        %1027 = vmatmul.bf16.gmra.mxu0 %v805
        %v1028 = vpop.f32.mrf.mxu0
        %v1029 = vadd.f32 %v841, %v1028
        %v1030 = vpop.f32.mrf.mxu0
        %v1031 = vadd.f32 %v841, %v1030
        %1032 = vmatmul.bf16.gmra.mxu0 %v806
        %v1033 = vpop.f32.mrf.mxu0
        %v1034 = vadd.f32 %v841, %v1033
        %v1035 = vpop.f32.mrf.mxu0
        %1036 = vdwg.mxu0
        %1037 = vmatpush.bf16.msra.mxu0 %v974
        %1038 = vmatpush.bf16.msra.mxu0 %v970
        %1039 = vmatpush.bf16.msra.mxu0 %v966
        %1040 = vmatpush.bf16.msra.mxu0 %v962
        %1041 = vmatpush.bf16.msra.mxu0 %v958
        %1042 = vmatpush.bf16.msra.mxu0 %v954
        %1043 = vmatpush.bf16.msra.mxu0 %v950
        %1044 = vmatpush.bf16.msra.mxu0 %v946
        %1045 = vmatmul.bf16.gmra.mxu0 %v803
        %v1046 = vpop.f32.mrf.mxu0
        %v1047 = vadd.f32 %v842, %v1046
        %v1048 = vpop.f32.mrf.mxu0
        %v1049 = vadd.f32 %v842, %v1048
        %1050 = vmatmul.bf16.gmra.mxu0 %v804
        %v1051 = vpop.f32.mrf.mxu0
        %v1052 = vadd.f32 %v842, %v1051
        %v1053 = vpop.f32.mrf.mxu0
        %v1054 = vadd.f32 %v842, %v1053
        %1055 = vmatmul.bf16.gmra.mxu0 %v805
        %v1056 = vpop.f32.mrf.mxu0
        %v1057 = vadd.f32 %v842, %v1056
        %v1058 = vpop.f32.mrf.mxu0
        %v1059 = vadd.f32 %v842, %v1058
        %1060 = vmatmul.bf16.gmra.mxu0 %v806
        %v1061 = vpop.f32.mrf.mxu0
        %v1062 = vadd.f32 %v842, %v1061
        %v1063 = vpop.f32.mrf.mxu0
        %1064 = vdwg.mxu0
        %1065 = vmatpush.bf16.msra.mxu0 %v975
        %1066 = vmatpush.bf16.msra.mxu0 %v971
        %1067 = vmatpush.bf16.msra.mxu0 %v967
        %1068 = vmatpush.bf16.msra.mxu0 %v963
        %1069 = vmatpush.bf16.msra.mxu0 %v959
        %1070 = vmatpush.bf16.msra.mxu0 %v955
        %1071 = vmatpush.bf16.msra.mxu0 %v951
        %1072 = vmatpush.bf16.msra.mxu0 %v947
        %1073 = vmatmul.bf16.gmra.mxu0 %v803
        %v1074 = vpop.f32.mrf.mxu0
        %v1075 = vadd.f32 %v843, %v1074
        %v1076 = vpop.f32.mrf.mxu0
        %v1077 = vadd.f32 %v843, %v1076
        %1078 = vmatmul.bf16.gmra.mxu0 %v804
        %v1079 = vpop.f32.mrf.mxu0
        %v1080 = vadd.f32 %v843, %v1079
        %v1081 = vpop.f32.mrf.mxu0
        %v1082 = vadd.f32 %v843, %v1081
        %1083 = vmatmul.bf16.gmra.mxu0 %v805
        %v1084 = vpop.f32.mrf.mxu0
        %v1085 = vadd.f32 %v843, %v1084
        %v1086 = vpop.f32.mrf.mxu0
        %v1087 = vadd.f32 %v843, %v1086
        %1088 = vmatmul.bf16.gmra.mxu0 %v806
        %v1089 = vpop.f32.mrf.mxu0
        %v1090 = vadd.f32 %v843, %v1089
        %v1091 = vpop.f32.mrf.mxu0
        %1092 = vdwg.mxu0
        %1093 = vmatpush.bf16.msra.mxu0 %v976
        %1094 = vmatpush.bf16.msra.mxu0 %v972
        %1095 = vmatpush.bf16.msra.mxu0 %v968
        %1096 = vmatpush.bf16.msra.mxu0 %v964
        %1097 = vmatpush.bf16.msra.mxu0 %v960
        %1098 = vmatpush.bf16.msra.mxu0 %v956
        %1099 = vmatpush.bf16.msra.mxu0 %v952
        %1100 = vmatpush.bf16.msra.mxu0 %v948
        %1101 = vmatmul.bf16.gmra.mxu0 %v803
        %v1102 = vpop.f32.mrf.mxu0
        %v1103 = vadd.f32 %v844, %v1102
        %v1104 = vpop.f32.mrf.mxu0
        %v1105 = vadd.f32 %v844, %v1104
        %1106 = vmatmul.bf16.gmra.mxu0 %v804
        %v1107 = vpop.f32.mrf.mxu0
        %v1108 = vadd.f32 %v844, %v1107
        %v1109 = vpop.f32.mrf.mxu0
        %v1110 = vadd.f32 %v844, %v1109
        %1111 = vmatmul.bf16.gmra.mxu0 %v805
        %v1112 = vpop.f32.mrf.mxu0
        %v1113 = vadd.f32 %v844, %v1112
        %v1114 = vpop.f32.mrf.mxu0
        %v1115 = vadd.f32 %v844, %v1114
        %1116 = vmatmul.bf16.gmra.mxu0 %v806
        %v1117 = vpop.f32.mrf.mxu0
        %v1118 = vadd.f32 %v844, %v1117
        %v1119 = vpop.f32.mrf.mxu0
        %1120 = vdwg.mxu0
        %v1121 = vmax.f32 %v1019, 0.0
        %v1122 = vmax.f32 %v1047, 0.0
        %v1123 = vmax.f32 %v1075, 0.0
        %v1124 = vmax.f32 %v1103, 0.0
        %v1125 = vmax.f32 %v1021, 0.0
        %v1126 = vmax.f32 %v1049, 0.0
        %v1127 = vmax.f32 %v1077, 0.0
        %v1128 = vmax.f32 %v1105, 0.0
        %v1129 = vmax.f32 %v1024, 0.0
        %v1130 = vmax.f32 %v1052, 0.0
        %v1131 = vmax.f32 %v1080, 0.0
        %v1132 = vmax.f32 %v1108, 0.0
        %v1133 = vmax.f32 %v1026, 0.0
        %v1134 = vmax.f32 %v1054, 0.0
        %v1135 = vmax.f32 %v1082, 0.0
        %v1136 = vmax.f32 %v1110, 0.0
        %v1137 = vmax.f32 %v1029, 0.0
        %v1138 = vmax.f32 %v1057, 0.0
        %v1139 = vmax.f32 %v1085, 0.0
        %v1140 = vmax.f32 %v1113, 0.0
        %v1141 = vmax.f32 %v1031, 0.0
        %v1142 = vmax.f32 %v1059, 0.0
        %v1143 = vmax.f32 %v1087, 0.0
        %v1144 = vmax.f32 %v1115, 0.0
        %v1145 = vmax.f32 %v1034, 0.0
        %v1146 = vmax.f32 %v1062, 0.0
        %v1147 = vmax.f32 %v1090, 0.0
        %v1148 = vmax.f32 %v1118, 0.0
        %v1149 = vpack.c.bf16 %v1125, %v1121
        %v1150 = vpack.c.bf16 %v1126, %v1122
        %v1151 = vpack.c.bf16 %v1127, %v1123
        %v1152 = vpack.c.bf16 %v1128, %v1124
        %v1153 = vpack.c.bf16 %v1133, %v1129
        %v1154 = vpack.c.bf16 %v1134, %v1130
        %v1155 = vpack.c.bf16 %v1135, %v1131
        %v1156 = vpack.c.bf16 %v1136, %v1132
        %v1157 = vpack.c.bf16 %v1141, %v1137
        %v1158 = vpack.c.bf16 %v1142, %v1138
        %v1159 = vpack.c.bf16 %v1143, %v1139
        %v1160 = vpack.c.bf16 %v1144, %v1140
        %v1161 = vpack.c.bf16 %v1145, %v1145
        %v1162 = vpack.c.bf16 %v1146, %v1146
        %v1163 = vpack.c.bf16 %v1147, %v1147
        %v1164 = vpack.c.bf16 %v1148, %v1148
        %v1165 = vld [vmem:[%s7] sm:$0xff]
        %v1166 = vld [vmem:[%s7 + $0x8] sm:$0xff]
        %v1167 = vld [vmem:[%s7 + $0x10] sm:$0xff]
        %v1168 = vld [vmem:[%s7 + $0x18] sm:$0xff]
        %v1169 = vld [vmem:[%s7 + $0x20] sm:$0xff]
        %v1170 = vld [vmem:[%s7 + $0x28] sm:$0xff]
        %v1171 = vld [vmem:[%s7 + $0x30] sm:$0xff]
        %v1172 = vld [vmem:[%s7 + $0x38] sm:$0xff]
        %v1173 = vld [vmem:[%s7 + $0x40] sm:$0xff]
        %v1174 = vld [vmem:[%s7 + $0x48] sm:$0xff]
        %v1175 = vld [vmem:[%s7 + $0x50] sm:$0xff]
        %v1176 = vld [vmem:[%s7 + $0x58] sm:$0xff]
        %v1177 = vld [vmem:[%s7 + $0x60] sm:$0xff]
        %v1178 = vld [vmem:[%s7 + $0x68] sm:$0xff]
        %v1179 = vld [vmem:[%s7 + $0x70] sm:$0xff]
        %v1180 = vld [vmem:[%s7 + $0x78] sm:$0xff]
        %v1181 = vld [vmem:[%s7 + $0x80] sm:$0xff]
        %v1182 = vld [vmem:[%s7 + $0x88] sm:$0xff]
        %v1183 = vld [vmem:[%s7 + $0x90] sm:$0xff]
        %v1184 = vld [vmem:[%s7 + $0x98] sm:$0xff]
        %v1185 = vld [vmem:[%s7 + $0xa0] sm:$0xff]
        %v1186 = vld [vmem:[%s7 + $0xa8] sm:$0xff]
        %v1187 = vld [vmem:[%s7 + $0xb0] sm:$0xff]
        %v1188 = vld [vmem:[%s7 + $0xb8] sm:$0xff]
        %v1189 = vld [vmem:[%s7 + $0xc0] sm:$0xff]
        %v1190 = vld [vmem:[%s7 + $0xc8] sm:$0xff]
        %v1191 = vld [vmem:[%s7 + $0xd0] sm:$0xff]
        %v1192 = vld [vmem:[%s7 + $0xd8] sm:$0xff]
        %v1193 = vld [vmem:[%s7 + $0xe0] sm:$0xff]
        %v1194 = vld [vmem:[%s7 + $0xe8] sm:$0xff]
        %v1195 = vld [vmem:[%s7 + $0xf0] sm:$0xff]
        %v1196 = vld [vmem:[%s7 + $0xf8] sm:$0xff]
        %v1197 = vld [vmem:[%s7 + $0x100] sm:$0xff]
        %v1198 = vld [vmem:[%s7 + $0x108] sm:$0xff]
        %v1199 = vld [vmem:[%s7 + $0x110] sm:$0xff]
        %v1200 = vld [vmem:[%s7 + $0x118] sm:$0xff]
        %v1201 = vld [vmem:[%s7 + $0x120] sm:$0xff]
        %v1202 = vld [vmem:[%s7 + $0x128] sm:$0xff]
        %v1203 = vld [vmem:[%s7 + $0x130] sm:$0xff]
        %v1204 = vld [vmem:[%s7 + $0x138] sm:$0xff]
        %v1205 = vld [vmem:[%s7 + $0x140] sm:$0xff]
        %v1206 = vld [vmem:[%s7 + $0x148] sm:$0xff]
        %v1207 = vld [vmem:[%s7 + $0x150] sm:$0xff]
        %v1208 = vld [vmem:[%s7 + $0x158] sm:$0xff]
        %v1209 = vld [vmem:[%s7 + $0x160] sm:$0xff]
        %v1210 = vld [vmem:[%s7 + $0x168] sm:$0xff]
        %v1211 = vld [vmem:[%s7 + $0x170] sm:$0xff]
        %v1212 = vld [vmem:[%s7 + $0x178] sm:$0xff]
        %v1213 = vld [vmem:[%s7 + $0x180] sm:$0xff]
        %v1214 = vld [vmem:[%s7 + $0x188] sm:$0xff]
        %v1215 = vld [vmem:[%s7 + $0x190] sm:$0xff]
        %v1216 = vld [vmem:[%s7 + $0x198] sm:$0xff]
        %v1217 = vld [vmem:[%s7 + $0x1a0] sm:$0xff]
        %v1218 = vld [vmem:[%s7 + $0x1a8] sm:$0xff]
        %v1219 = vld [vmem:[%s7 + $0x1b0] sm:$0xff]
        %v1220 = vld [vmem:[%s7 + $0x1b8] sm:$0xff]
        %v1221 = vld [vmem:[%s7 + $0x1c0] sm:$0xff]
        %v1222 = vld [vmem:[%s7 + $0x1c8] sm:$0xff]
        %v1223 = vld [vmem:[%s7 + $0x1d0] sm:$0xff]
        %v1224 = vld [vmem:[%s7 + $0x1d8] sm:$0xff]
        %v1225 = vld [vmem:[%s7 + $0x1e0] sm:$0xff]
        %v1226 = vld [vmem:[%s7 + $0x1e8] sm:$0xff]
        %v1227 = vld [vmem:[%s7 + $0x1f0] sm:$0xff]
        %v1228 = vld [vmem:[%s7 + $0x1f8] sm:$0xff]
        %v1229 = vld [vmem:[%s8] sm:$0x3]
        %v1231 = vperm.slane %v1229, 0
        %v1232 = vperm.slane %v1229, 1
        %v1299 = vunpack.c.l.b16 %v1165
        %v1300 = vunpack.c.h.b16 %v1165
        %v1301 = vunpack.c.l.b16 %v1166
        %v1302 = vunpack.c.h.b16 %v1166
        %v1303 = vunpack.c.l.b16 %v1167
        %v1304 = vunpack.c.h.b16 %v1167
        %v1305 = vunpack.c.l.b16 %v1168
        %v1306 = vunpack.c.h.b16 %v1168
        %v1307 = vunpack.c.l.b16 %v1169
        %v1308 = vunpack.c.h.b16 %v1169
        %v1309 = vunpack.c.l.b16 %v1170
        %v1310 = vunpack.c.h.b16 %v1170
        %v1311 = vunpack.c.l.b16 %v1171
        %v1312 = vunpack.c.h.b16 %v1171
        %v1313 = vunpack.c.l.b16 %v1172
        %v1314 = vunpack.c.h.b16 %v1172
        %v1315 = vunpack.c.l.b16 %v1173
        %v1316 = vunpack.c.h.b16 %v1173
        %v1317 = vunpack.c.l.b16 %v1174
        %v1318 = vunpack.c.h.b16 %v1174
        %v1319 = vunpack.c.l.b16 %v1175
        %v1320 = vunpack.c.h.b16 %v1175
        %v1321 = vunpack.c.l.b16 %v1176
        %v1322 = vunpack.c.h.b16 %v1176
        %v1323 = vunpack.c.l.b16 %v1177
        %v1324 = vunpack.c.h.b16 %v1177
        %v1325 = vunpack.c.l.b16 %v1178
        %v1326 = vunpack.c.h.b16 %v1178
        %v1327 = vunpack.c.l.b16 %v1179
        %v1328 = vunpack.c.h.b16 %v1179
        %v1329 = vunpack.c.l.b16 %v1180
        %v1330 = vunpack.c.h.b16 %v1180
        %v1331 = vunpack.c.l.b16 %v1181
        %v1332 = vunpack.c.h.b16 %v1181
        %v1333 = vunpack.c.l.b16 %v1182
        %v1334 = vunpack.c.h.b16 %v1182
        %v1335 = vunpack.c.l.b16 %v1183
        %v1336 = vunpack.c.h.b16 %v1183
        %v1337 = vunpack.c.l.b16 %v1184
        %v1338 = vunpack.c.h.b16 %v1184
        %v1339 = vunpack.c.l.b16 %v1185
        %v1340 = vunpack.c.h.b16 %v1185
        %v1341 = vunpack.c.l.b16 %v1186
        %v1342 = vunpack.c.h.b16 %v1186
        %v1343 = vunpack.c.l.b16 %v1187
        %v1344 = vunpack.c.h.b16 %v1187
        %v1345 = vunpack.c.l.b16 %v1188
        %v1346 = vunpack.c.h.b16 %v1188
        %v1347 = vunpack.c.l.b16 %v1189
        %v1348 = vunpack.c.h.b16 %v1189
        %v1349 = vunpack.c.l.b16 %v1190
        %v1350 = vunpack.c.h.b16 %v1190
        %v1351 = vunpack.c.l.b16 %v1191
        %v1352 = vunpack.c.h.b16 %v1191
        %v1353 = vunpack.c.l.b16 %v1192
        %v1354 = vunpack.c.h.b16 %v1192
        %v1355 = vunpack.c.l.b16 %v1193
        %v1356 = vunpack.c.h.b16 %v1193
        %v1357 = vunpack.c.l.b16 %v1194
        %v1358 = vunpack.c.h.b16 %v1194
        %v1359 = vunpack.c.l.b16 %v1195
        %v1360 = vunpack.c.h.b16 %v1195
        %v1361 = vunpack.c.l.b16 %v1196
        %v1362 = vunpack.c.h.b16 %v1196
        %v1363 = vunpack.c.l.b16 %v1197
        %v1364 = vunpack.c.h.b16 %v1197
        %v1365 = vunpack.c.l.b16 %v1198
        %v1366 = vunpack.c.h.b16 %v1198
        %v1367 = vunpack.c.l.b16 %v1199
        %v1368 = vunpack.c.h.b16 %v1199
        %v1369 = vunpack.c.l.b16 %v1200
        %v1370 = vunpack.c.h.b16 %v1200
        %v1371 = vunpack.c.l.b16 %v1201
        %v1372 = vunpack.c.h.b16 %v1201
        %v1373 = vunpack.c.l.b16 %v1202
        %v1374 = vunpack.c.h.b16 %v1202
        %v1375 = vunpack.c.l.b16 %v1203
        %v1376 = vunpack.c.h.b16 %v1203
        %v1377 = vunpack.c.l.b16 %v1204
        %v1378 = vunpack.c.h.b16 %v1204
        %v1379 = vunpack.c.l.b16 %v1205
        %v1380 = vunpack.c.h.b16 %v1205
        %v1381 = vunpack.c.l.b16 %v1206
        %v1382 = vunpack.c.h.b16 %v1206
        %v1383 = vunpack.c.l.b16 %v1207
        %v1384 = vunpack.c.h.b16 %v1207
        %v1385 = vunpack.c.l.b16 %v1208
        %v1386 = vunpack.c.h.b16 %v1208
        %v1387 = vunpack.c.l.b16 %v1209
        %v1388 = vunpack.c.h.b16 %v1209
        %v1389 = vunpack.c.l.b16 %v1210
        %v1390 = vunpack.c.h.b16 %v1210
        %v1391 = vunpack.c.l.b16 %v1211
        %v1392 = vunpack.c.h.b16 %v1211
        %v1393 = vunpack.c.l.b16 %v1212
        %v1394 = vunpack.c.h.b16 %v1212
        %v1395 = vunpack.c.l.b16 %v1213
        %v1396 = vunpack.c.h.b16 %v1213
        %v1397 = vunpack.c.l.b16 %v1214
        %v1398 = vunpack.c.h.b16 %v1214
        %v1399 = vunpack.c.l.b16 %v1215
        %v1400 = vunpack.c.h.b16 %v1215
        %v1401 = vunpack.c.l.b16 %v1216
        %v1402 = vunpack.c.h.b16 %v1216
        %v1403 = vunpack.c.l.b16 %v1217
        %v1404 = vunpack.c.h.b16 %v1217
        %v1405 = vunpack.c.l.b16 %v1218
        %v1406 = vunpack.c.h.b16 %v1218
        %v1407 = vunpack.c.l.b16 %v1219
        %v1408 = vunpack.c.h.b16 %v1219
        %v1409 = vunpack.c.l.b16 %v1220
        %v1410 = vunpack.c.h.b16 %v1220
        %v1411 = vunpack.c.l.b16 %v1221
        %v1412 = vunpack.c.h.b16 %v1221
        %v1413 = vunpack.c.l.b16 %v1222
        %v1414 = vunpack.c.h.b16 %v1222
        %v1415 = vunpack.c.l.b16 %v1223
        %v1416 = vunpack.c.h.b16 %v1223
        %v1417 = vunpack.c.l.b16 %v1224
        %v1418 = vunpack.c.h.b16 %v1224
        %v1419 = vunpack.c.l.b16 %v1225
        %v1420 = vunpack.c.h.b16 %v1225
        %v1421 = vunpack.c.l.b16 %v1226
        %v1422 = vunpack.c.h.b16 %v1226
        %v1423 = vunpack.c.l.b16 %v1227
        %v1424 = vunpack.c.h.b16 %v1227
        %v1425 = vunpack.c.l.b16 %v1228
        %v1426 = vunpack.c.h.b16 %v1228
        %v1427 = vpack.c.b16 %v1301, %v1299
        %v1428 = vpack.c.b16 %v1302, %v1300
        %v1429 = vpack.c.b16 %v1305, %v1303
        %v1430 = vpack.c.b16 %v1306, %v1304
        %v1431 = vpack.c.b16 %v1309, %v1307
        %v1432 = vpack.c.b16 %v1310, %v1308
        %v1433 = vpack.c.b16 %v1313, %v1311
        %v1434 = vpack.c.b16 %v1314, %v1312
        %v1435 = vpack.c.b16 %v1317, %v1315
        %v1436 = vpack.c.b16 %v1318, %v1316
        %v1437 = vpack.c.b16 %v1321, %v1319
        %v1438 = vpack.c.b16 %v1322, %v1320
        %v1439 = vpack.c.b16 %v1325, %v1323
        %v1440 = vpack.c.b16 %v1326, %v1324
        %v1441 = vpack.c.b16 %v1329, %v1327
        %v1442 = vpack.c.b16 %v1330, %v1328
        %v1443 = vpack.c.b16 %v1333, %v1331
        %v1444 = vpack.c.b16 %v1334, %v1332
        %v1445 = vpack.c.b16 %v1337, %v1335
        %v1446 = vpack.c.b16 %v1338, %v1336
        %v1447 = vpack.c.b16 %v1341, %v1339
        %v1448 = vpack.c.b16 %v1342, %v1340
        %v1449 = vpack.c.b16 %v1345, %v1343
        %v1450 = vpack.c.b16 %v1346, %v1344
        %v1451 = vpack.c.b16 %v1349, %v1347
        %v1452 = vpack.c.b16 %v1350, %v1348
        %v1453 = vpack.c.b16 %v1353, %v1351
        %v1454 = vpack.c.b16 %v1354, %v1352
        %v1455 = vpack.c.b16 %v1357, %v1355
        %v1456 = vpack.c.b16 %v1358, %v1356
        %v1457 = vpack.c.b16 %v1361, %v1359
        %v1458 = vpack.c.b16 %v1362, %v1360
        %v1459 = vpack.c.b16 %v1365, %v1363
        %v1460 = vpack.c.b16 %v1366, %v1364
        %v1461 = vpack.c.b16 %v1369, %v1367
        %v1462 = vpack.c.b16 %v1370, %v1368
        %v1463 = vpack.c.b16 %v1373, %v1371
        %v1464 = vpack.c.b16 %v1374, %v1372
        %v1465 = vpack.c.b16 %v1377, %v1375
        %v1466 = vpack.c.b16 %v1378, %v1376
        %v1467 = vpack.c.b16 %v1381, %v1379
        %v1468 = vpack.c.b16 %v1382, %v1380
        %v1469 = vpack.c.b16 %v1385, %v1383
        %v1470 = vpack.c.b16 %v1386, %v1384
        %v1471 = vpack.c.b16 %v1389, %v1387
        %v1472 = vpack.c.b16 %v1390, %v1388
        %v1473 = vpack.c.b16 %v1393, %v1391
        %v1474 = vpack.c.b16 %v1394, %v1392
        %v1475 = vpack.c.b16 %v1397, %v1395
        %v1476 = vpack.c.b16 %v1398, %v1396
        %v1477 = vpack.c.b16 %v1401, %v1399
        %v1478 = vpack.c.b16 %v1402, %v1400
        %v1479 = vpack.c.b16 %v1405, %v1403
        %v1480 = vpack.c.b16 %v1406, %v1404
        %v1481 = vpack.c.b16 %v1409, %v1407
        %v1482 = vpack.c.b16 %v1410, %v1408
        %v1483 = vpack.c.b16 %v1413, %v1411
        %v1484 = vpack.c.b16 %v1414, %v1412
        %v1485 = vpack.c.b16 %v1417, %v1415
        %v1486 = vpack.c.b16 %v1418, %v1416
        %v1487 = vpack.c.b16 %v1421, %v1419
        %v1488 = vpack.c.b16 %v1422, %v1420
        %v1489 = vpack.c.b16 %v1425, %v1423
        %v1490 = vpack.c.b16 %v1426, %v1424
        %1555 = vmatpush.bf16.msra.mxu0 %v1441
        %1556 = vmatpush.bf16.msra.mxu0 %v1439
        %1557 = vmatpush.bf16.msra.mxu0 %v1437
        %1558 = vmatpush.bf16.msra.mxu0 %v1435
        %1559 = vmatpush.bf16.msra.mxu0 %v1433
        %1560 = vmatpush.bf16.msra.mxu0 %v1431
        %1561 = vmatpush.bf16.msra.mxu0 %v1429
        %1562 = vmatpush.bf16.msra.mxu0 %v1427
        %1563 = vmatmul.bf16.gmra.mxu0 %v1149
        %v1564 = vpop.f32.mrf.mxu0
        %v1565 = vadd.f32 %v1231, %v1564
        %v1566 = vpop.f32.mrf.mxu0
        %v1567 = vadd.f32 %v1231, %v1566
        %1568 = vmatmul.bf16.gmra.mxu0 %v1153
        %v1569 = vpop.f32.mrf.mxu0
        %v1570 = vadd.f32 %v1231, %v1569
        %v1571 = vpop.f32.mrf.mxu0
        %v1572 = vadd.f32 %v1231, %v1571
        %1573 = vmatmul.bf16.gmra.mxu0 %v1157
        %v1574 = vpop.f32.mrf.mxu0
        %v1575 = vadd.f32 %v1231, %v1574
        %v1576 = vpop.f32.mrf.mxu0
        %v1577 = vadd.f32 %v1231, %v1576
        %1578 = vmatmul.bf16.gmra.mxu0 %v1161
        %v1579 = vpop.f32.mrf.mxu0
        %v1580 = vadd.f32 %v1231, %v1579
        %v1581 = vpop.f32.mrf.mxu0
        %1582 = vdwg.mxu0
        %1583 = vmatpush.bf16.msra.mxu0 %v1457
        %1584 = vmatpush.bf16.msra.mxu0 %v1455
        %1585 = vmatpush.bf16.msra.mxu0 %v1453
        %1586 = vmatpush.bf16.msra.mxu0 %v1451
        %1587 = vmatpush.bf16.msra.mxu0 %v1449
        %1588 = vmatpush.bf16.msra.mxu0 %v1447
        %1589 = vmatpush.bf16.msra.mxu0 %v1445
        %1590 = vmatpush.bf16.msra.mxu0 %v1443
        %1591 = vmatmul.bf16.gmra.mxu0 %v1150
        %v1592 = vpop.f32.mrf.mxu0
        %v1593 = vadd.f32 %v1565, %v1592
        %v1594 = vpop.f32.mrf.mxu0
        %v1595 = vadd.f32 %v1567, %v1594
        %1596 = vmatmul.bf16.gmra.mxu0 %v1154
        %v1597 = vpop.f32.mrf.mxu0
        %v1598 = vadd.f32 %v1570, %v1597
        %v1599 = vpop.f32.mrf.mxu0
        %v1600 = vadd.f32 %v1572, %v1599
        %1601 = vmatmul.bf16.gmra.mxu0 %v1158
        %v1602 = vpop.f32.mrf.mxu0
        %v1603 = vadd.f32 %v1575, %v1602
        %v1604 = vpop.f32.mrf.mxu0
        %v1605 = vadd.f32 %v1577, %v1604
        %1606 = vmatmul.bf16.gmra.mxu0 %v1162
        %v1607 = vpop.f32.mrf.mxu0
        %v1608 = vadd.f32 %v1580, %v1607
        %v1609 = vpop.f32.mrf.mxu0
        %1610 = vdwg.mxu0
        %1611 = vmatpush.bf16.msra.mxu0 %v1473
        %1612 = vmatpush.bf16.msra.mxu0 %v1471
        %1613 = vmatpush.bf16.msra.mxu0 %v1469
        %1614 = vmatpush.bf16.msra.mxu0 %v1467
        %1615 = vmatpush.bf16.msra.mxu0 %v1465
        %1616 = vmatpush.bf16.msra.mxu0 %v1463
        %1617 = vmatpush.bf16.msra.mxu0 %v1461
        %1618 = vmatpush.bf16.msra.mxu0 %v1459
        %1619 = vmatmul.bf16.gmra.mxu0 %v1151
        %v1620 = vpop.f32.mrf.mxu0
        %v1621 = vadd.f32 %v1593, %v1620
        %v1622 = vpop.f32.mrf.mxu0
        %v1623 = vadd.f32 %v1595, %v1622
        %1624 = vmatmul.bf16.gmra.mxu0 %v1155
        %v1625 = vpop.f32.mrf.mxu0
        %v1626 = vadd.f32 %v1598, %v1625
        %v1627 = vpop.f32.mrf.mxu0
        %v1628 = vadd.f32 %v1600, %v1627
        %1629 = vmatmul.bf16.gmra.mxu0 %v1159
        %v1630 = vpop.f32.mrf.mxu0
        %v1631 = vadd.f32 %v1603, %v1630
        %v1632 = vpop.f32.mrf.mxu0
        %v1633 = vadd.f32 %v1605, %v1632
        %1634 = vmatmul.bf16.gmra.mxu0 %v1163
        %v1635 = vpop.f32.mrf.mxu0
        %v1636 = vadd.f32 %v1608, %v1635
        %v1637 = vpop.f32.mrf.mxu0
        %1638 = vdwg.mxu0
        %1639 = vmatpush.bf16.msra.mxu0 %v1489
        %1640 = vmatpush.bf16.msra.mxu0 %v1487
        %1641 = vmatpush.bf16.msra.mxu0 %v1485
        %1642 = vmatpush.bf16.msra.mxu0 %v1483
        %1643 = vmatpush.bf16.msra.mxu0 %v1481
        %1644 = vmatpush.bf16.msra.mxu0 %v1479
        %1645 = vmatpush.bf16.msra.mxu0 %v1477
        %1646 = vmatpush.bf16.msra.mxu0 %v1475
        %1647 = vmatmul.bf16.gmra.mxu0 %v1152
        %v1648 = vpop.f32.mrf.mxu0
        %v1649 = vadd.f32 %v1621, %v1648
        %v1650 = vpop.f32.mrf.mxu0
        %v1651 = vadd.f32 %v1623, %v1650
        %1652 = vmatmul.bf16.gmra.mxu0 %v1156
        %v1653 = vpop.f32.mrf.mxu0
        %v1654 = vadd.f32 %v1626, %v1653
        %v1655 = vpop.f32.mrf.mxu0
        %v1656 = vadd.f32 %v1628, %v1655
        %1657 = vmatmul.bf16.gmra.mxu0 %v1160
        %v1658 = vpop.f32.mrf.mxu0
        %v1659 = vadd.f32 %v1631, %v1658
        %v1660 = vpop.f32.mrf.mxu0
        %v1661 = vadd.f32 %v1633, %v1660
        %1662 = vmatmul.bf16.gmra.mxu0 %v1164
        %v1663 = vpop.f32.mrf.mxu0
        %v1664 = vadd.f32 %v1636, %v1663
        %v1665 = vpop.f32.mrf.mxu0
        %1666 = vdwg.mxu0
        %1667 = vmatpush.bf16.msra.mxu0 %v1442
        %1668 = vmatpush.bf16.msra.mxu0 %v1440
        %1669 = vmatpush.bf16.msra.mxu0 %v1438
        %1670 = vmatpush.bf16.msra.mxu0 %v1436
        %1671 = vmatpush.bf16.msra.mxu0 %v1434
        %1672 = vmatpush.bf16.msra.mxu0 %v1432
        %1673 = vmatpush.bf16.msra.mxu0 %v1430
        %1674 = vmatpush.bf16.msra.mxu0 %v1428
        %1675 = vmatmul.bf16.gmra.mxu0 %v1149
        %v1676 = vpop.f32.mrf.mxu0
        %v1677 = vadd.f32 %v1232, %v1676
        %v1678 = vpop.f32.mrf.mxu0
        %v1679 = vadd.f32 %v1232, %v1678
        %1680 = vmatmul.bf16.gmra.mxu0 %v1153
        %v1681 = vpop.f32.mrf.mxu0
        %v1682 = vadd.f32 %v1232, %v1681
        %v1683 = vpop.f32.mrf.mxu0
        %v1684 = vadd.f32 %v1232, %v1683
        %1685 = vmatmul.bf16.gmra.mxu0 %v1157
        %v1686 = vpop.f32.mrf.mxu0
        %v1687 = vadd.f32 %v1232, %v1686
        %v1688 = vpop.f32.mrf.mxu0
        %v1689 = vadd.f32 %v1232, %v1688
        %1690 = vmatmul.bf16.gmra.mxu0 %v1161
        %v1691 = vpop.f32.mrf.mxu0
        %v1692 = vadd.f32 %v1232, %v1691
        %v1693 = vpop.f32.mrf.mxu0
        %1694 = vdwg.mxu0
        %1695 = vmatpush.bf16.msra.mxu0 %v1458
        %1696 = vmatpush.bf16.msra.mxu0 %v1456
        %1697 = vmatpush.bf16.msra.mxu0 %v1454
        %1698 = vmatpush.bf16.msra.mxu0 %v1452
        %1699 = vmatpush.bf16.msra.mxu0 %v1450
        %1700 = vmatpush.bf16.msra.mxu0 %v1448
        %1701 = vmatpush.bf16.msra.mxu0 %v1446
        %1702 = vmatpush.bf16.msra.mxu0 %v1444
        %1703 = vmatmul.bf16.gmra.mxu0 %v1150
        %v1704 = vpop.f32.mrf.mxu0
        %v1705 = vadd.f32 %v1677, %v1704
        %v1706 = vpop.f32.mrf.mxu0
        %v1707 = vadd.f32 %v1679, %v1706
        %1708 = vmatmul.bf16.gmra.mxu0 %v1154
        %v1709 = vpop.f32.mrf.mxu0
        %v1710 = vadd.f32 %v1682, %v1709
        %v1711 = vpop.f32.mrf.mxu0
        %v1712 = vadd.f32 %v1684, %v1711
        %1713 = vmatmul.bf16.gmra.mxu0 %v1158
        %v1714 = vpop.f32.mrf.mxu0
        %v1715 = vadd.f32 %v1687, %v1714
        %v1716 = vpop.f32.mrf.mxu0
        %v1717 = vadd.f32 %v1689, %v1716
        %1718 = vmatmul.bf16.gmra.mxu0 %v1162
        %v1719 = vpop.f32.mrf.mxu0
        %v1720 = vadd.f32 %v1692, %v1719
        %v1721 = vpop.f32.mrf.mxu0
        %1722 = vdwg.mxu0
        %1723 = vmatpush.bf16.msra.mxu0 %v1474
        %1724 = vmatpush.bf16.msra.mxu0 %v1472
        %1725 = vmatpush.bf16.msra.mxu0 %v1470
        %1726 = vmatpush.bf16.msra.mxu0 %v1468
        %1727 = vmatpush.bf16.msra.mxu0 %v1466
        %1728 = vmatpush.bf16.msra.mxu0 %v1464
        %1729 = vmatpush.bf16.msra.mxu0 %v1462
        %1730 = vmatpush.bf16.msra.mxu0 %v1460
        %1731 = vmatmul.bf16.gmra.mxu0 %v1151
        %v1732 = vpop.f32.mrf.mxu0
        %v1733 = vadd.f32 %v1705, %v1732
        %v1734 = vpop.f32.mrf.mxu0
        %v1735 = vadd.f32 %v1707, %v1734
        %1736 = vmatmul.bf16.gmra.mxu0 %v1155
        %v1737 = vpop.f32.mrf.mxu0
        %v1738 = vadd.f32 %v1710, %v1737
        %v1739 = vpop.f32.mrf.mxu0
        %v1740 = vadd.f32 %v1712, %v1739
        %1741 = vmatmul.bf16.gmra.mxu0 %v1159
        %v1742 = vpop.f32.mrf.mxu0
        %v1743 = vadd.f32 %v1715, %v1742
        %v1744 = vpop.f32.mrf.mxu0
        %v1745 = vadd.f32 %v1717, %v1744
        %1746 = vmatmul.bf16.gmra.mxu0 %v1163
        %v1747 = vpop.f32.mrf.mxu0
        %v1748 = vadd.f32 %v1720, %v1747
        %v1749 = vpop.f32.mrf.mxu0
        %1750 = vdwg.mxu0
        %1751 = vmatpush.bf16.msra.mxu0 %v1490
        %1752 = vmatpush.bf16.msra.mxu0 %v1488
        %1753 = vmatpush.bf16.msra.mxu0 %v1486
        %1754 = vmatpush.bf16.msra.mxu0 %v1484
        %1755 = vmatpush.bf16.msra.mxu0 %v1482
        %1756 = vmatpush.bf16.msra.mxu0 %v1480
        %1757 = vmatpush.bf16.msra.mxu0 %v1478
        %1758 = vmatpush.bf16.msra.mxu0 %v1476
        %1759 = vmatmul.bf16.gmra.mxu0 %v1152
        %v1760 = vpop.f32.mrf.mxu0
        %v1761 = vadd.f32 %v1733, %v1760
        %v1762 = vpop.f32.mrf.mxu0
        %v1763 = vadd.f32 %v1735, %v1762
        %1764 = vmatmul.bf16.gmra.mxu0 %v1156
        %v1765 = vpop.f32.mrf.mxu0
        %v1766 = vadd.f32 %v1738, %v1765
        %v1767 = vpop.f32.mrf.mxu0
        %v1768 = vadd.f32 %v1740, %v1767
        %1769 = vmatmul.bf16.gmra.mxu0 %v1160
        %v1770 = vpop.f32.mrf.mxu0
        %v1771 = vadd.f32 %v1743, %v1770
        %v1772 = vpop.f32.mrf.mxu0
        %v1773 = vadd.f32 %v1745, %v1772
        %1774 = vmatmul.bf16.gmra.mxu0 %v1164
        %v1775 = vpop.f32.mrf.mxu0
        %v1776 = vadd.f32 %v1748, %v1775
        %v1777 = vpop.f32.mrf.mxu0
        %1778 = vdwg.mxu0
        %v1779 = vmax.f32 %v1649, 0.0
        %v1780 = vmax.f32 %v1761, 0.0
        %v1781 = vmax.f32 %v1651, 0.0
        %v1782 = vmax.f32 %v1763, 0.0
        %v1783 = vmax.f32 %v1654, 0.0
        %v1784 = vmax.f32 %v1766, 0.0
        %v1785 = vmax.f32 %v1656, 0.0
        %v1786 = vmax.f32 %v1768, 0.0
        %v1787 = vmax.f32 %v1659, 0.0
        %v1788 = vmax.f32 %v1771, 0.0
        %v1789 = vmax.f32 %v1661, 0.0
        %v1790 = vmax.f32 %v1773, 0.0
        %v1791 = vmax.f32 %v1664, 0.0
        %v1792 = vmax.f32 %v1776, 0.0
        %v1793 = vpack.c.bf16 %v1781, %v1779
        %v1794 = vpack.c.bf16 %v1782, %v1780
        %v1795 = vpack.c.bf16 %v1785, %v1783
        %v1796 = vpack.c.bf16 %v1786, %v1784
        %v1797 = vpack.c.bf16 %v1789, %v1787
        %v1798 = vpack.c.bf16 %v1790, %v1788
        %v1799 = vpack.c.bf16 %v1791, %v1791
        %v1800 = vpack.c.bf16 %v1792, %v1792
        %v1801 = vld [vmem:[%s9] sm:$0xf]
        %v1802 = vld [vmem:[%s9 + $0x4] sm:$0xf]
        %v1803 = vld [vmem:[%s9 + $0x8] sm:$0xf]
        %v1804 = vld [vmem:[%s9 + $0xc] sm:$0xf]
        %v1805 = vld [vmem:[%s9 + $0x10] sm:$0xf]
        %v1806 = vld [vmem:[%s9 + $0x14] sm:$0xf]
        %v1807 = vld [vmem:[%s9 + $0x18] sm:$0xf]
        %v1808 = vld [vmem:[%s9 + $0x1c] sm:$0xf]
        %v1809 = vld [vmem:[%s9 + $0x20] sm:$0xf]
        %v1810 = vld [vmem:[%s9 + $0x24] sm:$0xf]
        %v1811 = vld [vmem:[%s9 + $0x28] sm:$0xf]
        %v1812 = vld [vmem:[%s9 + $0x2c] sm:$0xf]
        %v1813 = vld [vmem:[%s9 + $0x30] sm:$0xf]
        %v1814 = vld [vmem:[%s9 + $0x34] sm:$0xf]
        %v1815 = vld [vmem:[%s9 + $0x38] sm:$0xf]
        %v1816 = vld [vmem:[%s9 + $0x3c] sm:$0xf]
        %v1817 = vld [vmem:[%s9 + $0x40] sm:$0xf]
        %v1818 = vld [vmem:[%s9 + $0x44] sm:$0xf]
        %v1819 = vld [vmem:[%s9 + $0x48] sm:$0xf]
        %v1820 = vld [vmem:[%s9 + $0x4c] sm:$0xf]
        %v1821 = vld [vmem:[%s9 + $0x50] sm:$0xf]
        %v1822 = vld [vmem:[%s9 + $0x54] sm:$0xf]
        %v1823 = vld [vmem:[%s9 + $0x58] sm:$0xf]
        %v1824 = vld [vmem:[%s9 + $0x5c] sm:$0xf]
        %v1825 = vld [vmem:[%s9 + $0x60] sm:$0xf]
        %v1826 = vld [vmem:[%s9 + $0x64] sm:$0xf]
        %v1827 = vld [vmem:[%s9 + $0x68] sm:$0xf]
        %v1828 = vld [vmem:[%s9 + $0x6c] sm:$0xf]
        %v1829 = vld [vmem:[%s9 + $0x70] sm:$0xf]
        %v1830 = vld [vmem:[%s9 + $0x74] sm:$0xf]
        %v1831 = vld [vmem:[%s9 + $0x78] sm:$0xf]
        %v1832 = vld [vmem:[%s9 + $0x7c] sm:$0xf]
        %v1833 = vld [vmem:[%s10] sm:$0x1]
        %v1835 = vperm.slane %v1833, 0
        %v1869 = vunpack.c.l.b16 %v1801
        %v1870 = vunpack.c.l.b16 %v1802
        %v1871 = vunpack.c.l.b16 %v1803
        %v1872 = vunpack.c.l.b16 %v1804
        %v1873 = vunpack.c.l.b16 %v1805
        %v1874 = vunpack.c.l.b16 %v1806
        %v1875 = vunpack.c.l.b16 %v1807
        %v1876 = vunpack.c.l.b16 %v1808
        %v1877 = vunpack.c.l.b16 %v1809
        %v1878 = vunpack.c.l.b16 %v1810
        %v1879 = vunpack.c.l.b16 %v1811
        %v1880 = vunpack.c.l.b16 %v1812
        %v1881 = vunpack.c.l.b16 %v1813
        %v1882 = vunpack.c.l.b16 %v1814
        %v1883 = vunpack.c.l.b16 %v1815
        %v1884 = vunpack.c.l.b16 %v1816
        %v1885 = vunpack.c.l.b16 %v1817
        %v1886 = vunpack.c.l.b16 %v1818
        %v1887 = vunpack.c.l.b16 %v1819
        %v1888 = vunpack.c.l.b16 %v1820
        %v1889 = vunpack.c.l.b16 %v1821
        %v1890 = vunpack.c.l.b16 %v1822
        %v1891 = vunpack.c.l.b16 %v1823
        %v1892 = vunpack.c.l.b16 %v1824
        %v1893 = vunpack.c.l.b16 %v1825
        %v1894 = vunpack.c.l.b16 %v1826
        %v1895 = vunpack.c.l.b16 %v1827
        %v1896 = vunpack.c.l.b16 %v1828
        %v1897 = vunpack.c.l.b16 %v1829
        %v1898 = vunpack.c.l.b16 %v1830
        %v1899 = vunpack.c.l.b16 %v1831
        %v1900 = vunpack.c.l.b16 %v1832
        %v1901 = vpack.c.b16 %v1870, %v1869
        %v1902 = vpack.c.b16 %v1872, %v1871
        %v1903 = vpack.c.b16 %v1874, %v1873
        %v1904 = vpack.c.b16 %v1876, %v1875
        %v1905 = vpack.c.b16 %v1878, %v1877
        %v1906 = vpack.c.b16 %v1880, %v1879
        %v1907 = vpack.c.b16 %v1882, %v1881
        %v1908 = vpack.c.b16 %v1884, %v1883
        %v1909 = vpack.c.b16 %v1886, %v1885
        %v1910 = vpack.c.b16 %v1888, %v1887
        %v1911 = vpack.c.b16 %v1890, %v1889
        %v1912 = vpack.c.b16 %v1892, %v1891
        %v1913 = vpack.c.b16 %v1894, %v1893
        %v1914 = vpack.c.b16 %v1896, %v1895
        %v1915 = vpack.c.b16 %v1898, %v1897
        %v1916 = vpack.c.b16 %v1900, %v1899
        %1933 = vmatpush.bf16.msra.mxu0 %v1908
        %1934 = vmatpush.bf16.msra.mxu0 %v1907
        %1935 = vmatpush.bf16.msra.mxu0 %v1906
        %1936 = vmatpush.bf16.msra.mxu0 %v1905
        %1937 = vmatpush.bf16.msra.mxu0 %v1904
        %1938 = vmatpush.bf16.msra.mxu0 %v1903
        %1939 = vmatpush.bf16.msra.mxu0 %v1902
        %1940 = vmatpush.bf16.msra.mxu0 %v1901
        %1941 = vmatmul.bf16.gmra.mxu0 %v1793
        %v1942 = vpop.f32.mrf.mxu0
        %v1943 = vadd.f32 %v1835, %v1942
        %v1944 = vpop.f32.mrf.mxu0
        %v1945 = vadd.f32 %v1835, %v1944
        %1946 = vmatmul.bf16.gmra.mxu0 %v1795
        %v1947 = vpop.f32.mrf.mxu0
        %v1948 = vadd.f32 %v1835, %v1947
        %v1949 = vpop.f32.mrf.mxu0
        %v1950 = vadd.f32 %v1835, %v1949
        %1951 = vmatmul.bf16.gmra.mxu0 %v1797
        %v1952 = vpop.f32.mrf.mxu0
        %v1953 = vadd.f32 %v1835, %v1952
        %v1954 = vpop.f32.mrf.mxu0
        %v1955 = vadd.f32 %v1835, %v1954
        %1956 = vmatmul.bf16.gmra.mxu0 %v1799
        %v1957 = vpop.f32.mrf.mxu0
        %v1958 = vadd.f32 %v1835, %v1957
        %v1959 = vpop.f32.mrf.mxu0
        %1960 = vdwg.mxu0
        %1961 = vmatpush.bf16.msra.mxu0 %v1916
        %1962 = vmatpush.bf16.msra.mxu0 %v1915
        %1963 = vmatpush.bf16.msra.mxu0 %v1914
        %1964 = vmatpush.bf16.msra.mxu0 %v1913
        %1965 = vmatpush.bf16.msra.mxu0 %v1912
        %1966 = vmatpush.bf16.msra.mxu0 %v1911
        %1967 = vmatpush.bf16.msra.mxu0 %v1910
        %1968 = vmatpush.bf16.msra.mxu0 %v1909
        %1969 = vmatmul.bf16.gmra.mxu0 %v1794
        %v1970 = vpop.f32.mrf.mxu0
        %v1971 = vadd.f32 %v1943, %v1970
        %v1972 = vpop.f32.mrf.mxu0
        %v1973 = vadd.f32 %v1945, %v1972
        %1974 = vmatmul.bf16.gmra.mxu0 %v1796
        %v1975 = vpop.f32.mrf.mxu0
        %v1976 = vadd.f32 %v1948, %v1975
        %v1977 = vpop.f32.mrf.mxu0
        %v1978 = vadd.f32 %v1950, %v1977
        %1979 = vmatmul.bf16.gmra.mxu0 %v1798
        %v1980 = vpop.f32.mrf.mxu0
        %v1981 = vadd.f32 %v1953, %v1980
        %v1982 = vpop.f32.mrf.mxu0
        %v1983 = vadd.f32 %v1955, %v1982
        %1984 = vmatmul.bf16.gmra.mxu0 %v1800
        %v1985 = vpop.f32.mrf.mxu0
        %v1986 = vadd.f32 %v1958, %v1985
        %v1987 = vpop.f32.mrf.mxu0
        %1988 = vdwg.mxu0
        %v1989 = vmax.f32 %v1971, 0.0
        %v1990 = vmax.f32 %v1973, 0.0
        %v1991 = vmax.f32 %v1976, 0.0
        %v1992 = vmax.f32 %v1978, 0.0
        %v1993 = vmax.f32 %v1981, 0.0
        %v1994 = vmax.f32 %v1983, 0.0
        %v1995 = vmax.f32 %v1986, 0.0
        %v1996 = vpack.c.bf16 %v1990, %v1989
        %v1997 = vpack.c.bf16 %v1992, %v1991
        %v1998 = vpack.c.bf16 %v1994, %v1993
        %v1999 = vpack.c.bf16 %v1995, %v1995
        %v2000 = vld [vmem:[%s11] sm:$0xf]
        %v2001 = vld [vmem:[%s12] sm:$0xff]
        %2003 = vset.pattern.permute.xlu0 0
        %2004 = vperm.xlu0 %2003, %v2001
        %v2005 = vpop.permute.xlu0 %2004
        %2007 = vmatpush.bf16.xpose.msra.mxu0 0
        %2008 = vmatpush.bf16.xpose.msra.mxu0 0
        %2009 = vmatpush.bf16.xpose.msra.mxu0 0
        %2010 = vmatpush.bf16.xpose.msra.mxu0 0
        %2011 = vmatpush.bf16.xpose.msra.mxu0 %v1999
        %2012 = vmatpush.bf16.xpose.msra.mxu0 %v1998
        %2013 = vmatpush.bf16.xpose.msra.mxu0 %v1997
        %2014 = vmatpush.bf16.xpose.msra.mxu0 %v1996
        %2015 = vmatmul.bf16.gmra.mxu0 %v2000
        %v2016 = vpop.f32.mrf.mxu0
        %v2017 = vadd.f32 %v2005, %v2016
        %v2018 = vpop.f32.mrf.mxu0
        %2019 = vdwg.mxu0
        %v2020 = vtanh.pop %v2017
        %vm2021 = vcmask 424960
        %2022 = vst.msk [vmem:[%s544] sm:$0xff] %vm2021, %v2020
        %p2023 = scmp.lt.s32.totalorder %s29, 1
        %s2024 = scalar_select %p2023, %s29, 1
        %p2025 = scmp.lt.s32.totalorder %s30, 0
        %s2026 = scalar_select %p2025, %s30, 0
        %s2027 = sadd.s32 %s2026, %s2024
        %s2028 = smul.addr %s2027, 8
        %s2029 = scalar_lea.vmem %s13, %s2028
        // Predicated region
        $region77: #{msn_forward.9} parent=71 // pred_check
          %p2030 = pneg %p349
        $region78: #{msn_forward.9} parent=71 // pred_check_branch
          %2032 = sbr.rel (%p2030) target = $region80
        $region79: #{msn_forward.9} parent=71 // pred_region
          _
        $region80: #{msn_forward.9} parent=71 // pred_fallthru
          _
      $region72: #{msn_forward.9} parent=5 // pred_fallthru
        _
      %p2033 = scmp.le.s32.totalorder 2, %s20
      // Predicated region
      $region81: #{msn_forward.9} parent=5 // pred_check
        %p2034 = pneg %p2033
      $region82: #{msn_forward.9} parent=5 // pred_check_branch
        %2036 = sbr.rel (%p2034) target = $region84
      $region83: #{msn_forward.9} parent=5 // pred_region
        %s2037 = ssub.s32 %s20, 2
        // Predicated region
        $region85: #{msn_forward.9} parent=83 // pred_check
          %p2038 = pneg %p355
        $region86: #{msn_forward.9} parent=83 // pred_check_branch
          %2040 = sbr.rel (%p2038) target = $region88
        $region87: #{msn_forward.9} parent=83 // pred_region
          %p2041 = scmp.lt.s32.totalorder %s31, 1
          %s2042 = scalar_select %p2041, %s31, 1
          %p2043 = scmp.lt.s32.totalorder %s32, 0
          %s2044 = scalar_select %p2043, %s32, 0
          %s2045 = sadd.s32 %s2044, %s2042
          %s2046 = smul.addr %s2045, 8
          %s2047 = scalar_lea.vmem %s13, %s2046
        $region88: #{msn_forward.9} parent=83 // pred_fallthru
          _
      $region84: #{msn_forward.9} parent=5 // pred_fallthru
        _
    $region6: #{msn_forward.9} parent=1 // loop_footer
      %s24 = sadd.s32 1, %s20
    $region7: #{msn_forward.9} parent=1 // loop_footer_branch
      %19 = sbr.rel target = $region3
    $region8: #{msn_forward.9} parent=1 // loop_exit
      _
    %2048 = vsyncpa [#allocation3], 1
    %s2049 = scalar_lea.sflag [#allocation3], 1
    %2050 = vsyncpa %s2049, 1

// kernel: msn_forward.8
$region0: #{msn_forward.8}
  #allocation0 [shape = 'u32[]', space=smem, size = 0x4, offset = 0x4, fixed_abs, tag = 'smem constant byte address 0x4 - core index']
  #allocation1 [shape = 'u32[72,128]{1,0:T(1,128)}', space=vmem, size = 0x9000, scoped, tag = 'internal scratch']
  #allocation2 [shape = 'f32[1,1024]{1,0:T(1,128)}', space=vmem, size = 0x1000, scoped, tag = 'scratch operand']
  %s0 = inlined_call_operand.vmem [shape: f32[2,52,3], index: 0, kind: input, shape index: {}]
  %s1 = inlined_call_operand.vmem [shape: f32[2,52,65], index: 1, kind: input, shape index: {}]
  %s2 = inlined_call_operand.vmem [shape: bf16[3,128], index: 2, kind: input, shape index: {}]
  %s3 = inlined_call_operand.vmem [shape: bf16[65,128], index: 3, kind: input, shape index: {}]
  %s4 = inlined_call_operand.vmem [shape: f32[1,128], index: 4, kind: input, shape index: {}]
  %s5 = inlined_call_operand.vmem [shape: bf16[128,256], index: 5, kind: input, shape index: {}]
  %s6 = inlined_call_operand.vmem [shape: f32[1,256], index: 6, kind: input, shape index: {}]
  %s7 = inlined_call_operand.hbm [shape: bf16[256,1024], index: 7, kind: input, shape index: {}]
  %s8 = inlined_call_operand.vmem [shape: f32[1,1024], index: 8, kind: input, shape index: {}]
  %s9 = inlined_call_operand.hbm [shape: bf16[1024,512], index: 9, kind: input, shape index: {}]
  %s10 = inlined_call_operand.vmem [shape: f32[1,512], index: 10, kind: input, shape index: {}]
  %s11 = inlined_call_operand.vmem [shape: f32[2,1,512], index: 11, kind: output, shape index: {}]
  %s12 = sld [smem:[#allocation0]]
  $region97: #{msn_forward.8} parent=0
    _
  %s14 = ssub.s32 1, %s12
  %s15 = scalar_select 0, %s14, %s12
  $region1: #{msn_forward.8} parent=0
    #allocation3 [shape = 'u8[524288]{0}', space=vmem, size = 0x80000, scoped, tag = 'input window, operand 7, single buffered']
    #allocation4 [shape = 's32[2]{0}', space=sflag, size = 0x8, scoped, tag = 'scoped memory for msn_forward.8']
    #allocation5 [shape = 'u8[1048576]{0}', space=vmem, size = 0x100000, scoped, tag = 'input window, operand 9, single buffered']
    #allocation6 [shape = 's32[1]{0}', space=sflag, size = 0x4, scoped, tag = 'scoped memory for msn_forward.8']
    %16 = vsyncpa [#allocation4], 0
    %17 = vsyncpa [#allocation6], 0
    loop: start=0, step=1, limit=4
    $region2: #{msn_forward.8} parent=1 // loop_pre_header
      _
    $region3: #{msn_forward.8} parent=1 // loop_header
      %s19 = sphi 0, %s23
      %p20 = scmp.ge.s32.totalorder %s19, 4
      %s26 = sphi 0, %s38
      %s27 = sphi 0, %s34
      %s28 = sphi 0, %s26
      %s29 = sphi 0, %s27
      %s30 = sphi 0, %s28
      %s31 = sphi 0, %s29
      %s43 = sphi 0, %s45
      %s46 = sphi 0, %s43
      %s47 = sphi 0, %s46
      %s63 = sphi 0, %s47
      %s71 = sphi 0, %s73
      %s74 = sphi 0, %s71
      %s75 = sphi 0, %s74
      %s91 = sphi 0, %s75
      %s95 = sphi 0, %s95
      %s97 = sphi 0, %s95
      %s98 = sphi 0, %s97
      %s112 = sphi 0, %s98
      %s116 = sphi 0, %s116
      %s118 = sphi 0, %s116
      %s119 = sphi 0, %s118
      %s133 = sphi 0, %s119
      %s137 = sphi 0, %s137
      %s139 = sphi 0, %s137
      %s140 = sphi 0, %s139
      %s154 = sphi 0, %s140
      %s158 = sphi 0, %s158
      %s160 = sphi 0, %s158
      %s161 = sphi 0, %s160
      %s175 = sphi 0, %s161
      %s179 = sphi 0, %s179
      %s181 = sphi 0, %s179
      %s182 = sphi 0, %s181
      %s196 = sphi 0, %s182
      %s200 = sphi 0, %s200
      %s202 = sphi 0, %s200
      %s203 = sphi 0, %s202
      %s217 = sphi 0, %s203
      %s221 = sphi 0, %s221
      %s223 = sphi 0, %s221
      %s224 = sphi 0, %s223
      %s238 = sphi 0, %s224
      %s242 = sphi 0, %s242
      %s244 = sphi 0, %s242
      %s245 = sphi 0, %s244
      %s259 = sphi 0, %s245
      %s263 = sphi 0, %s263
      %s265 = sphi 0, %s263
      %s266 = sphi 0, %s265
      %s280 = sphi 0, %s266
      %s286 = sphi 0, %s288
      %s289 = sphi 0, %s286
      %s290 = sphi 0, %s289
      %s306 = sphi 0, %s290
    $region4: #{msn_forward.8} parent=1 // loop_header_branch
      %22 = sbr.rel (%p20) target = $region8
    $region5: #{msn_forward.8} parent=1 // loop_body
      %s24 = ssub.s32 %s19, 1
      %s25 = ssub.s32 %s19, 2
      %s32 = sadd.s32 1, %s27
      %p33 = scmp.ge.s32.totalorder %s32, 1
      %s34 = scalar_select %p33, 0, %s32
      %s35 = sadd.s32 1, %s26
      %s36 = scalar_select %p33, %s35, %s26
      %p37 = scmp.ge.s32.totalorder %s36, 2
      %s38 = scalar_select %p37, 0, %s36
      %s39 = ssub.s32 %s26, %s38
      %s40 = ssub.s32 %s27, %s34
      %s41 = sor.u32 %s39, %s40
      %p42 = scmp.eq.s32.totalorder %s41, 0
      %s44 = sadd.s32 %s43, 1
      %s45 = scalar_select %p42, %s43, %s44
      %p48 = pneg %p42
      %p49 = scmp.eq.s32.totalorder %s19, 1
      %p50 = por %p48, %p49
      %p51 = scmp.ne.s32.totalorder %s43, %s46
      %p52 = scmp.eq.s32.totalorder %s19, 0
      %p53 = por %p51, %p52
      %p54 = scmp.ne.s32.totalorder %s43, %s46
      %p55 = scmp.eq.s32.totalorder %s24, 1
      %p56 = por %p54, %p55
      %p57 = scmp.ne.s32.totalorder %s46, %s47
      %p58 = scmp.eq.s32.totalorder %s24, 0
      %p59 = por %p57, %p58
      %p60 = scmp.ne.s32.totalorder %s46, %s47
      %p61 = scmp.eq.s32.totalorder %s25, 1
      %p62 = por %p60, %p61
      %p64 = scmp.ne.s32.totalorder %s47, %s63
      %p65 = scmp.eq.s32.totalorder %s25, 0
      %p66 = por %p64, %p65
      %s67 = ssub.s32 %s26, %s38
      %s68 = ssub.s32 %s27, %s34
      %s69 = sor.u32 %s67, %s68
      %p70 = scmp.eq.s32.totalorder %s69, 0
      %s72 = sadd.s32 %s71, 1
      %s73 = scalar_select %p70, %s71, %s72
      %p76 = pneg %p70
      %p77 = scmp.eq.s32.totalorder %s19, 1
      %p78 = por %p76, %p77
      %p79 = scmp.ne.s32.totalorder %s71, %s74
      %p80 = scmp.eq.s32.totalorder %s19, 0
      %p81 = por %p79, %p80
      %p82 = scmp.ne.s32.totalorder %s71, %s74
      %p83 = scmp.eq.s32.totalorder %s24, 1
      %p84 = por %p82, %p83
      %p85 = scmp.ne.s32.totalorder %s74, %s75
      %p86 = scmp.eq.s32.totalorder %s24, 0
      %p87 = por %p85, %p86
      %p88 = scmp.ne.s32.totalorder %s74, %s75
      %p89 = scmp.eq.s32.totalorder %s25, 1
      %p90 = por %p88, %p89
      %p92 = scmp.ne.s32.totalorder %s75, %s91
      %p93 = scmp.eq.s32.totalorder %s25, 0
      %p94 = por %p92, %p93
      %s96 = sadd.s32 %s95, 1
      %p99 = scmp.eq.s32.totalorder %s19, 1
      %p100 = scmp.ne.s32.totalorder %s95, %s97
      %p101 = scmp.eq.s32.totalorder %s19, 0
      %p102 = por %p100, %p101
      %p103 = scmp.ne.s32.totalorder %s95, %s97
      %p104 = scmp.eq.s32.totalorder %s24, 1
      %p105 = por %p103, %p104
      %p106 = scmp.ne.s32.totalorder %s97, %s98
      %p107 = scmp.eq.s32.totalorder %s24, 0
      %p108 = por %p106, %p107
      %p109 = scmp.ne.s32.totalorder %s97, %s98
      %p110 = scmp.eq.s32.totalorder %s25, 1
      %p111 = por %p109, %p110
      %p113 = scmp.ne.s32.totalorder %s98, %s112
      %p114 = scmp.eq.s32.totalorder %s25, 0
      %p115 = por %p113, %p114
      %s117 = sadd.s32 %s116, 1
      %p120 = scmp.eq.s32.totalorder %s19, 1
      %p121 = scmp.ne.s32.totalorder %s116, %s118
      %p122 = scmp.eq.s32.totalorder %s19, 0
      %p123 = por %p121, %p122
      %p124 = scmp.ne.s32.totalorder %s116, %s118
      %p125 = scmp.eq.s32.totalorder %s24, 1
      %p126 = por %p124, %p125
      %p127 = scmp.ne.s32.totalorder %s118, %s119
      %p128 = scmp.eq.s32.totalorder %s24, 0
      %p129 = por %p127, %p128
      %p130 = scmp.ne.s32.totalorder %s118, %s119
      %p131 = scmp.eq.s32.totalorder %s25, 1
      %p132 = por %p130, %p131
      %p134 = scmp.ne.s32.totalorder %s119, %s133
      %p135 = scmp.eq.s32.totalorder %s25, 0
      %p136 = por %p134, %p135
      %s138 = sadd.s32 %s137, 1
      %p141 = scmp.eq.s32.totalorder %s19, 1
      %p142 = scmp.ne.s32.totalorder %s137, %s139
      %p143 = scmp.eq.s32.totalorder %s19, 0
      %p144 = por %p142, %p143
      %p145 = scmp.ne.s32.totalorder %s137, %s139
      %p146 = scmp.eq.s32.totalorder %s24, 1
      %p147 = por %p145, %p146
      %p148 = scmp.ne.s32.totalorder %s139, %s140
      %p149 = scmp.eq.s32.totalorder %s24, 0
      %p150 = por %p148, %p149
      %p151 = scmp.ne.s32.totalorder %s139, %s140
      %p152 = scmp.eq.s32.totalorder %s25, 1
      %p153 = por %p151, %p152
      %p155 = scmp.ne.s32.totalorder %s140, %s154
      %p156 = scmp.eq.s32.totalorder %s25, 0
      %p157 = por %p155, %p156
      %s159 = sadd.s32 %s158, 1
      %p162 = scmp.eq.s32.totalorder %s19, 1
      %p163 = scmp.ne.s32.totalorder %s158, %s160
      %p164 = scmp.eq.s32.totalorder %s19, 0
      %p165 = por %p163, %p164
      %p166 = scmp.ne.s32.totalorder %s158, %s160
      %p167 = scmp.eq.s32.totalorder %s24, 1
      %p168 = por %p166, %p167
      %p169 = scmp.ne.s32.totalorder %s160, %s161
      %p170 = scmp.eq.s32.totalorder %s24, 0
      %p171 = por %p169, %p170
      %p172 = scmp.ne.s32.totalorder %s160, %s161
      %p173 = scmp.eq.s32.totalorder %s25, 1
      %p174 = por %p172, %p173
      %p176 = scmp.ne.s32.totalorder %s161, %s175
      %p177 = scmp.eq.s32.totalorder %s25, 0
      %p178 = por %p176, %p177
      %s180 = sadd.s32 %s179, 1
      %p183 = scmp.eq.s32.totalorder %s19, 1
      %p184 = scmp.ne.s32.totalorder %s179, %s181
      %p185 = scmp.eq.s32.totalorder %s19, 0
      %p186 = por %p184, %p185
      %p187 = scmp.ne.s32.totalorder %s179, %s181
      %p188 = scmp.eq.s32.totalorder %s24, 1
      %p189 = por %p187, %p188
      %p190 = scmp.ne.s32.totalorder %s181, %s182
      %p191 = scmp.eq.s32.totalorder %s24, 0
      %p192 = por %p190, %p191
      %p193 = scmp.ne.s32.totalorder %s181, %s182
      %p194 = scmp.eq.s32.totalorder %s25, 1
      %p195 = por %p193, %p194
      %p197 = scmp.ne.s32.totalorder %s182, %s196
      %p198 = scmp.eq.s32.totalorder %s25, 0
      %p199 = por %p197, %p198
      %s201 = sadd.s32 %s200, 1
      %p204 = scmp.eq.s32.totalorder %s19, 1
      %p205 = scmp.ne.s32.totalorder %s200, %s202
      %p206 = scmp.eq.s32.totalorder %s19, 0
      %p207 = por %p205, %p206
      %p208 = scmp.ne.s32.totalorder %s200, %s202
      %p209 = scmp.eq.s32.totalorder %s24, 1
      %p210 = por %p208, %p209
      %p211 = scmp.ne.s32.totalorder %s202, %s203
      %p212 = scmp.eq.s32.totalorder %s24, 0
      %p213 = por %p211, %p212
      %p214 = scmp.ne.s32.totalorder %s202, %s203
      %p215 = scmp.eq.s32.totalorder %s25, 1
      %p216 = por %p214, %p215
      %p218 = scmp.ne.s32.totalorder %s203, %s217
      %p219 = scmp.eq.s32.totalorder %s25, 0
      %p220 = por %p218, %p219
      %s222 = sadd.s32 %s221, 1
      %p225 = scmp.eq.s32.totalorder %s19, 1
      %p226 = scmp.ne.s32.totalorder %s221, %s223
      %p227 = scmp.eq.s32.totalorder %s19, 0
      %p228 = por %p226, %p227
      %p229 = scmp.ne.s32.totalorder %s221, %s223
      %p230 = scmp.eq.s32.totalorder %s24, 1
      %p231 = por %p229, %p230
      %p232 = scmp.ne.s32.totalorder %s223, %s224
      %p233 = scmp.eq.s32.totalorder %s24, 0
      %p234 = por %p232, %p233
      %p235 = scmp.ne.s32.totalorder %s223, %s224
      %p236 = scmp.eq.s32.totalorder %s25, 1
      %p237 = por %p235, %p236
      %p239 = scmp.ne.s32.totalorder %s224, %s238
      %p240 = scmp.eq.s32.totalorder %s25, 0
      %p241 = por %p239, %p240
      %s243 = sadd.s32 %s242, 1
      %p246 = scmp.eq.s32.totalorder %s19, 1
      %p247 = scmp.ne.s32.totalorder %s242, %s244
      %p248 = scmp.eq.s32.totalorder %s19, 0
      %p249 = por %p247, %p248
      %p250 = scmp.ne.s32.totalorder %s242, %s244
      %p251 = scmp.eq.s32.totalorder %s24, 1
      %p252 = por %p250, %p251
      %p253 = scmp.ne.s32.totalorder %s244, %s245
      %p254 = scmp.eq.s32.totalorder %s24, 0
      %p255 = por %p253, %p254
      %p256 = scmp.ne.s32.totalorder %s244, %s245
      %p257 = scmp.eq.s32.totalorder %s25, 1
      %p258 = por %p256, %p257
      %p260 = scmp.ne.s32.totalorder %s245, %s259
      %p261 = scmp.eq.s32.totalorder %s25, 0
      %p262 = por %p260, %p261
      %s264 = sadd.s32 %s263, 1
      %p267 = scmp.eq.s32.totalorder %s19, 1
      %p268 = scmp.ne.s32.totalorder %s263, %s265
      %p269 = scmp.eq.s32.totalorder %s19, 0
      %p270 = por %p268, %p269
      %p271 = scmp.ne.s32.totalorder %s263, %s265
      %p272 = scmp.eq.s32.totalorder %s24, 1
      %p273 = por %p271, %p272
      %p274 = scmp.ne.s32.totalorder %s265, %s266
      %p275 = scmp.eq.s32.totalorder %s24, 0
      %p276 = por %p274, %p275
      %p277 = scmp.ne.s32.totalorder %s265, %s266
      %p278 = scmp.eq.s32.totalorder %s25, 1
      %p279 = por %p277, %p278
      %p281 = scmp.ne.s32.totalorder %s266, %s280
      %p282 = scmp.eq.s32.totalorder %s25, 0
      %p283 = por %p281, %p282
      %s284 = ssub.s32 %s26, %s38
      %p285 = scmp.eq.s32.totalorder %s284, 0
      %s287 = sadd.s32 %s286, 1
      %s288 = scalar_select %p285, %s286, %s287
      %p291 = pneg %p285
      %p292 = scmp.eq.s32.totalorder %s19, 1
      %p293 = por %p291, %p292
      %p294 = scmp.ne.s32.totalorder %s286, %s289
      %p295 = scmp.eq.s32.totalorder %s19, 0
      %p296 = por %p294, %p295
      %p297 = scmp.ne.s32.totalorder %s286, %s289
      %p298 = scmp.eq.s32.totalorder %s24, 1
      %p299 = por %p297, %p298
      %p300 = scmp.ne.s32.totalorder %s289, %s290
      %p301 = scmp.eq.s32.totalorder %s24, 0
      %p302 = por %p300, %p301
      %p303 = scmp.ne.s32.totalorder %s289, %s290
      %p304 = scmp.eq.s32.totalorder %s25, 1
      %p305 = por %p303, %p304
      %p307 = scmp.ne.s32.totalorder %s290, %s306
      %p308 = scmp.eq.s32.totalorder %s25, 0
      %p309 = por %p307, %p308
      %p310 = scmp.le.s32.totalorder 1, %s19
      %p311 = scmp.lt.s32.totalorder %s19, 3
      %p312 = pnand %p310, %p311
      %p313 = pneg %p312
      // Predicated region
      $region9: #{msn_forward.8} parent=5 // pred_check
        _
      $region10: #{msn_forward.8} parent=5 // pred_check_branch
        %315 = sbr.rel (%p312) target = $region12
      $region11: #{msn_forward.8} parent=5 // pred_region
        %s316 = ssub.s32 %s19, 1
        // Predicated region
        $region13: #{msn_forward.8} parent=11 // pred_check
          %p317 = pneg %p108
        $region14: #{msn_forward.8} parent=11 // pred_check_branch
          %319 = sbr.rel (%p317) target = $region16
        $region15: #{msn_forward.8} parent=11 // pred_region
          _
        $region16: #{msn_forward.8} parent=11 // pred_fallthru
          _
        // Predicated region
        $region17: #{msn_forward.8} parent=11 // pred_check
          %p320 = pneg %p129
        $region18: #{msn_forward.8} parent=11 // pred_check_branch
          %322 = sbr.rel (%p320) target = $region20
        $region19: #{msn_forward.8} parent=11 // pred_region
          _
        $region20: #{msn_forward.8} parent=11 // pred_fallthru
          _
        // Predicated region
        $region21: #{msn_forward.8} parent=11 // pred_check
          %p323 = pneg %p150
        $region22: #{msn_forward.8} parent=11 // pred_check_branch
          %325 = sbr.rel (%p323) target = $region24
        $region23: #{msn_forward.8} parent=11 // pred_region
          _
        $region24: #{msn_forward.8} parent=11 // pred_fallthru
          _
        // Predicated region
        $region25: #{msn_forward.8} parent=11 // pred_check
          %p326 = pneg %p171
        $region26: #{msn_forward.8} parent=11 // pred_check_branch
          %328 = sbr.rel (%p326) target = $region28
        $region27: #{msn_forward.8} parent=11 // pred_region
          _
        $region28: #{msn_forward.8} parent=11 // pred_fallthru
          _
        // Predicated region
        $region29: #{msn_forward.8} parent=11 // pred_check
          %p329 = pneg %p192
        $region30: #{msn_forward.8} parent=11 // pred_check_branch
          %331 = sbr.rel (%p329) target = $region32
        $region31: #{msn_forward.8} parent=11 // pred_region
          _
        $region32: #{msn_forward.8} parent=11 // pred_fallthru
          _
        // Predicated region
        $region33: #{msn_forward.8} parent=11 // pred_check
          %p332 = pneg %p213
        $region34: #{msn_forward.8} parent=11 // pred_check_branch
          %334 = sbr.rel (%p332) target = $region36
        $region35: #{msn_forward.8} parent=11 // pred_region
          %336 = vsyncadd [#allocation4], 0
          %s337 = sshll.u32 %s7, 4
          %s338 = int_to_ptr.hbm [resolvable:$true] %s337
          %s339 = sshll.u32 [#allocation3], 4
          %s340 = int_to_ptr.vmem [resolvable:$true] %s339
          %345 = dma.hbm_to_vmem [thread:$0]  %s338, 16384, %s340, [#allocation4], 512, 512, 32
        $region36: #{msn_forward.8} parent=11 // pred_fallthru
          _
        // Predicated region
        $region37: #{msn_forward.8} parent=11 // pred_check
          %p346 = pneg %p234
        $region38: #{msn_forward.8} parent=11 // pred_check_branch
          %348 = sbr.rel (%p346) target = $region40
        $region39: #{msn_forward.8} parent=11 // pred_region
          _
        $region40: #{msn_forward.8} parent=11 // pred_fallthru
          _
        // Predicated region
        $region41: #{msn_forward.8} parent=11 // pred_check
          %p349 = pneg %p255
        $region42: #{msn_forward.8} parent=11 // pred_check_branch
          %351 = sbr.rel (%p349) target = $region44
        $region43: #{msn_forward.8} parent=11 // pred_region
          %353 = vsyncadd [#allocation6], 0
          %s354 = sshll.u32 %s9, 4
          %s355 = int_to_ptr.hbm [resolvable:$true] %s354
          %s356 = sshll.u32 [#allocation5], 4
          %s357 = int_to_ptr.vmem [resolvable:$true] %s356
          %362 = dma.hbm_to_vmem [thread:$0]  %s355, 32768, %s357, [#allocation6], 256, 256, 16
        $region44: #{msn_forward.8} parent=11 // pred_fallthru
          _
        // Predicated region
        $region45: #{msn_forward.8} parent=11 // pred_check
          %p363 = pneg %p276
        $region46: #{msn_forward.8} parent=11 // pred_check_branch
          %365 = sbr.rel (%p363) target = $region48
        $region47: #{msn_forward.8} parent=11 // pred_region
          _
        $region48: #{msn_forward.8} parent=11 // pred_fallthru
          _
      $region12: #{msn_forward.8} parent=5 // pred_fallthru
        _
      %p366 = scmp.lt.s32.totalorder %s19, 2
      // Predicated region
      $region49: #{msn_forward.8} parent=5 // pred_check
        %p367 = pneg %p366
      $region50: #{msn_forward.8} parent=5 // pred_check_branch
        %369 = sbr.rel (%p367) target = $region52
      $region51: #{msn_forward.8} parent=5 // pred_region
        // Predicated region
        $region53: #{msn_forward.8} parent=51 // pred_check
          %p370 = pneg %p53
        $region54: #{msn_forward.8} parent=51 // pred_check_branch
          %372 = sbr.rel (%p370) target = $region56
        $region55: #{msn_forward.8} parent=51 // pred_region
          %s373 = smul.u32 7, %s27
          %p374 = scmp.lt.s32.totalorder %s26, 1
          %s375 = scalar_select %p374, %s26, 1
          %p376 = scmp.lt.s32.totalorder %s373, 6
          %s377 = scalar_select %p376, %s373, 6
          %s378 = smul.addr %s375, 7
          %s379 = sadd.s32 %s377, %s378
          %s380 = smul.addr %s379, 8
          %s381 = scalar_lea.vmem %s0, %s380
          %s382 = smul.u32 7, %s27
        $region56: #{msn_forward.8} parent=51 // pred_fallthru
          _
        // Predicated region
        $region57: #{msn_forward.8} parent=51 // pred_check
          %p383 = pneg %p81
        $region58: #{msn_forward.8} parent=51 // pred_check_branch
          %385 = sbr.rel (%p383) target = $region60
        $region59: #{msn_forward.8} parent=51 // pred_region
          %s386 = smul.u32 7, %s27
          %p387 = scmp.lt.s32.totalorder %s26, 1
          %s388 = scalar_select %p387, %s26, 1
          %p389 = scmp.lt.s32.totalorder %s386, 6
          %s390 = scalar_select %p389, %s386, 6
          %s391 = smul.addr %s388, 7
          %s392 = sadd.s32 %s390, %s391
          %s393 = smul.addr %s392, 8
          %s394 = scalar_lea.vmem %s1, %s393
          %s395 = smul.u32 7, %s27
        $region60: #{msn_forward.8} parent=51 // pred_fallthru
          _
      $region52: #{msn_forward.8} parent=5 // pred_fallthru
        _
      %p396 = scmp.le.s32.totalorder 1, %s19
      %p397 = scmp.lt.s32.totalorder %s19, 3
      %p398 = pnand %p396, %p397
      %p399 = pneg %p398
      // Predicated region
      $region61: #{msn_forward.8} parent=5 // pred_check
        _
      $region62: #{msn_forward.8} parent=5 // pred_check_branch
        %401 = sbr.rel (%p398) target = $region64
      $region63: #{msn_forward.8} parent=5 // pred_region
        %s402 = ssub.s32 %s19, 1
        // Predicated region
        $region65: #{msn_forward.8} parent=63 // pred_check
          %p403 = pneg %p213
        $region66: #{msn_forward.8} parent=63 // pred_check_branch
          %405 = sbr.rel (%p403) target = $region68
        $region67: #{msn_forward.8} parent=63 // pred_region
          %407 = dma.done [#allocation4], 16384
        $region68: #{msn_forward.8} parent=63 // pred_fallthru
          _
        // Predicated region
        $region69: #{msn_forward.8} parent=63 // pred_check
          %p408 = pneg %p255
        $region70: #{msn_forward.8} parent=63 // pred_check_branch
          %410 = sbr.rel (%p408) target = $region72
        $region71: #{msn_forward.8} parent=63 // pred_region
          %412 = dma.done [#allocation6], 32768
        $region72: #{msn_forward.8} parent=63 // pred_fallthru
          _
        %s413 = smul.u32 7, %s29
        %p414 = scmp.lt.s32.totalorder %s28, 1
        %s415 = scalar_select %p414, %s28, 1
        %p416 = scmp.lt.s32.totalorder %s413, 6
        %s417 = scalar_select %p416, %s413, 6
        %s418 = smul.addr %s415, 7
        %s419 = sadd.s32 %s417, %s418
        %s420 = smul.addr %s419, 8
        %s421 = scalar_lea.vmem %s0, %s420
        %p422 = pneg %p59
        %p423 = pneg %p56
        %s424 = smul.u32 7, %s29
        %p425 = scmp.lt.s32.totalorder %s28, 1
        %s426 = scalar_select %p425, %s28, 1
        %p427 = scmp.lt.s32.totalorder %s424, 6
        %s428 = scalar_select %p427, %s424, 6
        %s429 = smul.addr %s426, 7
        %s430 = sadd.s32 %s428, %s429
        %s431 = smul.addr %s430, 8
        %s432 = scalar_lea.vmem %s1, %s431
        %p433 = pneg %p87
        %p434 = pneg %p84
        %p435 = pneg %p108
        %p436 = pneg %p105
        %p437 = pneg %p129
        %p438 = pneg %p126
        %p439 = pneg %p150
        %p440 = pneg %p147
        %p441 = pneg %p171
        %p442 = pneg %p168
        %p443 = pneg %p192
        %p444 = pneg %p189
        %p445 = pneg %p213
        %p446 = pneg %p210
        %p447 = pneg %p234
        %p448 = pneg %p231
        %p449 = pneg %p255
        %p450 = pneg %p252
        %p451 = pneg %p276
        %p452 = pneg %p273
        %p453 = pneg %p302
        %p454 = pneg %p299
        %p455 = scmp.lt.s32.totalorder %s28, 1
        %s456 = scalar_select %p455, %s28, 1
        %s457 = smul.addr %s456, 4
        %s458 = scalar_lea.vmem %s11, %s457
        %s459 = smul.u32 7, %s29
        %p460 = scmp.lt.s32.totalorder %s28, 1
        %s461 = scalar_select %p460, %s28, 1
        %p462 = scmp.lt.s32.totalorder %s459, 6
        %s463 = scalar_select %p462, %s459, 6
        %s464 = smul.addr %s461, 7
        %s465 = sadd.s32 %s463, %s464
        %s466 = smul.addr %s465, 8
        %s467 = scalar_lea.vmem %s0, %s466
        %s468 = smul.u32 7, %s29
        %s469 = smul.u32 7, %s29
        %p470 = scmp.lt.s32.totalorder %s28, 1
        %s471 = scalar_select %p470, %s28, 1
        %p472 = scmp.lt.s32.totalorder %s469, 6
        %s473 = scalar_select %p472, %s469, 6
        %s474 = smul.addr %s471, 7
        %s475 = sadd.s32 %s473, %s474
        %s476 = smul.addr %s475, 8
        %s477 = scalar_lea.vmem %s1, %s476
        %s478 = smul.u32 7, %s29
        %p479 = scmp.lt.s32.totalorder %s28, 1
        %s480 = scalar_select %p479, %s28, 1
        %s481 = smul.addr %s480, 4
        %s482 = scalar_lea.vmem %s11, %s481
        %v484 = vld [vmem:[%s467] sm:$0xff]
        %v485 = vld [vmem:[%s467 + $0x8] sm:$0xff]
        %v486 = vld [vmem:[%s467 + $0x10] sm:$0xff]
        %v487 = vld [vmem:[%s467 + $0x18] sm:$0xff]
        %v488 = vld [vmem:[%s467 + $0x20] sm:$0xff]
        %v489 = vld [vmem:[%s467 + $0x28] sm:$0xff]
        %v490 = vld [vmem:[%s467 + $0x30] sm:$0xf]
        %v491 = vld [vmem:[%s477] sm:$0xff]
        %v492 = vld [vmem:[%s477 + $0x8] sm:$0xff]
        %v493 = vld [vmem:[%s477 + $0x10] sm:$0xff]
        %v494 = vld [vmem:[%s477 + $0x18] sm:$0xff]
        %v495 = vld [vmem:[%s477 + $0x20] sm:$0xff]
        %v496 = vld [vmem:[%s477 + $0x28] sm:$0xff]
        %v497 = vld [vmem:[%s477 + $0x30] sm:$0xf]
        %v498 = vpack.c.bf16 %v492, %v491
        %v499 = vpack.c.bf16 %v494, %v493
        %v500 = vpack.c.bf16 %v496, %v495
        %v501 = vpack.c.bf16 %v497, %v497
        %v502 = vld [vmem:[%s2] sm:$0x3]
        %v503 = vld [vmem:[%s3] sm:$0xf]
        %v504 = vld [vmem:[%s3 + $0x4] sm:$0xf]
        %v505 = vld [vmem:[%s3 + $0x8] sm:$0xf]
        %v506 = vld [vmem:[%s3 + $0xc] sm:$0xf]
        %v507 = vld [vmem:[%s3 + $0x10] sm:$0xf]
        %v508 = vld [vmem:[%s3 + $0x14] sm:$0xf]
        %v509 = vld [vmem:[%s3 + $0x18] sm:$0xf]
        %v510 = vld [vmem:[%s3 + $0x1c] sm:$0xf]
        %v511 = vld [vmem:[%s3 + $0x20] sm:$0x1]
        %v512 = vld [vmem:[%s4] sm:$0x1]
        %v513 = vunpack.c.l.bf16 %v502
        %515 = vset.pattern.permute.xlu0 0
        %516 = vperm.xlu0 %515, %v484
        %v517 = vpop.permute.xlu0 %516
        %520 = vset.pattern.permute.xlu0 0
        %521 = vperm.xlu0 %520, %v485
        %v522 = vpop.permute.xlu0 %521
        %525 = vset.pattern.permute.xlu0 0
        %526 = vperm.xlu0 %525, %v486
        %v527 = vpop.permute.xlu0 %526
        %530 = vset.pattern.permute.xlu0 0
        %531 = vperm.xlu0 %530, %v487
        %v532 = vpop.permute.xlu0 %531
        %535 = vset.pattern.permute.xlu0 0
        %536 = vperm.xlu0 %535, %v488
        %v537 = vpop.permute.xlu0 %536
        %540 = vset.pattern.permute.xlu0 0
        %541 = vperm.xlu0 %540, %v489
        %v542 = vpop.permute.xlu0 %541
        %545 = vset.pattern.permute.xlu0 0
        %546 = vperm.xlu0 %545, %v490
        %v547 = vpop.permute.xlu0 %546
        %v549 = vperm.slane %v513, 0
        %v550 = vmul.f32 %v517, %v549
        %v551 = vmul.f32 %v522, %v549
        %v552 = vmul.f32 %v527, %v549
        %v553 = vmul.f32 %v532, %v549
        %v554 = vmul.f32 %v537, %v549
        %v555 = vmul.f32 %v542, %v549
        %v556 = vmul.f32 %v547, %v549
        %557 = vset.pattern.permute.xlu0 1
        %558 = vperm.xlu0 %557, %v484
        %v559 = vpop.permute.xlu0 %558
        %561 = vset.pattern.permute.xlu0 1
        %562 = vperm.xlu0 %561, %v485
        %v563 = vpop.permute.xlu0 %562
        %565 = vset.pattern.permute.xlu0 1
        %566 = vperm.xlu0 %565, %v486
        %v567 = vpop.permute.xlu0 %566
        %569 = vset.pattern.permute.xlu0 1
        %570 = vperm.xlu0 %569, %v487
        %v571 = vpop.permute.xlu0 %570
        %573 = vset.pattern.permute.xlu0 1
        %574 = vperm.xlu0 %573, %v488
        %v575 = vpop.permute.xlu0 %574
        %577 = vset.pattern.permute.xlu0 1
        %578 = vperm.xlu0 %577, %v489
        %v579 = vpop.permute.xlu0 %578
        %581 = vset.pattern.permute.xlu0 1
        %582 = vperm.xlu0 %581, %v490
        %v583 = vpop.permute.xlu0 %582
        %v585 = vperm.slane %v513, 1
        %v586 = vmul.f32 %v559, %v585
        %v587 = vmul.f32 %v563, %v585
        %v588 = vmul.f32 %v567, %v585
        %v589 = vmul.f32 %v571, %v585
        %v590 = vmul.f32 %v575, %v585
        %v591 = vmul.f32 %v579, %v585
        %v592 = vmul.f32 %v583, %v585
        %v593 = vadd.f32 %v550, %v586
        %v594 = vadd.f32 %v551, %v587
        %v595 = vadd.f32 %v552, %v588
        %v596 = vadd.f32 %v553, %v589
        %v597 = vadd.f32 %v554, %v590
        %v598 = vadd.f32 %v555, %v591
        %v599 = vadd.f32 %v556, %v592
        %600 = vset.pattern.permute.xlu0 2
        %601 = vperm.xlu0 %600, %v484
        %v602 = vpop.permute.xlu0 %601
        %604 = vset.pattern.permute.xlu0 2
        %605 = vperm.xlu0 %604, %v485
        %v606 = vpop.permute.xlu0 %605
        %608 = vset.pattern.permute.xlu0 2
        %609 = vperm.xlu0 %608, %v486
        %v610 = vpop.permute.xlu0 %609
        %612 = vset.pattern.permute.xlu0 2
        %613 = vperm.xlu0 %612, %v487
        %v614 = vpop.permute.xlu0 %613
        %616 = vset.pattern.permute.xlu0 2
        %617 = vperm.xlu0 %616, %v488
        %v618 = vpop.permute.xlu0 %617
        %620 = vset.pattern.permute.xlu0 2
        %621 = vperm.xlu0 %620, %v489
        %v622 = vpop.permute.xlu0 %621
        %624 = vset.pattern.permute.xlu0 2
        %625 = vperm.xlu0 %624, %v490
        %v626 = vpop.permute.xlu0 %625
        %v628 = vperm.slane %v513, 2
        %v629 = vmul.f32 %v602, %v628
        %v630 = vmul.f32 %v606, %v628
        %v631 = vmul.f32 %v610, %v628
        %v632 = vmul.f32 %v614, %v628
        %v633 = vmul.f32 %v618, %v628
        %v634 = vmul.f32 %v622, %v628
        %v635 = vmul.f32 %v626, %v628
        %v636 = vadd.f32 %v593, %v629
        %v637 = vadd.f32 %v594, %v630
        %v638 = vadd.f32 %v595, %v631
        %v639 = vadd.f32 %v596, %v632
        %v640 = vadd.f32 %v597, %v633
        %v641 = vadd.f32 %v598, %v634
        %v642 = vadd.f32 %v599, %v635
        %v652 = vunpack.c.l.b16 %v503
        %v653 = vunpack.c.l.b16 %v504
        %v654 = vunpack.c.l.b16 %v505
        %v655 = vunpack.c.l.b16 %v506
        %v656 = vunpack.c.l.b16 %v507
        %v657 = vunpack.c.l.b16 %v508
        %v658 = vunpack.c.l.b16 %v509
        %v659 = vunpack.c.l.b16 %v510
        %v660 = vunpack.c.l.b16 %v511
        %v661 = vpack.c.b16 %v653, %v652
        %v662 = vpack.c.b16 %v655, %v654
        %v663 = vpack.c.b16 %v657, %v656
        %v664 = vpack.c.b16 %v659, %v658
        %v665 = vpack.c.b16 %v660, %v660
        %vm670 = vcmask 531456
        %v672 = vsel %vm670, %v498, 0
        %v675 = vsel %vm670, %v499, 0
        %v678 = vsel %vm670, %v500, 0
        %v681 = vsel %vm670, %v501, 0
        %vm683 = vcmask 1040384
        %v684 = vsel 0, 4294967295, 65535
        %v685 = vsel %vm683, %v684, 0
        %v687 = vand.u32 %v665, %v685
        %689 = vmatpush.bf16.msra.mxu0 0
        %690 = vmatpush.bf16.msra.mxu0 0
        %691 = vmatpush.bf16.msra.mxu0 0
        %692 = vmatpush.bf16.msra.mxu0 %v687
        %693 = vmatpush.bf16.msra.mxu0 %v664
        %694 = vmatpush.bf16.msra.mxu0 %v663
        %695 = vmatpush.bf16.msra.mxu0 %v662
        %696 = vmatpush.bf16.msra.mxu0 %v661
        %697 = vmatmul.bf16.gmra.mxu0 %v672
        %v698 = vpop.f32.mrf.mxu0
        %v699 = vadd.f32 0.0, %v698
        %v700 = vpop.f32.mrf.mxu0
        %v701 = vadd.f32 0.0, %v700
        %702 = vmatmul.bf16.gmra.mxu0 %v675
        %v703 = vpop.f32.mrf.mxu0
        %v704 = vadd.f32 0.0, %v703
        %v705 = vpop.f32.mrf.mxu0
        %v706 = vadd.f32 0.0, %v705
        %707 = vmatmul.bf16.gmra.mxu0 %v678
        %v708 = vpop.f32.mrf.mxu0
        %v709 = vadd.f32 0.0, %v708
        %v710 = vpop.f32.mrf.mxu0
        %v711 = vadd.f32 0.0, %v710
        %712 = vmatmul.bf16.gmra.mxu0 %v681
        %v713 = vpop.f32.mrf.mxu0
        %v714 = vadd.f32 0.0, %v713
        %v715 = vpop.f32.mrf.mxu0
        %716 = vdwg.mxu0
        %v717 = vadd.f32 %v636, %v699
        %v718 = vadd.f32 %v637, %v701
        %v719 = vadd.f32 %v638, %v704
        %v720 = vadd.f32 %v639, %v706
        %v721 = vadd.f32 %v640, %v709
        %v722 = vadd.f32 %v641, %v711
        %v723 = vadd.f32 %v642, %v714
        %v725 = vperm.slane %v512, 0
        %v727 = vadd.f32 %v717, %v725
        %v728 = vadd.f32 %v718, %v725
        %v729 = vadd.f32 %v719, %v725
        %v730 = vadd.f32 %v720, %v725
        %v731 = vadd.f32 %v721, %v725
        %v732 = vadd.f32 %v722, %v725
        %v733 = vadd.f32 %v723, %v725
        %v734 = vmax.f32 %v727, 0.0
        %v735 = vmax.f32 %v728, 0.0
        %v736 = vmax.f32 %v729, 0.0
        %v737 = vmax.f32 %v730, 0.0
        %v738 = vmax.f32 %v731, 0.0
        %v739 = vmax.f32 %v732, 0.0
        %v740 = vmax.f32 %v733, 0.0
        %v741 = vpack.c.bf16 %v735, %v734
        %v742 = vpack.c.bf16 %v737, %v736
        %v743 = vpack.c.bf16 %v739, %v738
        %v744 = vpack.c.bf16 %v740, %v740
        %v745 = vld [vmem:[%s5] sm:$0xff]
        %v746 = vld [vmem:[%s5 + $0x8] sm:$0xff]
        %v747 = vld [vmem:[%s5 + $0x10] sm:$0xff]
        %v748 = vld [vmem:[%s5 + $0x18] sm:$0xff]
        %v749 = vld [vmem:[%s5 + $0x20] sm:$0xff]
        %v750 = vld [vmem:[%s5 + $0x28] sm:$0xff]
        %v751 = vld [vmem:[%s5 + $0x30] sm:$0xff]
        %v752 = vld [vmem:[%s5 + $0x38] sm:$0xff]
        %v753 = vld [vmem:[%s5 + $0x40] sm:$0xff]
        %v754 = vld [vmem:[%s5 + $0x48] sm:$0xff]
        %v755 = vld [vmem:[%s5 + $0x50] sm:$0xff]
        %v756 = vld [vmem:[%s5 + $0x58] sm:$0xff]
        %v757 = vld [vmem:[%s5 + $0x60] sm:$0xff]
        %v758 = vld [vmem:[%s5 + $0x68] sm:$0xff]
        %v759 = vld [vmem:[%s5 + $0x70] sm:$0xff]
        %v760 = vld [vmem:[%s5 + $0x78] sm:$0xff]
        %v761 = vld [vmem:[%s6] sm:$0x3]
        %v763 = vperm.slane %v761, 0
        %v764 = vperm.slane %v761, 1
        %v783 = vunpack.c.l.b16 %v745
        %v784 = vunpack.c.h.b16 %v745
        %v785 = vunpack.c.l.b16 %v746
        %v786 = vunpack.c.h.b16 %v746
        %v787 = vunpack.c.l.b16 %v747
        %v788 = vunpack.c.h.b16 %v747
        %v789 = vunpack.c.l.b16 %v748
        %v790 = vunpack.c.h.b16 %v748
        %v791 = vunpack.c.l.b16 %v749
        %v792 = vunpack.c.h.b16 %v749
        %v793 = vunpack.c.l.b16 %v750
        %v794 = vunpack.c.h.b16 %v750
        %v795 = vunpack.c.l.b16 %v751
        %v796 = vunpack.c.h.b16 %v751
        %v797 = vunpack.c.l.b16 %v752
        %v798 = vunpack.c.h.b16 %v752
        %v799 = vunpack.c.l.b16 %v753
        %v800 = vunpack.c.h.b16 %v753
        %v801 = vunpack.c.l.b16 %v754
        %v802 = vunpack.c.h.b16 %v754
        %v803 = vunpack.c.l.b16 %v755
        %v804 = vunpack.c.h.b16 %v755
        %v805 = vunpack.c.l.b16 %v756
        %v806 = vunpack.c.h.b16 %v756
        %v807 = vunpack.c.l.b16 %v757
        %v808 = vunpack.c.h.b16 %v757
        %v809 = vunpack.c.l.b16 %v758
        %v810 = vunpack.c.h.b16 %v758
        %v811 = vunpack.c.l.b16 %v759
        %v812 = vunpack.c.h.b16 %v759
        %v813 = vunpack.c.l.b16 %v760
        %v814 = vunpack.c.h.b16 %v760
        %v815 = vpack.c.b16 %v785, %v783
        %v816 = vpack.c.b16 %v786, %v784
        %v817 = vpack.c.b16 %v789, %v787
        %v818 = vpack.c.b16 %v790, %v788
        %v819 = vpack.c.b16 %v793, %v791
        %v820 = vpack.c.b16 %v794, %v792
        %v821 = vpack.c.b16 %v797, %v795
        %v822 = vpack.c.b16 %v798, %v796
        %v823 = vpack.c.b16 %v801, %v799
        %v824 = vpack.c.b16 %v802, %v800
        %v825 = vpack.c.b16 %v805, %v803
        %v826 = vpack.c.b16 %v806, %v804
        %v827 = vpack.c.b16 %v809, %v807
        %v828 = vpack.c.b16 %v810, %v808
        %v829 = vpack.c.b16 %v813, %v811
        %v830 = vpack.c.b16 %v814, %v812
        %847 = vmatpush.bf16.msra.mxu0 %v829
        %848 = vmatpush.bf16.msra.mxu0 %v827
        %849 = vmatpush.bf16.msra.mxu0 %v825
        %850 = vmatpush.bf16.msra.mxu0 %v823
        %851 = vmatpush.bf16.msra.mxu0 %v821
        %852 = vmatpush.bf16.msra.mxu0 %v819
        %853 = vmatpush.bf16.msra.mxu0 %v817
        %854 = vmatpush.bf16.msra.mxu0 %v815
        %855 = vmatmul.bf16.gmra.mxu0 %v741
        %v856 = vpop.f32.mrf.mxu0
        %v857 = vadd.f32 %v763, %v856
        %v858 = vpop.f32.mrf.mxu0
        %v859 = vadd.f32 %v763, %v858
        %860 = vmatmul.bf16.gmra.mxu0 %v742
        %v861 = vpop.f32.mrf.mxu0
        %v862 = vadd.f32 %v763, %v861
        %v863 = vpop.f32.mrf.mxu0
        %v864 = vadd.f32 %v763, %v863
        %865 = vmatmul.bf16.gmra.mxu0 %v743
        %v866 = vpop.f32.mrf.mxu0
        %v867 = vadd.f32 %v763, %v866
        %v868 = vpop.f32.mrf.mxu0
        %v869 = vadd.f32 %v763, %v868
        %870 = vmatmul.bf16.gmra.mxu0 %v744
        %v871 = vpop.f32.mrf.mxu0
        %v872 = vadd.f32 %v763, %v871
        %v873 = vpop.f32.mrf.mxu0
        %874 = vdwg.mxu0
        %875 = vmatpush.bf16.msra.mxu0 %v830
        %876 = vmatpush.bf16.msra.mxu0 %v828
        %877 = vmatpush.bf16.msra.mxu0 %v826
        %878 = vmatpush.bf16.msra.mxu0 %v824
        %879 = vmatpush.bf16.msra.mxu0 %v822
        %880 = vmatpush.bf16.msra.mxu0 %v820
        %881 = vmatpush.bf16.msra.mxu0 %v818
        %882 = vmatpush.bf16.msra.mxu0 %v816
        %883 = vmatmul.bf16.gmra.mxu0 %v741
        %v884 = vpop.f32.mrf.mxu0
        %v885 = vadd.f32 %v764, %v884
        %v886 = vpop.f32.mrf.mxu0
        %v887 = vadd.f32 %v764, %v886
        %888 = vmatmul.bf16.gmra.mxu0 %v742
        %v889 = vpop.f32.mrf.mxu0
        %v890 = vadd.f32 %v764, %v889
        %v891 = vpop.f32.mrf.mxu0
        %v892 = vadd.f32 %v764, %v891
        %893 = vmatmul.bf16.gmra.mxu0 %v743
        %v894 = vpop.f32.mrf.mxu0
        %v895 = vadd.f32 %v764, %v894
        %v896 = vpop.f32.mrf.mxu0
        %v897 = vadd.f32 %v764, %v896
        %898 = vmatmul.bf16.gmra.mxu0 %v744
        %v899 = vpop.f32.mrf.mxu0
        %v900 = vadd.f32 %v764, %v899
        %v901 = vpop.f32.mrf.mxu0
        %902 = vdwg.mxu0
        %v903 = vmax.f32 %v857, 0.0
        %v904 = vmax.f32 %v885, 0.0
        %v905 = vmax.f32 %v859, 0.0
        %v906 = vmax.f32 %v887, 0.0
        %v907 = vmax.f32 %v862, 0.0
        %v908 = vmax.f32 %v890, 0.0
        %v909 = vmax.f32 %v864, 0.0
        %v910 = vmax.f32 %v892, 0.0
        %v911 = vmax.f32 %v867, 0.0
        %v912 = vmax.f32 %v895, 0.0
        %v913 = vmax.f32 %v869, 0.0
        %v914 = vmax.f32 %v897, 0.0
        %v915 = vmax.f32 %v872, 0.0
        %v916 = vmax.f32 %v900, 0.0
        %v917 = vpack.c.bf16 %v905, %v903
        %v918 = vpack.c.bf16 %v906, %v904
        %v919 = vpack.c.bf16 %v909, %v907
        %v920 = vpack.c.bf16 %v910, %v908
        %v921 = vpack.c.bf16 %v913, %v911
        %v922 = vpack.c.bf16 %v914, %v912
        %v923 = vpack.c.bf16 %v915, %v915
        %v924 = vpack.c.bf16 %v916, %v916
        %v925 = vld [vmem:[#allocation3] sm:$0xff]
        %v926 = vld [vmem:[#allocation3 + $0x8] sm:$0xff]
        %v927 = vld [vmem:[#allocation3 + $0x10] sm:$0xff]
        %v928 = vld [vmem:[#allocation3 + $0x18] sm:$0xff]
        %v929 = vld [vmem:[#allocation3 + $0x20] sm:$0xff]
        %v930 = vld [vmem:[#allocation3 + $0x28] sm:$0xff]
        %v931 = vld [vmem:[#allocation3 + $0x30] sm:$0xff]
        %v932 = vld [vmem:[#allocation3 + $0x38] sm:$0xff]
        %v933 = vld [vmem:[#allocation3 + $0x40] sm:$0xff]
        %v934 = vld [vmem:[#allocation3 + $0x48] sm:$0xff]
        %v935 = vld [vmem:[#allocation3 + $0x50] sm:$0xff]
        %v936 = vld [vmem:[#allocation3 + $0x58] sm:$0xff]
        %v937 = vld [vmem:[#allocation3 + $0x60] sm:$0xff]
        %v938 = vld [vmem:[#allocation3 + $0x68] sm:$0xff]
        %v939 = vld [vmem:[#allocation3 + $0x70] sm:$0xff]
        %v940 = vld [vmem:[#allocation3 + $0x78] sm:$0xff]
        %v941 = vld [vmem:[#allocation3 + $0x80] sm:$0xff]
        %v942 = vld [vmem:[#allocation3 + $0x88] sm:$0xff]
        %v943 = vld [vmem:[#allocation3 + $0x90] sm:$0xff]
        %v944 = vld [vmem:[#allocation3 + $0x98] sm:$0xff]
        %v945 = vld [vmem:[#allocation3 + $0xa0] sm:$0xff]
        %v946 = vld [vmem:[#allocation3 + $0xa8] sm:$0xff]
        %v947 = vld [vmem:[#allocation3 + $0xb0] sm:$0xff]
        %v948 = vld [vmem:[#allocation3 + $0xb8] sm:$0xff]
        %v949 = vld [vmem:[#allocation3 + $0xc0] sm:$0xff]
        %v950 = vld [vmem:[#allocation3 + $0xc8] sm:$0xff]
        %v951 = vld [vmem:[#allocation3 + $0xd0] sm:$0xff]
        %v952 = vld [vmem:[#allocation3 + $0xd8] sm:$0xff]
        %v953 = vld [vmem:[#allocation3 + $0xe0] sm:$0xff]
        %v954 = vld [vmem:[#allocation3 + $0xe8] sm:$0xff]
        %v955 = vld [vmem:[#allocation3 + $0xf0] sm:$0xff]
        %v956 = vld [vmem:[#allocation3 + $0xf8] sm:$0xff]
        %v957 = vld [vmem:[#allocation3 + $0x100] sm:$0xff]
        %v958 = vld [vmem:[#allocation3 + $0x108] sm:$0xff]
        %v959 = vld [vmem:[#allocation3 + $0x110] sm:$0xff]
        %v960 = vld [vmem:[#allocation3 + $0x118] sm:$0xff]
        %v961 = vld [vmem:[#allocation3 + $0x120] sm:$0xff]
        %v962 = vld [vmem:[#allocation3 + $0x128] sm:$0xff]
        %v963 = vld [vmem:[#allocation3 + $0x130] sm:$0xff]
        %v964 = vld [vmem:[#allocation3 + $0x138] sm:$0xff]
        %v965 = vld [vmem:[#allocation3 + $0x140] sm:$0xff]
        %v966 = vld [vmem:[#allocation3 + $0x148] sm:$0xff]
        %v967 = vld [vmem:[#allocation3 + $0x150] sm:$0xff]
        %v968 = vld [vmem:[#allocation3 + $0x158] sm:$0xff]
        %v969 = vld [vmem:[#allocation3 + $0x160] sm:$0xff]
        %v970 = vld [vmem:[#allocation3 + $0x168] sm:$0xff]
        %v971 = vld [vmem:[#allocation3 + $0x170] sm:$0xff]
        %v972 = vld [vmem:[#allocation3 + $0x178] sm:$0xff]
        %v973 = vld [vmem:[#allocation3 + $0x180] sm:$0xff]
        %v974 = vld [vmem:[#allocation3 + $0x188] sm:$0xff]
        %v975 = vld [vmem:[#allocation3 + $0x190] sm:$0xff]
        %v976 = vld [vmem:[#allocation3 + $0x198] sm:$0xff]
        %v977 = vld [vmem:[#allocation3 + $0x1a0] sm:$0xff]
        %v978 = vld [vmem:[#allocation3 + $0x1a8] sm:$0xff]
        %v979 = vld [vmem:[#allocation3 + $0x1b0] sm:$0xff]
        %v980 = vld [vmem:[#allocation3 + $0x1b8] sm:$0xff]
        %v981 = vld [vmem:[#allocation3 + $0x1c0] sm:$0xff]
        %v982 = vld [vmem:[#allocation3 + $0x1c8] sm:$0xff]
        %v983 = vld [vmem:[#allocation3 + $0x1d0] sm:$0xff]
        %v984 = vld [vmem:[#allocation3 + $0x1d8] sm:$0xff]
        %v985 = vld [vmem:[#allocation3 + $0x1e0] sm:$0xff]
        %v986 = vld [vmem:[#allocation3 + $0x1e8] sm:$0xff]
        %v987 = vld [vmem:[#allocation3 + $0x1f0] sm:$0xff]
        %v988 = vld [vmem:[#allocation3 + $0x1f8] sm:$0xff]
        %v989 = vld [vmem:[#allocation3 + $0x200] sm:$0xff]
        %v990 = vld [vmem:[#allocation3 + $0x208] sm:$0xff]
        %v991 = vld [vmem:[#allocation3 + $0x210] sm:$0xff]
        %v992 = vld [vmem:[#allocation3 + $0x218] sm:$0xff]
        %v993 = vld [vmem:[#allocation3 + $0x220] sm:$0xff]
        %v994 = vld [vmem:[#allocation3 + $0x228] sm:$0xff]
        %v995 = vld [vmem:[#allocation3 + $0x230] sm:$0xff]
        %v996 = vld [vmem:[#allocation3 + $0x238] sm:$0xff]
        %v997 = vld [vmem:[#allocation3 + $0x240] sm:$0xff]
        %v998 = vld [vmem:[#allocation3 + $0x248] sm:$0xff]
        %v999 = vld [vmem:[#allocation3 + $0x250] sm:$0xff]
        %v1000 = vld [vmem:[#allocation3 + $0x258] sm:$0xff]
        %v1001 = vld [vmem:[#allocation3 + $0x260] sm:$0xff]
        %v1002 = vld [vmem:[#allocation3 + $0x268] sm:$0xff]
        %v1003 = vld [vmem:[#allocation3 + $0x270] sm:$0xff]
        %v1004 = vld [vmem:[#allocation3 + $0x278] sm:$0xff]
        %v1005 = vld [vmem:[#allocation3 + $0x280] sm:$0xff]
        %v1006 = vld [vmem:[#allocation3 + $0x288] sm:$0xff]
        %v1007 = vld [vmem:[#allocation3 + $0x290] sm:$0xff]
        %v1008 = vld [vmem:[#allocation3 + $0x298] sm:$0xff]
        %v1009 = vld [vmem:[#allocation3 + $0x2a0] sm:$0xff]
        %v1010 = vld [vmem:[#allocation3 + $0x2a8] sm:$0xff]
        %v1011 = vld [vmem:[#allocation3 + $0x2b0] sm:$0xff]
        %v1012 = vld [vmem:[#allocation3 + $0x2b8] sm:$0xff]
        %v1013 = vld [vmem:[#allocation3 + $0x2c0] sm:$0xff]
        %v1014 = vld [vmem:[#allocation3 + $0x2c8] sm:$0xff]
        %v1015 = vld [vmem:[#allocation3 + $0x2d0] sm:$0xff]
        %v1016 = vld [vmem:[#allocation3 + $0x2d8] sm:$0xff]
        %v1017 = vld [vmem:[#allocation3 + $0x2e0] sm:$0xff]
        %v1018 = vld [vmem:[#allocation3 + $0x2e8] sm:$0xff]
        %v1019 = vld [vmem:[#allocation3 + $0x2f0] sm:$0xff]
        %v1020 = vld [vmem:[#allocation3 + $0x2f8] sm:$0xff]
        %v1021 = vld [vmem:[#allocation3 + $0x300] sm:$0xff]
        %v1022 = vld [vmem:[#allocation3 + $0x308] sm:$0xff]
        %v1023 = vld [vmem:[#allocation3 + $0x310] sm:$0xff]
        %v1024 = vld [vmem:[#allocation3 + $0x318] sm:$0xff]
        %v1025 = vld [vmem:[#allocation3 + $0x320] sm:$0xff]
        %v1026 = vld [vmem:[#allocation3 + $0x328] sm:$0xff]
        %v1027 = vld [vmem:[#allocation3 + $0x330] sm:$0xff]
        %v1028 = vld [vmem:[#allocation3 + $0x338] sm:$0xff]
        %v1029 = vld [vmem:[#allocation3 + $0x340] sm:$0xff]
        %v1030 = vld [vmem:[#allocation3 + $0x348] sm:$0xff]
        %v1031 = vld [vmem:[#allocation3 + $0x350] sm:$0xff]
        %v1032 = vld [vmem:[#allocation3 + $0x358] sm:$0xff]
        %v1033 = vld [vmem:[#allocation3 + $0x360] sm:$0xff]
        %v1034 = vld [vmem:[#allocation3 + $0x368] sm:$0xff]
        %v1035 = vld [vmem:[#allocation3 + $0x370] sm:$0xff]
        %v1036 = vld [vmem:[#allocation3 + $0x378] sm:$0xff]
        %v1037 = vld [vmem:[#allocation3 + $0x380] sm:$0xff]
        %v1038 = vld [vmem:[#allocation3 + $0x388] sm:$0xff]
        %v1039 = vld [vmem:[#allocation3 + $0x390] sm:$0xff]
        %v1040 = vld [vmem:[#allocation3 + $0x398] sm:$0xff]
        %v1041 = vld [vmem:[#allocation3 + $0x3a0] sm:$0xff]
        %v1042 = vld [vmem:[#allocation3 + $0x3a8] sm:$0xff]
        %v1043 = vld [vmem:[#allocation3 + $0x3b0] sm:$0xff]
        %v1044 = vld [vmem:[#allocation3 + $0x3b8] sm:$0xff]
        %v1045 = vld [vmem:[#allocation3 + $0x3c0] sm:$0xff]
        %v1046 = vld [vmem:[#allocation3 + $0x3c8] sm:$0xff]
        %v1047 = vld [vmem:[#allocation3 + $0x3d0] sm:$0xff]
        %v1048 = vld [vmem:[#allocation3 + $0x3d8] sm:$0xff]
        %v1049 = vld [vmem:[#allocation3 + $0x3e0] sm:$0xff]
        %v1050 = vld [vmem:[#allocation3 + $0x3e8] sm:$0xff]
        %v1051 = vld [vmem:[#allocation3 + $0x3f0] sm:$0xff]
        %v1052 = vld [vmem:[#allocation3 + $0x3f8] sm:$0xff]
        %v1053 = vld [vmem:[%s8] sm:$0xff]
        %v1055 = vperm.slane %v1053, 0
        %v1056 = vperm.slane %v1053, 1
        %v1057 = vperm.slane %v1053, 2
        %v1058 = vperm.slane %v1053, 3
        %v1059 = vperm.slane %v1053, 4
        %v1060 = vperm.slane %v1053, 5
        %v1061 = vperm.slane %v1053, 6
        %v1062 = vperm.slane %v1053, 7
        %v1199 = vunpack.c.l.b16 %v925
        %v1200 = vunpack.c.h.b16 %v925
        %v1201 = vunpack.c.l.b16 %v926
        %v1202 = vunpack.c.h.b16 %v926
        %v1203 = vunpack.c.l.b16 %v927
        %v1204 = vunpack.c.h.b16 %v927
        %v1205 = vunpack.c.l.b16 %v928
        %v1206 = vunpack.c.h.b16 %v928
        %v1207 = vunpack.c.l.b16 %v929
        %v1208 = vunpack.c.h.b16 %v929
        %v1209 = vunpack.c.l.b16 %v930
        %v1210 = vunpack.c.h.b16 %v930
        %v1211 = vunpack.c.l.b16 %v931
        %v1212 = vunpack.c.h.b16 %v931
        %v1213 = vunpack.c.l.b16 %v932
        %v1214 = vunpack.c.h.b16 %v932
        %v1215 = vunpack.c.l.b16 %v933
        %v1216 = vunpack.c.h.b16 %v933
        %v1217 = vunpack.c.l.b16 %v934
        %v1218 = vunpack.c.h.b16 %v934
        %v1219 = vunpack.c.l.b16 %v935
        %v1220 = vunpack.c.h.b16 %v935
        %v1221 = vunpack.c.l.b16 %v936
        %v1222 = vunpack.c.h.b16 %v936
        %v1223 = vunpack.c.l.b16 %v937
        %v1224 = vunpack.c.h.b16 %v937
        %v1225 = vunpack.c.l.b16 %v938
        %v1226 = vunpack.c.h.b16 %v938
        %v1227 = vunpack.c.l.b16 %v939
        %v1228 = vunpack.c.h.b16 %v939
        %v1229 = vunpack.c.l.b16 %v940
        %v1230 = vunpack.c.h.b16 %v940
        %v1231 = vunpack.c.l.b16 %v941
        %v1232 = vunpack.c.h.b16 %v941
        %v1233 = vunpack.c.l.b16 %v942
        %v1234 = vunpack.c.h.b16 %v942
        %v1235 = vunpack.c.l.b16 %v943
        %v1236 = vunpack.c.h.b16 %v943
        %v1237 = vunpack.c.l.b16 %v944
        %v1238 = vunpack.c.h.b16 %v944
        %v1239 = vunpack.c.l.b16 %v945
        %v1240 = vunpack.c.h.b16 %v945
        %v1241 = vunpack.c.l.b16 %v946
        %v1242 = vunpack.c.h.b16 %v946
        %v1243 = vunpack.c.l.b16 %v947
        %v1244 = vunpack.c.h.b16 %v947
        %v1245 = vunpack.c.l.b16 %v948
        %v1246 = vunpack.c.h.b16 %v948
        %v1247 = vunpack.c.l.b16 %v949
        %v1248 = vunpack.c.h.b16 %v949
        %v1249 = vunpack.c.l.b16 %v950
        %v1250 = vunpack.c.h.b16 %v950
        %v1251 = vunpack.c.l.b16 %v951
        %v1252 = vunpack.c.h.b16 %v951
        %v1253 = vunpack.c.l.b16 %v952
        %v1254 = vunpack.c.h.b16 %v952
        %v1255 = vunpack.c.l.b16 %v953
        %v1256 = vunpack.c.h.b16 %v953
        %v1257 = vunpack.c.l.b16 %v954
        %v1258 = vunpack.c.h.b16 %v954
        %v1259 = vunpack.c.l.b16 %v955
        %v1260 = vunpack.c.h.b16 %v955
        %v1261 = vunpack.c.l.b16 %v956
        %v1262 = vunpack.c.h.b16 %v956
        %v1263 = vunpack.c.l.b16 %v957
        %v1264 = vunpack.c.h.b16 %v957
        %v1265 = vunpack.c.l.b16 %v958
        %v1266 = vunpack.c.h.b16 %v958
        %v1267 = vunpack.c.l.b16 %v959
        %v1268 = vunpack.c.h.b16 %v959
        %v1269 = vunpack.c.l.b16 %v960
        %v1270 = vunpack.c.h.b16 %v960
        %v1271 = vunpack.c.l.b16 %v961
        %v1272 = vunpack.c.h.b16 %v961
        %v1273 = vunpack.c.l.b16 %v962
        %v1274 = vunpack.c.h.b16 %v962
        %v1275 = vunpack.c.l.b16 %v963
        %v1276 = vunpack.c.h.b16 %v963
        %v1277 = vunpack.c.l.b16 %v964
        %v1278 = vunpack.c.h.b16 %v964
        %v1279 = vunpack.c.l.b16 %v965
        %v1280 = vunpack.c.h.b16 %v965
        %v1281 = vunpack.c.l.b16 %v966
        %v1282 = vunpack.c.h.b16 %v966
        %v1283 = vunpack.c.l.b16 %v967
        %v1284 = vunpack.c.h.b16 %v967
        %v1285 = vunpack.c.l.b16 %v968
        %v1286 = vunpack.c.h.b16 %v968
        %v1287 = vunpack.c.l.b16 %v969
        %v1288 = vunpack.c.h.b16 %v969
        %v1289 = vunpack.c.l.b16 %v970
        %v1290 = vunpack.c.h.b16 %v970
        %v1291 = vunpack.c.l.b16 %v971
        %v1292 = vunpack.c.h.b16 %v971
        %v1293 = vunpack.c.l.b16 %v972
        %v1294 = vunpack.c.h.b16 %v972
        %v1295 = vunpack.c.l.b16 %v973
        %v1296 = vunpack.c.h.b16 %v973
        %v1297 = vunpack.c.l.b16 %v974
        %v1298 = vunpack.c.h.b16 %v974
        %v1299 = vunpack.c.l.b16 %v975
        %v1300 = vunpack.c.h.b16 %v975
        %v1301 = vunpack.c.l.b16 %v976
        %v1302 = vunpack.c.h.b16 %v976
        %v1303 = vunpack.c.l.b16 %v977
        %v1304 = vunpack.c.h.b16 %v977
        %v1305 = vunpack.c.l.b16 %v978
        %v1306 = vunpack.c.h.b16 %v978
        %v1307 = vunpack.c.l.b16 %v979
        %v1308 = vunpack.c.h.b16 %v979
        %v1309 = vunpack.c.l.b16 %v980
        %v1310 = vunpack.c.h.b16 %v980
        %v1311 = vunpack.c.l.b16 %v981
        %v1312 = vunpack.c.h.b16 %v981
        %v1313 = vunpack.c.l.b16 %v982
        %v1314 = vunpack.c.h.b16 %v982
        %v1315 = vunpack.c.l.b16 %v983
        %v1316 = vunpack.c.h.b16 %v983
        %v1317 = vunpack.c.l.b16 %v984
        %v1318 = vunpack.c.h.b16 %v984
        %v1319 = vunpack.c.l.b16 %v985
        %v1320 = vunpack.c.h.b16 %v985
        %v1321 = vunpack.c.l.b16 %v986
        %v1322 = vunpack.c.h.b16 %v986
        %v1323 = vunpack.c.l.b16 %v987
        %v1324 = vunpack.c.h.b16 %v987
        %v1325 = vunpack.c.l.b16 %v988
        %v1326 = vunpack.c.h.b16 %v988
        %v1327 = vunpack.c.l.b16 %v989
        %v1328 = vunpack.c.h.b16 %v989
        %v1329 = vunpack.c.l.b16 %v990
        %v1330 = vunpack.c.h.b16 %v990
        %v1331 = vunpack.c.l.b16 %v991
        %v1332 = vunpack.c.h.b16 %v991
        %v1333 = vunpack.c.l.b16 %v992
        %v1334 = vunpack.c.h.b16 %v992
        %v1335 = vunpack.c.l.b16 %v993
        %v1336 = vunpack.c.h.b16 %v993
        %v1337 = vunpack.c.l.b16 %v994
        %v1338 = vunpack.c.h.b16 %v994
        %v1339 = vunpack.c.l.b16 %v995
        %v1340 = vunpack.c.h.b16 %v995
        %v1341 = vunpack.c.l.b16 %v996
        %v1342 = vunpack.c.h.b16 %v996
        %v1343 = vunpack.c.l.b16 %v997
        %v1344 = vunpack.c.h.b16 %v997
        %v1345 = vunpack.c.l.b16 %v998
        %v1346 = vunpack.c.h.b16 %v998
        %v1347 = vunpack.c.l.b16 %v999
        %v1348 = vunpack.c.h.b16 %v999
        %v1349 = vunpack.c.l.b16 %v1000
        %v1350 = vunpack.c.h.b16 %v1000
        %v1351 = vunpack.c.l.b16 %v1001
        %v1352 = vunpack.c.h.b16 %v1001
        %v1353 = vunpack.c.l.b16 %v1002
        %v1354 = vunpack.c.h.b16 %v1002
        %v1355 = vunpack.c.l.b16 %v1003
        %v1356 = vunpack.c.h.b16 %v1003
        %v1357 = vunpack.c.l.b16 %v1004
        %v1358 = vunpack.c.h.b16 %v1004
        %v1359 = vunpack.c.l.b16 %v1005
        %v1360 = vunpack.c.h.b16 %v1005
        %v1361 = vunpack.c.l.b16 %v1006
        %v1362 = vunpack.c.h.b16 %v1006
        %v1363 = vunpack.c.l.b16 %v1007
        %v1364 = vunpack.c.h.b16 %v1007
        %v1365 = vunpack.c.l.b16 %v1008
        %v1366 = vunpack.c.h.b16 %v1008
        %v1367 = vunpack.c.l.b16 %v1009
        %v1368 = vunpack.c.h.b16 %v1009
        %v1369 = vunpack.c.l.b16 %v1010
        %v1370 = vunpack.c.h.b16 %v1010
        %v1371 = vunpack.c.l.b16 %v1011
        %v1372 = vunpack.c.h.b16 %v1011
        %v1373 = vunpack.c.l.b16 %v1012
        %v1374 = vunpack.c.h.b16 %v1012
        %v1375 = vunpack.c.l.b16 %v1013
        %v1376 = vunpack.c.h.b16 %v1013
        %v1377 = vunpack.c.l.b16 %v1014
        %v1378 = vunpack.c.h.b16 %v1014
        %v1379 = vunpack.c.l.b16 %v1015
        %v1380 = vunpack.c.h.b16 %v1015
        %v1381 = vunpack.c.l.b16 %v1016
        %v1382 = vunpack.c.h.b16 %v1016
        %v1383 = vunpack.c.l.b16 %v1017
        %v1384 = vunpack.c.h.b16 %v1017
        %v1385 = vunpack.c.l.b16 %v1018
        %v1386 = vunpack.c.h.b16 %v1018
        %v1387 = vunpack.c.l.b16 %v1019
        %v1388 = vunpack.c.h.b16 %v1019
        %v1389 = vunpack.c.l.b16 %v1020
        %v1390 = vunpack.c.h.b16 %v1020
        %v1391 = vunpack.c.l.b16 %v1021
        %v1392 = vunpack.c.h.b16 %v1021
        %v1393 = vunpack.c.l.b16 %v1022
        %v1394 = vunpack.c.h.b16 %v1022
        %v1395 = vunpack.c.l.b16 %v1023
        %v1396 = vunpack.c.h.b16 %v1023
        %v1397 = vunpack.c.l.b16 %v1024
        %v1398 = vunpack.c.h.b16 %v1024
        %v1399 = vunpack.c.l.b16 %v1025
        %v1400 = vunpack.c.h.b16 %v1025
        %v1401 = vunpack.c.l.b16 %v1026
        %v1402 = vunpack.c.h.b16 %v1026
        %v1403 = vunpack.c.l.b16 %v1027
        %v1404 = vunpack.c.h.b16 %v1027
        %v1405 = vunpack.c.l.b16 %v1028
        %v1406 = vunpack.c.h.b16 %v1028
        %v1407 = vunpack.c.l.b16 %v1029
        %v1408 = vunpack.c.h.b16 %v1029
        %v1409 = vunpack.c.l.b16 %v1030
        %v1410 = vunpack.c.h.b16 %v1030
        %v1411 = vunpack.c.l.b16 %v1031
        %v1412 = vunpack.c.h.b16 %v1031
        %v1413 = vunpack.c.l.b16 %v1032
        %v1414 = vunpack.c.h.b16 %v1032
        %v1415 = vunpack.c.l.b16 %v1033
        %v1416 = vunpack.c.h.b16 %v1033
        %v1417 = vunpack.c.l.b16 %v1034
        %v1418 = vunpack.c.h.b16 %v1034
        %v1419 = vunpack.c.l.b16 %v1035
        %v1420 = vunpack.c.h.b16 %v1035
        %v1421 = vunpack.c.l.b16 %v1036
        %v1422 = vunpack.c.h.b16 %v1036
        %v1423 = vunpack.c.l.b16 %v1037
        %v1424 = vunpack.c.h.b16 %v1037
        %v1425 = vunpack.c.l.b16 %v1038
        %v1426 = vunpack.c.h.b16 %v1038
        %v1427 = vunpack.c.l.b16 %v1039
        %v1428 = vunpack.c.h.b16 %v1039
        %v1429 = vunpack.c.l.b16 %v1040
        %v1430 = vunpack.c.h.b16 %v1040
        %v1431 = vunpack.c.l.b16 %v1041
        %v1432 = vunpack.c.h.b16 %v1041
        %v1433 = vunpack.c.l.b16 %v1042
        %v1434 = vunpack.c.h.b16 %v1042
        %v1435 = vunpack.c.l.b16 %v1043
        %v1436 = vunpack.c.h.b16 %v1043
        %v1437 = vunpack.c.l.b16 %v1044
        %v1438 = vunpack.c.h.b16 %v1044
        %v1439 = vunpack.c.l.b16 %v1045
        %v1440 = vunpack.c.h.b16 %v1045
        %v1441 = vunpack.c.l.b16 %v1046
        %v1442 = vunpack.c.h.b16 %v1046
        %v1443 = vunpack.c.l.b16 %v1047
        %v1444 = vunpack.c.h.b16 %v1047
        %v1445 = vunpack.c.l.b16 %v1048
        %v1446 = vunpack.c.h.b16 %v1048
        %v1447 = vunpack.c.l.b16 %v1049
        %v1448 = vunpack.c.h.b16 %v1049
        %v1449 = vunpack.c.l.b16 %v1050
        %v1450 = vunpack.c.h.b16 %v1050
        %v1451 = vunpack.c.l.b16 %v1051
        %v1452 = vunpack.c.h.b16 %v1051
        %v1453 = vunpack.c.l.b16 %v1052
        %v1454 = vunpack.c.h.b16 %v1052
        %v1455 = vpack.c.b16 %v1207, %v1199
        %v1456 = vpack.c.b16 %v1208, %v1200
        %v1457 = vpack.c.b16 %v1209, %v1201
        %v1458 = vpack.c.b16 %v1210, %v1202
        %v1459 = vpack.c.b16 %v1211, %v1203
        %v1460 = vpack.c.b16 %v1212, %v1204
        %v1461 = vpack.c.b16 %v1213, %v1205
        %v1462 = vpack.c.b16 %v1214, %v1206
        %v1463 = vpack.c.b16 %v1223, %v1215
        %v1464 = vpack.c.b16 %v1224, %v1216
        %v1465 = vpack.c.b16 %v1225, %v1217
        %v1466 = vpack.c.b16 %v1226, %v1218
        %v1467 = vpack.c.b16 %v1227, %v1219
        %v1468 = vpack.c.b16 %v1228, %v1220
        %v1469 = vpack.c.b16 %v1229, %v1221
        %v1470 = vpack.c.b16 %v1230, %v1222
        %v1471 = vpack.c.b16 %v1239, %v1231
        %v1472 = vpack.c.b16 %v1240, %v1232
        %v1473 = vpack.c.b16 %v1241, %v1233
        %v1474 = vpack.c.b16 %v1242, %v1234
        %v1475 = vpack.c.b16 %v1243, %v1235
        %v1476 = vpack.c.b16 %v1244, %v1236
        %v1477 = vpack.c.b16 %v1245, %v1237
        %v1478 = vpack.c.b16 %v1246, %v1238
        %v1479 = vpack.c.b16 %v1255, %v1247
        %v1480 = vpack.c.b16 %v1256, %v1248
        %v1481 = vpack.c.b16 %v1257, %v1249
        %v1482 = vpack.c.b16 %v1258, %v1250
        %v1483 = vpack.c.b16 %v1259, %v1251
        %v1484 = vpack.c.b16 %v1260, %v1252
        %v1485 = vpack.c.b16 %v1261, %v1253
        %v1486 = vpack.c.b16 %v1262, %v1254
        %v1487 = vpack.c.b16 %v1271, %v1263
        %v1488 = vpack.c.b16 %v1272, %v1264
        %v1489 = vpack.c.b16 %v1273, %v1265
        %v1490 = vpack.c.b16 %v1274, %v1266
        %v1491 = vpack.c.b16 %v1275, %v1267
        %v1492 = vpack.c.b16 %v1276, %v1268
        %v1493 = vpack.c.b16 %v1277, %v1269
        %v1494 = vpack.c.b16 %v1278, %v1270
        %v1495 = vpack.c.b16 %v1287, %v1279
        %v1496 = vpack.c.b16 %v1288, %v1280
        %v1497 = vpack.c.b16 %v1289, %v1281
        %v1498 = vpack.c.b16 %v1290, %v1282
        %v1499 = vpack.c.b16 %v1291, %v1283
        %v1500 = vpack.c.b16 %v1292, %v1284
        %v1501 = vpack.c.b16 %v1293, %v1285
        %v1502 = vpack.c.b16 %v1294, %v1286
        %v1503 = vpack.c.b16 %v1303, %v1295
        %v1504 = vpack.c.b16 %v1304, %v1296
        %v1505 = vpack.c.b16 %v1305, %v1297
        %v1506 = vpack.c.b16 %v1306, %v1298
        %v1507 = vpack.c.b16 %v1307, %v1299
        %v1508 = vpack.c.b16 %v1308, %v1300
        %v1509 = vpack.c.b16 %v1309, %v1301
        %v1510 = vpack.c.b16 %v1310, %v1302
        %v1511 = vpack.c.b16 %v1319, %v1311
        %v1512 = vpack.c.b16 %v1320, %v1312
        %v1513 = vpack.c.b16 %v1321, %v1313
        %v1514 = vpack.c.b16 %v1322, %v1314
        %v1515 = vpack.c.b16 %v1323, %v1315
        %v1516 = vpack.c.b16 %v1324, %v1316
        %v1517 = vpack.c.b16 %v1325, %v1317
        %v1518 = vpack.c.b16 %v1326, %v1318
        %v1519 = vpack.c.b16 %v1335, %v1327
        %v1520 = vpack.c.b16 %v1336, %v1328
        %v1521 = vpack.c.b16 %v1337, %v1329
        %v1522 = vpack.c.b16 %v1338, %v1330
        %v1523 = vpack.c.b16 %v1339, %v1331
        %v1524 = vpack.c.b16 %v1340, %v1332
        %v1525 = vpack.c.b16 %v1341, %v1333
        %v1526 = vpack.c.b16 %v1342, %v1334
        %v1527 = vpack.c.b16 %v1351, %v1343
        %v1528 = vpack.c.b16 %v1352, %v1344
        %v1529 = vpack.c.b16 %v1353, %v1345
        %v1530 = vpack.c.b16 %v1354, %v1346
        %v1531 = vpack.c.b16 %v1355, %v1347
        %v1532 = vpack.c.b16 %v1356, %v1348
        %v1533 = vpack.c.b16 %v1357, %v1349
        %v1534 = vpack.c.b16 %v1358, %v1350
        %v1535 = vpack.c.b16 %v1367, %v1359
        %v1536 = vpack.c.b16 %v1368, %v1360
        %v1537 = vpack.c.b16 %v1369, %v1361
        %v1538 = vpack.c.b16 %v1370, %v1362
        %v1539 = vpack.c.b16 %v1371, %v1363
        %v1540 = vpack.c.b16 %v1372, %v1364
        %v1541 = vpack.c.b16 %v1373, %v1365
        %v1542 = vpack.c.b16 %v1374, %v1366
        %v1543 = vpack.c.b16 %v1383, %v1375
        %v1544 = vpack.c.b16 %v1384, %v1376
        %v1545 = vpack.c.b16 %v1385, %v1377
        %v1546 = vpack.c.b16 %v1386, %v1378
        %v1547 = vpack.c.b16 %v1387, %v1379
        %v1548 = vpack.c.b16 %v1388, %v1380
        %v1549 = vpack.c.b16 %v1389, %v1381
        %v1550 = vpack.c.b16 %v1390, %v1382
        %v1551 = vpack.c.b16 %v1399, %v1391
        %v1552 = vpack.c.b16 %v1400, %v1392
        %v1553 = vpack.c.b16 %v1401, %v1393
        %v1554 = vpack.c.b16 %v1402, %v1394
        %v1555 = vpack.c.b16 %v1403, %v1395
        %v1556 = vpack.c.b16 %v1404, %v1396
        %v1557 = vpack.c.b16 %v1405, %v1397
        %v1558 = vpack.c.b16 %v1406, %v1398
        %v1559 = vpack.c.b16 %v1415, %v1407
        %v1560 = vpack.c.b16 %v1416, %v1408
        %v1561 = vpack.c.b16 %v1417, %v1409
        %v1562 = vpack.c.b16 %v1418, %v1410
        %v1563 = vpack.c.b16 %v1419, %v1411
        %v1564 = vpack.c.b16 %v1420, %v1412
        %v1565 = vpack.c.b16 %v1421, %v1413
        %v1566 = vpack.c.b16 %v1422, %v1414
        %v1567 = vpack.c.b16 %v1431, %v1423
        %v1568 = vpack.c.b16 %v1432, %v1424
        %v1569 = vpack.c.b16 %v1433, %v1425
        %v1570 = vpack.c.b16 %v1434, %v1426
        %v1571 = vpack.c.b16 %v1435, %v1427
        %v1572 = vpack.c.b16 %v1436, %v1428
        %v1573 = vpack.c.b16 %v1437, %v1429
        %v1574 = vpack.c.b16 %v1438, %v1430
        %v1575 = vpack.c.b16 %v1447, %v1439
        %v1576 = vpack.c.b16 %v1448, %v1440
        %v1577 = vpack.c.b16 %v1449, %v1441
        %v1578 = vpack.c.b16 %v1450, %v1442
        %v1579 = vpack.c.b16 %v1451, %v1443
        %v1580 = vpack.c.b16 %v1452, %v1444
        %v1581 = vpack.c.b16 %v1453, %v1445
        %v1582 = vpack.c.b16 %v1454, %v1446
        %1711 = vmatpush.bf16.msra.mxu0 %v1511
        %1712 = vmatpush.bf16.msra.mxu0 %v1503
        %1713 = vmatpush.bf16.msra.mxu0 %v1495
        %1714 = vmatpush.bf16.msra.mxu0 %v1487
        %1715 = vmatpush.bf16.msra.mxu0 %v1479
        %1716 = vmatpush.bf16.msra.mxu0 %v1471
        %1717 = vmatpush.bf16.msra.mxu0 %v1463
        %1718 = vmatpush.bf16.msra.mxu0 %v1455
        %1719 = vmatmul.bf16.gmra.mxu0 %v917
        %v1720 = vpop.f32.mrf.mxu0
        %v1721 = vadd.f32 %v1055, %v1720
        %v1722 = vpop.f32.mrf.mxu0
        %v1723 = vadd.f32 %v1055, %v1722
        %1724 = vmatmul.bf16.gmra.mxu0 %v919
        %v1725 = vpop.f32.mrf.mxu0
        %v1726 = vadd.f32 %v1055, %v1725
        %v1727 = vpop.f32.mrf.mxu0
        %v1728 = vadd.f32 %v1055, %v1727
        %1729 = vmatmul.bf16.gmra.mxu0 %v921
        %v1730 = vpop.f32.mrf.mxu0
        %v1731 = vadd.f32 %v1055, %v1730
        %v1732 = vpop.f32.mrf.mxu0
        %v1733 = vadd.f32 %v1055, %v1732
        %1734 = vmatmul.bf16.gmra.mxu0 %v923
        %v1735 = vpop.f32.mrf.mxu0
        %v1736 = vadd.f32 %v1055, %v1735
        %v1737 = vpop.f32.mrf.mxu0
        %1738 = vdwg.mxu0
        %1739 = vmatpush.bf16.msra.mxu0 %v1575
        %1740 = vmatpush.bf16.msra.mxu0 %v1567
        %1741 = vmatpush.bf16.msra.mxu0 %v1559
        %1742 = vmatpush.bf16.msra.mxu0 %v1551
        %1743 = vmatpush.bf16.msra.mxu0 %v1543
        %1744 = vmatpush.bf16.msra.mxu0 %v1535
        %1745 = vmatpush.bf16.msra.mxu0 %v1527
        %1746 = vmatpush.bf16.msra.mxu0 %v1519
        %1747 = vmatmul.bf16.gmra.mxu0 %v918
        %v1748 = vpop.f32.mrf.mxu0
        %v1749 = vadd.f32 %v1721, %v1748
        %v1750 = vpop.f32.mrf.mxu0
        %v1751 = vadd.f32 %v1723, %v1750
        %1752 = vmatmul.bf16.gmra.mxu0 %v920
        %v1753 = vpop.f32.mrf.mxu0
        %v1754 = vadd.f32 %v1726, %v1753
        %v1755 = vpop.f32.mrf.mxu0
        %v1756 = vadd.f32 %v1728, %v1755
        %1757 = vmatmul.bf16.gmra.mxu0 %v922
        %v1758 = vpop.f32.mrf.mxu0
        %v1759 = vadd.f32 %v1731, %v1758
        %v1760 = vpop.f32.mrf.mxu0
        %v1761 = vadd.f32 %v1733, %v1760
        %1762 = vmatmul.bf16.gmra.mxu0 %v924
        %v1763 = vpop.f32.mrf.mxu0
        %v1764 = vadd.f32 %v1736, %v1763
        %v1765 = vpop.f32.mrf.mxu0
        %1766 = vdwg.mxu0
        %1767 = vmatpush.bf16.msra.mxu0 %v1512
        %1768 = vmatpush.bf16.msra.mxu0 %v1504
        %1769 = vmatpush.bf16.msra.mxu0 %v1496
        %1770 = vmatpush.bf16.msra.mxu0 %v1488
        %1771 = vmatpush.bf16.msra.mxu0 %v1480
        %1772 = vmatpush.bf16.msra.mxu0 %v1472
        %1773 = vmatpush.bf16.msra.mxu0 %v1464
        %1774 = vmatpush.bf16.msra.mxu0 %v1456
        %1775 = vmatmul.bf16.gmra.mxu0 %v917
        %v1776 = vpop.f32.mrf.mxu0
        %v1777 = vadd.f32 %v1056, %v1776
        %v1778 = vpop.f32.mrf.mxu0
        %v1779 = vadd.f32 %v1056, %v1778
        %1780 = vmatmul.bf16.gmra.mxu0 %v919
        %v1781 = vpop.f32.mrf.mxu0
        %v1782 = vadd.f32 %v1056, %v1781
        %v1783 = vpop.f32.mrf.mxu0
        %v1784 = vadd.f32 %v1056, %v1783
        %1785 = vmatmul.bf16.gmra.mxu0 %v921
        %v1786 = vpop.f32.mrf.mxu0
        %v1787 = vadd.f32 %v1056, %v1786
        %v1788 = vpop.f32.mrf.mxu0
        %v1789 = vadd.f32 %v1056, %v1788
        %1790 = vmatmul.bf16.gmra.mxu0 %v923
        %v1791 = vpop.f32.mrf.mxu0
        %v1792 = vadd.f32 %v1056, %v1791
        %v1793 = vpop.f32.mrf.mxu0
        %1794 = vdwg.mxu0
        %1795 = vmatpush.bf16.msra.mxu0 %v1576
        %1796 = vmatpush.bf16.msra.mxu0 %v1568
        %1797 = vmatpush.bf16.msra.mxu0 %v1560
        %1798 = vmatpush.bf16.msra.mxu0 %v1552
        %1799 = vmatpush.bf16.msra.mxu0 %v1544
        %1800 = vmatpush.bf16.msra.mxu0 %v1536
        %1801 = vmatpush.bf16.msra.mxu0 %v1528
        %1802 = vmatpush.bf16.msra.mxu0 %v1520
        %1803 = vmatmul.bf16.gmra.mxu0 %v918
        %v1804 = vpop.f32.mrf.mxu0
        %v1805 = vadd.f32 %v1777, %v1804
        %v1806 = vpop.f32.mrf.mxu0
        %v1807 = vadd.f32 %v1779, %v1806
        %1808 = vmatmul.bf16.gmra.mxu0 %v920
        %v1809 = vpop.f32.mrf.mxu0
        %v1810 = vadd.f32 %v1782, %v1809
        %v1811 = vpop.f32.mrf.mxu0
        %v1812 = vadd.f32 %v1784, %v1811
        %1813 = vmatmul.bf16.gmra.mxu0 %v922
        %v1814 = vpop.f32.mrf.mxu0
        %v1815 = vadd.f32 %v1787, %v1814
        %v1816 = vpop.f32.mrf.mxu0
        %v1817 = vadd.f32 %v1789, %v1816
        %1818 = vmatmul.bf16.gmra.mxu0 %v924
        %v1819 = vpop.f32.mrf.mxu0
        %v1820 = vadd.f32 %v1792, %v1819
        %v1821 = vpop.f32.mrf.mxu0
        %1822 = vdwg.mxu0
        %1823 = vmatpush.bf16.msra.mxu0 %v1513
        %1824 = vmatpush.bf16.msra.mxu0 %v1505
        %1825 = vmatpush.bf16.msra.mxu0 %v1497
        %1826 = vmatpush.bf16.msra.mxu0 %v1489
        %1827 = vmatpush.bf16.msra.mxu0 %v1481
        %1828 = vmatpush.bf16.msra.mxu0 %v1473
        %1829 = vmatpush.bf16.msra.mxu0 %v1465
        %1830 = vmatpush.bf16.msra.mxu0 %v1457
        %1831 = vmatmul.bf16.gmra.mxu0 %v917
        %v1832 = vpop.f32.mrf.mxu0
        %v1833 = vadd.f32 %v1057, %v1832
        %v1834 = vpop.f32.mrf.mxu0
        %v1835 = vadd.f32 %v1057, %v1834
        %1836 = vmatmul.bf16.gmra.mxu0 %v919
        %v1837 = vpop.f32.mrf.mxu0
        %v1838 = vadd.f32 %v1057, %v1837
        %v1839 = vpop.f32.mrf.mxu0
        %v1840 = vadd.f32 %v1057, %v1839
        %1841 = vmatmul.bf16.gmra.mxu0 %v921
        %v1842 = vpop.f32.mrf.mxu0
        %v1843 = vadd.f32 %v1057, %v1842
        %v1844 = vpop.f32.mrf.mxu0
        %v1845 = vadd.f32 %v1057, %v1844
        %1846 = vmatmul.bf16.gmra.mxu0 %v923
        %v1847 = vpop.f32.mrf.mxu0
        %v1848 = vadd.f32 %v1057, %v1847
        %v1849 = vpop.f32.mrf.mxu0
        %1850 = vdwg.mxu0
        %1851 = vmatpush.bf16.msra.mxu0 %v1577
        %1852 = vmatpush.bf16.msra.mxu0 %v1569
        %1853 = vmatpush.bf16.msra.mxu0 %v1561
        %1854 = vmatpush.bf16.msra.mxu0 %v1553
        %1855 = vmatpush.bf16.msra.mxu0 %v1545
        %1856 = vmatpush.bf16.msra.mxu0 %v1537
        %1857 = vmatpush.bf16.msra.mxu0 %v1529
        %1858 = vmatpush.bf16.msra.mxu0 %v1521
        %1859 = vmatmul.bf16.gmra.mxu0 %v918
        %v1860 = vpop.f32.mrf.mxu0
        %v1861 = vadd.f32 %v1833, %v1860
        %v1862 = vpop.f32.mrf.mxu0
        %v1863 = vadd.f32 %v1835, %v1862
        %1864 = vmatmul.bf16.gmra.mxu0 %v920
        %v1865 = vpop.f32.mrf.mxu0
        %v1866 = vadd.f32 %v1838, %v1865
        %v1867 = vpop.f32.mrf.mxu0
        %v1868 = vadd.f32 %v1840, %v1867
        %1869 = vmatmul.bf16.gmra.mxu0 %v922
        %v1870 = vpop.f32.mrf.mxu0
        %v1871 = vadd.f32 %v1843, %v1870
        %v1872 = vpop.f32.mrf.mxu0
        %v1873 = vadd.f32 %v1845, %v1872
        %1874 = vmatmul.bf16.gmra.mxu0 %v924
        %v1875 = vpop.f32.mrf.mxu0
        %v1876 = vadd.f32 %v1848, %v1875
        %v1877 = vpop.f32.mrf.mxu0
        %1878 = vdwg.mxu0
        %1879 = vmatpush.bf16.msra.mxu0 %v1514
        %1880 = vmatpush.bf16.msra.mxu0 %v1506
        %1881 = vmatpush.bf16.msra.mxu0 %v1498
        %1882 = vmatpush.bf16.msra.mxu0 %v1490
        %1883 = vmatpush.bf16.msra.mxu0 %v1482
        %1884 = vmatpush.bf16.msra.mxu0 %v1474
        %1885 = vmatpush.bf16.msra.mxu0 %v1466
        %1886 = vmatpush.bf16.msra.mxu0 %v1458
        %1887 = vmatmul.bf16.gmra.mxu0 %v917
        %v1888 = vpop.f32.mrf.mxu0
        %v1889 = vadd.f32 %v1058, %v1888
        %v1890 = vpop.f32.mrf.mxu0
        %v1891 = vadd.f32 %v1058, %v1890
        %1892 = vmatmul.bf16.gmra.mxu0 %v919
        %v1893 = vpop.f32.mrf.mxu0
        %v1894 = vadd.f32 %v1058, %v1893
        %v1895 = vpop.f32.mrf.mxu0
        %v1896 = vadd.f32 %v1058, %v1895
        %1897 = vmatmul.bf16.gmra.mxu0 %v921
        %v1898 = vpop.f32.mrf.mxu0
        %v1899 = vadd.f32 %v1058, %v1898
        %v1900 = vpop.f32.mrf.mxu0
        %v1901 = vadd.f32 %v1058, %v1900
        %1902 = vmatmul.bf16.gmra.mxu0 %v923
        %v1903 = vpop.f32.mrf.mxu0
        %v1904 = vadd.f32 %v1058, %v1903
        %v1905 = vpop.f32.mrf.mxu0
        %1906 = vdwg.mxu0
        %1907 = vmatpush.bf16.msra.mxu0 %v1578
        %1908 = vmatpush.bf16.msra.mxu0 %v1570
        %1909 = vmatpush.bf16.msra.mxu0 %v1562
        %1910 = vmatpush.bf16.msra.mxu0 %v1554
        %1911 = vmatpush.bf16.msra.mxu0 %v1546
        %1912 = vmatpush.bf16.msra.mxu0 %v1538
        %1913 = vmatpush.bf16.msra.mxu0 %v1530
        %1914 = vmatpush.bf16.msra.mxu0 %v1522
        %1915 = vmatmul.bf16.gmra.mxu0 %v918
        %v1916 = vpop.f32.mrf.mxu0
        %v1917 = vadd.f32 %v1889, %v1916
        %v1918 = vpop.f32.mrf.mxu0
        %v1919 = vadd.f32 %v1891, %v1918
        %1920 = vmatmul.bf16.gmra.mxu0 %v920
        %v1921 = vpop.f32.mrf.mxu0
        %v1922 = vadd.f32 %v1894, %v1921
        %v1923 = vpop.f32.mrf.mxu0
        %v1924 = vadd.f32 %v1896, %v1923
        %1925 = vmatmul.bf16.gmra.mxu0 %v922
        %v1926 = vpop.f32.mrf.mxu0
        %v1927 = vadd.f32 %v1899, %v1926
        %v1928 = vpop.f32.mrf.mxu0
        %v1929 = vadd.f32 %v1901, %v1928
        %1930 = vmatmul.bf16.gmra.mxu0 %v924
        %v1931 = vpop.f32.mrf.mxu0
        %v1932 = vadd.f32 %v1904, %v1931
        %v1933 = vpop.f32.mrf.mxu0
        %1934 = vdwg.mxu0
        %1935 = vmatpush.bf16.msra.mxu0 %v1515
        %1936 = vmatpush.bf16.msra.mxu0 %v1507
        %1937 = vmatpush.bf16.msra.mxu0 %v1499
        %1938 = vmatpush.bf16.msra.mxu0 %v1491
        %1939 = vmatpush.bf16.msra.mxu0 %v1483
        %1940 = vmatpush.bf16.msra.mxu0 %v1475
        %1941 = vmatpush.bf16.msra.mxu0 %v1467
        %1942 = vmatpush.bf16.msra.mxu0 %v1459
        %1943 = vmatmul.bf16.gmra.mxu0 %v917
        %v1944 = vpop.f32.mrf.mxu0
        %v1945 = vadd.f32 %v1059, %v1944
        %v1946 = vpop.f32.mrf.mxu0
        %v1947 = vadd.f32 %v1059, %v1946
        %1948 = vmatmul.bf16.gmra.mxu0 %v919
        %v1949 = vpop.f32.mrf.mxu0
        %v1950 = vadd.f32 %v1059, %v1949
        %v1951 = vpop.f32.mrf.mxu0
        %v1952 = vadd.f32 %v1059, %v1951
        %1953 = vmatmul.bf16.gmra.mxu0 %v921
        %v1954 = vpop.f32.mrf.mxu0
        %v1955 = vadd.f32 %v1059, %v1954
        %v1956 = vpop.f32.mrf.mxu0
        %v1957 = vadd.f32 %v1059, %v1956
        %1958 = vmatmul.bf16.gmra.mxu0 %v923
        %v1959 = vpop.f32.mrf.mxu0
        %v1960 = vadd.f32 %v1059, %v1959
        %v1961 = vpop.f32.mrf.mxu0
        %1962 = vdwg.mxu0
        %1963 = vmatpush.bf16.msra.mxu0 %v1579
        %1964 = vmatpush.bf16.msra.mxu0 %v1571
        %1965 = vmatpush.bf16.msra.mxu0 %v1563
        %1966 = vmatpush.bf16.msra.mxu0 %v1555
        %1967 = vmatpush.bf16.msra.mxu0 %v1547
        %1968 = vmatpush.bf16.msra.mxu0 %v1539
        %1969 = vmatpush.bf16.msra.mxu0 %v1531
        %1970 = vmatpush.bf16.msra.mxu0 %v1523
        %1971 = vmatmul.bf16.gmra.mxu0 %v918
        %v1972 = vpop.f32.mrf.mxu0
        %v1973 = vadd.f32 %v1945, %v1972
        %v1974 = vpop.f32.mrf.mxu0
        %v1975 = vadd.f32 %v1947, %v1974
        %1976 = vmatmul.bf16.gmra.mxu0 %v920
        %v1977 = vpop.f32.mrf.mxu0
        %v1978 = vadd.f32 %v1950, %v1977
        %v1979 = vpop.f32.mrf.mxu0
        %v1980 = vadd.f32 %v1952, %v1979
        %1981 = vmatmul.bf16.gmra.mxu0 %v922
        %v1982 = vpop.f32.mrf.mxu0
        %v1983 = vadd.f32 %v1955, %v1982
        %v1984 = vpop.f32.mrf.mxu0
        %v1985 = vadd.f32 %v1957, %v1984
        %1986 = vmatmul.bf16.gmra.mxu0 %v924
        %v1987 = vpop.f32.mrf.mxu0
        %v1988 = vadd.f32 %v1960, %v1987
        %v1989 = vpop.f32.mrf.mxu0
        %1990 = vdwg.mxu0
        %1991 = vmatpush.bf16.msra.mxu0 %v1516
        %1992 = vmatpush.bf16.msra.mxu0 %v1508
        %1993 = vmatpush.bf16.msra.mxu0 %v1500
        %1994 = vmatpush.bf16.msra.mxu0 %v1492
        %1995 = vmatpush.bf16.msra.mxu0 %v1484
        %1996 = vmatpush.bf16.msra.mxu0 %v1476
        %1997 = vmatpush.bf16.msra.mxu0 %v1468
        %1998 = vmatpush.bf16.msra.mxu0 %v1460
        %1999 = vmatmul.bf16.gmra.mxu0 %v917
        %v2000 = vpop.f32.mrf.mxu0
        %v2001 = vadd.f32 %v1060, %v2000
        %v2002 = vpop.f32.mrf.mxu0
        %v2003 = vadd.f32 %v1060, %v2002
        %2004 = vmatmul.bf16.gmra.mxu0 %v919
        %v2005 = vpop.f32.mrf.mxu0
        %v2006 = vadd.f32 %v1060, %v2005
        %v2007 = vpop.f32.mrf.mxu0
        %v2008 = vadd.f32 %v1060, %v2007
        %2009 = vmatmul.bf16.gmra.mxu0 %v921
        %v2010 = vpop.f32.mrf.mxu0
        %v2011 = vadd.f32 %v1060, %v2010
        %v2012 = vpop.f32.mrf.mxu0
        %v2013 = vadd.f32 %v1060, %v2012
        %2014 = vmatmul.bf16.gmra.mxu0 %v923
        %v2015 = vpop.f32.mrf.mxu0
        %v2016 = vadd.f32 %v1060, %v2015
        %v2017 = vpop.f32.mrf.mxu0
        %2018 = vdwg.mxu0
        %2019 = vmatpush.bf16.msra.mxu0 %v1580
        %2020 = vmatpush.bf16.msra.mxu0 %v1572
        %2021 = vmatpush.bf16.msra.mxu0 %v1564
        %2022 = vmatpush.bf16.msra.mxu0 %v1556
        %2023 = vmatpush.bf16.msra.mxu0 %v1548
        %2024 = vmatpush.bf16.msra.mxu0 %v1540
        %2025 = vmatpush.bf16.msra.mxu0 %v1532
        %2026 = vmatpush.bf16.msra.mxu0 %v1524
        %2027 = vmatmul.bf16.gmra.mxu0 %v918
        %v2028 = vpop.f32.mrf.mxu0
        %v2029 = vadd.f32 %v2001, %v2028
        %v2030 = vpop.f32.mrf.mxu0
        %v2031 = vadd.f32 %v2003, %v2030
        %2032 = vmatmul.bf16.gmra.mxu0 %v920
        %v2033 = vpop.f32.mrf.mxu0
        %v2034 = vadd.f32 %v2006, %v2033
        %v2035 = vpop.f32.mrf.mxu0
        %v2036 = vadd.f32 %v2008, %v2035
        %2037 = vmatmul.bf16.gmra.mxu0 %v922
        %v2038 = vpop.f32.mrf.mxu0
        %v2039 = vadd.f32 %v2011, %v2038
        %v2040 = vpop.f32.mrf.mxu0
        %v2041 = vadd.f32 %v2013, %v2040
        %2042 = vmatmul.bf16.gmra.mxu0 %v924
        %v2043 = vpop.f32.mrf.mxu0
        %v2044 = vadd.f32 %v2016, %v2043
        %v2045 = vpop.f32.mrf.mxu0
        %2046 = vdwg.mxu0
        %2047 = vmatpush.bf16.msra.mxu0 %v1517
        %2048 = vmatpush.bf16.msra.mxu0 %v1509
        %2049 = vmatpush.bf16.msra.mxu0 %v1501
        %2050 = vmatpush.bf16.msra.mxu0 %v1493
        %2051 = vmatpush.bf16.msra.mxu0 %v1485
        %2052 = vmatpush.bf16.msra.mxu0 %v1477
        %2053 = vmatpush.bf16.msra.mxu0 %v1469
        %2054 = vmatpush.bf16.msra.mxu0 %v1461
        %2055 = vmatmul.bf16.gmra.mxu0 %v917
        %v2056 = vpop.f32.mrf.mxu0
        %v2057 = vadd.f32 %v1061, %v2056
        %v2058 = vpop.f32.mrf.mxu0
        %v2059 = vadd.f32 %v1061, %v2058
        %2060 = vmatmul.bf16.gmra.mxu0 %v919
        %v2061 = vpop.f32.mrf.mxu0
        %v2062 = vadd.f32 %v1061, %v2061
        %v2063 = vpop.f32.mrf.mxu0
        %v2064 = vadd.f32 %v1061, %v2063
        %2065 = vmatmul.bf16.gmra.mxu0 %v921
        %v2066 = vpop.f32.mrf.mxu0
        %v2067 = vadd.f32 %v1061, %v2066
        %v2068 = vpop.f32.mrf.mxu0
        %v2069 = vadd.f32 %v1061, %v2068
        %2070 = vmatmul.bf16.gmra.mxu0 %v923
        %v2071 = vpop.f32.mrf.mxu0
        %v2072 = vadd.f32 %v1061, %v2071
        %v2073 = vpop.f32.mrf.mxu0
        %2074 = vdwg.mxu0
        %2075 = vmatpush.bf16.msra.mxu0 %v1581
        %2076 = vmatpush.bf16.msra.mxu0 %v1573
        %2077 = vmatpush.bf16.msra.mxu0 %v1565
        %2078 = vmatpush.bf16.msra.mxu0 %v1557
        %2079 = vmatpush.bf16.msra.mxu0 %v1549
        %2080 = vmatpush.bf16.msra.mxu0 %v1541
        %2081 = vmatpush.bf16.msra.mxu0 %v1533
        %2082 = vmatpush.bf16.msra.mxu0 %v1525
        %2083 = vmatmul.bf16.gmra.mxu0 %v918
        %v2084 = vpop.f32.mrf.mxu0
        %v2085 = vadd.f32 %v2057, %v2084
        %v2086 = vpop.f32.mrf.mxu0
        %v2087 = vadd.f32 %v2059, %v2086
        %2088 = vmatmul.bf16.gmra.mxu0 %v920
        %v2089 = vpop.f32.mrf.mxu0
        %v2090 = vadd.f32 %v2062, %v2089
        %v2091 = vpop.f32.mrf.mxu0
        %v2092 = vadd.f32 %v2064, %v2091
        %2093 = vmatmul.bf16.gmra.mxu0 %v922
        %v2094 = vpop.f32.mrf.mxu0
        %v2095 = vadd.f32 %v2067, %v2094
        %v2096 = vpop.f32.mrf.mxu0
        %v2097 = vadd.f32 %v2069, %v2096
        %2098 = vmatmul.bf16.gmra.mxu0 %v924
        %v2099 = vpop.f32.mrf.mxu0
        %v2100 = vadd.f32 %v2072, %v2099
        %v2101 = vpop.f32.mrf.mxu0
        %2102 = vdwg.mxu0
        %2103 = vmatpush.bf16.msra.mxu0 %v1518
        %2104 = vmatpush.bf16.msra.mxu0 %v1510
        %2105 = vmatpush.bf16.msra.mxu0 %v1502
        %2106 = vmatpush.bf16.msra.mxu0 %v1494
        %2107 = vmatpush.bf16.msra.mxu0 %v1486
        %2108 = vmatpush.bf16.msra.mxu0 %v1478
        %2109 = vmatpush.bf16.msra.mxu0 %v1470
        %2110 = vmatpush.bf16.msra.mxu0 %v1462
        %2111 = vmatmul.bf16.gmra.mxu0 %v917
        %v2112 = vpop.f32.mrf.mxu0
        %v2113 = vadd.f32 %v1062, %v2112
        %v2114 = vpop.f32.mrf.mxu0
        %v2115 = vadd.f32 %v1062, %v2114
        %2116 = vmatmul.bf16.gmra.mxu0 %v919
        %v2117 = vpop.f32.mrf.mxu0
        %v2118 = vadd.f32 %v1062, %v2117
        %v2119 = vpop.f32.mrf.mxu0
        %v2120 = vadd.f32 %v1062, %v2119
        %2121 = vmatmul.bf16.gmra.mxu0 %v921
        %v2122 = vpop.f32.mrf.mxu0
        %v2123 = vadd.f32 %v1062, %v2122
        %v2124 = vpop.f32.mrf.mxu0
        %v2125 = vadd.f32 %v1062, %v2124
        %2126 = vmatmul.bf16.gmra.mxu0 %v923
        %v2127 = vpop.f32.mrf.mxu0
        %v2128 = vadd.f32 %v1062, %v2127
        %v2129 = vpop.f32.mrf.mxu0
        %2130 = vdwg.mxu0
        %2131 = vmatpush.bf16.msra.mxu0 %v1582
        %2132 = vmatpush.bf16.msra.mxu0 %v1574
        %2133 = vmatpush.bf16.msra.mxu0 %v1566
        %2134 = vmatpush.bf16.msra.mxu0 %v1558
        %2135 = vmatpush.bf16.msra.mxu0 %v1550
        %2136 = vmatpush.bf16.msra.mxu0 %v1542
        %2137 = vmatpush.bf16.msra.mxu0 %v1534
        %2138 = vmatpush.bf16.msra.mxu0 %v1526
        %2139 = vmatmul.bf16.gmra.mxu0 %v918
        %v2140 = vpop.f32.mrf.mxu0
        %v2141 = vadd.f32 %v2113, %v2140
        %v2142 = vpop.f32.mrf.mxu0
        %v2143 = vadd.f32 %v2115, %v2142
        %2144 = vmatmul.bf16.gmra.mxu0 %v920
        %v2145 = vpop.f32.mrf.mxu0
        %v2146 = vadd.f32 %v2118, %v2145
        %v2147 = vpop.f32.mrf.mxu0
        %v2148 = vadd.f32 %v2120, %v2147
        %2149 = vmatmul.bf16.gmra.mxu0 %v922
        %v2150 = vpop.f32.mrf.mxu0
        %v2151 = vadd.f32 %v2123, %v2150
        %v2152 = vpop.f32.mrf.mxu0
        %v2153 = vadd.f32 %v2125, %v2152
        %2154 = vmatmul.bf16.gmra.mxu0 %v924
        %v2155 = vpop.f32.mrf.mxu0
        %v2156 = vadd.f32 %v2128, %v2155
        %v2157 = vpop.f32.mrf.mxu0
        %2158 = vdwg.mxu0
        %v2159 = vmax.f32 %v1749, %v1751
        %v2160 = vmax.f32 %v2159, %v1754
        %v2161 = vmax.f32 %v2160, %v1756
        %v2162 = vmax.f32 %v2161, %v1759
        %v2163 = vmax.f32 %v2162, %v1761
        %vm2164 = vcmask 1043456
        %v2165 = vsel %vm2164, %v1764, -inf
        %v2166 = vmax.f32 %v2163, %v2165
        %v2167 = vrot.slane %v2166, 4
        %v2168 = vmax.f32 %v2166, %v2167
        %v2169 = vrot.slane %v2168, 2
        %v2170 = vmax.f32 %v2168, %v2169
        %v2171 = vrot.slane %v2170, 1
        %v2172 = vmax.f32 %v2170, %v2171
        %v2173 = vmax.f32 %v1805, %v1807
        %v2174 = vmax.f32 %v2173, %v1810
        %v2175 = vmax.f32 %v2174, %v1812
        %v2176 = vmax.f32 %v2175, %v1815
        %v2177 = vmax.f32 %v2176, %v1817
        %v2178 = vsel %vm2164, %v1820, -inf
        %v2179 = vmax.f32 %v2177, %v2178
        %v2180 = vrot.slane %v2179, 4
        %v2181 = vmax.f32 %v2179, %v2180
        %v2182 = vrot.slane %v2181, 2
        %v2183 = vmax.f32 %v2181, %v2182
        %v2184 = vrot.slane %v2183, 1
        %v2185 = vmax.f32 %v2183, %v2184
        %v2186 = vmax.f32 %v1861, %v1863
        %v2187 = vmax.f32 %v2186, %v1866
        %v2188 = vmax.f32 %v2187, %v1868
        %v2189 = vmax.f32 %v2188, %v1871
        %v2190 = vmax.f32 %v2189, %v1873
        %v2191 = vsel %vm2164, %v1876, -inf
        %v2192 = vmax.f32 %v2190, %v2191
        %v2193 = vrot.slane %v2192, 4
        %v2194 = vmax.f32 %v2192, %v2193
        %v2195 = vrot.slane %v2194, 2
        %v2196 = vmax.f32 %v2194, %v2195
        %v2197 = vrot.slane %v2196, 1
        %v2198 = vmax.f32 %v2196, %v2197
        %v2199 = vmax.f32 %v1917, %v1919
        %v2200 = vmax.f32 %v2199, %v1922
        %v2201 = vmax.f32 %v2200, %v1924
        %v2202 = vmax.f32 %v2201, %v1927
        %v2203 = vmax.f32 %v2202, %v1929
        %v2204 = vsel %vm2164, %v1932, -inf
        %v2205 = vmax.f32 %v2203, %v2204
        %v2206 = vrot.slane %v2205, 4
        %v2207 = vmax.f32 %v2205, %v2206
        %v2208 = vrot.slane %v2207, 2
        %v2209 = vmax.f32 %v2207, %v2208
        %v2210 = vrot.slane %v2209, 1
        %v2211 = vmax.f32 %v2209, %v2210
        %v2212 = vmax.f32 %v1973, %v1975
        %v2213 = vmax.f32 %v2212, %v1978
        %v2214 = vmax.f32 %v2213, %v1980
        %v2215 = vmax.f32 %v2214, %v1983
        %v2216 = vmax.f32 %v2215, %v1985
        %v2217 = vsel %vm2164, %v1988, -inf
        %v2218 = vmax.f32 %v2216, %v2217
        %v2219 = vrot.slane %v2218, 4
        %v2220 = vmax.f32 %v2218, %v2219
        %v2221 = vrot.slane %v2220, 2
        %v2222 = vmax.f32 %v2220, %v2221
        %v2223 = vrot.slane %v2222, 1
        %v2224 = vmax.f32 %v2222, %v2223
        %v2225 = vmax.f32 %v2029, %v2031
        %v2226 = vmax.f32 %v2225, %v2034
        %v2227 = vmax.f32 %v2226, %v2036
        %v2228 = vmax.f32 %v2227, %v2039
        %v2229 = vmax.f32 %v2228, %v2041
        %v2230 = vsel %vm2164, %v2044, -inf
        %v2231 = vmax.f32 %v2229, %v2230
        %v2232 = vrot.slane %v2231, 4
        %v2233 = vmax.f32 %v2231, %v2232
        %v2234 = vrot.slane %v2233, 2
        %v2235 = vmax.f32 %v2233, %v2234
        %v2236 = vrot.slane %v2235, 1
        %v2237 = vmax.f32 %v2235, %v2236
        %v2238 = vmax.f32 %v2085, %v2087
        %v2239 = vmax.f32 %v2238, %v2090
        %v2240 = vmax.f32 %v2239, %v2092
        %v2241 = vmax.f32 %v2240, %v2095
        %v2242 = vmax.f32 %v2241, %v2097
        %v2243 = vsel %vm2164, %v2100, -inf
        %v2244 = vmax.f32 %v2242, %v2243
        %v2245 = vrot.slane %v2244, 4
        %v2246 = vmax.f32 %v2244, %v2245
        %v2247 = vrot.slane %v2246, 2
        %v2248 = vmax.f32 %v2246, %v2247
        %v2249 = vrot.slane %v2248, 1
        %v2250 = vmax.f32 %v2248, %v2249
        %v2251 = vmax.f32 %v2141, %v2143
        %v2252 = vmax.f32 %v2251, %v2146
        %v2253 = vmax.f32 %v2252, %v2148
        %v2254 = vmax.f32 %v2253, %v2151
        %v2255 = vmax.f32 %v2254, %v2153
        %v2256 = vsel %vm2164, %v2156, -inf
        %v2257 = vmax.f32 %v2255, %v2256
        %v2258 = vrot.slane %v2257, 4
        %v2259 = vmax.f32 %v2257, %v2258
        %v2260 = vrot.slane %v2259, 2
        %v2261 = vmax.f32 %v2259, %v2260
        %v2262 = vrot.slane %v2261, 1
        %v2263 = vmax.f32 %v2261, %v2262
        %p2264 = scmp.eq.s32.totalorder %s29, 0
        // Predicated region
        $region73: #{msn_forward.8} parent=63 // pred_check
          %p2265 = pneg %p2264
        $region74: #{msn_forward.8} parent=63 // pred_check_branch
          %2267 = sbr.rel (%p2265) target = $region76
        $region75: #{msn_forward.8} parent=63 // pred_region
          %v2276 = vrot.slane %v2185, 7
          %v2277 = vrot.slane %v2198, 6
          %v2278 = vrot.slane %v2211, 5
          %v2279 = vrot.slane %v2224, 4
          %v2280 = vrot.slane %v2237, 3
          %v2281 = vrot.slane %v2250, 2
          %v2282 = vrot.slane %v2263, 1
          %v2283 = vsel %vm683, %v2172, %v2276
          %vm2284 = vcmask 1042434
          %v2285 = vsel %vm2284, %v2277, %v2278
          %vm2286 = vcmask 1041408
          %v2287 = vsel %vm2286, %v2283, %v2285
          %vm2288 = vcmask 1044484
          %v2289 = vsel %vm2288, %v2279, %v2280
          %vm2290 = vcmask 1046534
          %v2291 = vsel %vm2290, %v2281, %v2282
          %vm2292 = vcmask 1045508
          %v2293 = vsel %vm2292, %v2289, %v2291
          %v2294 = vsel %vm2164, %v2287, %v2293
          %2296 = vst [vmem:[#allocation2] sm:$0xff] %v2294
        $region76: #{msn_forward.8} parent=63 // pred_fallthru
          _
        %p2297 = scmp.gt.s32.totalorder %s29, 0
        // Predicated region
        $region77: #{msn_forward.8} parent=63 // pred_check
          %p2298 = pneg %p2297
        $region78: #{msn_forward.8} parent=63 // pred_check_branch
          %2300 = sbr.rel (%p2298) target = $region80
        $region79: #{msn_forward.8} parent=63 // pred_region
          %v2301 = vld [vmem:[#allocation2] sm:$0xff]
          %v2310 = vrot.slane %v2185, 7
          %v2311 = vrot.slane %v2198, 6
          %v2312 = vrot.slane %v2211, 5
          %v2313 = vrot.slane %v2224, 4
          %v2314 = vrot.slane %v2237, 3
          %v2315 = vrot.slane %v2250, 2
          %v2316 = vrot.slane %v2263, 1
          %v2317 = vsel %vm683, %v2172, %v2310
          %vm2318 = vcmask 1042434
          %v2319 = vsel %vm2318, %v2311, %v2312
          %vm2320 = vcmask 1041408
          %v2321 = vsel %vm2320, %v2317, %v2319
          %vm2322 = vcmask 1044484
          %v2323 = vsel %vm2322, %v2313, %v2314
          %vm2324 = vcmask 1046534
          %v2325 = vsel %vm2324, %v2315, %v2316
          %vm2326 = vcmask 1045508
          %v2327 = vsel %vm2326, %v2323, %v2325
          %v2328 = vsel %vm2164, %v2321, %v2327
          %v2330 = vmax.f32 %v2301, %v2328
          %2331 = vst [vmem:[#allocation2] sm:$0xff] %v2330
        $region80: #{msn_forward.8} parent=63 // pred_fallthru
          _
        // Predicated region
        $region81: #{msn_forward.8} parent=63 // pred_check
          %p2332 = pneg %p2264
        $region82: #{msn_forward.8} parent=63 // pred_check_branch
          %2334 = sbr.rel (%p2332) target = $region84
        $region83: #{msn_forward.8} parent=63 // pred_region
          %v2335 = vld [vmem:[#allocation2] sm:$0xff]
          %v2337 = vperm.slane %v2335, 0
          %v2338 = vperm.slane %v2335, 1
          %v2339 = vperm.slane %v2335, 2
          %v2340 = vperm.slane %v2335, 3
          %v2341 = vperm.slane %v2335, 4
          %v2342 = vperm.slane %v2335, 5
          %v2343 = vperm.slane %v2335, 6
          %v2344 = vperm.slane %v2335, 7
          %v2353 = vpack.c.bf16 %v2337, %v2337
          %v2354 = vpack.c.bf16 %v2338, %v2338
          %v2355 = vpack.c.bf16 %v2339, %v2339
          %v2356 = vpack.c.bf16 %v2340, %v2340
          %v2357 = vpack.c.bf16 %v2341, %v2341
          %v2358 = vpack.c.bf16 %v2342, %v2342
          %v2359 = vpack.c.bf16 %v2343, %v2343
          %v2360 = vpack.c.bf16 %v2344, %v2344
          %v2361 = vld [vmem:[#allocation5] sm:$0xff]
          %v2362 = vld [vmem:[#allocation5 + $0x8] sm:$0xff]
          %v2363 = vld [vmem:[#allocation5 + $0x10] sm:$0xff]
          %v2364 = vld [vmem:[#allocation5 + $0x18] sm:$0xff]
          %v2365 = vld [vmem:[#allocation5 + $0x20] sm:$0xff]
          %v2366 = vld [vmem:[#allocation5 + $0x28] sm:$0xff]
          %v2367 = vld [vmem:[#allocation5 + $0x30] sm:$0xff]
          %v2368 = vld [vmem:[#allocation5 + $0x38] sm:$0xff]
          %v2369 = vld [vmem:[#allocation5 + $0x40] sm:$0xff]
          %v2370 = vld [vmem:[#allocation5 + $0x48] sm:$0xff]
          %v2371 = vld [vmem:[#allocation5 + $0x50] sm:$0xff]
          %v2372 = vld [vmem:[#allocation5 + $0x58] sm:$0xff]
          %v2373 = vld [vmem:[#allocation5 + $0x60] sm:$0xff]
          %v2374 = vld [vmem:[#allocation5 + $0x68] sm:$0xff]
          %v2375 = vld [vmem:[#allocation5 + $0x70] sm:$0xff]
          %v2376 = vld [vmem:[#allocation5 + $0x78] sm:$0xff]
          %v2377 = vld [vmem:[#allocation5 + $0x80] sm:$0xff]
          %v2378 = vld [vmem:[#allocation5 + $0x88] sm:$0xff]
          %v2379 = vld [vmem:[#allocation5 + $0x90] sm:$0xff]
          %v2380 = vld [vmem:[#allocation5 + $0x98] sm:$0xff]
          %v2381 = vld [vmem:[#allocation5 + $0xa0] sm:$0xff]
          %v2382 = vld [vmem:[#allocation5 + $0xa8] sm:$0xff]
          %v2383 = vld [vmem:[#allocation5 + $0xb0] sm:$0xff]
          %v2384 = vld [vmem:[#allocation5 + $0xb8] sm:$0xff]
          %v2385 = vld [vmem:[#allocation5 + $0xc0] sm:$0xff]
          %v2386 = vld [vmem:[#allocation5 + $0xc8] sm:$0xff]
          %v2387 = vld [vmem:[#allocation5 + $0xd0] sm:$0xff]
          %v2388 = vld [vmem:[#allocation5 + $0xd8] sm:$0xff]
          %v2389 = vld [vmem:[#allocation5 + $0xe0] sm:$0xff]
          %v2390 = vld [vmem:[#allocation5 + $0xe8] sm:$0xff]
          %v2391 = vld [vmem:[#allocation5 + $0xf0] sm:$0xff]
          %v2392 = vld [vmem:[#allocation5 + $0xf8] sm:$0xff]
          %v2393 = vld [vmem:[#allocation5 + $0x100] sm:$0xff]
          %v2394 = vld [vmem:[#allocation5 + $0x108] sm:$0xff]
          %v2395 = vld [vmem:[#allocation5 + $0x110] sm:$0xff]
          %v2396 = vld [vmem:[#allocation5 + $0x118] sm:$0xff]
          %v2397 = vld [vmem:[#allocation5 + $0x120] sm:$0xff]
          %v2398 = vld [vmem:[#allocation5 + $0x128] sm:$0xff]
          %v2399 = vld [vmem:[#allocation5 + $0x130] sm:$0xff]
          %v2400 = vld [vmem:[#allocation5 + $0x138] sm:$0xff]
          %v2401 = vld [vmem:[#allocation5 + $0x140] sm:$0xff]
          %v2402 = vld [vmem:[#allocation5 + $0x148] sm:$0xff]
          %v2403 = vld [vmem:[#allocation5 + $0x150] sm:$0xff]
          %v2404 = vld [vmem:[#allocation5 + $0x158] sm:$0xff]
          %v2405 = vld [vmem:[#allocation5 + $0x160] sm:$0xff]
          %v2406 = vld [vmem:[#allocation5 + $0x168] sm:$0xff]
          %v2407 = vld [vmem:[#allocation5 + $0x170] sm:$0xff]
          %v2408 = vld [vmem:[#allocation5 + $0x178] sm:$0xff]
          %v2409 = vld [vmem:[#allocation5 + $0x180] sm:$0xff]
          %v2410 = vld [vmem:[#allocation5 + $0x188] sm:$0xff]
          %v2411 = vld [vmem:[#allocation5 + $0x190] sm:$0xff]
          %v2412 = vld [vmem:[#allocation5 + $0x198] sm:$0xff]
          %v2413 = vld [vmem:[#allocation5 + $0x1a0] sm:$0xff]
          %v2414 = vld [vmem:[#allocation5 + $0x1a8] sm:$0xff]
          %v2415 = vld [vmem:[#allocation5 + $0x1b0] sm:$0xff]
          %v2416 = vld [vmem:[#allocation5 + $0x1b8] sm:$0xff]
          %v2417 = vld [vmem:[#allocation5 + $0x1c0] sm:$0xff]
          %v2418 = vld [vmem:[#allocation5 + $0x1c8] sm:$0xff]
          %v2419 = vld [vmem:[#allocation5 + $0x1d0] sm:$0xff]
          %v2420 = vld [vmem:[#allocation5 + $0x1d8] sm:$0xff]
          %v2421 = vld [vmem:[#allocation5 + $0x1e0] sm:$0xff]
          %v2422 = vld [vmem:[#allocation5 + $0x1e8] sm:$0xff]
          %v2423 = vld [vmem:[#allocation5 + $0x1f0] sm:$0xff]
          %v2424 = vld [vmem:[#allocation5 + $0x1f8] sm:$0xff]
          %v2425 = vld [vmem:[#allocation5 + $0x200] sm:$0xff]
          %v2426 = vld [vmem:[#allocation5 + $0x208] sm:$0xff]
          %v2427 = vld [vmem:[#allocation5 + $0x210] sm:$0xff]
          %v2428 = vld [vmem:[#allocation5 + $0x218] sm:$0xff]
          %v2429 = vld [vmem:[#allocation5 + $0x220] sm:$0xff]
          %v2430 = vld [vmem:[#allocation5 + $0x228] sm:$0xff]
          %v2431 = vld [vmem:[#allocation5 + $0x230] sm:$0xff]
          %v2432 = vld [vmem:[#allocation5 + $0x238] sm:$0xff]
          %v2433 = vld [vmem:[#allocation5 + $0x240] sm:$0xff]
          %v2434 = vld [vmem:[#allocation5 + $0x248] sm:$0xff]
          %v2435 = vld [vmem:[#allocation5 + $0x250] sm:$0xff]
          %v2436 = vld [vmem:[#allocation5 + $0x258] sm:$0xff]
          %v2437 = vld [vmem:[#allocation5 + $0x260] sm:$0xff]
          %v2438 = vld [vmem:[#allocation5 + $0x268] sm:$0xff]
          %v2439 = vld [vmem:[#allocation5 + $0x270] sm:$0xff]
          %v2440 = vld [vmem:[#allocation5 + $0x278] sm:$0xff]
          %v2441 = vld [vmem:[#allocation5 + $0x280] sm:$0xff]
          %v2442 = vld [vmem:[#allocation5 + $0x288] sm:$0xff]
          %v2443 = vld [vmem:[#allocation5 + $0x290] sm:$0xff]
          %v2444 = vld [vmem:[#allocation5 + $0x298] sm:$0xff]
          %v2445 = vld [vmem:[#allocation5 + $0x2a0] sm:$0xff]
          %v2446 = vld [vmem:[#allocation5 + $0x2a8] sm:$0xff]
          %v2447 = vld [vmem:[#allocation5 + $0x2b0] sm:$0xff]
          %v2448 = vld [vmem:[#allocation5 + $0x2b8] sm:$0xff]
          %v2449 = vld [vmem:[#allocation5 + $0x2c0] sm:$0xff]
          %v2450 = vld [vmem:[#allocation5 + $0x2c8] sm:$0xff]
          %v2451 = vld [vmem:[#allocation5 + $0x2d0] sm:$0xff]
          %v2452 = vld [vmem:[#allocation5 + $0x2d8] sm:$0xff]
          %v2453 = vld [vmem:[#allocation5 + $0x2e0] sm:$0xff]
          %v2454 = vld [vmem:[#allocation5 + $0x2e8] sm:$0xff]
          %v2455 = vld [vmem:[#allocation5 + $0x2f0] sm:$0xff]
          %v2456 = vld [vmem:[#allocation5 + $0x2f8] sm:$0xff]
          %v2457 = vld [vmem:[#allocation5 + $0x300] sm:$0xff]
          %v2458 = vld [vmem:[#allocation5 + $0x308] sm:$0xff]
          %v2459 = vld [vmem:[#allocation5 + $0x310] sm:$0xff]
          %v2460 = vld [vmem:[#allocation5 + $0x318] sm:$0xff]
          %v2461 = vld [vmem:[#allocation5 + $0x320] sm:$0xff]
          %v2462 = vld [vmem:[#allocation5 + $0x328] sm:$0xff]
          %v2463 = vld [vmem:[#allocation5 + $0x330] sm:$0xff]
          %v2464 = vld [vmem:[#allocation5 + $0x338] sm:$0xff]
          %v2465 = vld [vmem:[#allocation5 + $0x340] sm:$0xff]
          %v2466 = vld [vmem:[#allocation5 + $0x348] sm:$0xff]
          %v2467 = vld [vmem:[#allocation5 + $0x350] sm:$0xff]
          %v2468 = vld [vmem:[#allocation5 + $0x358] sm:$0xff]
          %v2469 = vld [vmem:[#allocation5 + $0x360] sm:$0xff]
          %v2470 = vld [vmem:[#allocation5 + $0x368] sm:$0xff]
          %v2471 = vld [vmem:[#allocation5 + $0x370] sm:$0xff]
          %v2472 = vld [vmem:[#allocation5 + $0x378] sm:$0xff]
          %v2473 = vld [vmem:[#allocation5 + $0x380] sm:$0xff]
          %v2474 = vld [vmem:[#allocation5 + $0x388] sm:$0xff]
          %v2475 = vld [vmem:[#allocation5 + $0x390] sm:$0xff]
          %v2476 = vld [vmem:[#allocation5 + $0x398] sm:$0xff]
          %v2477 = vld [vmem:[#allocation5 + $0x3a0] sm:$0xff]
          %v2478 = vld [vmem:[#allocation5 + $0x3a8] sm:$0xff]
          %v2479 = vld [vmem:[#allocation5 + $0x3b0] sm:$0xff]
          %v2480 = vld [vmem:[#allocation5 + $0x3b8] sm:$0xff]
          %v2481 = vld [vmem:[#allocation5 + $0x3c0] sm:$0xff]
          %v2482 = vld [vmem:[#allocation5 + $0x3c8] sm:$0xff]
          %v2483 = vld [vmem:[#allocation5 + $0x3d0] sm:$0xff]
          %v2484 = vld [vmem:[#allocation5 + $0x3d8] sm:$0xff]
          %v2485 = vld [vmem:[#allocation5 + $0x3e0] sm:$0xff]
          %v2486 = vld [vmem:[#allocation5 + $0x3e8] sm:$0xff]
          %v2487 = vld [vmem:[#allocation5 + $0x3f0] sm:$0xff]
          %v2488 = vld [vmem:[#allocation5 + $0x3f8] sm:$0xff]
          %v2489 = vld [vmem:[#allocation5 + $0x400] sm:$0xff]
          %v2490 = vld [vmem:[#allocation5 + $0x408] sm:$0xff]
          %v2491 = vld [vmem:[#allocation5 + $0x410] sm:$0xff]
          %v2492 = vld [vmem:[#allocation5 + $0x418] sm:$0xff]
          %v2493 = vld [vmem:[#allocation5 + $0x420] sm:$0xff]
          %v2494 = vld [vmem:[#allocation5 + $0x428] sm:$0xff]
          %v2495 = vld [vmem:[#allocation5 + $0x430] sm:$0xff]
          %v2496 = vld [vmem:[#allocation5 + $0x438] sm:$0xff]
          %v2497 = vld [vmem:[#allocation5 + $0x440] sm:$0xff]
          %v2498 = vld [vmem:[#allocation5 + $0x448] sm:$0xff]
          %v2499 = vld [vmem:[#allocation5 + $0x450] sm:$0xff]
          %v2500 = vld [vmem:[#allocation5 + $0x458] sm:$0xff]
          %v2501 = vld [vmem:[#allocation5 + $0x460] sm:$0xff]
          %v2502 = vld [vmem:[#allocation5 + $0x468] sm:$0xff]
          %v2503 = vld [vmem:[#allocation5 + $0x470] sm:$0xff]
          %v2504 = vld [vmem:[#allocation5 + $0x478] sm:$0xff]
          %v2505 = vld [vmem:[#allocation5 + $0x480] sm:$0xff]
          %v2506 = vld [vmem:[#allocation5 + $0x488] sm:$0xff]
          %v2507 = vld [vmem:[#allocation5 + $0x490] sm:$0xff]
          %v2508 = vld [vmem:[#allocation5 + $0x498] sm:$0xff]
          %v2509 = vld [vmem:[#allocation5 + $0x4a0] sm:$0xff]
          %v2510 = vld [vmem:[#allocation5 + $0x4a8] sm:$0xff]
          %v2511 = vld [vmem:[#allocation5 + $0x4b0] sm:$0xff]
          %v2512 = vld [vmem:[#allocation5 + $0x4b8] sm:$0xff]
          %v2513 = vld [vmem:[#allocation5 + $0x4c0] sm:$0xff]
          %v2514 = vld [vmem:[#allocation5 + $0x4c8] sm:$0xff]
          %v2515 = vld [vmem:[#allocation5 + $0x4d0] sm:$0xff]
          %v2516 = vld [vmem:[#allocation5 + $0x4d8] sm:$0xff]
          %v2517 = vld [vmem:[#allocation5 + $0x4e0] sm:$0xff]
          %v2518 = vld [vmem:[#allocation5 + $0x4e8] sm:$0xff]
          %v2519 = vld [vmem:[#allocation5 + $0x4f0] sm:$0xff]
          %v2520 = vld [vmem:[#allocation5 + $0x4f8] sm:$0xff]
          %v2521 = vld [vmem:[#allocation5 + $0x500] sm:$0xff]
          %v2522 = vld [vmem:[#allocation5 + $0x508] sm:$0xff]
          %v2523 = vld [vmem:[#allocation5 + $0x510] sm:$0xff]
          %v2524 = vld [vmem:[#allocation5 + $0x518] sm:$0xff]
          %v2525 = vld [vmem:[#allocation5 + $0x520] sm:$0xff]
          %v2526 = vld [vmem:[#allocation5 + $0x528] sm:$0xff]
          %v2527 = vld [vmem:[#allocation5 + $0x530] sm:$0xff]
          %v2528 = vld [vmem:[#allocation5 + $0x538] sm:$0xff]
          %v2529 = vld [vmem:[#allocation5 + $0x540] sm:$0xff]
          %v2530 = vld [vmem:[#allocation5 + $0x548] sm:$0xff]
          %v2531 = vld [vmem:[#allocation5 + $0x550] sm:$0xff]
          %v2532 = vld [vmem:[#allocation5 + $0x558] sm:$0xff]
          %v2533 = vld [vmem:[#allocation5 + $0x560] sm:$0xff]
          %v2534 = vld [vmem:[#allocation5 + $0x568] sm:$0xff]
          %v2535 = vld [vmem:[#allocation5 + $0x570] sm:$0xff]
          %v2536 = vld [vmem:[#allocation5 + $0x578] sm:$0xff]
          %v2537 = vld [vmem:[#allocation5 + $0x580] sm:$0xff]
          %v2538 = vld [vmem:[#allocation5 + $0x588] sm:$0xff]
          %v2539 = vld [vmem:[#allocation5 + $0x590] sm:$0xff]
          %v2540 = vld [vmem:[#allocation5 + $0x598] sm:$0xff]
          %v2541 = vld [vmem:[#allocation5 + $0x5a0] sm:$0xff]
          %v2542 = vld [vmem:[#allocation5 + $0x5a8] sm:$0xff]
          %v2543 = vld [vmem:[#allocation5 + $0x5b0] sm:$0xff]
          %v2544 = vld [vmem:[#allocation5 + $0x5b8] sm:$0xff]
          %v2545 = vld [vmem:[#allocation5 + $0x5c0] sm:$0xff]
          %v2546 = vld [vmem:[#allocation5 + $0x5c8] sm:$0xff]
          %v2547 = vld [vmem:[#allocation5 + $0x5d0] sm:$0xff]
          %v2548 = vld [vmem:[#allocation5 + $0x5d8] sm:$0xff]
          %v2549 = vld [vmem:[#allocation5 + $0x5e0] sm:$0xff]
          %v2550 = vld [vmem:[#allocation5 + $0x5e8] sm:$0xff]
          %v2551 = vld [vmem:[#allocation5 + $0x5f0] sm:$0xff]
          %v2552 = vld [vmem:[#allocation5 + $0x5f8] sm:$0xff]
          %v2553 = vld [vmem:[#allocation5 + $0x600] sm:$0xff]
          %v2554 = vld [vmem:[#allocation5 + $0x608] sm:$0xff]
          %v2555 = vld [vmem:[#allocation5 + $0x610] sm:$0xff]
          %v2556 = vld [vmem:[#allocation5 + $0x618] sm:$0xff]
          %v2557 = vld [vmem:[#allocation5 + $0x620] sm:$0xff]
          %v2558 = vld [vmem:[#allocation5 + $0x628] sm:$0xff]
          %v2559 = vld [vmem:[#allocation5 + $0x630] sm:$0xff]
          %v2560 = vld [vmem:[#allocation5 + $0x638] sm:$0xff]
          %v2561 = vld [vmem:[#allocation5 + $0x640] sm:$0xff]
          %v2562 = vld [vmem:[#allocation5 + $0x648] sm:$0xff]
          %v2563 = vld [vmem:[#allocation5 + $0x650] sm:$0xff]
          %v2564 = vld [vmem:[#allocation5 + $0x658] sm:$0xff]
          %v2565 = vld [vmem:[#allocation5 + $0x660] sm:$0xff]
          %v2566 = vld [vmem:[#allocation5 + $0x668] sm:$0xff]
          %v2567 = vld [vmem:[#allocation5 + $0x670] sm:$0xff]
          %v2568 = vld [vmem:[#allocation5 + $0x678] sm:$0xff]
          %v2569 = vld [vmem:[#allocation5 + $0x680] sm:$0xff]
          %v2570 = vld [vmem:[#allocation5 + $0x688] sm:$0xff]
          %v2571 = vld [vmem:[#allocation5 + $0x690] sm:$0xff]
          %v2572 = vld [vmem:[#allocation5 + $0x698] sm:$0xff]
          %v2573 = vld [vmem:[#allocation5 + $0x6a0] sm:$0xff]
          %v2574 = vld [vmem:[#allocation5 + $0x6a8] sm:$0xff]
          %v2575 = vld [vmem:[#allocation5 + $0x6b0] sm:$0xff]
          %v2576 = vld [vmem:[#allocation5 + $0x6b8] sm:$0xff]
          %v2577 = vld [vmem:[#allocation5 + $0x6c0] sm:$0xff]
          %v2578 = vld [vmem:[#allocation5 + $0x6c8] sm:$0xff]
          %v2579 = vld [vmem:[#allocation5 + $0x6d0] sm:$0xff]
          %v2580 = vld [vmem:[#allocation5 + $0x6d8] sm:$0xff]
          %v2581 = vld [vmem:[#allocation5 + $0x6e0] sm:$0xff]
          %v2582 = vld [vmem:[#allocation5 + $0x6e8] sm:$0xff]
          %v2583 = vld [vmem:[#allocation5 + $0x6f0] sm:$0xff]
          %v2584 = vld [vmem:[#allocation5 + $0x6f8] sm:$0xff]
          %v2585 = vld [vmem:[#allocation5 + $0x700] sm:$0xff]
          %v2586 = vld [vmem:[#allocation5 + $0x708] sm:$0xff]
          %v2587 = vld [vmem:[#allocation5 + $0x710] sm:$0xff]
          %v2588 = vld [vmem:[#allocation5 + $0x718] sm:$0xff]
          %v2589 = vld [vmem:[#allocation5 + $0x720] sm:$0xff]
          %v2590 = vld [vmem:[#allocation5 + $0x728] sm:$0xff]
          %v2591 = vld [vmem:[#allocation5 + $0x730] sm:$0xff]
          %v2592 = vld [vmem:[#allocation5 + $0x738] sm:$0xff]
          %v2593 = vld [vmem:[#allocation5 + $0x740] sm:$0xff]
          %v2594 = vld [vmem:[#allocation5 + $0x748] sm:$0xff]
          %v2595 = vld [vmem:[#allocation5 + $0x750] sm:$0xff]
          %v2596 = vld [vmem:[#allocation5 + $0x758] sm:$0xff]
          %v2597 = vld [vmem:[#allocation5 + $0x760] sm:$0xff]
          %v2598 = vld [vmem:[#allocation5 + $0x768] sm:$0xff]
          %v2599 = vld [vmem:[#allocation5 + $0x770] sm:$0xff]
          %v2600 = vld [vmem:[#allocation5 + $0x778] sm:$0xff]
          %v2601 = vld [vmem:[#allocation5 + $0x780] sm:$0xff]
          %v2602 = vld [vmem:[#allocation5 + $0x788] sm:$0xff]
          %v2603 = vld [vmem:[#allocation5 + $0x790] sm:$0xff]
          %v2604 = vld [vmem:[#allocation5 + $0x798] sm:$0xff]
          %v2605 = vld [vmem:[#allocation5 + $0x7a0] sm:$0xff]
          %v2606 = vld [vmem:[#allocation5 + $0x7a8] sm:$0xff]
          %v2607 = vld [vmem:[#allocation5 + $0x7b0] sm:$0xff]
          %v2608 = vld [vmem:[#allocation5 + $0x7b8] sm:$0xff]
          %v2609 = vld [vmem:[#allocation5 + $0x7c0] sm:$0xff]
          %v2610 = vld [vmem:[#allocation5 + $0x7c8] sm:$0xff]
          %v2611 = vld [vmem:[#allocation5 + $0x7d0] sm:$0xff]
          %v2612 = vld [vmem:[#allocation5 + $0x7d8] sm:$0xff]
          %v2613 = vld [vmem:[#allocation5 + $0x7e0] sm:$0xff]
          %v2614 = vld [vmem:[#allocation5 + $0x7e8] sm:$0xff]
          %v2615 = vld [vmem:[#allocation5 + $0x7f0] sm:$0xff]
          %v2616 = vld [vmem:[#allocation5 + $0x7f8] sm:$0xff]
          %v2617 = vld [vmem:[%s10] sm:$0xf]
          %v2874 = vunpack.c.l.b16 %v2361
          %v2875 = vunpack.c.h.b16 %v2361
          %v2876 = vunpack.c.l.b16 %v2362
          %v2877 = vunpack.c.h.b16 %v2362
          %v2878 = vunpack.c.l.b16 %v2363
          %v2879 = vunpack.c.h.b16 %v2363
          %v2880 = vunpack.c.l.b16 %v2364
          %v2881 = vunpack.c.h.b16 %v2364
          %v2882 = vunpack.c.l.b16 %v2365
          %v2883 = vunpack.c.h.b16 %v2365
          %v2884 = vunpack.c.l.b16 %v2366
          %v2885 = vunpack.c.h.b16 %v2366
          %v2886 = vunpack.c.l.b16 %v2367
          %v2887 = vunpack.c.h.b16 %v2367
          %v2888 = vunpack.c.l.b16 %v2368
          %v2889 = vunpack.c.h.b16 %v2368
          %v2890 = vunpack.c.l.b16 %v2369
          %v2891 = vunpack.c.h.b16 %v2369
          %v2892 = vunpack.c.l.b16 %v2370
          %v2893 = vunpack.c.h.b16 %v2370
          %v2894 = vunpack.c.l.b16 %v2371
          %v2895 = vunpack.c.h.b16 %v2371
          %v2896 = vunpack.c.l.b16 %v2372
          %v2897 = vunpack.c.h.b16 %v2372
          %v2898 = vunpack.c.l.b16 %v2373
          %v2899 = vunpack.c.h.b16 %v2373
          %v2900 = vunpack.c.l.b16 %v2374
          %v2901 = vunpack.c.h.b16 %v2374
          %v2902 = vunpack.c.l.b16 %v2375
          %v2903 = vunpack.c.h.b16 %v2375
          %v2904 = vunpack.c.l.b16 %v2376
          %v2905 = vunpack.c.h.b16 %v2376
          %v2906 = vunpack.c.l.b16 %v2377
          %v2907 = vunpack.c.h.b16 %v2377
          %v2908 = vunpack.c.l.b16 %v2378
          %v2909 = vunpack.c.h.b16 %v2378
          %v2910 = vunpack.c.l.b16 %v2379
          %v2911 = vunpack.c.h.b16 %v2379
          %v2912 = vunpack.c.l.b16 %v2380
          %v2913 = vunpack.c.h.b16 %v2380
          %v2914 = vunpack.c.l.b16 %v2381
          %v2915 = vunpack.c.h.b16 %v2381
          %v2916 = vunpack.c.l.b16 %v2382
          %v2917 = vunpack.c.h.b16 %v2382
          %v2918 = vunpack.c.l.b16 %v2383
          %v2919 = vunpack.c.h.b16 %v2383
          %v2920 = vunpack.c.l.b16 %v2384
          %v2921 = vunpack.c.h.b16 %v2384
          %v2922 = vunpack.c.l.b16 %v2385
          %v2923 = vunpack.c.h.b16 %v2385
          %v2924 = vunpack.c.l.b16 %v2386
          %v2925 = vunpack.c.h.b16 %v2386
          %v2926 = vunpack.c.l.b16 %v2387
          %v2927 = vunpack.c.h.b16 %v2387
          %v2928 = vunpack.c.l.b16 %v2388
          %v2929 = vunpack.c.h.b16 %v2388
          %v2930 = vunpack.c.l.b16 %v2389
          %v2931 = vunpack.c.h.b16 %v2389
          %v2932 = vunpack.c.l.b16 %v2390
          %v2933 = vunpack.c.h.b16 %v2390
          %v2934 = vunpack.c.l.b16 %v2391
          %v2935 = vunpack.c.h.b16 %v2391
          %v2936 = vunpack.c.l.b16 %v2392
          %v2937 = vunpack.c.h.b16 %v2392
          %v2938 = vunpack.c.l.b16 %v2393
          %v2939 = vunpack.c.h.b16 %v2393
          %v2940 = vunpack.c.l.b16 %v2394
          %v2941 = vunpack.c.h.b16 %v2394
          %v2942 = vunpack.c.l.b16 %v2395
          %v2943 = vunpack.c.h.b16 %v2395
          %v2944 = vunpack.c.l.b16 %v2396
          %v2945 = vunpack.c.h.b16 %v2396
          %v2946 = vunpack.c.l.b16 %v2397
          %v2947 = vunpack.c.h.b16 %v2397
          %v2948 = vunpack.c.l.b16 %v2398
          %v2949 = vunpack.c.h.b16 %v2398
          %v2950 = vunpack.c.l.b16 %v2399
          %v2951 = vunpack.c.h.b16 %v2399
          %v2952 = vunpack.c.l.b16 %v2400
          %v2953 = vunpack.c.h.b16 %v2400
          %v2954 = vunpack.c.l.b16 %v2401
          %v2955 = vunpack.c.h.b16 %v2401
          %v2956 = vunpack.c.l.b16 %v2402
          %v2957 = vunpack.c.h.b16 %v2402
          %v2958 = vunpack.c.l.b16 %v2403
          %v2959 = vunpack.c.h.b16 %v2403
          %v2960 = vunpack.c.l.b16 %v2404
          %v2961 = vunpack.c.h.b16 %v2404
          %v2962 = vunpack.c.l.b16 %v2405
          %v2963 = vunpack.c.h.b16 %v2405
          %v2964 = vunpack.c.l.b16 %v2406
          %v2965 = vunpack.c.h.b16 %v2406
          %v2966 = vunpack.c.l.b16 %v2407
          %v2967 = vunpack.c.h.b16 %v2407
          %v2968 = vunpack.c.l.b16 %v2408
          %v2969 = vunpack.c.h.b16 %v2408
          %v2970 = vunpack.c.l.b16 %v2409
          %v2971 = vunpack.c.h.b16 %v2409
          %v2972 = vunpack.c.l.b16 %v2410
          %v2973 = vunpack.c.h.b16 %v2410
          %v2974 = vunpack.c.l.b16 %v2411
          %v2975 = vunpack.c.h.b16 %v2411
          %v2976 = vunpack.c.l.b16 %v2412
          %v2977 = vunpack.c.h.b16 %v2412
          %v2978 = vunpack.c.l.b16 %v2413
          %v2979 = vunpack.c.h.b16 %v2413
          %v2980 = vunpack.c.l.b16 %v2414
          %v2981 = vunpack.c.h.b16 %v2414
          %v2982 = vunpack.c.l.b16 %v2415
          %v2983 = vunpack.c.h.b16 %v2415
          %v2984 = vunpack.c.l.b16 %v2416
          %v2985 = vunpack.c.h.b16 %v2416
          %v2986 = vunpack.c.l.b16 %v2417
          %v2987 = vunpack.c.h.b16 %v2417
          %v2988 = vunpack.c.l.b16 %v2418
          %v2989 = vunpack.c.h.b16 %v2418
          %v2990 = vunpack.c.l.b16 %v2419
          %v2991 = vunpack.c.h.b16 %v2419
          %v2992 = vunpack.c.l.b16 %v2420
          %v2993 = vunpack.c.h.b16 %v2420
          %v2994 = vunpack.c.l.b16 %v2421
          %v2995 = vunpack.c.h.b16 %v2421
          %v2996 = vunpack.c.l.b16 %v2422
          %v2997 = vunpack.c.h.b16 %v2422
          %v2998 = vunpack.c.l.b16 %v2423
          %v2999 = vunpack.c.h.b16 %v2423
          %v3000 = vunpack.c.l.b16 %v2424
          %v3001 = vunpack.c.h.b16 %v2424
          %v3002 = vunpack.c.l.b16 %v2425
          %v3003 = vunpack.c.h.b16 %v2425
          %v3004 = vunpack.c.l.b16 %v2426
          %v3005 = vunpack.c.h.b16 %v2426
          %v3006 = vunpack.c.l.b16 %v2427
          %v3007 = vunpack.c.h.b16 %v2427
          %v3008 = vunpack.c.l.b16 %v2428
          %v3009 = vunpack.c.h.b16 %v2428
          %v3010 = vunpack.c.l.b16 %v2429
          %v3011 = vunpack.c.h.b16 %v2429
          %v3012 = vunpack.c.l.b16 %v2430
          %v3013 = vunpack.c.h.b16 %v2430
          %v3014 = vunpack.c.l.b16 %v2431
          %v3015 = vunpack.c.h.b16 %v2431
          %v3016 = vunpack.c.l.b16 %v2432
          %v3017 = vunpack.c.h.b16 %v2432
          %v3018 = vunpack.c.l.b16 %v2433
          %v3019 = vunpack.c.h.b16 %v2433
          %v3020 = vunpack.c.l.b16 %v2434
          %v3021 = vunpack.c.h.b16 %v2434
          %v3022 = vunpack.c.l.b16 %v2435
          %v3023 = vunpack.c.h.b16 %v2435
          %v3024 = vunpack.c.l.b16 %v2436
          %v3025 = vunpack.c.h.b16 %v2436
          %v3026 = vunpack.c.l.b16 %v2437
          %v3027 = vunpack.c.h.b16 %v2437
          %v3028 = vunpack.c.l.b16 %v2438
          %v3029 = vunpack.c.h.b16 %v2438
          %v3030 = vunpack.c.l.b16 %v2439
          %v3031 = vunpack.c.h.b16 %v2439
          %v3032 = vunpack.c.l.b16 %v2440
          %v3033 = vunpack.c.h.b16 %v2440
          %v3034 = vunpack.c.l.b16 %v2441
          %v3035 = vunpack.c.h.b16 %v2441
          %v3036 = vunpack.c.l.b16 %v2442
          %v3037 = vunpack.c.h.b16 %v2442
          %v3038 = vunpack.c.l.b16 %v2443
          %v3039 = vunpack.c.h.b16 %v2443
          %v3040 = vunpack.c.l.b16 %v2444
          %v3041 = vunpack.c.h.b16 %v2444
          %v3042 = vunpack.c.l.b16 %v2445
          %v3043 = vunpack.c.h.b16 %v2445
          %v3044 = vunpack.c.l.b16 %v2446
          %v3045 = vunpack.c.h.b16 %v2446
          %v3046 = vunpack.c.l.b16 %v2447
          %v3047 = vunpack.c.h.b16 %v2447
          %v3048 = vunpack.c.l.b16 %v2448
          %v3049 = vunpack.c.h.b16 %v2448
          %v3050 = vunpack.c.l.b16 %v2449
          %v3051 = vunpack.c.h.b16 %v2449
          %v3052 = vunpack.c.l.b16 %v2450
          %v3053 = vunpack.c.h.b16 %v2450
          %v3054 = vunpack.c.l.b16 %v2451
          %v3055 = vunpack.c.h.b16 %v2451
          %v3056 = vunpack.c.l.b16 %v2452
          %v3057 = vunpack.c.h.b16 %v2452
          %v3058 = vunpack.c.l.b16 %v2453
          %v3059 = vunpack.c.h.b16 %v2453
          %v3060 = vunpack.c.l.b16 %v2454
          %v3061 = vunpack.c.h.b16 %v2454
          %v3062 = vunpack.c.l.b16 %v2455
          %v3063 = vunpack.c.h.b16 %v2455
          %v3064 = vunpack.c.l.b16 %v2456
          %v3065 = vunpack.c.h.b16 %v2456
          %v3066 = vunpack.c.l.b16 %v2457
          %v3067 = vunpack.c.h.b16 %v2457
          %v3068 = vunpack.c.l.b16 %v2458
          %v3069 = vunpack.c.h.b16 %v2458
          %v3070 = vunpack.c.l.b16 %v2459
          %v3071 = vunpack.c.h.b16 %v2459
          %v3072 = vunpack.c.l.b16 %v2460
          %v3073 = vunpack.c.h.b16 %v2460
          %v3074 = vunpack.c.l.b16 %v2461
          %v3075 = vunpack.c.h.b16 %v2461
          %v3076 = vunpack.c.l.b16 %v2462
          %v3077 = vunpack.c.h.b16 %v2462
          %v3078 = vunpack.c.l.b16 %v2463
          %v3079 = vunpack.c.h.b16 %v2463
          %v3080 = vunpack.c.l.b16 %v2464
          %v3081 = vunpack.c.h.b16 %v2464
          %v3082 = vunpack.c.l.b16 %v2465
          %v3083 = vunpack.c.h.b16 %v2465
          %v3084 = vunpack.c.l.b16 %v2466
          %v3085 = vunpack.c.h.b16 %v2466
          %v3086 = vunpack.c.l.b16 %v2467
          %v3087 = vunpack.c.h.b16 %v2467
          %v3088 = vunpack.c.l.b16 %v2468
          %v3089 = vunpack.c.h.b16 %v2468
          %v3090 = vunpack.c.l.b16 %v2469
          %v3091 = vunpack.c.h.b16 %v2469
          %v3092 = vunpack.c.l.b16 %v2470
          %v3093 = vunpack.c.h.b16 %v2470
          %v3094 = vunpack.c.l.b16 %v2471
          %v3095 = vunpack.c.h.b16 %v2471
          %v3096 = vunpack.c.l.b16 %v2472
          %v3097 = vunpack.c.h.b16 %v2472
          %v3098 = vunpack.c.l.b16 %v2473
          %v3099 = vunpack.c.h.b16 %v2473
          %v3100 = vunpack.c.l.b16 %v2474
          %v3101 = vunpack.c.h.b16 %v2474
          %v3102 = vunpack.c.l.b16 %v2475
          %v3103 = vunpack.c.h.b16 %v2475
          %v3104 = vunpack.c.l.b16 %v2476
          %v3105 = vunpack.c.h.b16 %v2476
          %v3106 = vunpack.c.l.b16 %v2477
          %v3107 = vunpack.c.h.b16 %v2477
          %v3108 = vunpack.c.l.b16 %v2478
          %v3109 = vunpack.c.h.b16 %v2478
          %v3110 = vunpack.c.l.b16 %v2479
          %v3111 = vunpack.c.h.b16 %v2479
          %v3112 = vunpack.c.l.b16 %v2480
          %v3113 = vunpack.c.h.b16 %v2480
          %v3114 = vunpack.c.l.b16 %v2481
          %v3115 = vunpack.c.h.b16 %v2481
          %v3116 = vunpack.c.l.b16 %v2482
          %v3117 = vunpack.c.h.b16 %v2482
          %v3118 = vunpack.c.l.b16 %v2483
          %v3119 = vunpack.c.h.b16 %v2483
          %v3120 = vunpack.c.l.b16 %v2484
          %v3121 = vunpack.c.h.b16 %v2484
          %v3122 = vunpack.c.l.b16 %v2485
          %v3123 = vunpack.c.h.b16 %v2485
          %v3124 = vunpack.c.l.b16 %v2486
          %v3125 = vunpack.c.h.b16 %v2486
          %v3126 = vunpack.c.l.b16 %v2487
          %v3127 = vunpack.c.h.b16 %v2487
          %v3128 = vunpack.c.l.b16 %v2488
          %v3129 = vunpack.c.h.b16 %v2488
          %v3130 = vunpack.c.l.b16 %v2489
          %v3131 = vunpack.c.h.b16 %v2489
          %v3132 = vunpack.c.l.b16 %v2490
          %v3133 = vunpack.c.h.b16 %v2490
          %v3134 = vunpack.c.l.b16 %v2491
          %v3135 = vunpack.c.h.b16 %v2491
          %v3136 = vunpack.c.l.b16 %v2492
          %v3137 = vunpack.c.h.b16 %v2492
          %v3138 = vunpack.c.l.b16 %v2493
          %v3139 = vunpack.c.h.b16 %v2493
          %v3140 = vunpack.c.l.b16 %v2494
          %v3141 = vunpack.c.h.b16 %v2494
          %v3142 = vunpack.c.l.b16 %v2495
          %v3143 = vunpack.c.h.b16 %v2495
          %v3144 = vunpack.c.l.b16 %v2496
          %v3145 = vunpack.c.h.b16 %v2496
          %v3146 = vunpack.c.l.b16 %v2497
          %v3147 = vunpack.c.h.b16 %v2497
          %v3148 = vunpack.c.l.b16 %v2498
          %v3149 = vunpack.c.h.b16 %v2498
          %v3150 = vunpack.c.l.b16 %v2499
          %v3151 = vunpack.c.h.b16 %v2499
          %v3152 = vunpack.c.l.b16 %v2500
          %v3153 = vunpack.c.h.b16 %v2500
          %v3154 = vunpack.c.l.b16 %v2501
          %v3155 = vunpack.c.h.b16 %v2501
          %v3156 = vunpack.c.l.b16 %v2502
          %v3157 = vunpack.c.h.b16 %v2502
          %v3158 = vunpack.c.l.b16 %v2503
          %v3159 = vunpack.c.h.b16 %v2503
          %v3160 = vunpack.c.l.b16 %v2504
          %v3161 = vunpack.c.h.b16 %v2504
          %v3162 = vunpack.c.l.b16 %v2505
          %v3163 = vunpack.c.h.b16 %v2505
          %v3164 = vunpack.c.l.b16 %v2506
          %v3165 = vunpack.c.h.b16 %v2506
          %v3166 = vunpack.c.l.b16 %v2507
          %v3167 = vunpack.c.h.b16 %v2507
          %v3168 = vunpack.c.l.b16 %v2508
          %v3169 = vunpack.c.h.b16 %v2508
          %v3170 = vunpack.c.l.b16 %v2509
          %v3171 = vunpack.c.h.b16 %v2509
          %v3172 = vunpack.c.l.b16 %v2510
          %v3173 = vunpack.c.h.b16 %v2510
          %v3174 = vunpack.c.l.b16 %v2511
          %v3175 = vunpack.c.h.b16 %v2511
          %v3176 = vunpack.c.l.b16 %v2512
          %v3177 = vunpack.c.h.b16 %v2512
          %v3178 = vunpack.c.l.b16 %v2513
          %v3179 = vunpack.c.h.b16 %v2513
          %v3180 = vunpack.c.l.b16 %v2514
          %v3181 = vunpack.c.h.b16 %v2514
          %v3182 = vunpack.c.l.b16 %v2515
          %v3183 = vunpack.c.h.b16 %v2515
          %v3184 = vunpack.c.l.b16 %v2516
          %v3185 = vunpack.c.h.b16 %v2516
          %v3186 = vunpack.c.l.b16 %v2517
          %v3187 = vunpack.c.h.b16 %v2517
          %v3188 = vunpack.c.l.b16 %v2518
          %v3189 = vunpack.c.h.b16 %v2518
          %v3190 = vunpack.c.l.b16 %v2519
          %v3191 = vunpack.c.h.b16 %v2519
          %v3192 = vunpack.c.l.b16 %v2520
          %v3193 = vunpack.c.h.b16 %v2520
          %v3194 = vunpack.c.l.b16 %v2521
          %v3195 = vunpack.c.h.b16 %v2521
          %v3196 = vunpack.c.l.b16 %v2522
          %v3197 = vunpack.c.h.b16 %v2522
          %v3198 = vunpack.c.l.b16 %v2523
          %v3199 = vunpack.c.h.b16 %v2523
          %v3200 = vunpack.c.l.b16 %v2524
          %v3201 = vunpack.c.h.b16 %v2524
          %v3202 = vunpack.c.l.b16 %v2525
          %v3203 = vunpack.c.h.b16 %v2525
          %v3204 = vunpack.c.l.b16 %v2526
          %v3205 = vunpack.c.h.b16 %v2526
          %v3206 = vunpack.c.l.b16 %v2527
          %v3207 = vunpack.c.h.b16 %v2527
          %v3208 = vunpack.c.l.b16 %v2528
          %v3209 = vunpack.c.h.b16 %v2528
          %v3210 = vunpack.c.l.b16 %v2529
          %v3211 = vunpack.c.h.b16 %v2529
          %v3212 = vunpack.c.l.b16 %v2530
          %v3213 = vunpack.c.h.b16 %v2530
          %v3214 = vunpack.c.l.b16 %v2531
          %v3215 = vunpack.c.h.b16 %v2531
          %v3216 = vunpack.c.l.b16 %v2532
          %v3217 = vunpack.c.h.b16 %v2532
          %v3218 = vunpack.c.l.b16 %v2533
          %v3219 = vunpack.c.h.b16 %v2533
          %v3220 = vunpack.c.l.b16 %v2534
          %v3221 = vunpack.c.h.b16 %v2534
          %v3222 = vunpack.c.l.b16 %v2535
          %v3223 = vunpack.c.h.b16 %v2535
          %v3224 = vunpack.c.l.b16 %v2536
          %v3225 = vunpack.c.h.b16 %v2536
          %v3226 = vunpack.c.l.b16 %v2537
          %v3227 = vunpack.c.h.b16 %v2537
          %v3228 = vunpack.c.l.b16 %v2538
          %v3229 = vunpack.c.h.b16 %v2538
          %v3230 = vunpack.c.l.b16 %v2539
          %v3231 = vunpack.c.h.b16 %v2539
          %v3232 = vunpack.c.l.b16 %v2540
          %v3233 = vunpack.c.h.b16 %v2540
          %v3234 = vunpack.c.l.b16 %v2541
          %v3235 = vunpack.c.h.b16 %v2541
          %v3236 = vunpack.c.l.b16 %v2542
          %v3237 = vunpack.c.h.b16 %v2542
          %v3238 = vunpack.c.l.b16 %v2543
          %v3239 = vunpack.c.h.b16 %v2543
          %v3240 = vunpack.c.l.b16 %v2544
          %v3241 = vunpack.c.h.b16 %v2544
          %v3242 = vunpack.c.l.b16 %v2545
          %v3243 = vunpack.c.h.b16 %v2545
          %v3244 = vunpack.c.l.b16 %v2546
          %v3245 = vunpack.c.h.b16 %v2546
          %v3246 = vunpack.c.l.b16 %v2547
          %v3247 = vunpack.c.h.b16 %v2547
          %v3248 = vunpack.c.l.b16 %v2548
          %v3249 = vunpack.c.h.b16 %v2548
          %v3250 = vunpack.c.l.b16 %v2549
          %v3251 = vunpack.c.h.b16 %v2549
          %v3252 = vunpack.c.l.b16 %v2550
          %v3253 = vunpack.c.h.b16 %v2550
          %v3254 = vunpack.c.l.b16 %v2551
          %v3255 = vunpack.c.h.b16 %v2551
          %v3256 = vunpack.c.l.b16 %v2552
          %v3257 = vunpack.c.h.b16 %v2552
          %v3258 = vunpack.c.l.b16 %v2553
          %v3259 = vunpack.c.h.b16 %v2553
          %v3260 = vunpack.c.l.b16 %v2554
          %v3261 = vunpack.c.h.b16 %v2554
          %v3262 = vunpack.c.l.b16 %v2555
          %v3263 = vunpack.c.h.b16 %v2555
          %v3264 = vunpack.c.l.b16 %v2556
          %v3265 = vunpack.c.h.b16 %v2556
          %v3266 = vunpack.c.l.b16 %v2557
          %v3267 = vunpack.c.h.b16 %v2557
          %v3268 = vunpack.c.l.b16 %v2558
          %v3269 = vunpack.c.h.b16 %v2558
          %v3270 = vunpack.c.l.b16 %v2559
          %v3271 = vunpack.c.h.b16 %v2559
          %v3272 = vunpack.c.l.b16 %v2560
          %v3273 = vunpack.c.h.b16 %v2560
          %v3274 = vunpack.c.l.b16 %v2561
          %v3275 = vunpack.c.h.b16 %v2561
          %v3276 = vunpack.c.l.b16 %v2562
          %v3277 = vunpack.c.h.b16 %v2562
          %v3278 = vunpack.c.l.b16 %v2563
          %v3279 = vunpack.c.h.b16 %v2563
          %v3280 = vunpack.c.l.b16 %v2564
          %v3281 = vunpack.c.h.b16 %v2564
          %v3282 = vunpack.c.l.b16 %v2565
          %v3283 = vunpack.c.h.b16 %v2565
          %v3284 = vunpack.c.l.b16 %v2566
          %v3285 = vunpack.c.h.b16 %v2566
          %v3286 = vunpack.c.l.b16 %v2567
          %v3287 = vunpack.c.h.b16 %v2567
          %v3288 = vunpack.c.l.b16 %v2568
          %v3289 = vunpack.c.h.b16 %v2568
          %v3290 = vunpack.c.l.b16 %v2569
          %v3291 = vunpack.c.h.b16 %v2569
          %v3292 = vunpack.c.l.b16 %v2570
          %v3293 = vunpack.c.h.b16 %v2570
          %v3294 = vunpack.c.l.b16 %v2571
          %v3295 = vunpack.c.h.b16 %v2571
          %v3296 = vunpack.c.l.b16 %v2572
          %v3297 = vunpack.c.h.b16 %v2572
          %v3298 = vunpack.c.l.b16 %v2573
          %v3299 = vunpack.c.h.b16 %v2573
          %v3300 = vunpack.c.l.b16 %v2574
          %v3301 = vunpack.c.h.b16 %v2574
          %v3302 = vunpack.c.l.b16 %v2575
          %v3303 = vunpack.c.h.b16 %v2575
          %v3304 = vunpack.c.l.b16 %v2576
          %v3305 = vunpack.c.h.b16 %v2576
          %v3306 = vunpack.c.l.b16 %v2577
          %v3307 = vunpack.c.h.b16 %v2577
          %v3308 = vunpack.c.l.b16 %v2578
          %v3309 = vunpack.c.h.b16 %v2578
          %v3310 = vunpack.c.l.b16 %v2579
          %v3311 = vunpack.c.h.b16 %v2579
          %v3312 = vunpack.c.l.b16 %v2580
          %v3313 = vunpack.c.h.b16 %v2580
          %v3314 = vunpack.c.l.b16 %v2581
          %v3315 = vunpack.c.h.b16 %v2581
          %v3316 = vunpack.c.l.b16 %v2582
          %v3317 = vunpack.c.h.b16 %v2582
          %v3318 = vunpack.c.l.b16 %v2583
          %v3319 = vunpack.c.h.b16 %v2583
          %v3320 = vunpack.c.l.b16 %v2584
          %v3321 = vunpack.c.h.b16 %v2584
          %v3322 = vunpack.c.l.b16 %v2585
          %v3323 = vunpack.c.h.b16 %v2585
          %v3324 = vunpack.c.l.b16 %v2586
          %v3325 = vunpack.c.h.b16 %v2586
          %v3326 = vunpack.c.l.b16 %v2587
          %v3327 = vunpack.c.h.b16 %v2587
          %v3328 = vunpack.c.l.b16 %v2588
          %v3329 = vunpack.c.h.b16 %v2588
          %v3330 = vunpack.c.l.b16 %v2589
          %v3331 = vunpack.c.h.b16 %v2589
          %v3332 = vunpack.c.l.b16 %v2590
          %v3333 = vunpack.c.h.b16 %v2590
          %v3334 = vunpack.c.l.b16 %v2591
          %v3335 = vunpack.c.h.b16 %v2591
          %v3336 = vunpack.c.l.b16 %v2592
          %v3337 = vunpack.c.h.b16 %v2592
          %v3338 = vunpack.c.l.b16 %v2593
          %v3339 = vunpack.c.h.b16 %v2593
          %v3340 = vunpack.c.l.b16 %v2594
          %v3341 = vunpack.c.h.b16 %v2594
          %v3342 = vunpack.c.l.b16 %v2595
          %v3343 = vunpack.c.h.b16 %v2595
          %v3344 = vunpack.c.l.b16 %v2596
          %v3345 = vunpack.c.h.b16 %v2596
          %v3346 = vunpack.c.l.b16 %v2597
          %v3347 = vunpack.c.h.b16 %v2597
          %v3348 = vunpack.c.l.b16 %v2598
          %v3349 = vunpack.c.h.b16 %v2598
          %v3350 = vunpack.c.l.b16 %v2599
          %v3351 = vunpack.c.h.b16 %v2599
          %v3352 = vunpack.c.l.b16 %v2600
          %v3353 = vunpack.c.h.b16 %v2600
          %v3354 = vunpack.c.l.b16 %v2601
          %v3355 = vunpack.c.h.b16 %v2601
          %v3356 = vunpack.c.l.b16 %v2602
          %v3357 = vunpack.c.h.b16 %v2602
          %v3358 = vunpack.c.l.b16 %v2603
          %v3359 = vunpack.c.h.b16 %v2603
          %v3360 = vunpack.c.l.b16 %v2604
          %v3361 = vunpack.c.h.b16 %v2604
          %v3362 = vunpack.c.l.b16 %v2605
          %v3363 = vunpack.c.h.b16 %v2605
          %v3364 = vunpack.c.l.b16 %v2606
          %v3365 = vunpack.c.h.b16 %v2606
          %v3366 = vunpack.c.l.b16 %v2607
          %v3367 = vunpack.c.h.b16 %v2607
          %v3368 = vunpack.c.l.b16 %v2608
          %v3369 = vunpack.c.h.b16 %v2608
          %v3370 = vunpack.c.l.b16 %v2609
          %v3371 = vunpack.c.h.b16 %v2609
          %v3372 = vunpack.c.l.b16 %v2610
          %v3373 = vunpack.c.h.b16 %v2610
          %v3374 = vunpack.c.l.b16 %v2611
          %v3375 = vunpack.c.h.b16 %v2611
          %v3376 = vunpack.c.l.b16 %v2612
          %v3377 = vunpack.c.h.b16 %v2612
          %v3378 = vunpack.c.l.b16 %v2613
          %v3379 = vunpack.c.h.b16 %v2613
          %v3380 = vunpack.c.l.b16 %v2614
          %v3381 = vunpack.c.h.b16 %v2614
          %v3382 = vunpack.c.l.b16 %v2615
          %v3383 = vunpack.c.h.b16 %v2615
          %v3384 = vunpack.c.l.b16 %v2616
          %v3385 = vunpack.c.h.b16 %v2616
          %v3386 = vpack.c.b16 %v2878, %v2874
          %v3387 = vpack.c.b16 %v2879, %v2875
          %v3388 = vpack.c.b16 %v2880, %v2876
          %v3389 = vpack.c.b16 %v2881, %v2877
          %v3390 = vpack.c.b16 %v2886, %v2882
          %v3391 = vpack.c.b16 %v2887, %v2883
          %v3392 = vpack.c.b16 %v2888, %v2884
          %v3393 = vpack.c.b16 %v2889, %v2885
          %v3394 = vpack.c.b16 %v2894, %v2890
          %v3395 = vpack.c.b16 %v2895, %v2891
          %v3396 = vpack.c.b16 %v2896, %v2892
          %v3397 = vpack.c.b16 %v2897, %v2893
          %v3398 = vpack.c.b16 %v2902, %v2898
          %v3399 = vpack.c.b16 %v2903, %v2899
          %v3400 = vpack.c.b16 %v2904, %v2900
          %v3401 = vpack.c.b16 %v2905, %v2901
          %v3402 = vpack.c.b16 %v2910, %v2906
          %v3403 = vpack.c.b16 %v2911, %v2907
          %v3404 = vpack.c.b16 %v2912, %v2908
          %v3405 = vpack.c.b16 %v2913, %v2909
          %v3406 = vpack.c.b16 %v2918, %v2914
          %v3407 = vpack.c.b16 %v2919, %v2915
          %v3408 = vpack.c.b16 %v2920, %v2916
          %v3409 = vpack.c.b16 %v2921, %v2917
          %v3410 = vpack.c.b16 %v2926, %v2922
          %v3411 = vpack.c.b16 %v2927, %v2923
          %v3412 = vpack.c.b16 %v2928, %v2924
          %v3413 = vpack.c.b16 %v2929, %v2925
          %v3414 = vpack.c.b16 %v2934, %v2930
          %v3415 = vpack.c.b16 %v2935, %v2931
          %v3416 = vpack.c.b16 %v2936, %v2932
          %v3417 = vpack.c.b16 %v2937, %v2933
          %v3418 = vpack.c.b16 %v2942, %v2938
          %v3419 = vpack.c.b16 %v2943, %v2939
          %v3420 = vpack.c.b16 %v2944, %v2940
          %v3421 = vpack.c.b16 %v2945, %v2941
          %v3422 = vpack.c.b16 %v2950, %v2946
          %v3423 = vpack.c.b16 %v2951, %v2947
          %v3424 = vpack.c.b16 %v2952, %v2948
          %v3425 = vpack.c.b16 %v2953, %v2949
          %v3426 = vpack.c.b16 %v2958, %v2954
          %v3427 = vpack.c.b16 %v2959, %v2955
          %v3428 = vpack.c.b16 %v2960, %v2956
          %v3429 = vpack.c.b16 %v2961, %v2957
          %v3430 = vpack.c.b16 %v2966, %v2962
          %v3431 = vpack.c.b16 %v2967, %v2963
          %v3432 = vpack.c.b16 %v2968, %v2964
          %v3433 = vpack.c.b16 %v2969, %v2965
          %v3434 = vpack.c.b16 %v2974, %v2970
          %v3435 = vpack.c.b16 %v2975, %v2971
          %v3436 = vpack.c.b16 %v2976, %v2972
          %v3437 = vpack.c.b16 %v2977, %v2973
          %v3438 = vpack.c.b16 %v2982, %v2978
          %v3439 = vpack.c.b16 %v2983, %v2979
          %v3440 = vpack.c.b16 %v2984, %v2980
          %v3441 = vpack.c.b16 %v2985, %v2981
          %v3442 = vpack.c.b16 %v2990, %v2986
          %v3443 = vpack.c.b16 %v2991, %v2987
          %v3444 = vpack.c.b16 %v2992, %v2988
          %v3445 = vpack.c.b16 %v2993, %v2989
          %v3446 = vpack.c.b16 %v2998, %v2994
          %v3447 = vpack.c.b16 %v2999, %v2995
          %v3448 = vpack.c.b16 %v3000, %v2996
          %v3449 = vpack.c.b16 %v3001, %v2997
          %v3450 = vpack.c.b16 %v3006, %v3002
          %v3451 = vpack.c.b16 %v3007, %v3003
          %v3452 = vpack.c.b16 %v3008, %v3004
          %v3453 = vpack.c.b16 %v3009, %v3005
          %v3454 = vpack.c.b16 %v3014, %v3010
          %v3455 = vpack.c.b16 %v3015, %v3011
          %v3456 = vpack.c.b16 %v3016, %v3012
          %v3457 = vpack.c.b16 %v3017, %v3013
          %v3458 = vpack.c.b16 %v3022, %v3018
          %v3459 = vpack.c.b16 %v3023, %v3019
          %v3460 = vpack.c.b16 %v3024, %v3020
          %v3461 = vpack.c.b16 %v3025, %v3021
          %v3462 = vpack.c.b16 %v3030, %v3026
          %v3463 = vpack.c.b16 %v3031, %v3027
          %v3464 = vpack.c.b16 %v3032, %v3028
          %v3465 = vpack.c.b16 %v3033, %v3029
          %v3466 = vpack.c.b16 %v3038, %v3034
          %v3467 = vpack.c.b16 %v3039, %v3035
          %v3468 = vpack.c.b16 %v3040, %v3036
          %v3469 = vpack.c.b16 %v3041, %v3037
          %v3470 = vpack.c.b16 %v3046, %v3042
          %v3471 = vpack.c.b16 %v3047, %v3043
          %v3472 = vpack.c.b16 %v3048, %v3044
          %v3473 = vpack.c.b16 %v3049, %v3045
          %v3474 = vpack.c.b16 %v3054, %v3050
          %v3475 = vpack.c.b16 %v3055, %v3051
          %v3476 = vpack.c.b16 %v3056, %v3052
          %v3477 = vpack.c.b16 %v3057, %v3053
          %v3478 = vpack.c.b16 %v3062, %v3058
          %v3479 = vpack.c.b16 %v3063, %v3059
          %v3480 = vpack.c.b16 %v3064, %v3060
          %v3481 = vpack.c.b16 %v3065, %v3061
          %v3482 = vpack.c.b16 %v3070, %v3066
          %v3483 = vpack.c.b16 %v3071, %v3067
          %v3484 = vpack.c.b16 %v3072, %v3068
          %v3485 = vpack.c.b16 %v3073, %v3069
          %v3486 = vpack.c.b16 %v3078, %v3074
          %v3487 = vpack.c.b16 %v3079, %v3075
          %v3488 = vpack.c.b16 %v3080, %v3076
          %v3489 = vpack.c.b16 %v3081, %v3077
          %v3490 = vpack.c.b16 %v3086, %v3082
          %v3491 = vpack.c.b16 %v3087, %v3083
          %v3492 = vpack.c.b16 %v3088, %v3084
          %v3493 = vpack.c.b16 %v3089, %v3085
          %v3494 = vpack.c.b16 %v3094, %v3090
          %v3495 = vpack.c.b16 %v3095, %v3091
          %v3496 = vpack.c.b16 %v3096, %v3092
          %v3497 = vpack.c.b16 %v3097, %v3093
          %v3498 = vpack.c.b16 %v3102, %v3098
          %v3499 = vpack.c.b16 %v3103, %v3099
          %v3500 = vpack.c.b16 %v3104, %v3100
          %v3501 = vpack.c.b16 %v3105, %v3101
          %v3502 = vpack.c.b16 %v3110, %v3106
          %v3503 = vpack.c.b16 %v3111, %v3107
          %v3504 = vpack.c.b16 %v3112, %v3108
          %v3505 = vpack.c.b16 %v3113, %v3109
          %v3506 = vpack.c.b16 %v3118, %v3114
          %v3507 = vpack.c.b16 %v3119, %v3115
          %v3508 = vpack.c.b16 %v3120, %v3116
          %v3509 = vpack.c.b16 %v3121, %v3117
          %v3510 = vpack.c.b16 %v3126, %v3122
          %v3511 = vpack.c.b16 %v3127, %v3123
          %v3512 = vpack.c.b16 %v3128, %v3124
          %v3513 = vpack.c.b16 %v3129, %v3125
          %v3514 = vpack.c.b16 %v3134, %v3130
          %v3515 = vpack.c.b16 %v3135, %v3131
          %v3516 = vpack.c.b16 %v3136, %v3132
          %v3517 = vpack.c.b16 %v3137, %v3133
          %v3518 = vpack.c.b16 %v3142, %v3138
          %v3519 = vpack.c.b16 %v3143, %v3139
          %v3520 = vpack.c.b16 %v3144, %v3140
          %v3521 = vpack.c.b16 %v3145, %v3141
          %v3522 = vpack.c.b16 %v3150, %v3146
          %v3523 = vpack.c.b16 %v3151, %v3147
          %v3524 = vpack.c.b16 %v3152, %v3148
          %v3525 = vpack.c.b16 %v3153, %v3149
          %v3526 = vpack.c.b16 %v3158, %v3154
          %v3527 = vpack.c.b16 %v3159, %v3155
          %v3528 = vpack.c.b16 %v3160, %v3156
          %v3529 = vpack.c.b16 %v3161, %v3157
          %v3530 = vpack.c.b16 %v3166, %v3162
          %v3531 = vpack.c.b16 %v3167, %v3163
          %v3532 = vpack.c.b16 %v3168, %v3164
          %v3533 = vpack.c.b16 %v3169, %v3165
          %v3534 = vpack.c.b16 %v3174, %v3170
          %v3535 = vpack.c.b16 %v3175, %v3171
          %v3536 = vpack.c.b16 %v3176, %v3172
          %v3537 = vpack.c.b16 %v3177, %v3173
          %v3538 = vpack.c.b16 %v3182, %v3178
          %v3539 = vpack.c.b16 %v3183, %v3179
          %v3540 = vpack.c.b16 %v3184, %v3180
          %v3541 = vpack.c.b16 %v3185, %v3181
          %v3542 = vpack.c.b16 %v3190, %v3186
          %v3543 = vpack.c.b16 %v3191, %v3187
          %v3544 = vpack.c.b16 %v3192, %v3188
          %v3545 = vpack.c.b16 %v3193, %v3189
          %v3546 = vpack.c.b16 %v3198, %v3194
          %v3547 = vpack.c.b16 %v3199, %v3195
          %v3548 = vpack.c.b16 %v3200, %v3196
          %v3549 = vpack.c.b16 %v3201, %v3197
          %v3550 = vpack.c.b16 %v3206, %v3202
          %v3551 = vpack.c.b16 %v3207, %v3203
          %v3552 = vpack.c.b16 %v3208, %v3204
          %v3553 = vpack.c.b16 %v3209, %v3205
          %v3554 = vpack.c.b16 %v3214, %v3210
          %v3555 = vpack.c.b16 %v3215, %v3211
          %v3556 = vpack.c.b16 %v3216, %v3212
          %v3557 = vpack.c.b16 %v3217, %v3213
          %v3558 = vpack.c.b16 %v3222, %v3218
          %v3559 = vpack.c.b16 %v3223, %v3219
          %v3560 = vpack.c.b16 %v3224, %v3220
          %v3561 = vpack.c.b16 %v3225, %v3221
          %v3562 = vpack.c.b16 %v3230, %v3226
          %v3563 = vpack.c.b16 %v3231, %v3227
          %v3564 = vpack.c.b16 %v3232, %v3228
          %v3565 = vpack.c.b16 %v3233, %v3229
          %v3566 = vpack.c.b16 %v3238, %v3234
          %v3567 = vpack.c.b16 %v3239, %v3235
          %v3568 = vpack.c.b16 %v3240, %v3236
          %v3569 = vpack.c.b16 %v3241, %v3237
          %v3570 = vpack.c.b16 %v3246, %v3242
          %v3571 = vpack.c.b16 %v3247, %v3243
          %v3572 = vpack.c.b16 %v3248, %v3244
          %v3573 = vpack.c.b16 %v3249, %v3245
          %v3574 = vpack.c.b16 %v3254, %v3250
          %v3575 = vpack.c.b16 %v3255, %v3251
          %v3576 = vpack.c.b16 %v3256, %v3252
          %v3577 = vpack.c.b16 %v3257, %v3253
          %v3578 = vpack.c.b16 %v3262, %v3258
          %v3579 = vpack.c.b16 %v3263, %v3259
          %v3580 = vpack.c.b16 %v3264, %v3260
          %v3581 = vpack.c.b16 %v3265, %v3261
          %v3582 = vpack.c.b16 %v3270, %v3266
          %v3583 = vpack.c.b16 %v3271, %v3267
          %v3584 = vpack.c.b16 %v3272, %v3268
          %v3585 = vpack.c.b16 %v3273, %v3269
          %v3586 = vpack.c.b16 %v3278, %v3274
          %v3587 = vpack.c.b16 %v3279, %v3275
          %v3588 = vpack.c.b16 %v3280, %v3276
          %v3589 = vpack.c.b16 %v3281, %v3277
          %v3590 = vpack.c.b16 %v3286, %v3282
          %v3591 = vpack.c.b16 %v3287, %v3283
          %v3592 = vpack.c.b16 %v3288, %v3284
          %v3593 = vpack.c.b16 %v3289, %v3285
          %v3594 = vpack.c.b16 %v3294, %v3290
          %v3595 = vpack.c.b16 %v3295, %v3291
          %v3596 = vpack.c.b16 %v3296, %v3292
          %v3597 = vpack.c.b16 %v3297, %v3293
          %v3598 = vpack.c.b16 %v3302, %v3298
          %v3599 = vpack.c.b16 %v3303, %v3299
          %v3600 = vpack.c.b16 %v3304, %v3300
          %v3601 = vpack.c.b16 %v3305, %v3301
          %v3602 = vpack.c.b16 %v3310, %v3306
          %v3603 = vpack.c.b16 %v3311, %v3307
          %v3604 = vpack.c.b16 %v3312, %v3308
          %v3605 = vpack.c.b16 %v3313, %v3309
          %v3606 = vpack.c.b16 %v3318, %v3314
          %v3607 = vpack.c.b16 %v3319, %v3315
          %v3608 = vpack.c.b16 %v3320, %v3316
          %v3609 = vpack.c.b16 %v3321, %v3317
          %v3610 = vpack.c.b16 %v3326, %v3322
          %v3611 = vpack.c.b16 %v3327, %v3323
          %v3612 = vpack.c.b16 %v3328, %v3324
          %v3613 = vpack.c.b16 %v3329, %v3325
          %v3614 = vpack.c.b16 %v3334, %v3330
          %v3615 = vpack.c.b16 %v3335, %v3331
          %v3616 = vpack.c.b16 %v3336, %v3332
          %v3617 = vpack.c.b16 %v3337, %v3333
          %v3618 = vpack.c.b16 %v3342, %v3338
          %v3619 = vpack.c.b16 %v3343, %v3339
          %v3620 = vpack.c.b16 %v3344, %v3340
          %v3621 = vpack.c.b16 %v3345, %v3341
          %v3622 = vpack.c.b16 %v3350, %v3346
          %v3623 = vpack.c.b16 %v3351, %v3347
          %v3624 = vpack.c.b16 %v3352, %v3348
          %v3625 = vpack.c.b16 %v3353, %v3349
          %v3626 = vpack.c.b16 %v3358, %v3354
          %v3627 = vpack.c.b16 %v3359, %v3355
          %v3628 = vpack.c.b16 %v3360, %v3356
          %v3629 = vpack.c.b16 %v3361, %v3357
          %v3630 = vpack.c.b16 %v3366, %v3362
          %v3631 = vpack.c.b16 %v3367, %v3363
          %v3632 = vpack.c.b16 %v3368, %v3364
          %v3633 = vpack.c.b16 %v3369, %v3365
          %v3634 = vpack.c.b16 %v3374, %v3370
          %v3635 = vpack.c.b16 %v3375, %v3371
          %v3636 = vpack.c.b16 %v3376, %v3372
          %v3637 = vpack.c.b16 %v3377, %v3373
          %v3638 = vpack.c.b16 %v3382, %v3378
          %v3639 = vpack.c.b16 %v3383, %v3379
          %v3640 = vpack.c.b16 %v3384, %v3380
          %v3641 = vpack.c.b16 %v3385, %v3381
          %v3899 = vperm.slane %v2617, 0
          %v3900 = vperm.slane %v2617, 1
          %v3901 = vperm.slane %v2617, 2
          %v3902 = vperm.slane %v2617, 3
          %3907 = vmatpush.bf16.msra.mxu0 %v3414
          %3908 = vmatpush.bf16.msra.mxu0 %v3410
          %3909 = vmatpush.bf16.msra.mxu0 %v3406
          %3910 = vmatpush.bf16.msra.mxu0 %v3402
          %3911 = vmatpush.bf16.msra.mxu0 %v3398
          %3912 = vmatpush.bf16.msra.mxu0 %v3394
          %3913 = vmatpush.bf16.msra.mxu0 %v3390
          %3914 = vmatpush.bf16.msra.mxu0 %v3386
          %3915 = vmatmul.bf16.gmra.mxu0 %v2353
          %v3916 = vpop.f32.mrf.mxu0
          %v3917 = vadd.f32 %v3899, %v3916
          %v3918 = vpop.f32.mrf.mxu0
          %3919 = vdwg.mxu0
          %3920 = vmatpush.bf16.msra.mxu0 %v3446
          %3921 = vmatpush.bf16.msra.mxu0 %v3442
          %3922 = vmatpush.bf16.msra.mxu0 %v3438
          %3923 = vmatpush.bf16.msra.mxu0 %v3434
          %3924 = vmatpush.bf16.msra.mxu0 %v3430
          %3925 = vmatpush.bf16.msra.mxu0 %v3426
          %3926 = vmatpush.bf16.msra.mxu0 %v3422
          %3927 = vmatpush.bf16.msra.mxu0 %v3418
          %3928 = vmatmul.bf16.gmra.mxu0 %v2354
          %v3929 = vpop.f32.mrf.mxu0
          %v3930 = vadd.f32 %v3917, %v3929
          %v3931 = vpop.f32.mrf.mxu0
          %3932 = vdwg.mxu0
          %3933 = vmatpush.bf16.msra.mxu0 %v3478
          %3934 = vmatpush.bf16.msra.mxu0 %v3474
          %3935 = vmatpush.bf16.msra.mxu0 %v3470
          %3936 = vmatpush.bf16.msra.mxu0 %v3466
          %3937 = vmatpush.bf16.msra.mxu0 %v3462
          %3938 = vmatpush.bf16.msra.mxu0 %v3458
          %3939 = vmatpush.bf16.msra.mxu0 %v3454
          %3940 = vmatpush.bf16.msra.mxu0 %v3450
          %3941 = vmatmul.bf16.gmra.mxu0 %v2355
          %v3942 = vpop.f32.mrf.mxu0
          %v3943 = vadd.f32 %v3930, %v3942
          %v3944 = vpop.f32.mrf.mxu0
          %3945 = vdwg.mxu0
          %3946 = vmatpush.bf16.msra.mxu0 %v3510
          %3947 = vmatpush.bf16.msra.mxu0 %v3506
          %3948 = vmatpush.bf16.msra.mxu0 %v3502
          %3949 = vmatpush.bf16.msra.mxu0 %v3498
          %3950 = vmatpush.bf16.msra.mxu0 %v3494
          %3951 = vmatpush.bf16.msra.mxu0 %v3490
          %3952 = vmatpush.bf16.msra.mxu0 %v3486
          %3953 = vmatpush.bf16.msra.mxu0 %v3482
          %3954 = vmatmul.bf16.gmra.mxu0 %v2356
          %v3955 = vpop.f32.mrf.mxu0
          %v3956 = vadd.f32 %v3943, %v3955
          %v3957 = vpop.f32.mrf.mxu0
          %3958 = vdwg.mxu0
          %3959 = vmatpush.bf16.msra.mxu0 %v3542
          %3960 = vmatpush.bf16.msra.mxu0 %v3538
          %3961 = vmatpush.bf16.msra.mxu0 %v3534
          %3962 = vmatpush.bf16.msra.mxu0 %v3530
          %3963 = vmatpush.bf16.msra.mxu0 %v3526
          %3964 = vmatpush.bf16.msra.mxu0 %v3522
          %3965 = vmatpush.bf16.msra.mxu0 %v3518
          %3966 = vmatpush.bf16.msra.mxu0 %v3514
          %3967 = vmatmul.bf16.gmra.mxu0 %v2357
          %v3968 = vpop.f32.mrf.mxu0
          %v3969 = vadd.f32 %v3956, %v3968
          %v3970 = vpop.f32.mrf.mxu0
          %3971 = vdwg.mxu0
          %3972 = vmatpush.bf16.msra.mxu0 %v3574
          %3973 = vmatpush.bf16.msra.mxu0 %v3570
          %3974 = vmatpush.bf16.msra.mxu0 %v3566
          %3975 = vmatpush.bf16.msra.mxu0 %v3562
          %3976 = vmatpush.bf16.msra.mxu0 %v3558
          %3977 = vmatpush.bf16.msra.mxu0 %v3554
          %3978 = vmatpush.bf16.msra.mxu0 %v3550
          %3979 = vmatpush.bf16.msra.mxu0 %v3546
          %3980 = vmatmul.bf16.gmra.mxu0 %v2358
          %v3981 = vpop.f32.mrf.mxu0
          %v3982 = vadd.f32 %v3969, %v3981
          %v3983 = vpop.f32.mrf.mxu0
          %3984 = vdwg.mxu0
          %3985 = vmatpush.bf16.msra.mxu0 %v3606
          %3986 = vmatpush.bf16.msra.mxu0 %v3602
          %3987 = vmatpush.bf16.msra.mxu0 %v3598
          %3988 = vmatpush.bf16.msra.mxu0 %v3594
          %3989 = vmatpush.bf16.msra.mxu0 %v3590
          %3990 = vmatpush.bf16.msra.mxu0 %v3586
          %3991 = vmatpush.bf16.msra.mxu0 %v3582
          %3992 = vmatpush.bf16.msra.mxu0 %v3578
          %3993 = vmatmul.bf16.gmra.mxu0 %v2359
          %v3994 = vpop.f32.mrf.mxu0
          %v3995 = vadd.f32 %v3982, %v3994
          %v3996 = vpop.f32.mrf.mxu0
          %3997 = vdwg.mxu0
          %3998 = vmatpush.bf16.msra.mxu0 %v3638
          %3999 = vmatpush.bf16.msra.mxu0 %v3634
          %4000 = vmatpush.bf16.msra.mxu0 %v3630
          %4001 = vmatpush.bf16.msra.mxu0 %v3626
          %4002 = vmatpush.bf16.msra.mxu0 %v3622
          %4003 = vmatpush.bf16.msra.mxu0 %v3618
          %4004 = vmatpush.bf16.msra.mxu0 %v3614
          %4005 = vmatpush.bf16.msra.mxu0 %v3610
          %4006 = vmatmul.bf16.gmra.mxu0 %v2360
          %v4007 = vpop.f32.mrf.mxu0
          %v4008 = vadd.f32 %v3995, %v4007
          %v4009 = vpop.f32.mrf.mxu0
          %4010 = vdwg.mxu0
          %4011 = vmatpush.bf16.msra.mxu0 %v3415
          %4012 = vmatpush.bf16.msra.mxu0 %v3411
          %4013 = vmatpush.bf16.msra.mxu0 %v3407
          %4014 = vmatpush.bf16.msra.mxu0 %v3403
          %4015 = vmatpush.bf16.msra.mxu0 %v3399
          %4016 = vmatpush.bf16.msra.mxu0 %v3395
          %4017 = vmatpush.bf16.msra.mxu0 %v3391
          %4018 = vmatpush.bf16.msra.mxu0 %v3387
          %4019 = vmatmul.bf16.gmra.mxu0 %v2353
          %v4020 = vpop.f32.mrf.mxu0
          %v4021 = vadd.f32 %v3900, %v4020
          %v4022 = vpop.f32.mrf.mxu0
          %4023 = vdwg.mxu0
          %4024 = vmatpush.bf16.msra.mxu0 %v3447
          %4025 = vmatpush.bf16.msra.mxu0 %v3443
          %4026 = vmatpush.bf16.msra.mxu0 %v3439
          %4027 = vmatpush.bf16.msra.mxu0 %v3435
          %4028 = vmatpush.bf16.msra.mxu0 %v3431
          %4029 = vmatpush.bf16.msra.mxu0 %v3427
          %4030 = vmatpush.bf16.msra.mxu0 %v3423
          %4031 = vmatpush.bf16.msra.mxu0 %v3419
          %4032 = vmatmul.bf16.gmra.mxu0 %v2354
          %v4033 = vpop.f32.mrf.mxu0
          %v4034 = vadd.f32 %v4021, %v4033
          %v4035 = vpop.f32.mrf.mxu0
          %4036 = vdwg.mxu0
          %4037 = vmatpush.bf16.msra.mxu0 %v3479
          %4038 = vmatpush.bf16.msra.mxu0 %v3475
          %4039 = vmatpush.bf16.msra.mxu0 %v3471
          %4040 = vmatpush.bf16.msra.mxu0 %v3467
          %4041 = vmatpush.bf16.msra.mxu0 %v3463
          %4042 = vmatpush.bf16.msra.mxu0 %v3459
          %4043 = vmatpush.bf16.msra.mxu0 %v3455
          %4044 = vmatpush.bf16.msra.mxu0 %v3451
          %4045 = vmatmul.bf16.gmra.mxu0 %v2355
          %v4046 = vpop.f32.mrf.mxu0
          %v4047 = vadd.f32 %v4034, %v4046
          %v4048 = vpop.f32.mrf.mxu0
          %4049 = vdwg.mxu0
          %4050 = vmatpush.bf16.msra.mxu0 %v3511
          %4051 = vmatpush.bf16.msra.mxu0 %v3507
          %4052 = vmatpush.bf16.msra.mxu0 %v3503
          %4053 = vmatpush.bf16.msra.mxu0 %v3499
          %4054 = vmatpush.bf16.msra.mxu0 %v3495
          %4055 = vmatpush.bf16.msra.mxu0 %v3491
          %4056 = vmatpush.bf16.msra.mxu0 %v3487
          %4057 = vmatpush.bf16.msra.mxu0 %v3483
          %4058 = vmatmul.bf16.gmra.mxu0 %v2356
          %v4059 = vpop.f32.mrf.mxu0
          %v4060 = vadd.f32 %v4047, %v4059
          %v4061 = vpop.f32.mrf.mxu0
          %4062 = vdwg.mxu0
          %4063 = vmatpush.bf16.msra.mxu0 %v3543
          %4064 = vmatpush.bf16.msra.mxu0 %v3539
          %4065 = vmatpush.bf16.msra.mxu0 %v3535
          %4066 = vmatpush.bf16.msra.mxu0 %v3531
          %4067 = vmatpush.bf16.msra.mxu0 %v3527
          %4068 = vmatpush.bf16.msra.mxu0 %v3523
          %4069 = vmatpush.bf16.msra.mxu0 %v3519
          %4070 = vmatpush.bf16.msra.mxu0 %v3515
          %4071 = vmatmul.bf16.gmra.mxu0 %v2357
          %v4072 = vpop.f32.mrf.mxu0
          %v4073 = vadd.f32 %v4060, %v4072
          %v4074 = vpop.f32.mrf.mxu0
          %4075 = vdwg.mxu0
          %4076 = vmatpush.bf16.msra.mxu0 %v3575
          %4077 = vmatpush.bf16.msra.mxu0 %v3571
          %4078 = vmatpush.bf16.msra.mxu0 %v3567
          %4079 = vmatpush.bf16.msra.mxu0 %v3563
          %4080 = vmatpush.bf16.msra.mxu0 %v3559
          %4081 = vmatpush.bf16.msra.mxu0 %v3555
          %4082 = vmatpush.bf16.msra.mxu0 %v3551
          %4083 = vmatpush.bf16.msra.mxu0 %v3547
          %4084 = vmatmul.bf16.gmra.mxu0 %v2358
          %v4085 = vpop.f32.mrf.mxu0
          %v4086 = vadd.f32 %v4073, %v4085
          %v4087 = vpop.f32.mrf.mxu0
          %4088 = vdwg.mxu0
          %4089 = vmatpush.bf16.msra.mxu0 %v3607
          %4090 = vmatpush.bf16.msra.mxu0 %v3603
          %4091 = vmatpush.bf16.msra.mxu0 %v3599
          %4092 = vmatpush.bf16.msra.mxu0 %v3595
          %4093 = vmatpush.bf16.msra.mxu0 %v3591
          %4094 = vmatpush.bf16.msra.mxu0 %v3587
          %4095 = vmatpush.bf16.msra.mxu0 %v3583
          %4096 = vmatpush.bf16.msra.mxu0 %v3579
          %4097 = vmatmul.bf16.gmra.mxu0 %v2359
          %v4098 = vpop.f32.mrf.mxu0
          %v4099 = vadd.f32 %v4086, %v4098
          %v4100 = vpop.f32.mrf.mxu0
          %4101 = vdwg.mxu0
          %4102 = vmatpush.bf16.msra.mxu0 %v3639
          %4103 = vmatpush.bf16.msra.mxu0 %v3635
          %4104 = vmatpush.bf16.msra.mxu0 %v3631
          %4105 = vmatpush.bf16.msra.mxu0 %v3627
          %4106 = vmatpush.bf16.msra.mxu0 %v3623
          %4107 = vmatpush.bf16.msra.mxu0 %v3619
          %4108 = vmatpush.bf16.msra.mxu0 %v3615
          %4109 = vmatpush.bf16.msra.mxu0 %v3611
          %4110 = vmatmul.bf16.gmra.mxu0 %v2360
          %v4111 = vpop.f32.mrf.mxu0
          %v4112 = vadd.f32 %v4099, %v4111
          %v4113 = vpop.f32.mrf.mxu0
          %4114 = vdwg.mxu0
          %4115 = vmatpush.bf16.msra.mxu0 %v3416
          %4116 = vmatpush.bf16.msra.mxu0 %v3412
          %4117 = vmatpush.bf16.msra.mxu0 %v3408
          %4118 = vmatpush.bf16.msra.mxu0 %v3404
          %4119 = vmatpush.bf16.msra.mxu0 %v3400
          %4120 = vmatpush.bf16.msra.mxu0 %v3396
          %4121 = vmatpush.bf16.msra.mxu0 %v3392
          %4122 = vmatpush.bf16.msra.mxu0 %v3388
          %4123 = vmatmul.bf16.gmra.mxu0 %v2353
          %v4124 = vpop.f32.mrf.mxu0
          %v4125 = vadd.f32 %v3901, %v4124
          %v4126 = vpop.f32.mrf.mxu0
          %4127 = vdwg.mxu0
          %4128 = vmatpush.bf16.msra.mxu0 %v3448
          %4129 = vmatpush.bf16.msra.mxu0 %v3444
          %4130 = vmatpush.bf16.msra.mxu0 %v3440
          %4131 = vmatpush.bf16.msra.mxu0 %v3436
          %4132 = vmatpush.bf16.msra.mxu0 %v3432
          %4133 = vmatpush.bf16.msra.mxu0 %v3428
          %4134 = vmatpush.bf16.msra.mxu0 %v3424
          %4135 = vmatpush.bf16.msra.mxu0 %v3420
          %4136 = vmatmul.bf16.gmra.mxu0 %v2354
          %v4137 = vpop.f32.mrf.mxu0
          %v4138 = vadd.f32 %v4125, %v4137
          %v4139 = vpop.f32.mrf.mxu0
          %4140 = vdwg.mxu0
          %4141 = vmatpush.bf16.msra.mxu0 %v3480
          %4142 = vmatpush.bf16.msra.mxu0 %v3476
          %4143 = vmatpush.bf16.msra.mxu0 %v3472
          %4144 = vmatpush.bf16.msra.mxu0 %v3468
          %4145 = vmatpush.bf16.msra.mxu0 %v3464
          %4146 = vmatpush.bf16.msra.mxu0 %v3460
          %4147 = vmatpush.bf16.msra.mxu0 %v3456
          %4148 = vmatpush.bf16.msra.mxu0 %v3452
          %4149 = vmatmul.bf16.gmra.mxu0 %v2355
          %v4150 = vpop.f32.mrf.mxu0
          %v4151 = vadd.f32 %v4138, %v4150
          %v4152 = vpop.f32.mrf.mxu0
          %4153 = vdwg.mxu0
          %4154 = vmatpush.bf16.msra.mxu0 %v3512
          %4155 = vmatpush.bf16.msra.mxu0 %v3508
          %4156 = vmatpush.bf16.msra.mxu0 %v3504
          %4157 = vmatpush.bf16.msra.mxu0 %v3500
          %4158 = vmatpush.bf16.msra.mxu0 %v3496
          %4159 = vmatpush.bf16.msra.mxu0 %v3492
          %4160 = vmatpush.bf16.msra.mxu0 %v3488
          %4161 = vmatpush.bf16.msra.mxu0 %v3484
          %4162 = vmatmul.bf16.gmra.mxu0 %v2356
          %v4163 = vpop.f32.mrf.mxu0
          %v4164 = vadd.f32 %v4151, %v4163
          %v4165 = vpop.f32.mrf.mxu0
          %4166 = vdwg.mxu0
          %4167 = vmatpush.bf16.msra.mxu0 %v3544
          %4168 = vmatpush.bf16.msra.mxu0 %v3540
          %4169 = vmatpush.bf16.msra.mxu0 %v3536
          %4170 = vmatpush.bf16.msra.mxu0 %v3532
          %4171 = vmatpush.bf16.msra.mxu0 %v3528
          %4172 = vmatpush.bf16.msra.mxu0 %v3524
          %4173 = vmatpush.bf16.msra.mxu0 %v3520
          %4174 = vmatpush.bf16.msra.mxu0 %v3516
          %4175 = vmatmul.bf16.gmra.mxu0 %v2357
          %v4176 = vpop.f32.mrf.mxu0
          %v4177 = vadd.f32 %v4164, %v4176
          %v4178 = vpop.f32.mrf.mxu0
          %4179 = vdwg.mxu0
          %4180 = vmatpush.bf16.msra.mxu0 %v3576
          %4181 = vmatpush.bf16.msra.mxu0 %v3572
          %4182 = vmatpush.bf16.msra.mxu0 %v3568
          %4183 = vmatpush.bf16.msra.mxu0 %v3564
          %4184 = vmatpush.bf16.msra.mxu0 %v3560
          %4185 = vmatpush.bf16.msra.mxu0 %v3556
          %4186 = vmatpush.bf16.msra.mxu0 %v3552
          %4187 = vmatpush.bf16.msra.mxu0 %v3548
          %4188 = vmatmul.bf16.gmra.mxu0 %v2358
          %v4189 = vpop.f32.mrf.mxu0
          %v4190 = vadd.f32 %v4177, %v4189
          %v4191 = vpop.f32.mrf.mxu0
          %4192 = vdwg.mxu0
          %4193 = vmatpush.bf16.msra.mxu0 %v3608
          %4194 = vmatpush.bf16.msra.mxu0 %v3604
          %4195 = vmatpush.bf16.msra.mxu0 %v3600
          %4196 = vmatpush.bf16.msra.mxu0 %v3596
          %4197 = vmatpush.bf16.msra.mxu0 %v3592
          %4198 = vmatpush.bf16.msra.mxu0 %v3588
          %4199 = vmatpush.bf16.msra.mxu0 %v3584
          %4200 = vmatpush.bf16.msra.mxu0 %v3580
          %4201 = vmatmul.bf16.gmra.mxu0 %v2359
          %v4202 = vpop.f32.mrf.mxu0
          %v4203 = vadd.f32 %v4190, %v4202
          %v4204 = vpop.f32.mrf.mxu0
          %4205 = vdwg.mxu0
          %4206 = vmatpush.bf16.msra.mxu0 %v3640
          %4207 = vmatpush.bf16.msra.mxu0 %v3636
          %4208 = vmatpush.bf16.msra.mxu0 %v3632
          %4209 = vmatpush.bf16.msra.mxu0 %v3628
          %4210 = vmatpush.bf16.msra.mxu0 %v3624
          %4211 = vmatpush.bf16.msra.mxu0 %v3620
          %4212 = vmatpush.bf16.msra.mxu0 %v3616
          %4213 = vmatpush.bf16.msra.mxu0 %v3612
          %4214 = vmatmul.bf16.gmra.mxu0 %v2360
          %v4215 = vpop.f32.mrf.mxu0
          %v4216 = vadd.f32 %v4203, %v4215
          %v4217 = vpop.f32.mrf.mxu0
          %4218 = vdwg.mxu0
          %4219 = vmatpush.bf16.msra.mxu0 %v3417
          %4220 = vmatpush.bf16.msra.mxu0 %v3413
          %4221 = vmatpush.bf16.msra.mxu0 %v3409
          %4222 = vmatpush.bf16.msra.mxu0 %v3405
          %4223 = vmatpush.bf16.msra.mxu0 %v3401
          %4224 = vmatpush.bf16.msra.mxu0 %v3397
          %4225 = vmatpush.bf16.msra.mxu0 %v3393
          %4226 = vmatpush.bf16.msra.mxu0 %v3389
          %4227 = vmatmul.bf16.gmra.mxu0 %v2353
          %v4228 = vpop.f32.mrf.mxu0
          %v4229 = vadd.f32 %v3902, %v4228
          %v4230 = vpop.f32.mrf.mxu0
          %4231 = vdwg.mxu0
          %4232 = vmatpush.bf16.msra.mxu0 %v3449
          %4233 = vmatpush.bf16.msra.mxu0 %v3445
          %4234 = vmatpush.bf16.msra.mxu0 %v3441
          %4235 = vmatpush.bf16.msra.mxu0 %v3437
          %4236 = vmatpush.bf16.msra.mxu0 %v3433
          %4237 = vmatpush.bf16.msra.mxu0 %v3429
          %4238 = vmatpush.bf16.msra.mxu0 %v3425
          %4239 = vmatpush.bf16.msra.mxu0 %v3421
          %4240 = vmatmul.bf16.gmra.mxu0 %v2354
          %v4241 = vpop.f32.mrf.mxu0
          %v4242 = vadd.f32 %v4229, %v4241
          %v4243 = vpop.f32.mrf.mxu0
          %4244 = vdwg.mxu0
          %4245 = vmatpush.bf16.msra.mxu0 %v3481
          %4246 = vmatpush.bf16.msra.mxu0 %v3477
          %4247 = vmatpush.bf16.msra.mxu0 %v3473
          %4248 = vmatpush.bf16.msra.mxu0 %v3469
          %4249 = vmatpush.bf16.msra.mxu0 %v3465
          %4250 = vmatpush.bf16.msra.mxu0 %v3461
          %4251 = vmatpush.bf16.msra.mxu0 %v3457
          %4252 = vmatpush.bf16.msra.mxu0 %v3453
          %4253 = vmatmul.bf16.gmra.mxu0 %v2355
          %v4254 = vpop.f32.mrf.mxu0
          %v4255 = vadd.f32 %v4242, %v4254
          %v4256 = vpop.f32.mrf.mxu0
          %4257 = vdwg.mxu0
          %4258 = vmatpush.bf16.msra.mxu0 %v3513
          %4259 = vmatpush.bf16.msra.mxu0 %v3509
          %4260 = vmatpush.bf16.msra.mxu0 %v3505
          %4261 = vmatpush.bf16.msra.mxu0 %v3501
          %4262 = vmatpush.bf16.msra.mxu0 %v3497
          %4263 = vmatpush.bf16.msra.mxu0 %v3493
          %4264 = vmatpush.bf16.msra.mxu0 %v3489
          %4265 = vmatpush.bf16.msra.mxu0 %v3485
          %4266 = vmatmul.bf16.gmra.mxu0 %v2356
          %v4267 = vpop.f32.mrf.mxu0
          %v4268 = vadd.f32 %v4255, %v4267
          %v4269 = vpop.f32.mrf.mxu0
          %4270 = vdwg.mxu0
          %4271 = vmatpush.bf16.msra.mxu0 %v3545
          %4272 = vmatpush.bf16.msra.mxu0 %v3541
          %4273 = vmatpush.bf16.msra.mxu0 %v3537
          %4274 = vmatpush.bf16.msra.mxu0 %v3533
          %4275 = vmatpush.bf16.msra.mxu0 %v3529
          %4276 = vmatpush.bf16.msra.mxu0 %v3525
          %4277 = vmatpush.bf16.msra.mxu0 %v3521
          %4278 = vmatpush.bf16.msra.mxu0 %v3517
          %4279 = vmatmul.bf16.gmra.mxu0 %v2357
          %v4280 = vpop.f32.mrf.mxu0
          %v4281 = vadd.f32 %v4268, %v4280
          %v4282 = vpop.f32.mrf.mxu0
          %4283 = vdwg.mxu0
          %4284 = vmatpush.bf16.msra.mxu0 %v3577
          %4285 = vmatpush.bf16.msra.mxu0 %v3573
          %4286 = vmatpush.bf16.msra.mxu0 %v3569
          %4287 = vmatpush.bf16.msra.mxu0 %v3565
          %4288 = vmatpush.bf16.msra.mxu0 %v3561
          %4289 = vmatpush.bf16.msra.mxu0 %v3557
          %4290 = vmatpush.bf16.msra.mxu0 %v3553
          %4291 = vmatpush.bf16.msra.mxu0 %v3549
          %4292 = vmatmul.bf16.gmra.mxu0 %v2358
          %v4293 = vpop.f32.mrf.mxu0
          %v4294 = vadd.f32 %v4281, %v4293
          %v4295 = vpop.f32.mrf.mxu0
          %4296 = vdwg.mxu0
          %4297 = vmatpush.bf16.msra.mxu0 %v3609
          %4298 = vmatpush.bf16.msra.mxu0 %v3605
          %4299 = vmatpush.bf16.msra.mxu0 %v3601
          %4300 = vmatpush.bf16.msra.mxu0 %v3597
          %4301 = vmatpush.bf16.msra.mxu0 %v3593
          %4302 = vmatpush.bf16.msra.mxu0 %v3589
          %4303 = vmatpush.bf16.msra.mxu0 %v3585
          %4304 = vmatpush.bf16.msra.mxu0 %v3581
          %4305 = vmatmul.bf16.gmra.mxu0 %v2359
          %v4306 = vpop.f32.mrf.mxu0
          %v4307 = vadd.f32 %v4294, %v4306
          %v4308 = vpop.f32.mrf.mxu0
          %4309 = vdwg.mxu0
          %4310 = vmatpush.bf16.msra.mxu0 %v3641
          %4311 = vmatpush.bf16.msra.mxu0 %v3637
          %4312 = vmatpush.bf16.msra.mxu0 %v3633
          %4313 = vmatpush.bf16.msra.mxu0 %v3629
          %4314 = vmatpush.bf16.msra.mxu0 %v3625
          %4315 = vmatpush.bf16.msra.mxu0 %v3621
          %4316 = vmatpush.bf16.msra.mxu0 %v3617
          %4317 = vmatpush.bf16.msra.mxu0 %v3613
          %4318 = vmatmul.bf16.gmra.mxu0 %v2360
          %v4319 = vpop.f32.mrf.mxu0
          %v4320 = vadd.f32 %v4307, %v4319
          %v4321 = vpop.f32.mrf.mxu0
          %4322 = vdwg.mxu0
          %v4327 = vrot.slane %v4112, 7
          %v4328 = vrot.slane %v4216, 6
          %v4329 = vrot.slane %v4320, 5
          %v4330 = vsel %vm683, %v4008, %v4327
          %vm4331 = vcmask 1042434
          %v4332 = vsel %vm4331, %v4328, %v4329
          %vm4333 = vcmask 1041408
          %v4334 = vsel %vm4333, %v4330, %v4332
          %v4336 = vlaneseq
          %vm4337 = vcmp.ge.s32.totalorder %v4336, 0
          %vm4338 = vcmp.lt.s32.totalorder %v4336, 512
          %vm4339 = vmand %vm4337, %vm4338
          %4340 = vst.msk [vmem:[%s482] sm:$0xf] %vm4339, %v4334
        $region84: #{msn_forward.8} parent=63 // pred_fallthru
          _
        %p4341 = scmp.lt.s32.totalorder %s28, 1
        %s4342 = scalar_select %p4341, %s28, 1
        %s4343 = smul.addr %s4342, 4
        %s4344 = scalar_lea.vmem %s11, %s4343
        // Predicated region
        $region85: #{msn_forward.8} parent=63 // pred_check
          %p4345 = pneg %p299
        $region86: #{msn_forward.8} parent=63 // pred_check_branch
          %4347 = sbr.rel (%p4345) target = $region88
        $region87: #{msn_forward.8} parent=63 // pred_region
          _
        $region88: #{msn_forward.8} parent=63 // pred_fallthru
          _
      $region64: #{msn_forward.8} parent=5 // pred_fallthru
        _
      %p4348 = scmp.le.s32.totalorder 2, %s19
      // Predicated region
      $region89: #{msn_forward.8} parent=5 // pred_check
        %p4349 = pneg %p4348
      $region90: #{msn_forward.8} parent=5 // pred_check_branch
        %4351 = sbr.rel (%p4349) target = $region92
      $region91: #{msn_forward.8} parent=5 // pred_region
        %s4352 = ssub.s32 %s19, 2
        // Predicated region
        $region93: #{msn_forward.8} parent=91 // pred_check
          %p4353 = pneg %p305
        $region94: #{msn_forward.8} parent=91 // pred_check_branch
          %4355 = sbr.rel (%p4353) target = $region96
        $region95: #{msn_forward.8} parent=91 // pred_region
          %p4356 = scmp.lt.s32.totalorder %s30, 1
          %s4357 = scalar_select %p4356, %s30, 1
          %s4358 = smul.addr %s4357, 4
          %s4359 = scalar_lea.vmem %s11, %s4358
        $region96: #{msn_forward.8} parent=91 // pred_fallthru
          _
      $region92: #{msn_forward.8} parent=5 // pred_fallthru
        _
    $region6: #{msn_forward.8} parent=1 // loop_footer
      %s23 = sadd.s32 1, %s19
    $region7: #{msn_forward.8} parent=1 // loop_footer_branch
      %18 = sbr.rel target = $region3
    $region8: #{msn_forward.8} parent=1 // loop_exit
      _
    %4360 = vsyncpa [#allocation4], 1
    %s4361 = scalar_lea.sflag [#allocation4], 1
    %4362 = vsyncpa %s4361, 1
    %4363 = vsyncpa [#allocation6], 1

</llo_original>
